<compile_context>
chip_gen: v7x
topology: tpu7x:2x2x1
jax: 0.10.0
libtpu: 0.0.40
codegen_flags: <defaults>
</compile_context>

<pallas_src>
import functools

import numpy as np

import jax
import jax.numpy as jnp
from jax import lax
from jax.experimental import pallas as pl
from jax.experimental.pallas import tpu as pltpu


_ACTIVATIONS = {
    "identity": lambda x: x,
    "relu": jax.nn.relu,
    "tanh": jnp.tanh,
    "sigmoid": jax.nn.sigmoid,
    "leaky_relu": lambda x: jax.nn.leaky_relu(x, negative_slope=0.01),
}


def _conv1d_chain_kernel(*refs, kernel_sizes, dilations, activations,
                         has_bias, dot_dtype):
    """Fused causal dilated Conv1d chain for one (batch, seq-tile) grid step.

    refs = (x_ref, w0[, b0], w1[, b1], ..., o_ref)

      x_ref : (1, 1, C_in, tile + halo),  halo = sum_i (k_i - 1) * d_i
      w_i   : (C_out_i, k_i * C_in_i)     tap-major: w[co, t*C_in + ci]
      b_i   : (C_out_i, 1)
      o_ref : (1, C_out_last, tile)

    Layout: channels on sublanes, sequence on lanes (lane-dense output).
    Because the wrapper pre-pads the sequence by the *total* receptive-field
    halo (replicate), every layer here is a plain "valid" causal conv and the
    live window shrinks by (k_i - 1) * d_i per layer, ending exactly at `tile`.
    """
    x_ref = refs[0]
    o_ref = refs[-1]
    params = refs[1:-1]
    n_layers = len(kernel_sizes)
    f32_dot = jnp.dtype(dot_dtype) == jnp.dtype(jnp.float32)

    h = x_ref[...][0, 0].astype(jnp.float32)            # (C_in, tile + halo)

    p = 0
    for i in range(n_layers):
        k, d = kernel_sizes[i], dilations[i]
        c_in = h.shape[0]
        w = params[p][...]                               # (C_out, k * C_in)
        p += 1
        pad = (k - 1) * d
        lw = h.shape[1] - pad                            # this layer's out width

        # Conv as a sum of k shifted (C_out, C_in) @ (C_in, lw) MXU matmuls,
        # accumulated in f32.  All slices are static (trace-time) offsets.
        acc = None
        for t in range(k):
            wt = w[:, t * c_in:(t + 1) * c_in]           # (C_out, C_in)
            ht = h[:, t * d:t * d + lw]                  # (C_in, lw)
            if f32_dot:
                part = jnp.dot(wt, ht,
                               preferred_element_type=jnp.float32,
                               precision=lax.Precision.HIGHEST)
            else:
                part = jnp.dot(wt.astype(dot_dtype), ht.astype(dot_dtype),
                               preferred_element_type=jnp.float32)
            acc = part if acc is None else acc + part

        if has_bias:
            acc = acc + params[p][...].astype(jnp.float32)   # (C_out, 1) bcast
            p += 1

        # dropout: eval-mode semantics (identity).
        # TODO(synk): training-mode dropout (p > 0) would need
        # pltpu.prng_seed + pltpu.prng_random_bits; not implemented here.
        h = _ACTIVATIONS[activations[i]](acc)

    o_ref[...] = h[None].astype(o_ref.dtype)             # (1, C_out, tile)


class ExtendedConv1DListPallas:
    """JAX/Pallas forward-only equivalent of phlower's ExtendedConv1DList."""

    def __init__(self, nodes, kernel_sizes, dilations, activations, bias,
                 dropouts=None, *, key, seq_tile=256, dot_dtype=jnp.float32):
        assert len(nodes) >= 2
        self._nodes = list(nodes)
        self._activations = self._validate_args(activations, "identity")
        self._kernel_sizes = self._validate_args(kernel_sizes, None)
        self._dilations = self._validate_args(dilations, 1)
        self._dropouts = self._validate_args(dropouts or [], 0.0)
        assert all(k is not None and k >= 1 for k in self._kernel_sizes)
        assert all(p < 1.0 for p in self._dropouts)
        self._is_bias = bias
        self._dot_dtype = jnp.dtype(dot_dtype)
        assert seq_tile % 128 == 0, "seq_tile must be a multiple of 128 (lanes)"
        self._seq_tile = int(seq_tile)

        # Deterministic init mimicking torch.nn.Conv1d defaults:
        # uniform(+-1/sqrt(fan_in)), fan_in = C_in * kernel_size.
        self.weights_oik = []    # (C_out, C_in, k)   torch layout (reference)
        self.weights_flat = []   # (C_out, k * C_in)  tap-major   (kernel)
        self.biases = []         # (C_out, 1)
        for c_in, c_out, k in zip(self._nodes[:-1], self._nodes[1:],
                                  self._kernel_sizes):
            key, wk, bk = jax.random.split(key, 3)
            bound = 1.0 / float(np.sqrt(c_in * k))
            w = jax.random.uniform(wk, (c_out, c_in, k), jnp.float32,
                                   -bound, bound)
            self.weights_oik.append(w)
            # flat[co, t*C_in + ci] = w[co, ci, t]
            self.weights_flat.append(
                jnp.transpose(w, (0, 2, 1)).reshape(c_out, k * c_in))
            if bias:
                self.biases.append(
                    jax.random.uniform(bk, (c_out, 1), jnp.float32,
                                       -bound, bound))

    # ---- torch-module-like helpers -----------------------------------------
    def _validate_args(self, values, default):
        values = list(values) if values else []
        if len(values) == 0:
            values = [default] * (len(self._nodes) - 1)
        assert len(self._nodes) == len(values) + 1, f"{values} is too many."
        return values

    def __len__(self):
        return len(self._nodes) - 1

    def get_padding_lengths(self):
        return (np.array(self._kernel_sizes) - 1) * np.array(self._dilations)

    # ---- forward -------------------------------------------------------------
    def __call__(self, x, *, dot_dtype=None):
        assert x.ndim == 3, "expected (batch, channels, length)"
        B, C_in, L = x.shape
        assert C_in == self._nodes[0]
        dot_dtype = (jnp.dtype(dot_dtype) if dot_dtype is not None
                     else self._dot_dtype)

        halo = int(self.get_padding_lengths().sum())
        tl = self._seq_tile
        n_l = max(1, pl.cdiv(L, tl))
        L_t = n_l * tl
        C_out = self._nodes[-1]

        # Left replicate-pad by the total receptive-field halo (equivalent to
        # the per-layer replicate padding of the torch module for a causal
        # chain) and right-pad to a tile multiple (causal outputs at positions
        # < L never see the right pad; extra positions are sliced off below).
        x_pad = jnp.pad(x, ((0, 0), (0, 0), (halo, L_t - L)), mode="edge")

        # Overlapping (tile + halo) windows so every grid step's input is a
        # plain rectangular BlockSpec tile (no dynamic indexing in-kernel).
        # Halo duplication cost is ~halo/tile (a few percent).
        win = tl + halo
        x_tiles = jnp.stack(
            [x_pad[:, :, i * tl:i * tl + win] for i in range(n_l)], axis=1
        )  # (B, n_l, C_in, tile + halo)

        in_specs = [pl.BlockSpec((1, 1, C_in, win), lambda b, l: (b, l, 0, 0))]
        operands = [x_tiles]
        for i in range(len(self)):
            w = self.weights_flat[i]
            in_specs.append(pl.BlockSpec(w.shape, lambda b, l: (0, 0)))
            operands.append(w)
            if self._is_bias:
                bb = self.biases[i]
                in_specs.append(pl.BlockSpec(bb.shape, lambda b, l: (0, 0)))
                operands.append(bb)
        # NOTE: with large channel counts, the grid-invariant weight/bias specs
        # should be single-buffered (pipeline_mode=pl.Buffered(1)) and/or kept
        # in bf16 to respect v7x's 64 MiB VMEM; at these sizes (a few KiB) the
        # default double-buffering is free, so it is left alone for robustness.

        kernel = functools.partial(
            _conv1d_chain_kernel,
            kernel_sizes=tuple(self._kernel_sizes),
            dilations=tuple(self._dilations),
            activations=tuple(self._activations),
            has_bias=self._is_bias,
            dot_dtype=dot_dtype,
        )

        out = pl.pallas_call(
            kernel,
            out_shape=jax.ShapeDtypeStruct((B, C_out, L_t), x.dtype),
            grid_spec=pltpu.PrefetchScalarGridSpec(
                num_scalar_prefetch=0,
                grid=(B, n_l),
                in_specs=in_specs,
                out_specs=pl.BlockSpec((1, C_out, tl), lambda b, l: (b, 0, l)),
            ),
            compiler_params=pltpu.CompilerParams(
                dimension_semantics=("parallel", "parallel"),
            ),
        )(*operands)

        return out[:, :, :L] if L_t != L else out

    # ---- pure-JAX reference (true f32 conv semantics, mirrors torch) --------
    def reference(self, x):
        h = x.astype(jnp.float32)
        pads = self.get_padding_lengths()
        for i in range(len(self)):
            hp = jnp.pad(h, ((0, 0), (0, 0), (int(pads[i]), 0)), mode="edge")
            h = lax.conv_general_dilated(
                hp, self.weights_oik[i],
                window_strides=(1,), padding=[(0, 0)],
                rhs_dilation=(self._dilations[i],),
                dimension_numbers=("NCH", "OIH", "NCH"),
                precision=lax.Precision.HIGHEST)
            if self._is_bias:
                h = h + self.biases[i][None, :, :]
            h = _ACTIVATIONS[self._activations[i]](h)
        return h.astype(x.dtype)


if __name__ == "__main__":
    key = jax.random.PRNGKey(0)
    key, pkey, xkey = jax.random.split(key, 3)

    # Small config consistent with the module.
    nodes = [4, 8, 8, 4]
    kernel_sizes = [3, 3, 2]
    dilations = [1, 2, 4]
    activations = ["relu", "tanh", "identity"]
    dropouts = [0.0, 0.0, 0.0]

    model = ExtendedConv1DListPallas(
        nodes, kernel_sizes, dilations, activations, bias=True,
        dropouts=dropouts, key=pkey, seq_tile=256)

    B, L = 2, 500                 # ragged L exercises the tail-padding path
    x = jax.random.normal(xkey, (B, nodes[0], L), jnp.float32)

    ref = model.reference(x)

    # f32 dot path (default).  Tolerance leaves room for MXU accumulation
    # order / matmul precision differences; a semantic bug would be O(0.1-1).
    out = jax.block_until_ready(model(x))
    assert out.shape == (B, nodes[-1], L)
    assert jnp.allclose(out, ref, atol=1e-2, rtol=1e-2), "f32 kernel mismatch"

    # bf16 dot-operand path (MXU-native on v6e/v7x), f32 accumulation.
    out_bf16 = jax.block_until_ready(model(x, dot_dtype=jnp.bfloat16))
    assert jnp.allclose(out_bf16, ref, atol=5e-2, rtol=5e-2), \
        "bf16 kernel mismatch"

    print("KERNEL_OK")
</pallas_src>

<mosaic_0001>
module attributes {stable_mosaic.version = 11 : i64} {
  func.func @_conv1d_chain_kernel(%arg0: i32, %arg1: i32, %arg2: memref<1x1x4x266xf32, #tpu.memory_space<vmem>>, %arg3: memref<8x12xf32, #tpu.memory_space<vmem>>, %arg4: memref<8x1xf32, #tpu.memory_space<vmem>>, %arg5: memref<8x24xf32, #tpu.memory_space<vmem>>, %arg6: memref<8x1xf32, #tpu.memory_space<vmem>>, %arg7: memref<4x16xf32, #tpu.memory_space<vmem>>, %arg8: memref<4x1xf32, #tpu.memory_space<vmem>>, %arg9: memref<1x4x256xf32, #tpu.memory_space<vmem>>) attributes {dimension_semantics = [#tpu.dimension_semantics<parallel>, #tpu.dimension_semantics<parallel>], iteration_bounds = array<i64: 2, 2>, scalar_prefetch = 0 : i64, scratch_operands = 0 : i64, tpu.core_type = #tpu.core_type<tc>, window_params = [{transform_indices = @transform_0, window_bounds = array<i64: 1, 1, 4, 266>}, {pipeline_mode = #tpu.pipeline_mode<synchronous>, transform_indices = @transform_1, window_bounds = array<i64: 8, 12>}, {pipeline_mode = #tpu.pipeline_mode<synchronous>, transform_indices = @transform_2, window_bounds = array<i64: 8, 1>}, {pipeline_mode = #tpu.pipeline_mode<synchronous>, transform_indices = @transform_3, window_bounds = array<i64: 8, 24>}, {pipeline_mode = #tpu.pipeline_mode<synchronous>, transform_indices = @transform_4, window_bounds = array<i64: 8, 1>}, {pipeline_mode = #tpu.pipeline_mode<synchronous>, transform_indices = @transform_5, window_bounds = array<i64: 4, 16>}, {pipeline_mode = #tpu.pipeline_mode<synchronous>, transform_indices = @transform_6, window_bounds = array<i64: 4, 1>}, {transform_indices = @transform_7, window_bounds = array<i64: 1, 4, 256>}]} {
    %c0 = arith.constant 0 : index
    %c0_0 = arith.constant 0 : index
    %c0_1 = arith.constant 0 : index
    %c0_2 = arith.constant 0 : index
    %0 = vector.load %arg2[%c0, %c0_0, %c0_1, %c0_2] : memref<1x1x4x266xf32, #tpu.memory_space<vmem>>, vector<1x1x4x266xf32>
    %1 = vector.shape_cast %0 : vector<1x1x4x266xf32> to vector<4x266xf32>
    %c0_3 = arith.constant 0 : index
    %c0_4 = arith.constant 0 : index
    %2 = vector.load %arg3[%c0_3, %c0_4] : memref<8x12xf32, #tpu.memory_space<vmem>>, vector<8x12xf32>
    %3 = vector.extract_strided_slice %2 {offsets = [0, 0], sizes = [8, 4], strides = [1, 1]} : vector<8x12xf32> to vector<8x4xf32>
    %4 = vector.extract_strided_slice %1 {offsets = [0, 0], sizes = [4, 264], strides = [1, 1]} : vector<4x266xf32> to vector<4x264xf32>
    %cst = arith.constant dense<0.000000e+00> : vector<8x264xf32>
    %5 = tpu.matmul %3, %4, %cst {dimension_numbers = #tpu.dot_dimension_numbers<[1], [0], [0], [1], [0, 0, 1, 1], [], []>, precision = #tpu.contract_precision<fp32>} : vector<8x4xf32>, vector<4x264xf32>, vector<8x264xf32> -> vector<8x264xf32>
    %6 = vector.extract_strided_slice %2 {offsets = [0, 4], sizes = [8, 4], strides = [1, 1]} : vector<8x12xf32> to vector<8x4xf32>
    %7 = vector.extract_strided_slice %1 {offsets = [0, 1], sizes = [4, 264], strides = [1, 1]} : vector<4x266xf32> to vector<4x264xf32>
    %cst_5 = arith.constant dense<0.000000e+00> : vector<8x264xf32>
    %8 = tpu.matmul %6, %7, %cst_5 {dimension_numbers = #tpu.dot_dimension_numbers<[1], [0], [0], [1], [0, 0, 1, 1], [], []>, precision = #tpu.contract_precision<fp32>} : vector<8x4xf32>, vector<4x264xf32>, vector<8x264xf32> -> vector<8x264xf32>
    %9 = arith.addf %5, %8 : vector<8x264xf32>
    %10 = vector.extract_strided_slice %2 {offsets = [0, 8], sizes = [8, 4], strides = [1, 1]} : vector<8x12xf32> to vector<8x4xf32>
    %11 = vector.extract_strided_slice %1 {offsets = [0, 2], sizes = [4, 264], strides = [1, 1]} : vector<4x266xf32> to vector<4x264xf32>
    %cst_6 = arith.constant dense<0.000000e+00> : vector<8x264xf32>
    %12 = tpu.matmul %10, %11, %cst_6 {dimension_numbers = #tpu.dot_dimension_numbers<[1], [0], [0], [1], [0, 0, 1, 1], [], []>, precision = #tpu.contract_precision<fp32>} : vector<8x4xf32>, vector<4x264xf32>, vector<8x264xf32> -> vector<8x264xf32>
    %13 = arith.addf %9, %12 : vector<8x264xf32>
    %c0_7 = arith.constant 0 : index
    %c0_8 = arith.constant 0 : index
    %14 = vector.load %arg4[%c0_7, %c0_8] : memref<8x1xf32, #tpu.memory_space<vmem>>, vector<8x1xf32>
    %15 = vector.broadcast %14 : vector<8x1xf32> to vector<8x264xf32>
    %16 = arith.addf %13, %15 : vector<8x264xf32>
    %cst_9 = arith.constant 0.000000e+00 : f32
    %17 = vector.broadcast %cst_9 : f32 to vector<8x264xf32>
    %18 = arith.maximumf %16, %17 : vector<8x264xf32>
    %c0_10 = arith.constant 0 : index
    %c0_11 = arith.constant 0 : index
    %19 = vector.load %arg5[%c0_10, %c0_11] : memref<8x24xf32, #tpu.memory_space<vmem>>, vector<8x24xf32>
    %20 = vector.extract_strided_slice %19 {offsets = [0, 0], sizes = [8, 8], strides = [1, 1]} : vector<8x24xf32> to vector<8x8xf32>
    %21 = vector.extract_strided_slice %18 {offsets = [0, 0], sizes = [8, 260], strides = [1, 1]} : vector<8x264xf32> to vector<8x260xf32>
    %cst_12 = arith.constant dense<0.000000e+00> : vector<8x260xf32>
    %22 = tpu.matmul %20, %21, %cst_12 {dimension_numbers = #tpu.dot_dimension_numbers<[1], [0], [0], [1], [0, 0, 1, 1], [], []>, precision = #tpu.contract_precision<fp32>} : vector<8x8xf32>, vector<8x260xf32>, vector<8x260xf32> -> vector<8x260xf32>
    %23 = vector.extract_strided_slice %19 {offsets = [0, 8], sizes = [8, 8], strides = [1, 1]} : vector<8x24xf32> to vector<8x8xf32>
    %24 = vector.extract_strided_slice %18 {offsets = [0, 2], sizes = [8, 260], strides = [1, 1]} : vector<8x264xf32> to vector<8x260xf32>
    %cst_13 = arith.constant dense<0.000000e+00> : vector<8x260xf32>
    %25 = tpu.matmul %23, %24, %cst_13 {dimension_numbers = #tpu.dot_dimension_numbers<[1], [0], [0], [1], [0, 0, 1, 1], [], []>, precision = #tpu.contract_precision<fp32>} : vector<8x8xf32>, vector<8x260xf32>, vector<8x260xf32> -> vector<8x260xf32>
    %26 = arith.addf %22, %25 : vector<8x260xf32>
    %27 = vector.extract_strided_slice %19 {offsets = [0, 16], sizes = [8, 8], strides = [1, 1]} : vector<8x24xf32> to vector<8x8xf32>
    %28 = vector.extract_strided_slice %18 {offsets = [0, 4], sizes = [8, 260], strides = [1, 1]} : vector<8x264xf32> to vector<8x260xf32>
    %cst_14 = arith.constant dense<0.000000e+00> : vector<8x260xf32>
    %29 = tpu.matmul %27, %28, %cst_14 {dimension_numbers = #tpu.dot_dimension_numbers<[1], [0], [0], [1], [0, 0, 1, 1], [], []>, precision = #tpu.contract_precision<fp32>} : vector<8x8xf32>, vector<8x260xf32>, vector<8x260xf32> -> vector<8x260xf32>
    %30 = arith.addf %26, %29 : vector<8x260xf32>
    %c0_15 = arith.constant 0 : index
    %c0_16 = arith.constant 0 : index
    %31 = vector.load %arg6[%c0_15, %c0_16] : memref<8x1xf32, #tpu.memory_space<vmem>>, vector<8x1xf32>
    %32 = vector.broadcast %31 : vector<8x1xf32> to vector<8x260xf32>
    %33 = arith.addf %30, %32 : vector<8x260xf32>
    %34 = math.tanh %33 : vector<8x260xf32>
    %c0_17 = arith.constant 0 : index
    %c0_18 = arith.constant 0 : index
    %35 = vector.load %arg7[%c0_17, %c0_18] : memref<4x16xf32, #tpu.memory_space<vmem>>, vector<4x16xf32>
    %36 = vector.extract_strided_slice %35 {offsets = [0, 0], sizes = [4, 8], strides = [1, 1]} : vector<4x16xf32> to vector<4x8xf32>
    %37 = vector.extract_strided_slice %34 {offsets = [0, 0], sizes = [8, 256], strides = [1, 1]} : vector<8x260xf32> to vector<8x256xf32>
    %cst_19 = arith.constant dense<0.000000e+00> : vector<4x256xf32>
    %38 = tpu.matmul %36, %37, %cst_19 {dimension_numbers = #tpu.dot_dimension_numbers<[1], [0], [0], [1], [0, 0, 1, 1], [], []>, precision = #tpu.contract_precision<fp32>} : vector<4x8xf32>, vector<8x256xf32>, vector<4x256xf32> -> vector<4x256xf32>
    %39 = vector.extract_strided_slice %35 {offsets = [0, 8], sizes = [4, 8], strides = [1, 1]} : vector<4x16xf32> to vector<4x8xf32>
    %40 = vector.extract_strided_slice %34 {offsets = [0, 4], sizes = [8, 256], strides = [1, 1]} : vector<8x260xf32> to vector<8x256xf32>
    %cst_20 = arith.constant dense<0.000000e+00> : vector<4x256xf32>
    %41 = tpu.matmul %39, %40, %cst_20 {dimension_numbers = #tpu.dot_dimension_numbers<[1], [0], [0], [1], [0, 0, 1, 1], [], []>, precision = #tpu.contract_precision<fp32>} : vector<4x8xf32>, vector<8x256xf32>, vector<4x256xf32> -> vector<4x256xf32>
    %42 = arith.addf %38, %41 : vector<4x256xf32>
    %c0_21 = arith.constant 0 : index
    %c0_22 = arith.constant 0 : index
    %43 = vector.load %arg8[%c0_21, %c0_22] : memref<4x1xf32, #tpu.memory_space<vmem>>, vector<4x1xf32>
    %44 = vector.broadcast %43 : vector<4x1xf32> to vector<4x256xf32>
    %45 = arith.addf %42, %44 : vector<4x256xf32>
    %46 = vector.shape_cast %45 : vector<4x256xf32> to vector<1x4x256xf32>
    %c0_23 = arith.constant 0 : index
    %c0_24 = arith.constant 0 : index
    %c0_25 = arith.constant 0 : index
    %47 = vector.load %arg9[%c0_23, %c0_24, %c0_25] : memref<1x4x256xf32, #tpu.memory_space<vmem>>, vector<1x4x256xf32>
    tpu.vector_store %arg9[%c0_23, %c0_24, %c0_25], %46 {strides = array<i32>} : memref<1x4x256xf32, #tpu.memory_space<vmem>>, vector<1x4x256xf32>,
    return
  }
  func.func @transform_0(%arg0: i32, %arg1: i32) -> (i32, i32, i32, i32) {
    %c0_i32 = arith.constant 0 : i32
    %c0_i32_0 = arith.constant 0 : i32
    %c0_i32_1 = arith.constant 0 : i32
    return %arg0, %arg1, %c0_i32, %c0_i32_0 : i32, i32, i32, i32
  }
  func.func @transform_1(%arg0: i32, %arg1: i32) -> (i32, i32) {
    %c0_i32 = arith.constant 0 : i32
    %c0_i32_0 = arith.constant 0 : i32
    %c0_i32_1 = arith.constant 0 : i32
    return %c0_i32, %c0_i32_0 : i32, i32
  }
  func.func @transform_2(%arg0: i32, %arg1: i32) -> (i32, i32) {
    %c0_i32 = arith.constant 0 : i32
    %c0_i32_0 = arith.constant 0 : i32
    %c0_i32_1 = arith.constant 0 : i32
    return %c0_i32, %c0_i32_0 : i32, i32
  }
  func.func @transform_3(%arg0: i32, %arg1: i32) -> (i32, i32) {
    %c0_i32 = arith.constant 0 : i32
    %c0_i32_0 = arith.constant 0 : i32
    %c0_i32_1 = arith.constant 0 : i32
    return %c0_i32, %c0_i32_0 : i32, i32
  }
  func.func @transform_4(%arg0: i32, %arg1: i32) -> (i32, i32) {
    %c0_i32 = arith.constant 0 : i32
    %c0_i32_0 = arith.constant 0 : i32
    %c0_i32_1 = arith.constant 0 : i32
    return %c0_i32, %c0_i32_0 : i32, i32
  }
  func.func @transform_5(%arg0: i32, %arg1: i32) -> (i32, i32) {
    %c0_i32 = arith.constant 0 : i32
    %c0_i32_0 = arith.constant 0 : i32
    %c0_i32_1 = arith.constant 0 : i32
    return %c0_i32, %c0_i32_0 : i32, i32
  }
  func.func @transform_6(%arg0: i32, %arg1: i32) -> (i32, i32) {
    %c0_i32 = arith.constant 0 : i32
    %c0_i32_0 = arith.constant 0 : i32
    %c0_i32_1 = arith.constant 0 : i32
    return %c0_i32, %c0_i32_0 : i32, i32
  }
  func.func @transform_7(%arg0: i32, %arg1: i32) -> (i32, i32, i32) {
    %c0_i32 = arith.constant 0 : i32
    %c0_i32_0 = arith.constant 0 : i32
    return %arg0, %c0_i32, %arg1 : i32, i32, i32
  }
}

</mosaic_0001>

<llo_original>
// kernel: tpu_custom_call.1
$region0: #{tpu_custom_call.1}
  #allocation0 [shape = 'u32[]', space=smem, size = 0x4, offset = 0x4, fixed_abs, tag = 'smem constant byte address 0x4 - core index']
  #allocation1 [shape = 'u32[144,128]{1,0:T(1,128)}', space=vmem, size = 0x12000, scoped, tag = 'internal scratch']
  %s0 = inlined_call_operand.hbm [shape: f32[2,2,4,266], index: 0, kind: input, shape index: {}]
  %s1 = inlined_call_operand.vmem [shape: f32[8,12], index: 1, kind: input, shape index: {}]
  %s2 = inlined_call_operand.vmem [shape: f32[8,1], index: 2, kind: input, shape index: {}]
  %s3 = inlined_call_operand.vmem [shape: f32[8,24], index: 3, kind: input, shape index: {}]
  %s4 = inlined_call_operand.vmem [shape: f32[8,1], index: 4, kind: input, shape index: {}]
  %s5 = inlined_call_operand.vmem [shape: f32[4,16], index: 5, kind: input, shape index: {}]
  %s6 = inlined_call_operand.vmem [shape: f32[4,1], index: 6, kind: input, shape index: {}]
  %s7 = inlined_call_operand.hbm [shape: f32[2,4,512], index: 7, kind: output, shape index: {}]
  %s8 = sld [smem:[#allocation0]]
  $region65: #{tpu_custom_call.1} parent=0
    _
  %s10 = ssub.s32 1, %s8
  %s11 = scalar_select 0, %s10, %s8
  $region1: #{tpu_custom_call.1} parent=0
    #allocation2 [shape = 'u8[12288]{0}', space=vmem, size = 0x3000, scoped, tag = 'input window, operand 0']
    #allocation3 [shape = 's32[2]{0}', space=sflag, size = 0x8, scoped, tag = 'scoped memory for tpu_custom_call.1']
    #allocation4 [shape = 's32[2]{0}', space=sflag, size = 0x8, scoped, tag = 'scoped memory for tpu_custom_call.1']
    #allocation5 [shape = 'u8[8192]{0}', space=vmem, size = 0x2000, scoped, tag = 'output window, operand 0']
    %12 = vsyncpa [#allocation3], 0
    %s13 = scalar_lea.sflag [#allocation3], 1
    %14 = vsyncpa %s13, 0
    %15 = vsyncpa [#allocation4], 0
    %s16 = scalar_lea.sflag [#allocation4], 1
    %17 = vsyncpa %s16, 0
    loop: start=0, step=1, limit=6
    $region2: #{tpu_custom_call.1} parent=1 // loop_pre_header
      _
    $region3: #{tpu_custom_call.1} parent=1 // loop_header
      %s19 = sphi 0, %s23
      %p20 = scmp.ge.s32.totalorder %s19, 6
      %s26 = sphi 0, %s38
      %s27 = sphi 0, %s34
      %s28 = sphi 0, %s26
      %s29 = sphi 0, %s27
      %s30 = sphi 0, %s28
      %s31 = sphi 0, %s29
      %s43 = sphi 0, %s45
      %s46 = sphi 0, %s43
      %s47 = sphi 0, %s46
      %s63 = sphi 0, %s47
      %s67 = sphi 0, %s67
      %s69 = sphi 0, %s67
      %s70 = sphi 0, %s69
      %s84 = sphi 0, %s70
      %s88 = sphi 0, %s88
      %s90 = sphi 0, %s88
      %s91 = sphi 0, %s90
      %s105 = sphi 0, %s91
      %s109 = sphi 0, %s109
      %s111 = sphi 0, %s109
      %s112 = sphi 0, %s111
      %s126 = sphi 0, %s112
      %s130 = sphi 0, %s130
      %s132 = sphi 0, %s130
      %s133 = sphi 0, %s132
      %s147 = sphi 0, %s133
      %s151 = sphi 0, %s151
      %s153 = sphi 0, %s151
      %s154 = sphi 0, %s153
      %s168 = sphi 0, %s154
      %s172 = sphi 0, %s172
      %s174 = sphi 0, %s172
      %s175 = sphi 0, %s174
      %s189 = sphi 0, %s175
      %s197 = sphi 0, %s199
      %s200 = sphi 0, %s197
      %s201 = sphi 0, %s200
      %s217 = sphi 0, %s201
    $region4: #{tpu_custom_call.1} parent=1 // loop_header_branch
      %22 = sbr.rel (%p20) target = $region8
    $region5: #{tpu_custom_call.1} parent=1 // loop_body
      %s24 = ssub.s32 %s19, 1
      %s25 = ssub.s32 %s19, 2
      %s32 = sadd.s32 1, %s27
      %p33 = scmp.ge.s32.totalorder %s32, 2
      %s34 = scalar_select %p33, 0, %s32
      %s35 = sadd.s32 1, %s26
      %s36 = scalar_select %p33, %s35, %s26
      %p37 = scmp.ge.s32.totalorder %s36, 2
      %s38 = scalar_select %p37, 0, %s36
      %s39 = ssub.s32 %s26, %s38
      %s40 = ssub.s32 %s27, %s34
      %s41 = sor.u32 %s39, %s40
      %p42 = scmp.eq.s32.totalorder %s41, 0
      %s44 = sadd.s32 %s43, 1
      %s45 = scalar_select %p42, %s43, %s44
      %p48 = pneg %p42
      %p49 = scmp.eq.s32.totalorder %s19, 3
      %p50 = por %p48, %p49
      %p51 = scmp.ne.s32.totalorder %s43, %s46
      %p52 = scmp.eq.s32.totalorder %s19, 0
      %p53 = por %p51, %p52
      %p54 = scmp.ne.s32.totalorder %s43, %s46
      %p55 = scmp.eq.s32.totalorder %s24, 3
      %p56 = por %p54, %p55
      %p57 = scmp.ne.s32.totalorder %s46, %s47
      %p58 = scmp.eq.s32.totalorder %s24, 0
      %p59 = por %p57, %p58
      %p60 = scmp.ne.s32.totalorder %s46, %s47
      %p61 = scmp.eq.s32.totalorder %s25, 3
      %p62 = por %p60, %p61
      %p64 = scmp.ne.s32.totalorder %s47, %s63
      %p65 = scmp.eq.s32.totalorder %s25, 0
      %p66 = por %p64, %p65
      %s68 = sadd.s32 %s67, 1
      %p71 = scmp.eq.s32.totalorder %s19, 3
      %p72 = scmp.ne.s32.totalorder %s67, %s69
      %p73 = scmp.eq.s32.totalorder %s19, 0
      %p74 = por %p72, %p73
      %p75 = scmp.ne.s32.totalorder %s67, %s69
      %p76 = scmp.eq.s32.totalorder %s24, 3
      %p77 = por %p75, %p76
      %p78 = scmp.ne.s32.totalorder %s69, %s70
      %p79 = scmp.eq.s32.totalorder %s24, 0
      %p80 = por %p78, %p79
      %p81 = scmp.ne.s32.totalorder %s69, %s70
      %p82 = scmp.eq.s32.totalorder %s25, 3
      %p83 = por %p81, %p82
      %p85 = scmp.ne.s32.totalorder %s70, %s84
      %p86 = scmp.eq.s32.totalorder %s25, 0
      %p87 = por %p85, %p86
      %s89 = sadd.s32 %s88, 1
      %p92 = scmp.eq.s32.totalorder %s19, 3
      %p93 = scmp.ne.s32.totalorder %s88, %s90
      %p94 = scmp.eq.s32.totalorder %s19, 0
      %p95 = por %p93, %p94
      %p96 = scmp.ne.s32.totalorder %s88, %s90
      %p97 = scmp.eq.s32.totalorder %s24, 3
      %p98 = por %p96, %p97
      %p99 = scmp.ne.s32.totalorder %s90, %s91
      %p100 = scmp.eq.s32.totalorder %s24, 0
      %p101 = por %p99, %p100
      %p102 = scmp.ne.s32.totalorder %s90, %s91
      %p103 = scmp.eq.s32.totalorder %s25, 3
      %p104 = por %p102, %p103
      %p106 = scmp.ne.s32.totalorder %s91, %s105
      %p107 = scmp.eq.s32.totalorder %s25, 0
      %p108 = por %p106, %p107
      %s110 = sadd.s32 %s109, 1
      %p113 = scmp.eq.s32.totalorder %s19, 3
      %p114 = scmp.ne.s32.totalorder %s109, %s111
      %p115 = scmp.eq.s32.totalorder %s19, 0
      %p116 = por %p114, %p115
      %p117 = scmp.ne.s32.totalorder %s109, %s111
      %p118 = scmp.eq.s32.totalorder %s24, 3
      %p119 = por %p117, %p118
      %p120 = scmp.ne.s32.totalorder %s111, %s112
      %p121 = scmp.eq.s32.totalorder %s24, 0
      %p122 = por %p120, %p121
      %p123 = scmp.ne.s32.totalorder %s111, %s112
      %p124 = scmp.eq.s32.totalorder %s25, 3
      %p125 = por %p123, %p124
      %p127 = scmp.ne.s32.totalorder %s112, %s126
      %p128 = scmp.eq.s32.totalorder %s25, 0
      %p129 = por %p127, %p128
      %s131 = sadd.s32 %s130, 1
      %p134 = scmp.eq.s32.totalorder %s19, 3
      %p135 = scmp.ne.s32.totalorder %s130, %s132
      %p136 = scmp.eq.s32.totalorder %s19, 0
      %p137 = por %p135, %p136
      %p138 = scmp.ne.s32.totalorder %s130, %s132
      %p139 = scmp.eq.s32.totalorder %s24, 3
      %p140 = por %p138, %p139
      %p141 = scmp.ne.s32.totalorder %s132, %s133
      %p142 = scmp.eq.s32.totalorder %s24, 0
      %p143 = por %p141, %p142
      %p144 = scmp.ne.s32.totalorder %s132, %s133
      %p145 = scmp.eq.s32.totalorder %s25, 3
      %p146 = por %p144, %p145
      %p148 = scmp.ne.s32.totalorder %s133, %s147
      %p149 = scmp.eq.s32.totalorder %s25, 0
      %p150 = por %p148, %p149
      %s152 = sadd.s32 %s151, 1
      %p155 = scmp.eq.s32.totalorder %s19, 3
      %p156 = scmp.ne.s32.totalorder %s151, %s153
      %p157 = scmp.eq.s32.totalorder %s19, 0
      %p158 = por %p156, %p157
      %p159 = scmp.ne.s32.totalorder %s151, %s153
      %p160 = scmp.eq.s32.totalorder %s24, 3
      %p161 = por %p159, %p160
      %p162 = scmp.ne.s32.totalorder %s153, %s154
      %p163 = scmp.eq.s32.totalorder %s24, 0
      %p164 = por %p162, %p163
      %p165 = scmp.ne.s32.totalorder %s153, %s154
      %p166 = scmp.eq.s32.totalorder %s25, 3
      %p167 = por %p165, %p166
      %p169 = scmp.ne.s32.totalorder %s154, %s168
      %p170 = scmp.eq.s32.totalorder %s25, 0
      %p171 = por %p169, %p170
      %s173 = sadd.s32 %s172, 1
      %p176 = scmp.eq.s32.totalorder %s19, 3
      %p177 = scmp.ne.s32.totalorder %s172, %s174
      %p178 = scmp.eq.s32.totalorder %s19, 0
      %p179 = por %p177, %p178
      %p180 = scmp.ne.s32.totalorder %s172, %s174
      %p181 = scmp.eq.s32.totalorder %s24, 3
      %p182 = por %p180, %p181
      %p183 = scmp.ne.s32.totalorder %s174, %s175
      %p184 = scmp.eq.s32.totalorder %s24, 0
      %p185 = por %p183, %p184
      %p186 = scmp.ne.s32.totalorder %s174, %s175
      %p187 = scmp.eq.s32.totalorder %s25, 3
      %p188 = por %p186, %p187
      %p190 = scmp.ne.s32.totalorder %s175, %s189
      %p191 = scmp.eq.s32.totalorder %s25, 0
      %p192 = por %p190, %p191
      %s193 = ssub.s32 %s26, %s38
      %s194 = ssub.s32 %s27, %s34
      %s195 = sor.u32 %s193, %s194
      %p196 = scmp.eq.s32.totalorder %s195, 0
      %s198 = sadd.s32 %s197, 1
      %s199 = scalar_select %p196, %s197, %s198
      %p202 = pneg %p196
      %p203 = scmp.eq.s32.totalorder %s19, 3
      %p204 = por %p202, %p203
      %p205 = scmp.ne.s32.totalorder %s197, %s200
      %p206 = scmp.eq.s32.totalorder %s19, 0
      %p207 = por %p205, %p206
      %p208 = scmp.ne.s32.totalorder %s197, %s200
      %p209 = scmp.eq.s32.totalorder %s24, 3
      %p210 = por %p208, %p209
      %p211 = scmp.ne.s32.totalorder %s200, %s201
      %p212 = scmp.eq.s32.totalorder %s24, 0
      %p213 = por %p211, %p212
      %p214 = scmp.ne.s32.totalorder %s200, %s201
      %p215 = scmp.eq.s32.totalorder %s25, 3
      %p216 = por %p214, %p215
      %p218 = scmp.ne.s32.totalorder %s201, %s217
      %p219 = scmp.eq.s32.totalorder %s25, 0
      %p220 = por %p218, %p219
      %p221 = scmp.le.s32.totalorder 1, %s19
      %p222 = scmp.lt.s32.totalorder %s19, 5
      %p223 = pnand %p221, %p222
      %p224 = pneg %p223
      // Predicated region
      $region9: #{tpu_custom_call.1} parent=5 // pred_check
        _
      $region10: #{tpu_custom_call.1} parent=5 // pred_check_branch
        %226 = sbr.rel (%p223) target = $region12
      $region11: #{tpu_custom_call.1} parent=5 // pred_region
        %s227 = ssub.s32 %s19, 1
        // Predicated region
        $region13: #{tpu_custom_call.1} parent=11 // pred_check
          %p228 = pneg %p80
        $region14: #{tpu_custom_call.1} parent=11 // pred_check_branch
          %230 = sbr.rel (%p228) target = $region16
        $region15: #{tpu_custom_call.1} parent=11 // pred_region
          _
        $region16: #{tpu_custom_call.1} parent=11 // pred_fallthru
          _
        // Predicated region
        $region17: #{tpu_custom_call.1} parent=11 // pred_check
          %p231 = pneg %p101
        $region18: #{tpu_custom_call.1} parent=11 // pred_check_branch
          %233 = sbr.rel (%p231) target = $region20
        $region19: #{tpu_custom_call.1} parent=11 // pred_region
          _
        $region20: #{tpu_custom_call.1} parent=11 // pred_fallthru
          _
        // Predicated region
        $region21: #{tpu_custom_call.1} parent=11 // pred_check
          %p234 = pneg %p122
        $region22: #{tpu_custom_call.1} parent=11 // pred_check_branch
          %236 = sbr.rel (%p234) target = $region24
        $region23: #{tpu_custom_call.1} parent=11 // pred_region
          _
        $region24: #{tpu_custom_call.1} parent=11 // pred_fallthru
          _
        // Predicated region
        $region25: #{tpu_custom_call.1} parent=11 // pred_check
          %p237 = pneg %p143
        $region26: #{tpu_custom_call.1} parent=11 // pred_check_branch
          %239 = sbr.rel (%p237) target = $region28
        $region27: #{tpu_custom_call.1} parent=11 // pred_region
          _
        $region28: #{tpu_custom_call.1} parent=11 // pred_fallthru
          _
        // Predicated region
        $region29: #{tpu_custom_call.1} parent=11 // pred_check
          %p240 = pneg %p164
        $region30: #{tpu_custom_call.1} parent=11 // pred_check_branch
          %242 = sbr.rel (%p240) target = $region32
        $region31: #{tpu_custom_call.1} parent=11 // pred_region
          _
        $region32: #{tpu_custom_call.1} parent=11 // pred_fallthru
          _
        // Predicated region
        $region33: #{tpu_custom_call.1} parent=11 // pred_check
          %p243 = pneg %p185
        $region34: #{tpu_custom_call.1} parent=11 // pred_check_branch
          %245 = sbr.rel (%p243) target = $region36
        $region35: #{tpu_custom_call.1} parent=11 // pred_region
          _
        $region36: #{tpu_custom_call.1} parent=11 // pred_fallthru
          _
      $region12: #{tpu_custom_call.1} parent=5 // pred_fallthru
        _
      %p246 = scmp.lt.s32.totalorder %s19, 4
      // Predicated region
      $region37: #{tpu_custom_call.1} parent=5 // pred_check
        %p247 = pneg %p246
      $region38: #{tpu_custom_call.1} parent=5 // pred_check_branch
        %249 = sbr.rel (%p247) target = $region40
      $region39: #{tpu_custom_call.1} parent=5 // pred_region
        // Predicated region
        $region41: #{tpu_custom_call.1} parent=39 // pred_check
          %p250 = pneg %p53
        $region42: #{tpu_custom_call.1} parent=39 // pred_check_branch
          %252 = sbr.rel (%p250) target = $region44
        $region43: #{tpu_custom_call.1} parent=39 // pred_region
          %s253 = sand.u32 %s43, 1
          %s254 = scalar_lea.sflag [#allocation3], %s253
          %s255 = sand.u32 %s43, 1
          %s256 = smul.addr %s255, 12
          %s257 = scalar_lea.vmem [#allocation2], %s256
          %s259 = ssub.s32 192, 192
          %260 = vsyncadd %s254, %s259
          %s261 = smul.addr %s27, 3
          %s262 = smul.addr %s26, 6
          %s263 = sadd.s32 %s261, %s262
          %s264 = smul.addr %s263, 64
          %s265 = scalar_lea.hbm %s0, %s264
          %s267 = sshll.u32 %s257, 4
          %s268 = int_to_ptr.vmem [resolvable:$true] %s267
          %270 = dma.hbm_to_vmem [thread:$0]  %s265, 192, %s268, %s254
        $region44: #{tpu_custom_call.1} parent=39 // pred_fallthru
          _
      $region40: #{tpu_custom_call.1} parent=5 // pred_fallthru
        _
      %p271 = scmp.le.s32.totalorder 1, %s19
      %p272 = scmp.lt.s32.totalorder %s19, 5
      %p273 = pnand %p271, %p272
      %p274 = pneg %p273
      // Predicated region
      $region45: #{tpu_custom_call.1} parent=5 // pred_check
        _
      $region46: #{tpu_custom_call.1} parent=5 // pred_check_branch
        %276 = sbr.rel (%p273) target = $region48
      $region47: #{tpu_custom_call.1} parent=5 // pred_region
        %s277 = ssub.s32 %s19, 1
        %s278 = sand.u32 %s46, 1
        %s279 = scalar_lea.sflag [#allocation3], %s278
        %s280 = sand.u32 %s46, 1
        %s281 = smul.addr %s280, 12
        %s282 = scalar_lea.vmem [#allocation2], %s281
        // Predicated region
        $region49: #{tpu_custom_call.1} parent=47 // pred_check
          %p283 = pneg %p59
        $region50: #{tpu_custom_call.1} parent=47 // pred_check_branch
          %285 = sbr.rel (%p283) target = $region52
        $region51: #{tpu_custom_call.1} parent=47 // pred_region
          %286 = dma.done %s279, 192
        $region52: #{tpu_custom_call.1} parent=47 // pred_fallthru
          _
        %s287 = sand.u32 %s46, 1
        %s288 = scalar_lea.sflag [#allocation3], %s287
        %s289 = sand.u32 %s46, 1
        %s290 = smul.addr %s289, 12
        %s291 = scalar_lea.vmem [#allocation2], %s290
        %p292 = pneg %p59
        %p293 = pneg %p56
        %p294 = pneg %p80
        %p295 = pneg %p77
        %p296 = pneg %p101
        %p297 = pneg %p98
        %p298 = pneg %p122
        %p299 = pneg %p119
        %p300 = pneg %p143
        %p301 = pneg %p140
        %p302 = pneg %p164
        %p303 = pneg %p161
        %p304 = pneg %p185
        %p305 = pneg %p182
        %p306 = pneg %p213
        %p307 = pneg %p210
        %s308 = sand.u32 %s200, 1
        %s309 = scalar_lea.sflag [#allocation4], %s308
        %s310 = sand.u32 %s200, 1
        %s311 = smul.addr %s310, 8
        %s312 = scalar_lea.vmem [#allocation5], %s311
        %s313 = smul.u32 2, %s29
        %v314 = vld [vmem:[%s282] sm:$0xff]
        %v315 = vld [vmem:[%s282 + $0x8] sm:$0xf]
        %v316 = vld [vmem:[%s1] sm:$0xff]
        %318 = vrot.lane.b32.xlu0 %v316, 124
        %v319 = vpop.permute.xlu0 %318
        %v322 = vcombine.high %v314, %v314
        %323 = vrot.lane.b32.xlu0 %v314, 127
        %v324 = vpop.permute.xlu0 %323
        %325 = vrot.lane.b32.xlu0 %v322, 127
        %v326 = vpop.permute.xlu0 %325
        %327 = vrot.lane.b32.xlu0 %v315, 127
        %v328 = vpop.permute.xlu0 %327
        %vm329 = vcmask 1039360
        %v330 = vsel %vm329, %v324, %v326
        %v331 = vsel %vm329, %v326, %v328
        %vm332 = vcmask 31744
        %v333 = vsel %vm332, %v319, 0
        %vm335 = vcmask 1043456
        %v336 = vsel %vm335, %v330, 0
        %v338 = vsel %vm335, %v331, 0
        %v340 = vsel %vm335, %v328, 0
        %v342 = vand.u32 %v338, 4294901760
        %343 = vmatprep.subr.mxu0 %v342
        %v344 = vand.u32 %v336, 4294901760
        %345 = vmatpush1.msra.mxu0 %v344
        %346 = vmatprep.subr.mxu0 0.0
        %347 = vmatpush1.msra.mxu0 0.0
        %348 = vmatprep.subr.mxu0 0.0
        %349 = vmatpush1.msra.mxu0 0.0
        %350 = vmatprep.subr.mxu0 0.0
        %351 = vmatpush1.msra.mxu0 0.0
        %352 = vmatprep.subr.mxu0 0.0
        %353 = vmatpush1.msra.mxu0 0.0
        %354 = vmatprep.subr.mxu0 0.0
        %355 = vmatpush1.msra.mxu0 0.0
        %356 = vmatprep.subr.mxu0 0.0
        %357 = vmatpush1.msra.mxu0 0.0
        %358 = vmatprep.subr.mxu0 0.0
        %359 = vmatpush1.msra.mxu0 0.0
        %360 = vmatprep.subr.mxu0 0.0
        %361 = vmatpush1.msra.mxu0 0.0
        %362 = vmatprep.subr.mxu0 0.0
        %363 = vmatpush1.msra.mxu0 0.0
        %364 = vmatprep.subr.mxu0 0.0
        %365 = vmatpush1.msra.mxu0 0.0
        %366 = vmatprep.subr.mxu0 0.0
        %367 = vmatpush1.msra.mxu0 0.0
        %368 = vmatprep.subr.mxu0 0.0
        %369 = vmatpush1.msra.mxu0 0.0
        %370 = vmatprep.subr.mxu0 0.0
        %371 = vmatpush1.msra.mxu0 0.0
        %372 = vmatprep.subr.mxu0 0.0
        %373 = vmatpush1.msra.mxu0 0.0
        %374 = vmatprep.subr.mxu0 0.0
        %375 = vmatpush1.msra.mxu0 0.0
        %376 = vmatprep.subr.mxu0 0.0
        %377 = vmatpush1.msra.mxu0 0.0
        %378 = vmatprep.subr.mxu0 0.0
        %379 = vmatpush1.msra.mxu0 0.0
        %380 = vmatprep.subr.mxu0 0.0
        %381 = vmatpush1.msra.mxu0 0.0
        %382 = vmatprep.subr.mxu0 0.0
        %383 = vmatpush1.msra.mxu0 0.0
        %384 = vmatprep.subr.mxu0 0.0
        %385 = vmatpush1.msra.mxu0 0.0
        %386 = vmatprep.subr.mxu0 0.0
        %387 = vmatpush1.msra.mxu0 0.0
        %388 = vmatprep.subr.mxu0 0.0
        %389 = vmatpush1.msra.mxu0 0.0
        %390 = vmatprep.subr.mxu0 0.0
        %391 = vmatpush1.msra.mxu0 0.0
        %392 = vmatprep.subr.mxu0 0.0
        %393 = vmatpush1.msra.mxu0 0.0
        %394 = vmatprep.subr.mxu0 0.0
        %395 = vmatpush1.msra.mxu0 0.0
        %396 = vmatprep.subr.mxu0 0.0
        %397 = vmatpush1.msra.mxu0 0.0
        %398 = vmatprep.subr.mxu0 0.0
        %399 = vmatpush1.msra.mxu0 0.0
        %400 = vmatprep.subr.mxu0 0.0
        %401 = vmatpush1.msra.mxu0 0.0
        %402 = vmatprep.subr.mxu0 0.0
        %403 = vmatpush1.msra.mxu0 0.0
        %404 = vmatprep.subr.mxu0 0.0
        %405 = vmatpush1.msra.mxu0 0.0
        %406 = vmatprep.subr.mxu0 0.0
        %407 = vmatpush1.msra.mxu0 0.0
        %408 = vmatprep.mubr.f32.mxu0 0.0
        %v409 = vand.u32 %v333, 4294901760
        %v410 = vsub.f32 %v333, %v409
        %v411 = vand.u32 %v410, 4294901760
        %v412 = vsub.f32 %v410, %v411
        %v413 = vand.u32 %v412, 4294901760
        %414 = vmatmul.mubr.f32.gmra.mrb[0].mxu0 %v413
        %v415 = vpop.f32.mrb[0].mxu0
        %v416 = vadd.f32 0.0, %v415
        %v417 = vpop.f32.mrb[0].mxu0
        %v418 = vadd.f32 0.0, %v417
        %419 = vdwg.mxu0
        %v420 = vand.u32 %v338, 4294901760
        %v421 = vsub.f32 %v338, %v420
        %v422 = vand.u32 %v421, 4294901760
        %v423 = vsub.f32 %v421, %v422
        %v424 = vand.u32 %v423, 4294901760
        %425 = vmatprep.subr.mxu0 %v424
        %v426 = vand.u32 %v336, 4294901760
        %v427 = vsub.f32 %v336, %v426
        %v428 = vand.u32 %v427, 4294901760
        %v429 = vsub.f32 %v427, %v428
        %v430 = vand.u32 %v429, 4294901760
        %431 = vmatpush1.msra.mxu0 %v430
        %432 = vmatprep.subr.mxu0 0.0
        %433 = vmatpush1.msra.mxu0 0.0
        %434 = vmatprep.subr.mxu0 0.0
        %435 = vmatpush1.msra.mxu0 0.0
        %436 = vmatprep.subr.mxu0 0.0
        %437 = vmatpush1.msra.mxu0 0.0
        %438 = vmatprep.subr.mxu0 0.0
        %439 = vmatpush1.msra.mxu0 0.0
        %440 = vmatprep.subr.mxu0 0.0
        %441 = vmatpush1.msra.mxu0 0.0
        %442 = vmatprep.subr.mxu0 0.0
        %443 = vmatpush1.msra.mxu0 0.0
        %444 = vmatprep.subr.mxu0 0.0
        %445 = vmatpush1.msra.mxu0 0.0
        %446 = vmatprep.subr.mxu0 0.0
        %447 = vmatpush1.msra.mxu0 0.0
        %448 = vmatprep.subr.mxu0 0.0
        %449 = vmatpush1.msra.mxu0 0.0
        %450 = vmatprep.subr.mxu0 0.0
        %451 = vmatpush1.msra.mxu0 0.0
        %452 = vmatprep.subr.mxu0 0.0
        %453 = vmatpush1.msra.mxu0 0.0
        %454 = vmatprep.subr.mxu0 0.0
        %455 = vmatpush1.msra.mxu0 0.0
        %456 = vmatprep.subr.mxu0 0.0
        %457 = vmatpush1.msra.mxu0 0.0
        %458 = vmatprep.subr.mxu0 0.0
        %459 = vmatpush1.msra.mxu0 0.0
        %460 = vmatprep.subr.mxu0 0.0
        %461 = vmatpush1.msra.mxu0 0.0
        %462 = vmatprep.subr.mxu0 0.0
        %463 = vmatpush1.msra.mxu0 0.0
        %464 = vmatprep.subr.mxu0 0.0
        %465 = vmatpush1.msra.mxu0 0.0
        %466 = vmatprep.subr.mxu0 0.0
        %467 = vmatpush1.msra.mxu0 0.0
        %468 = vmatprep.subr.mxu0 0.0
        %469 = vmatpush1.msra.mxu0 0.0
        %470 = vmatprep.subr.mxu0 0.0
        %471 = vmatpush1.msra.mxu0 0.0
        %472 = vmatprep.subr.mxu0 0.0
        %473 = vmatpush1.msra.mxu0 0.0
        %474 = vmatprep.subr.mxu0 0.0
        %475 = vmatpush1.msra.mxu0 0.0
        %476 = vmatprep.subr.mxu0 0.0
        %477 = vmatpush1.msra.mxu0 0.0
        %478 = vmatprep.subr.mxu0 0.0
        %479 = vmatpush1.msra.mxu0 0.0
        %480 = vmatprep.subr.mxu0 0.0
        %481 = vmatpush1.msra.mxu0 0.0
        %482 = vmatprep.subr.mxu0 0.0
        %483 = vmatpush1.msra.mxu0 0.0
        %484 = vmatprep.subr.mxu0 0.0
        %485 = vmatpush1.msra.mxu0 0.0
        %486 = vmatprep.subr.mxu0 0.0
        %487 = vmatpush1.msra.mxu0 0.0
        %488 = vmatprep.subr.mxu0 0.0
        %489 = vmatpush1.msra.mxu0 0.0
        %490 = vmatprep.subr.mxu0 0.0
        %491 = vmatpush1.msra.mxu0 0.0
        %492 = vmatprep.subr.mxu0 0.0
        %493 = vmatpush1.msra.mxu0 0.0
        %494 = vmatprep.mubr.f32.mxu0 0.0
        %v495 = vand.u32 %v333, 4294901760
        %496 = vmatmul.mubr.f32.gmra.mrb[0].mxu0 %v495
        %v497 = vpop.f32.mrb[0].mxu0
        %v498 = vadd.f32 %v416, %v497
        %v499 = vpop.f32.mrb[0].mxu0
        %v500 = vadd.f32 %v418, %v499
        %501 = vdwg.mxu0
        %v502 = vand.u32 %v338, 4294901760
        %v503 = vsub.f32 %v338, %v502
        %504 = vmatprep.subr.mxu0 %v503
        %v505 = vand.u32 %v336, 4294901760
        %v506 = vsub.f32 %v336, %v505
        %507 = vmatpush1.msra.mxu0 %v506
        %508 = vmatprep.subr.mxu0 0.0
        %509 = vmatpush1.msra.mxu0 0.0
        %510 = vmatprep.subr.mxu0 0.0
        %511 = vmatpush1.msra.mxu0 0.0
        %512 = vmatprep.subr.mxu0 0.0
        %513 = vmatpush1.msra.mxu0 0.0
        %514 = vmatprep.subr.mxu0 0.0
        %515 = vmatpush1.msra.mxu0 0.0
        %516 = vmatprep.subr.mxu0 0.0
        %517 = vmatpush1.msra.mxu0 0.0
        %518 = vmatprep.subr.mxu0 0.0
        %519 = vmatpush1.msra.mxu0 0.0
        %520 = vmatprep.subr.mxu0 0.0
        %521 = vmatpush1.msra.mxu0 0.0
        %522 = vmatprep.subr.mxu0 0.0
        %523 = vmatpush1.msra.mxu0 0.0
        %524 = vmatprep.subr.mxu0 0.0
        %525 = vmatpush1.msra.mxu0 0.0
        %526 = vmatprep.subr.mxu0 0.0
        %527 = vmatpush1.msra.mxu0 0.0
        %528 = vmatprep.subr.mxu0 0.0
        %529 = vmatpush1.msra.mxu0 0.0
        %530 = vmatprep.subr.mxu0 0.0
        %531 = vmatpush1.msra.mxu0 0.0
        %532 = vmatprep.subr.mxu0 0.0
        %533 = vmatpush1.msra.mxu0 0.0
        %534 = vmatprep.subr.mxu0 0.0
        %535 = vmatpush1.msra.mxu0 0.0
        %536 = vmatprep.subr.mxu0 0.0
        %537 = vmatpush1.msra.mxu0 0.0
        %538 = vmatprep.subr.mxu0 0.0
        %539 = vmatpush1.msra.mxu0 0.0
        %540 = vmatprep.subr.mxu0 0.0
        %541 = vmatpush1.msra.mxu0 0.0
        %542 = vmatprep.subr.mxu0 0.0
        %543 = vmatpush1.msra.mxu0 0.0
        %544 = vmatprep.subr.mxu0 0.0
        %545 = vmatpush1.msra.mxu0 0.0
        %546 = vmatprep.subr.mxu0 0.0
        %547 = vmatpush1.msra.mxu0 0.0
        %548 = vmatprep.subr.mxu0 0.0
        %549 = vmatpush1.msra.mxu0 0.0
        %550 = vmatprep.subr.mxu0 0.0
        %551 = vmatpush1.msra.mxu0 0.0
        %552 = vmatprep.subr.mxu0 0.0
        %553 = vmatpush1.msra.mxu0 0.0
        %554 = vmatprep.subr.mxu0 0.0
        %555 = vmatpush1.msra.mxu0 0.0
        %556 = vmatprep.subr.mxu0 0.0
        %557 = vmatpush1.msra.mxu0 0.0
        %558 = vmatprep.subr.mxu0 0.0
        %559 = vmatpush1.msra.mxu0 0.0
        %560 = vmatprep.subr.mxu0 0.0
        %561 = vmatpush1.msra.mxu0 0.0
        %562 = vmatprep.subr.mxu0 0.0
        %563 = vmatpush1.msra.mxu0 0.0
        %564 = vmatprep.subr.mxu0 0.0
        %565 = vmatpush1.msra.mxu0 0.0
        %566 = vmatprep.subr.mxu0 0.0
        %567 = vmatpush1.msra.mxu0 0.0
        %568 = vmatprep.subr.mxu0 0.0
        %569 = vmatpush1.msra.mxu0 0.0
        %570 = vmatprep.mubr.f32.mxu0 0.0
        %v571 = vand.u32 %v333, 4294901760
        %v572 = vsub.f32 %v333, %v571
        %573 = vmatmul.mubr.f32.gmra.mrb[0].mxu0 %v572
        %v574 = vpop.f32.mrb[0].mxu0
        %v575 = vadd.f32 %v498, %v574
        %v576 = vpop.f32.mrb[0].mxu0
        %v577 = vadd.f32 %v500, %v576
        %578 = vdwg.mxu0
        %v579 = vand.u32 %v338, 4294901760
        %580 = vmatprep.subr.mxu0 %v579
        %v581 = vand.u32 %v336, 4294901760
        %582 = vmatpush1.msra.mxu0 %v581
        %583 = vmatprep.subr.mxu0 0.0
        %584 = vmatpush1.msra.mxu0 0.0
        %585 = vmatprep.subr.mxu0 0.0
        %586 = vmatpush1.msra.mxu0 0.0
        %587 = vmatprep.subr.mxu0 0.0
        %588 = vmatpush1.msra.mxu0 0.0
        %589 = vmatprep.subr.mxu0 0.0
        %590 = vmatpush1.msra.mxu0 0.0
        %591 = vmatprep.subr.mxu0 0.0
        %592 = vmatpush1.msra.mxu0 0.0
        %593 = vmatprep.subr.mxu0 0.0
        %594 = vmatpush1.msra.mxu0 0.0
        %595 = vmatprep.subr.mxu0 0.0
        %596 = vmatpush1.msra.mxu0 0.0
        %597 = vmatprep.subr.mxu0 0.0
        %598 = vmatpush1.msra.mxu0 0.0
        %599 = vmatprep.subr.mxu0 0.0
        %600 = vmatpush1.msra.mxu0 0.0
        %601 = vmatprep.subr.mxu0 0.0
        %602 = vmatpush1.msra.mxu0 0.0
        %603 = vmatprep.subr.mxu0 0.0
        %604 = vmatpush1.msra.mxu0 0.0
        %605 = vmatprep.subr.mxu0 0.0
        %606 = vmatpush1.msra.mxu0 0.0
        %607 = vmatprep.subr.mxu0 0.0
        %608 = vmatpush1.msra.mxu0 0.0
        %609 = vmatprep.subr.mxu0 0.0
        %610 = vmatpush1.msra.mxu0 0.0
        %611 = vmatprep.subr.mxu0 0.0
        %612 = vmatpush1.msra.mxu0 0.0
        %613 = vmatprep.subr.mxu0 0.0
        %614 = vmatpush1.msra.mxu0 0.0
        %615 = vmatprep.subr.mxu0 0.0
        %616 = vmatpush1.msra.mxu0 0.0
        %617 = vmatprep.subr.mxu0 0.0
        %618 = vmatpush1.msra.mxu0 0.0
        %619 = vmatprep.subr.mxu0 0.0
        %620 = vmatpush1.msra.mxu0 0.0
        %621 = vmatprep.subr.mxu0 0.0
        %622 = vmatpush1.msra.mxu0 0.0
        %623 = vmatprep.subr.mxu0 0.0
        %624 = vmatpush1.msra.mxu0 0.0
        %625 = vmatprep.subr.mxu0 0.0
        %626 = vmatpush1.msra.mxu0 0.0
        %627 = vmatprep.subr.mxu0 0.0
        %628 = vmatpush1.msra.mxu0 0.0
        %629 = vmatprep.subr.mxu0 0.0
        %630 = vmatpush1.msra.mxu0 0.0
        %631 = vmatprep.subr.mxu0 0.0
        %632 = vmatpush1.msra.mxu0 0.0
        %633 = vmatprep.subr.mxu0 0.0
        %634 = vmatpush1.msra.mxu0 0.0
        %635 = vmatprep.subr.mxu0 0.0
        %636 = vmatpush1.msra.mxu0 0.0
        %637 = vmatprep.subr.mxu0 0.0
        %638 = vmatpush1.msra.mxu0 0.0
        %639 = vmatprep.subr.mxu0 0.0
        %640 = vmatpush1.msra.mxu0 0.0
        %641 = vmatprep.subr.mxu0 0.0
        %642 = vmatpush1.msra.mxu0 0.0
        %643 = vmatprep.subr.mxu0 0.0
        %644 = vmatpush1.msra.mxu0 0.0
        %645 = vmatprep.mubr.f32.mxu0 0.0
        %v646 = vand.u32 %v333, 4294901760
        %v647 = vsub.f32 %v333, %v646
        %v648 = vand.u32 %v647, 4294901760
        %649 = vmatmul.mubr.f32.gmra.mrb[0].mxu0 %v648
        %v650 = vpop.f32.mrb[0].mxu0
        %v651 = vadd.f32 %v575, %v650
        %v652 = vpop.f32.mrb[0].mxu0
        %v653 = vadd.f32 %v577, %v652
        %654 = vdwg.mxu0
        %v655 = vand.u32 %v338, 4294901760
        %v656 = vsub.f32 %v338, %v655
        %v657 = vand.u32 %v656, 4294901760
        %658 = vmatprep.subr.mxu0 %v657
        %v659 = vand.u32 %v336, 4294901760
        %v660 = vsub.f32 %v336, %v659
        %v661 = vand.u32 %v660, 4294901760
        %662 = vmatpush1.msra.mxu0 %v661
        %663 = vmatprep.subr.mxu0 0.0
        %664 = vmatpush1.msra.mxu0 0.0
        %665 = vmatprep.subr.mxu0 0.0
        %666 = vmatpush1.msra.mxu0 0.0
        %667 = vmatprep.subr.mxu0 0.0
        %668 = vmatpush1.msra.mxu0 0.0
        %669 = vmatprep.subr.mxu0 0.0
        %670 = vmatpush1.msra.mxu0 0.0
        %671 = vmatprep.subr.mxu0 0.0
        %672 = vmatpush1.msra.mxu0 0.0
        %673 = vmatprep.subr.mxu0 0.0
        %674 = vmatpush1.msra.mxu0 0.0
        %675 = vmatprep.subr.mxu0 0.0
        %676 = vmatpush1.msra.mxu0 0.0
        %677 = vmatprep.subr.mxu0 0.0
        %678 = vmatpush1.msra.mxu0 0.0
        %679 = vmatprep.subr.mxu0 0.0
        %680 = vmatpush1.msra.mxu0 0.0
        %681 = vmatprep.subr.mxu0 0.0
        %682 = vmatpush1.msra.mxu0 0.0
        %683 = vmatprep.subr.mxu0 0.0
        %684 = vmatpush1.msra.mxu0 0.0
        %685 = vmatprep.subr.mxu0 0.0
        %686 = vmatpush1.msra.mxu0 0.0
        %687 = vmatprep.subr.mxu0 0.0
        %688 = vmatpush1.msra.mxu0 0.0
        %689 = vmatprep.subr.mxu0 0.0
        %690 = vmatpush1.msra.mxu0 0.0
        %691 = vmatprep.subr.mxu0 0.0
        %692 = vmatpush1.msra.mxu0 0.0
        %693 = vmatprep.subr.mxu0 0.0
        %694 = vmatpush1.msra.mxu0 0.0
        %695 = vmatprep.subr.mxu0 0.0
        %696 = vmatpush1.msra.mxu0 0.0
        %697 = vmatprep.subr.mxu0 0.0
        %698 = vmatpush1.msra.mxu0 0.0
        %699 = vmatprep.subr.mxu0 0.0
        %700 = vmatpush1.msra.mxu0 0.0
        %701 = vmatprep.subr.mxu0 0.0
        %702 = vmatpush1.msra.mxu0 0.0
        %703 = vmatprep.subr.mxu0 0.0
        %704 = vmatpush1.msra.mxu0 0.0
        %705 = vmatprep.subr.mxu0 0.0
        %706 = vmatpush1.msra.mxu0 0.0
        %707 = vmatprep.subr.mxu0 0.0
        %708 = vmatpush1.msra.mxu0 0.0
        %709 = vmatprep.subr.mxu0 0.0
        %710 = vmatpush1.msra.mxu0 0.0
        %711 = vmatprep.subr.mxu0 0.0
        %712 = vmatpush1.msra.mxu0 0.0
        %713 = vmatprep.subr.mxu0 0.0
        %714 = vmatpush1.msra.mxu0 0.0
        %715 = vmatprep.subr.mxu0 0.0
        %716 = vmatpush1.msra.mxu0 0.0
        %717 = vmatprep.subr.mxu0 0.0
        %718 = vmatpush1.msra.mxu0 0.0
        %719 = vmatprep.subr.mxu0 0.0
        %720 = vmatpush1.msra.mxu0 0.0
        %721 = vmatprep.subr.mxu0 0.0
        %722 = vmatpush1.msra.mxu0 0.0
        %723 = vmatprep.subr.mxu0 0.0
        %724 = vmatpush1.msra.mxu0 0.0
        %725 = vmatprep.mubr.f32.mxu0 0.0
        %v726 = vand.u32 %v333, 4294901760
        %727 = vmatmul.mubr.f32.gmra.mrb[0].mxu0 %v726
        %v728 = vpop.f32.mrb[0].mxu0
        %v729 = vadd.f32 %v651, %v728
        %v730 = vpop.f32.mrb[0].mxu0
        %v731 = vadd.f32 %v653, %v730
        %732 = vdwg.mxu0
        %v733 = vand.u32 %v338, 4294901760
        %734 = vmatprep.subr.mxu0 %v733
        %v735 = vand.u32 %v336, 4294901760
        %736 = vmatpush1.msra.mxu0 %v735
        %737 = vmatprep.subr.mxu0 0.0
        %738 = vmatpush1.msra.mxu0 0.0
        %739 = vmatprep.subr.mxu0 0.0
        %740 = vmatpush1.msra.mxu0 0.0
        %741 = vmatprep.subr.mxu0 0.0
        %742 = vmatpush1.msra.mxu0 0.0
        %743 = vmatprep.subr.mxu0 0.0
        %744 = vmatpush1.msra.mxu0 0.0
        %745 = vmatprep.subr.mxu0 0.0
        %746 = vmatpush1.msra.mxu0 0.0
        %747 = vmatprep.subr.mxu0 0.0
        %748 = vmatpush1.msra.mxu0 0.0
        %749 = vmatprep.subr.mxu0 0.0
        %750 = vmatpush1.msra.mxu0 0.0
        %751 = vmatprep.subr.mxu0 0.0
        %752 = vmatpush1.msra.mxu0 0.0
        %753 = vmatprep.subr.mxu0 0.0
        %754 = vmatpush1.msra.mxu0 0.0
        %755 = vmatprep.subr.mxu0 0.0
        %756 = vmatpush1.msra.mxu0 0.0
        %757 = vmatprep.subr.mxu0 0.0
        %758 = vmatpush1.msra.mxu0 0.0
        %759 = vmatprep.subr.mxu0 0.0
        %760 = vmatpush1.msra.mxu0 0.0
        %761 = vmatprep.subr.mxu0 0.0
        %762 = vmatpush1.msra.mxu0 0.0
        %763 = vmatprep.subr.mxu0 0.0
        %764 = vmatpush1.msra.mxu0 0.0
        %765 = vmatprep.subr.mxu0 0.0
        %766 = vmatpush1.msra.mxu0 0.0
        %767 = vmatprep.subr.mxu0 0.0
        %768 = vmatpush1.msra.mxu0 0.0
        %769 = vmatprep.subr.mxu0 0.0
        %770 = vmatpush1.msra.mxu0 0.0
        %771 = vmatprep.subr.mxu0 0.0
        %772 = vmatpush1.msra.mxu0 0.0
        %773 = vmatprep.subr.mxu0 0.0
        %774 = vmatpush1.msra.mxu0 0.0
        %775 = vmatprep.subr.mxu0 0.0
        %776 = vmatpush1.msra.mxu0 0.0
        %777 = vmatprep.subr.mxu0 0.0
        %778 = vmatpush1.msra.mxu0 0.0
        %779 = vmatprep.subr.mxu0 0.0
        %780 = vmatpush1.msra.mxu0 0.0
        %781 = vmatprep.subr.mxu0 0.0
        %782 = vmatpush1.msra.mxu0 0.0
        %783 = vmatprep.subr.mxu0 0.0
        %784 = vmatpush1.msra.mxu0 0.0
        %785 = vmatprep.subr.mxu0 0.0
        %786 = vmatpush1.msra.mxu0 0.0
        %787 = vmatprep.subr.mxu0 0.0
        %788 = vmatpush1.msra.mxu0 0.0
        %789 = vmatprep.subr.mxu0 0.0
        %790 = vmatpush1.msra.mxu0 0.0
        %791 = vmatprep.subr.mxu0 0.0
        %792 = vmatpush1.msra.mxu0 0.0
        %793 = vmatprep.subr.mxu0 0.0
        %794 = vmatpush1.msra.mxu0 0.0
        %795 = vmatprep.subr.mxu0 0.0
        %796 = vmatpush1.msra.mxu0 0.0
        %797 = vmatprep.subr.mxu0 0.0
        %798 = vmatpush1.msra.mxu0 0.0
        %799 = vmatprep.mubr.f32.mxu0 0.0
        %v800 = vand.u32 %v333, 4294901760
        %801 = vmatmul.mubr.f32.gmra.mrb[0].mxu0 %v800
        %v802 = vpop.f32.mrb[0].mxu0
        %v803 = vadd.f32 %v729, %v802
        %v804 = vpop.f32.mrb[0].mxu0
        %v805 = vadd.f32 %v731, %v804
        %806 = vdwg.mxu0
        %807 = vmatprep.subr.mxu0 0.0
        %v808 = vand.u32 %v340, 4294901760
        %809 = vmatpush1.msra.mxu0 %v808
        %810 = vmatprep.subr.mxu0 0.0
        %811 = vmatpush1.msra.mxu0 0.0
        %812 = vmatprep.subr.mxu0 0.0
        %813 = vmatpush1.msra.mxu0 0.0
        %814 = vmatprep.subr.mxu0 0.0
        %815 = vmatpush1.msra.mxu0 0.0
        %816 = vmatprep.subr.mxu0 0.0
        %817 = vmatpush1.msra.mxu0 0.0
        %818 = vmatprep.subr.mxu0 0.0
        %819 = vmatpush1.msra.mxu0 0.0
        %820 = vmatprep.subr.mxu0 0.0
        %821 = vmatpush1.msra.mxu0 0.0
        %822 = vmatprep.subr.mxu0 0.0
        %823 = vmatpush1.msra.mxu0 0.0
        %824 = vmatprep.subr.mxu0 0.0
        %825 = vmatpush1.msra.mxu0 0.0
        %826 = vmatprep.subr.mxu0 0.0
        %827 = vmatpush1.msra.mxu0 0.0
        %828 = vmatprep.subr.mxu0 0.0
        %829 = vmatpush1.msra.mxu0 0.0
        %830 = vmatprep.subr.mxu0 0.0
        %831 = vmatpush1.msra.mxu0 0.0
        %832 = vmatprep.subr.mxu0 0.0
        %833 = vmatpush1.msra.mxu0 0.0
        %834 = vmatprep.subr.mxu0 0.0
        %835 = vmatpush1.msra.mxu0 0.0
        %836 = vmatprep.subr.mxu0 0.0
        %837 = vmatpush1.msra.mxu0 0.0
        %838 = vmatprep.subr.mxu0 0.0
        %839 = vmatpush1.msra.mxu0 0.0
        %840 = vmatprep.subr.mxu0 0.0
        %841 = vmatpush1.msra.mxu0 0.0
        %842 = vmatprep.subr.mxu0 0.0
        %843 = vmatpush1.msra.mxu0 0.0
        %844 = vmatprep.subr.mxu0 0.0
        %845 = vmatpush1.msra.mxu0 0.0
        %846 = vmatprep.subr.mxu0 0.0
        %847 = vmatpush1.msra.mxu0 0.0
        %848 = vmatprep.subr.mxu0 0.0
        %849 = vmatpush1.msra.mxu0 0.0
        %850 = vmatprep.subr.mxu0 0.0
        %851 = vmatpush1.msra.mxu0 0.0
        %852 = vmatprep.subr.mxu0 0.0
        %853 = vmatpush1.msra.mxu0 0.0
        %854 = vmatprep.subr.mxu0 0.0
        %855 = vmatpush1.msra.mxu0 0.0
        %856 = vmatprep.subr.mxu0 0.0
        %857 = vmatpush1.msra.mxu0 0.0
        %858 = vmatprep.subr.mxu0 0.0
        %859 = vmatpush1.msra.mxu0 0.0
        %860 = vmatprep.subr.mxu0 0.0
        %861 = vmatpush1.msra.mxu0 0.0
        %862 = vmatprep.subr.mxu0 0.0
        %863 = vmatpush1.msra.mxu0 0.0
        %864 = vmatprep.subr.mxu0 0.0
        %865 = vmatpush1.msra.mxu0 0.0
        %866 = vmatprep.subr.mxu0 0.0
        %867 = vmatpush1.msra.mxu0 0.0
        %868 = vmatprep.subr.mxu0 0.0
        %869 = vmatpush1.msra.mxu0 0.0
        %870 = vmatprep.subr.mxu0 0.0
        %871 = vmatpush1.msra.mxu0 0.0
        %872 = vmatprep.mubr.f32.mxu0 0.0
        %v873 = vand.u32 %v333, 4294901760
        %v874 = vsub.f32 %v333, %v873
        %v875 = vand.u32 %v874, 4294901760
        %v876 = vsub.f32 %v874, %v875
        %v877 = vand.u32 %v876, 4294901760
        %878 = vmatmul.mubr.f32.gmra.mrb[0].mxu0 %v877
        %v879 = vpop.f32.mrb[0].mxu0
        %v880 = vadd.f32 0.0, %v879
        %v881 = vpop.f32.mrb[0].mxu0
        %882 = vdwg.mxu0
        %883 = vmatprep.subr.mxu0 0.0
        %v884 = vand.u32 %v340, 4294901760
        %v885 = vsub.f32 %v340, %v884
        %v886 = vand.u32 %v885, 4294901760
        %v887 = vsub.f32 %v885, %v886
        %v888 = vand.u32 %v887, 4294901760
        %889 = vmatpush1.msra.mxu0 %v888
        %890 = vmatprep.subr.mxu0 0.0
        %891 = vmatpush1.msra.mxu0 0.0
        %892 = vmatprep.subr.mxu0 0.0
        %893 = vmatpush1.msra.mxu0 0.0
        %894 = vmatprep.subr.mxu0 0.0
        %895 = vmatpush1.msra.mxu0 0.0
        %896 = vmatprep.subr.mxu0 0.0
        %897 = vmatpush1.msra.mxu0 0.0
        %898 = vmatprep.subr.mxu0 0.0
        %899 = vmatpush1.msra.mxu0 0.0
        %900 = vmatprep.subr.mxu0 0.0
        %901 = vmatpush1.msra.mxu0 0.0
        %902 = vmatprep.subr.mxu0 0.0
        %903 = vmatpush1.msra.mxu0 0.0
        %904 = vmatprep.subr.mxu0 0.0
        %905 = vmatpush1.msra.mxu0 0.0
        %906 = vmatprep.subr.mxu0 0.0
        %907 = vmatpush1.msra.mxu0 0.0
        %908 = vmatprep.subr.mxu0 0.0
        %909 = vmatpush1.msra.mxu0 0.0
        %910 = vmatprep.subr.mxu0 0.0
        %911 = vmatpush1.msra.mxu0 0.0
        %912 = vmatprep.subr.mxu0 0.0
        %913 = vmatpush1.msra.mxu0 0.0
        %914 = vmatprep.subr.mxu0 0.0
        %915 = vmatpush1.msra.mxu0 0.0
        %916 = vmatprep.subr.mxu0 0.0
        %917 = vmatpush1.msra.mxu0 0.0
        %918 = vmatprep.subr.mxu0 0.0
        %919 = vmatpush1.msra.mxu0 0.0
        %920 = vmatprep.subr.mxu0 0.0
        %921 = vmatpush1.msra.mxu0 0.0
        %922 = vmatprep.subr.mxu0 0.0
        %923 = vmatpush1.msra.mxu0 0.0
        %924 = vmatprep.subr.mxu0 0.0
        %925 = vmatpush1.msra.mxu0 0.0
        %926 = vmatprep.subr.mxu0 0.0
        %927 = vmatpush1.msra.mxu0 0.0
        %928 = vmatprep.subr.mxu0 0.0
        %929 = vmatpush1.msra.mxu0 0.0
        %930 = vmatprep.subr.mxu0 0.0
        %931 = vmatpush1.msra.mxu0 0.0
        %932 = vmatprep.subr.mxu0 0.0
        %933 = vmatpush1.msra.mxu0 0.0
        %934 = vmatprep.subr.mxu0 0.0
        %935 = vmatpush1.msra.mxu0 0.0
        %936 = vmatprep.subr.mxu0 0.0
        %937 = vmatpush1.msra.mxu0 0.0
        %938 = vmatprep.subr.mxu0 0.0
        %939 = vmatpush1.msra.mxu0 0.0
        %940 = vmatprep.subr.mxu0 0.0
        %941 = vmatpush1.msra.mxu0 0.0
        %942 = vmatprep.subr.mxu0 0.0
        %943 = vmatpush1.msra.mxu0 0.0
        %944 = vmatprep.subr.mxu0 0.0
        %945 = vmatpush1.msra.mxu0 0.0
        %946 = vmatprep.subr.mxu0 0.0
        %947 = vmatpush1.msra.mxu0 0.0
        %948 = vmatprep.subr.mxu0 0.0
        %949 = vmatpush1.msra.mxu0 0.0
        %950 = vmatprep.subr.mxu0 0.0
        %951 = vmatpush1.msra.mxu0 0.0
        %952 = vmatprep.mubr.f32.mxu0 0.0
        %v953 = vand.u32 %v333, 4294901760
        %954 = vmatmul.mubr.f32.gmra.mrb[0].mxu0 %v953
        %v955 = vpop.f32.mrb[0].mxu0
        %v956 = vadd.f32 %v880, %v955
        %v957 = vpop.f32.mrb[0].mxu0
        %958 = vdwg.mxu0
        %959 = vmatprep.subr.mxu0 0.0
        %v960 = vand.u32 %v340, 4294901760
        %v961 = vsub.f32 %v340, %v960
        %962 = vmatpush1.msra.mxu0 %v961
        %963 = vmatprep.subr.mxu0 0.0
        %964 = vmatpush1.msra.mxu0 0.0
        %965 = vmatprep.subr.mxu0 0.0
        %966 = vmatpush1.msra.mxu0 0.0
        %967 = vmatprep.subr.mxu0 0.0
        %968 = vmatpush1.msra.mxu0 0.0
        %969 = vmatprep.subr.mxu0 0.0
        %970 = vmatpush1.msra.mxu0 0.0
        %971 = vmatprep.subr.mxu0 0.0
        %972 = vmatpush1.msra.mxu0 0.0
        %973 = vmatprep.subr.mxu0 0.0
        %974 = vmatpush1.msra.mxu0 0.0
        %975 = vmatprep.subr.mxu0 0.0
        %976 = vmatpush1.msra.mxu0 0.0
        %977 = vmatprep.subr.mxu0 0.0
        %978 = vmatpush1.msra.mxu0 0.0
        %979 = vmatprep.subr.mxu0 0.0
        %980 = vmatpush1.msra.mxu0 0.0
        %981 = vmatprep.subr.mxu0 0.0
        %982 = vmatpush1.msra.mxu0 0.0
        %983 = vmatprep.subr.mxu0 0.0
        %984 = vmatpush1.msra.mxu0 0.0
        %985 = vmatprep.subr.mxu0 0.0
        %986 = vmatpush1.msra.mxu0 0.0
        %987 = vmatprep.subr.mxu0 0.0
        %988 = vmatpush1.msra.mxu0 0.0
        %989 = vmatprep.subr.mxu0 0.0
        %990 = vmatpush1.msra.mxu0 0.0
        %991 = vmatprep.subr.mxu0 0.0
        %992 = vmatpush1.msra.mxu0 0.0
        %993 = vmatprep.subr.mxu0 0.0
        %994 = vmatpush1.msra.mxu0 0.0
        %995 = vmatprep.subr.mxu0 0.0
        %996 = vmatpush1.msra.mxu0 0.0
        %997 = vmatprep.subr.mxu0 0.0
        %998 = vmatpush1.msra.mxu0 0.0
        %999 = vmatprep.subr.mxu0 0.0
        %1000 = vmatpush1.msra.mxu0 0.0
        %1001 = vmatprep.subr.mxu0 0.0
        %1002 = vmatpush1.msra.mxu0 0.0
        %1003 = vmatprep.subr.mxu0 0.0
        %1004 = vmatpush1.msra.mxu0 0.0
        %1005 = vmatprep.subr.mxu0 0.0
        %1006 = vmatpush1.msra.mxu0 0.0
        %1007 = vmatprep.subr.mxu0 0.0
        %1008 = vmatpush1.msra.mxu0 0.0
        %1009 = vmatprep.subr.mxu0 0.0
        %1010 = vmatpush1.msra.mxu0 0.0
        %1011 = vmatprep.subr.mxu0 0.0
        %1012 = vmatpush1.msra.mxu0 0.0
        %1013 = vmatprep.subr.mxu0 0.0
        %1014 = vmatpush1.msra.mxu0 0.0
        %1015 = vmatprep.subr.mxu0 0.0
        %1016 = vmatpush1.msra.mxu0 0.0
        %1017 = vmatprep.subr.mxu0 0.0
        %1018 = vmatpush1.msra.mxu0 0.0
        %1019 = vmatprep.subr.mxu0 0.0
        %1020 = vmatpush1.msra.mxu0 0.0
        %1021 = vmatprep.subr.mxu0 0.0
        %1022 = vmatpush1.msra.mxu0 0.0
        %1023 = vmatprep.subr.mxu0 0.0
        %1024 = vmatpush1.msra.mxu0 0.0
        %1025 = vmatprep.mubr.f32.mxu0 0.0
        %v1026 = vand.u32 %v333, 4294901760
        %v1027 = vsub.f32 %v333, %v1026
        %1028 = vmatmul.mubr.f32.gmra.mrb[0].mxu0 %v1027
        %v1029 = vpop.f32.mrb[0].mxu0
        %v1030 = vadd.f32 %v956, %v1029
        %v1031 = vpop.f32.mrb[0].mxu0
        %1032 = vdwg.mxu0
        %1033 = vmatprep.subr.mxu0 0.0
        %v1034 = vand.u32 %v340, 4294901760
        %1035 = vmatpush1.msra.mxu0 %v1034
        %1036 = vmatprep.subr.mxu0 0.0
        %1037 = vmatpush1.msra.mxu0 0.0
        %1038 = vmatprep.subr.mxu0 0.0
        %1039 = vmatpush1.msra.mxu0 0.0
        %1040 = vmatprep.subr.mxu0 0.0
        %1041 = vmatpush1.msra.mxu0 0.0
        %1042 = vmatprep.subr.mxu0 0.0
        %1043 = vmatpush1.msra.mxu0 0.0
        %1044 = vmatprep.subr.mxu0 0.0
        %1045 = vmatpush1.msra.mxu0 0.0
        %1046 = vmatprep.subr.mxu0 0.0
        %1047 = vmatpush1.msra.mxu0 0.0
        %1048 = vmatprep.subr.mxu0 0.0
        %1049 = vmatpush1.msra.mxu0 0.0
        %1050 = vmatprep.subr.mxu0 0.0
        %1051 = vmatpush1.msra.mxu0 0.0
        %1052 = vmatprep.subr.mxu0 0.0
        %1053 = vmatpush1.msra.mxu0 0.0
        %1054 = vmatprep.subr.mxu0 0.0
        %1055 = vmatpush1.msra.mxu0 0.0
        %1056 = vmatprep.subr.mxu0 0.0
        %1057 = vmatpush1.msra.mxu0 0.0
        %1058 = vmatprep.subr.mxu0 0.0
        %1059 = vmatpush1.msra.mxu0 0.0
        %1060 = vmatprep.subr.mxu0 0.0
        %1061 = vmatpush1.msra.mxu0 0.0
        %1062 = vmatprep.subr.mxu0 0.0
        %1063 = vmatpush1.msra.mxu0 0.0
        %1064 = vmatprep.subr.mxu0 0.0
        %1065 = vmatpush1.msra.mxu0 0.0
        %1066 = vmatprep.subr.mxu0 0.0
        %1067 = vmatpush1.msra.mxu0 0.0
        %1068 = vmatprep.subr.mxu0 0.0
        %1069 = vmatpush1.msra.mxu0 0.0
        %1070 = vmatprep.subr.mxu0 0.0
        %1071 = vmatpush1.msra.mxu0 0.0
        %1072 = vmatprep.subr.mxu0 0.0
        %1073 = vmatpush1.msra.mxu0 0.0
        %1074 = vmatprep.subr.mxu0 0.0
        %1075 = vmatpush1.msra.mxu0 0.0
        %1076 = vmatprep.subr.mxu0 0.0
        %1077 = vmatpush1.msra.mxu0 0.0
        %1078 = vmatprep.subr.mxu0 0.0
        %1079 = vmatpush1.msra.mxu0 0.0
        %1080 = vmatprep.subr.mxu0 0.0
        %1081 = vmatpush1.msra.mxu0 0.0
        %1082 = vmatprep.subr.mxu0 0.0
        %1083 = vmatpush1.msra.mxu0 0.0
        %1084 = vmatprep.subr.mxu0 0.0
        %1085 = vmatpush1.msra.mxu0 0.0
        %1086 = vmatprep.subr.mxu0 0.0
        %1087 = vmatpush1.msra.mxu0 0.0
        %1088 = vmatprep.subr.mxu0 0.0
        %1089 = vmatpush1.msra.mxu0 0.0
        %1090 = vmatprep.subr.mxu0 0.0
        %1091 = vmatpush1.msra.mxu0 0.0
        %1092 = vmatprep.subr.mxu0 0.0
        %1093 = vmatpush1.msra.mxu0 0.0
        %1094 = vmatprep.subr.mxu0 0.0
        %1095 = vmatpush1.msra.mxu0 0.0
        %1096 = vmatprep.subr.mxu0 0.0
        %1097 = vmatpush1.msra.mxu0 0.0
        %1098 = vmatprep.mubr.f32.mxu0 0.0
        %v1099 = vand.u32 %v333, 4294901760
        %v1100 = vsub.f32 %v333, %v1099
        %v1101 = vand.u32 %v1100, 4294901760
        %1102 = vmatmul.mubr.f32.gmra.mrb[0].mxu0 %v1101
        %v1103 = vpop.f32.mrb[0].mxu0
        %v1104 = vadd.f32 %v1030, %v1103
        %v1105 = vpop.f32.mrb[0].mxu0
        %1106 = vdwg.mxu0
        %1107 = vmatprep.subr.mxu0 0.0
        %v1108 = vand.u32 %v340, 4294901760
        %v1109 = vsub.f32 %v340, %v1108
        %v1110 = vand.u32 %v1109, 4294901760
        %1111 = vmatpush1.msra.mxu0 %v1110
        %1112 = vmatprep.subr.mxu0 0.0
        %1113 = vmatpush1.msra.mxu0 0.0
        %1114 = vmatprep.subr.mxu0 0.0
        %1115 = vmatpush1.msra.mxu0 0.0
        %1116 = vmatprep.subr.mxu0 0.0
        %1117 = vmatpush1.msra.mxu0 0.0
        %1118 = vmatprep.subr.mxu0 0.0
        %1119 = vmatpush1.msra.mxu0 0.0
        %1120 = vmatprep.subr.mxu0 0.0
        %1121 = vmatpush1.msra.mxu0 0.0
        %1122 = vmatprep.subr.mxu0 0.0
        %1123 = vmatpush1.msra.mxu0 0.0
        %1124 = vmatprep.subr.mxu0 0.0
        %1125 = vmatpush1.msra.mxu0 0.0
        %1126 = vmatprep.subr.mxu0 0.0
        %1127 = vmatpush1.msra.mxu0 0.0
        %1128 = vmatprep.subr.mxu0 0.0
        %1129 = vmatpush1.msra.mxu0 0.0
        %1130 = vmatprep.subr.mxu0 0.0
        %1131 = vmatpush1.msra.mxu0 0.0
        %1132 = vmatprep.subr.mxu0 0.0
        %1133 = vmatpush1.msra.mxu0 0.0
        %1134 = vmatprep.subr.mxu0 0.0
        %1135 = vmatpush1.msra.mxu0 0.0
        %1136 = vmatprep.subr.mxu0 0.0
        %1137 = vmatpush1.msra.mxu0 0.0
        %1138 = vmatprep.subr.mxu0 0.0
        %1139 = vmatpush1.msra.mxu0 0.0
        %1140 = vmatprep.subr.mxu0 0.0
        %1141 = vmatpush1.msra.mxu0 0.0
        %1142 = vmatprep.subr.mxu0 0.0
        %1143 = vmatpush1.msra.mxu0 0.0
        %1144 = vmatprep.subr.mxu0 0.0
        %1145 = vmatpush1.msra.mxu0 0.0
        %1146 = vmatprep.subr.mxu0 0.0
        %1147 = vmatpush1.msra.mxu0 0.0
        %1148 = vmatprep.subr.mxu0 0.0
        %1149 = vmatpush1.msra.mxu0 0.0
        %1150 = vmatprep.subr.mxu0 0.0
        %1151 = vmatpush1.msra.mxu0 0.0
        %1152 = vmatprep.subr.mxu0 0.0
        %1153 = vmatpush1.msra.mxu0 0.0
        %1154 = vmatprep.subr.mxu0 0.0
        %1155 = vmatpush1.msra.mxu0 0.0
        %1156 = vmatprep.subr.mxu0 0.0
        %1157 = vmatpush1.msra.mxu0 0.0
        %1158 = vmatprep.subr.mxu0 0.0
        %1159 = vmatpush1.msra.mxu0 0.0
        %1160 = vmatprep.subr.mxu0 0.0
        %1161 = vmatpush1.msra.mxu0 0.0
        %1162 = vmatprep.subr.mxu0 0.0
        %1163 = vmatpush1.msra.mxu0 0.0
        %1164 = vmatprep.subr.mxu0 0.0
        %1165 = vmatpush1.msra.mxu0 0.0
        %1166 = vmatprep.subr.mxu0 0.0
        %1167 = vmatpush1.msra.mxu0 0.0
        %1168 = vmatprep.subr.mxu0 0.0
        %1169 = vmatpush1.msra.mxu0 0.0
        %1170 = vmatprep.subr.mxu0 0.0
        %1171 = vmatpush1.msra.mxu0 0.0
        %1172 = vmatprep.subr.mxu0 0.0
        %1173 = vmatpush1.msra.mxu0 0.0
        %1174 = vmatprep.mubr.f32.mxu0 0.0
        %v1175 = vand.u32 %v333, 4294901760
        %1176 = vmatmul.mubr.f32.gmra.mrb[0].mxu0 %v1175
        %v1177 = vpop.f32.mrb[0].mxu0
        %v1178 = vadd.f32 %v1104, %v1177
        %v1179 = vpop.f32.mrb[0].mxu0
        %1180 = vdwg.mxu0
        %1181 = vmatprep.subr.mxu0 0.0
        %v1182 = vand.u32 %v340, 4294901760
        %1183 = vmatpush1.msra.mxu0 %v1182
        %1184 = vmatprep.subr.mxu0 0.0
        %1185 = vmatpush1.msra.mxu0 0.0
        %1186 = vmatprep.subr.mxu0 0.0
        %1187 = vmatpush1.msra.mxu0 0.0
        %1188 = vmatprep.subr.mxu0 0.0
        %1189 = vmatpush1.msra.mxu0 0.0
        %1190 = vmatprep.subr.mxu0 0.0
        %1191 = vmatpush1.msra.mxu0 0.0
        %1192 = vmatprep.subr.mxu0 0.0
        %1193 = vmatpush1.msra.mxu0 0.0
        %1194 = vmatprep.subr.mxu0 0.0
        %1195 = vmatpush1.msra.mxu0 0.0
        %1196 = vmatprep.subr.mxu0 0.0
        %1197 = vmatpush1.msra.mxu0 0.0
        %1198 = vmatprep.subr.mxu0 0.0
        %1199 = vmatpush1.msra.mxu0 0.0
        %1200 = vmatprep.subr.mxu0 0.0
        %1201 = vmatpush1.msra.mxu0 0.0
        %1202 = vmatprep.subr.mxu0 0.0
        %1203 = vmatpush1.msra.mxu0 0.0
        %1204 = vmatprep.subr.mxu0 0.0
        %1205 = vmatpush1.msra.mxu0 0.0
        %1206 = vmatprep.subr.mxu0 0.0
        %1207 = vmatpush1.msra.mxu0 0.0
        %1208 = vmatprep.subr.mxu0 0.0
        %1209 = vmatpush1.msra.mxu0 0.0
        %1210 = vmatprep.subr.mxu0 0.0
        %1211 = vmatpush1.msra.mxu0 0.0
        %1212 = vmatprep.subr.mxu0 0.0
        %1213 = vmatpush1.msra.mxu0 0.0
        %1214 = vmatprep.subr.mxu0 0.0
        %1215 = vmatpush1.msra.mxu0 0.0
        %1216 = vmatprep.subr.mxu0 0.0
        %1217 = vmatpush1.msra.mxu0 0.0
        %1218 = vmatprep.subr.mxu0 0.0
        %1219 = vmatpush1.msra.mxu0 0.0
        %1220 = vmatprep.subr.mxu0 0.0
        %1221 = vmatpush1.msra.mxu0 0.0
        %1222 = vmatprep.subr.mxu0 0.0
        %1223 = vmatpush1.msra.mxu0 0.0
        %1224 = vmatprep.subr.mxu0 0.0
        %1225 = vmatpush1.msra.mxu0 0.0
        %1226 = vmatprep.subr.mxu0 0.0
        %1227 = vmatpush1.msra.mxu0 0.0
        %1228 = vmatprep.subr.mxu0 0.0
        %1229 = vmatpush1.msra.mxu0 0.0
        %1230 = vmatprep.subr.mxu0 0.0
        %1231 = vmatpush1.msra.mxu0 0.0
        %1232 = vmatprep.subr.mxu0 0.0
        %1233 = vmatpush1.msra.mxu0 0.0
        %1234 = vmatprep.subr.mxu0 0.0
        %1235 = vmatpush1.msra.mxu0 0.0
        %1236 = vmatprep.subr.mxu0 0.0
        %1237 = vmatpush1.msra.mxu0 0.0
        %1238 = vmatprep.subr.mxu0 0.0
        %1239 = vmatpush1.msra.mxu0 0.0
        %1240 = vmatprep.subr.mxu0 0.0
        %1241 = vmatpush1.msra.mxu0 0.0
        %1242 = vmatprep.subr.mxu0 0.0
        %1243 = vmatpush1.msra.mxu0 0.0
        %1244 = vmatprep.subr.mxu0 0.0
        %1245 = vmatpush1.msra.mxu0 0.0
        %1246 = vmatprep.mubr.f32.mxu0 0.0
        %v1247 = vand.u32 %v333, 4294901760
        %1248 = vmatmul.mubr.f32.gmra.mrb[0].mxu0 %v1247
        %v1249 = vpop.f32.mrb[0].mxu0
        %v1250 = vadd.f32 %v1178, %v1249
        %v1251 = vpop.f32.mrb[0].mxu0
        %1252 = vdwg.mxu0
        %v1253 = vsel %vm332, %v316, 0
        %v1255 = vsel %vm335, %v314, 0
        %v1257 = vsel %vm335, %v322, 0
        %v1259 = vsel %vm335, %v315, 0
        %v1261 = vand.u32 %v1257, 4294901760
        %1262 = vmatprep.subr.mxu0 %v1261
        %v1263 = vand.u32 %v1255, 4294901760
        %1264 = vmatpush1.msra.mxu0 %v1263
        %1265 = vmatprep.subr.mxu0 0.0
        %1266 = vmatpush1.msra.mxu0 0.0
        %1267 = vmatprep.subr.mxu0 0.0
        %1268 = vmatpush1.msra.mxu0 0.0
        %1269 = vmatprep.subr.mxu0 0.0
        %1270 = vmatpush1.msra.mxu0 0.0
        %1271 = vmatprep.subr.mxu0 0.0
        %1272 = vmatpush1.msra.mxu0 0.0
        %1273 = vmatprep.subr.mxu0 0.0
        %1274 = vmatpush1.msra.mxu0 0.0
        %1275 = vmatprep.subr.mxu0 0.0
        %1276 = vmatpush1.msra.mxu0 0.0
        %1277 = vmatprep.subr.mxu0 0.0
        %1278 = vmatpush1.msra.mxu0 0.0
        %1279 = vmatprep.subr.mxu0 0.0
        %1280 = vmatpush1.msra.mxu0 0.0
        %1281 = vmatprep.subr.mxu0 0.0
        %1282 = vmatpush1.msra.mxu0 0.0
        %1283 = vmatprep.subr.mxu0 0.0
        %1284 = vmatpush1.msra.mxu0 0.0
        %1285 = vmatprep.subr.mxu0 0.0
        %1286 = vmatpush1.msra.mxu0 0.0
        %1287 = vmatprep.subr.mxu0 0.0
        %1288 = vmatpush1.msra.mxu0 0.0
        %1289 = vmatprep.subr.mxu0 0.0
        %1290 = vmatpush1.msra.mxu0 0.0
        %1291 = vmatprep.subr.mxu0 0.0
        %1292 = vmatpush1.msra.mxu0 0.0
        %1293 = vmatprep.subr.mxu0 0.0
        %1294 = vmatpush1.msra.mxu0 0.0
        %1295 = vmatprep.subr.mxu0 0.0
        %1296 = vmatpush1.msra.mxu0 0.0
        %1297 = vmatprep.subr.mxu0 0.0
        %1298 = vmatpush1.msra.mxu0 0.0
        %1299 = vmatprep.subr.mxu0 0.0
        %1300 = vmatpush1.msra.mxu0 0.0
        %1301 = vmatprep.subr.mxu0 0.0
        %1302 = vmatpush1.msra.mxu0 0.0
        %1303 = vmatprep.subr.mxu0 0.0
        %1304 = vmatpush1.msra.mxu0 0.0
        %1305 = vmatprep.subr.mxu0 0.0
        %1306 = vmatpush1.msra.mxu0 0.0
        %1307 = vmatprep.subr.mxu0 0.0
        %1308 = vmatpush1.msra.mxu0 0.0
        %1309 = vmatprep.subr.mxu0 0.0
        %1310 = vmatpush1.msra.mxu0 0.0
        %1311 = vmatprep.subr.mxu0 0.0
        %1312 = vmatpush1.msra.mxu0 0.0
        %1313 = vmatprep.subr.mxu0 0.0
        %1314 = vmatpush1.msra.mxu0 0.0
        %1315 = vmatprep.subr.mxu0 0.0
        %1316 = vmatpush1.msra.mxu0 0.0
        %1317 = vmatprep.subr.mxu0 0.0
        %1318 = vmatpush1.msra.mxu0 0.0
        %1319 = vmatprep.subr.mxu0 0.0
        %1320 = vmatpush1.msra.mxu0 0.0
        %1321 = vmatprep.subr.mxu0 0.0
        %1322 = vmatpush1.msra.mxu0 0.0
        %1323 = vmatprep.subr.mxu0 0.0
        %1324 = vmatpush1.msra.mxu0 0.0
        %1325 = vmatprep.subr.mxu0 0.0
        %1326 = vmatpush1.msra.mxu0 0.0
        %1327 = vmatprep.mubr.f32.mxu0 0.0
        %v1328 = vand.u32 %v1253, 4294901760
        %v1329 = vsub.f32 %v1253, %v1328
        %v1330 = vand.u32 %v1329, 4294901760
        %v1331 = vsub.f32 %v1329, %v1330
        %v1332 = vand.u32 %v1331, 4294901760
        %1333 = vmatmul.mubr.f32.gmra.mrb[0].mxu0 %v1332
        %v1334 = vpop.f32.mrb[0].mxu0
        %v1335 = vadd.f32 %v803, %v1334
        %v1336 = vpop.f32.mrb[0].mxu0
        %v1337 = vadd.f32 %v805, %v1336
        %1338 = vdwg.mxu0
        %v1339 = vand.u32 %v1257, 4294901760
        %v1340 = vsub.f32 %v1257, %v1339
        %v1341 = vand.u32 %v1340, 4294901760
        %v1342 = vsub.f32 %v1340, %v1341
        %v1343 = vand.u32 %v1342, 4294901760
        %1344 = vmatprep.subr.mxu0 %v1343
        %v1345 = vand.u32 %v1255, 4294901760
        %v1346 = vsub.f32 %v1255, %v1345
        %v1347 = vand.u32 %v1346, 4294901760
        %v1348 = vsub.f32 %v1346, %v1347
        %v1349 = vand.u32 %v1348, 4294901760
        %1350 = vmatpush1.msra.mxu0 %v1349
        %1351 = vmatprep.subr.mxu0 0.0
        %1352 = vmatpush1.msra.mxu0 0.0
        %1353 = vmatprep.subr.mxu0 0.0
        %1354 = vmatpush1.msra.mxu0 0.0
        %1355 = vmatprep.subr.mxu0 0.0
        %1356 = vmatpush1.msra.mxu0 0.0
        %1357 = vmatprep.subr.mxu0 0.0
        %1358 = vmatpush1.msra.mxu0 0.0
        %1359 = vmatprep.subr.mxu0 0.0
        %1360 = vmatpush1.msra.mxu0 0.0
        %1361 = vmatprep.subr.mxu0 0.0
        %1362 = vmatpush1.msra.mxu0 0.0
        %1363 = vmatprep.subr.mxu0 0.0
        %1364 = vmatpush1.msra.mxu0 0.0
        %1365 = vmatprep.subr.mxu0 0.0
        %1366 = vmatpush1.msra.mxu0 0.0
        %1367 = vmatprep.subr.mxu0 0.0
        %1368 = vmatpush1.msra.mxu0 0.0
        %1369 = vmatprep.subr.mxu0 0.0
        %1370 = vmatpush1.msra.mxu0 0.0
        %1371 = vmatprep.subr.mxu0 0.0
        %1372 = vmatpush1.msra.mxu0 0.0
        %1373 = vmatprep.subr.mxu0 0.0
        %1374 = vmatpush1.msra.mxu0 0.0
        %1375 = vmatprep.subr.mxu0 0.0
        %1376 = vmatpush1.msra.mxu0 0.0
        %1377 = vmatprep.subr.mxu0 0.0
        %1378 = vmatpush1.msra.mxu0 0.0
        %1379 = vmatprep.subr.mxu0 0.0
        %1380 = vmatpush1.msra.mxu0 0.0
        %1381 = vmatprep.subr.mxu0 0.0
        %1382 = vmatpush1.msra.mxu0 0.0
        %1383 = vmatprep.subr.mxu0 0.0
        %1384 = vmatpush1.msra.mxu0 0.0
        %1385 = vmatprep.subr.mxu0 0.0
        %1386 = vmatpush1.msra.mxu0 0.0
        %1387 = vmatprep.subr.mxu0 0.0
        %1388 = vmatpush1.msra.mxu0 0.0
        %1389 = vmatprep.subr.mxu0 0.0
        %1390 = vmatpush1.msra.mxu0 0.0
        %1391 = vmatprep.subr.mxu0 0.0
        %1392 = vmatpush1.msra.mxu0 0.0
        %1393 = vmatprep.subr.mxu0 0.0
        %1394 = vmatpush1.msra.mxu0 0.0
        %1395 = vmatprep.subr.mxu0 0.0
        %1396 = vmatpush1.msra.mxu0 0.0
        %1397 = vmatprep.subr.mxu0 0.0
        %1398 = vmatpush1.msra.mxu0 0.0
        %1399 = vmatprep.subr.mxu0 0.0
        %1400 = vmatpush1.msra.mxu0 0.0
        %1401 = vmatprep.subr.mxu0 0.0
        %1402 = vmatpush1.msra.mxu0 0.0
        %1403 = vmatprep.subr.mxu0 0.0
        %1404 = vmatpush1.msra.mxu0 0.0
        %1405 = vmatprep.subr.mxu0 0.0
        %1406 = vmatpush1.msra.mxu0 0.0
        %1407 = vmatprep.subr.mxu0 0.0
        %1408 = vmatpush1.msra.mxu0 0.0
        %1409 = vmatprep.subr.mxu0 0.0
        %1410 = vmatpush1.msra.mxu0 0.0
        %1411 = vmatprep.subr.mxu0 0.0
        %1412 = vmatpush1.msra.mxu0 0.0
        %1413 = vmatprep.mubr.f32.mxu0 0.0
        %v1414 = vand.u32 %v1253, 4294901760
        %1415 = vmatmul.mubr.f32.gmra.mrb[0].mxu0 %v1414
        %v1416 = vpop.f32.mrb[0].mxu0
        %v1417 = vadd.f32 %v1335, %v1416
        %v1418 = vpop.f32.mrb[0].mxu0
        %v1419 = vadd.f32 %v1337, %v1418
        %1420 = vdwg.mxu0
        %v1421 = vand.u32 %v1257, 4294901760
        %v1422 = vsub.f32 %v1257, %v1421
        %1423 = vmatprep.subr.mxu0 %v1422
        %v1424 = vand.u32 %v1255, 4294901760
        %v1425 = vsub.f32 %v1255, %v1424
        %1426 = vmatpush1.msra.mxu0 %v1425
        %1427 = vmatprep.subr.mxu0 0.0
        %1428 = vmatpush1.msra.mxu0 0.0
        %1429 = vmatprep.subr.mxu0 0.0
        %1430 = vmatpush1.msra.mxu0 0.0
        %1431 = vmatprep.subr.mxu0 0.0
        %1432 = vmatpush1.msra.mxu0 0.0
        %1433 = vmatprep.subr.mxu0 0.0
        %1434 = vmatpush1.msra.mxu0 0.0
        %1435 = vmatprep.subr.mxu0 0.0
        %1436 = vmatpush1.msra.mxu0 0.0
        %1437 = vmatprep.subr.mxu0 0.0
        %1438 = vmatpush1.msra.mxu0 0.0
        %1439 = vmatprep.subr.mxu0 0.0
        %1440 = vmatpush1.msra.mxu0 0.0
        %1441 = vmatprep.subr.mxu0 0.0
        %1442 = vmatpush1.msra.mxu0 0.0
        %1443 = vmatprep.subr.mxu0 0.0
        %1444 = vmatpush1.msra.mxu0 0.0
        %1445 = vmatprep.subr.mxu0 0.0
        %1446 = vmatpush1.msra.mxu0 0.0
        %1447 = vmatprep.subr.mxu0 0.0
        %1448 = vmatpush1.msra.mxu0 0.0
        %1449 = vmatprep.subr.mxu0 0.0
        %1450 = vmatpush1.msra.mxu0 0.0
        %1451 = vmatprep.subr.mxu0 0.0
        %1452 = vmatpush1.msra.mxu0 0.0
        %1453 = vmatprep.subr.mxu0 0.0
        %1454 = vmatpush1.msra.mxu0 0.0
        %1455 = vmatprep.subr.mxu0 0.0
        %1456 = vmatpush1.msra.mxu0 0.0
        %1457 = vmatprep.subr.mxu0 0.0
        %1458 = vmatpush1.msra.mxu0 0.0
        %1459 = vmatprep.subr.mxu0 0.0
        %1460 = vmatpush1.msra.mxu0 0.0
        %1461 = vmatprep.subr.mxu0 0.0
        %1462 = vmatpush1.msra.mxu0 0.0
        %1463 = vmatprep.subr.mxu0 0.0
        %1464 = vmatpush1.msra.mxu0 0.0
        %1465 = vmatprep.subr.mxu0 0.0
        %1466 = vmatpush1.msra.mxu0 0.0
        %1467 = vmatprep.subr.mxu0 0.0
        %1468 = vmatpush1.msra.mxu0 0.0
        %1469 = vmatprep.subr.mxu0 0.0
        %1470 = vmatpush1.msra.mxu0 0.0
        %1471 = vmatprep.subr.mxu0 0.0
        %1472 = vmatpush1.msra.mxu0 0.0
        %1473 = vmatprep.subr.mxu0 0.0
        %1474 = vmatpush1.msra.mxu0 0.0
        %1475 = vmatprep.subr.mxu0 0.0
        %1476 = vmatpush1.msra.mxu0 0.0
        %1477 = vmatprep.subr.mxu0 0.0
        %1478 = vmatpush1.msra.mxu0 0.0
        %1479 = vmatprep.subr.mxu0 0.0
        %1480 = vmatpush1.msra.mxu0 0.0
        %1481 = vmatprep.subr.mxu0 0.0
        %1482 = vmatpush1.msra.mxu0 0.0
        %1483 = vmatprep.subr.mxu0 0.0
        %1484 = vmatpush1.msra.mxu0 0.0
        %1485 = vmatprep.subr.mxu0 0.0
        %1486 = vmatpush1.msra.mxu0 0.0
        %1487 = vmatprep.subr.mxu0 0.0
        %1488 = vmatpush1.msra.mxu0 0.0
        %1489 = vmatprep.mubr.f32.mxu0 0.0
        %v1490 = vand.u32 %v1253, 4294901760
        %v1491 = vsub.f32 %v1253, %v1490
        %1492 = vmatmul.mubr.f32.gmra.mrb[0].mxu0 %v1491
        %v1493 = vpop.f32.mrb[0].mxu0
        %v1494 = vadd.f32 %v1417, %v1493
        %v1495 = vpop.f32.mrb[0].mxu0
        %v1496 = vadd.f32 %v1419, %v1495
        %1497 = vdwg.mxu0
        %v1498 = vand.u32 %v1257, 4294901760
        %1499 = vmatprep.subr.mxu0 %v1498
        %v1500 = vand.u32 %v1255, 4294901760
        %1501 = vmatpush1.msra.mxu0 %v1500
        %1502 = vmatprep.subr.mxu0 0.0
        %1503 = vmatpush1.msra.mxu0 0.0
        %1504 = vmatprep.subr.mxu0 0.0
        %1505 = vmatpush1.msra.mxu0 0.0
        %1506 = vmatprep.subr.mxu0 0.0
        %1507 = vmatpush1.msra.mxu0 0.0
        %1508 = vmatprep.subr.mxu0 0.0
        %1509 = vmatpush1.msra.mxu0 0.0
        %1510 = vmatprep.subr.mxu0 0.0
        %1511 = vmatpush1.msra.mxu0 0.0
        %1512 = vmatprep.subr.mxu0 0.0
        %1513 = vmatpush1.msra.mxu0 0.0
        %1514 = vmatprep.subr.mxu0 0.0
        %1515 = vmatpush1.msra.mxu0 0.0
        %1516 = vmatprep.subr.mxu0 0.0
        %1517 = vmatpush1.msra.mxu0 0.0
        %1518 = vmatprep.subr.mxu0 0.0
        %1519 = vmatpush1.msra.mxu0 0.0
        %1520 = vmatprep.subr.mxu0 0.0
        %1521 = vmatpush1.msra.mxu0 0.0
        %1522 = vmatprep.subr.mxu0 0.0
        %1523 = vmatpush1.msra.mxu0 0.0
        %1524 = vmatprep.subr.mxu0 0.0
        %1525 = vmatpush1.msra.mxu0 0.0
        %1526 = vmatprep.subr.mxu0 0.0
        %1527 = vmatpush1.msra.mxu0 0.0
        %1528 = vmatprep.subr.mxu0 0.0
        %1529 = vmatpush1.msra.mxu0 0.0
        %1530 = vmatprep.subr.mxu0 0.0
        %1531 = vmatpush1.msra.mxu0 0.0
        %1532 = vmatprep.subr.mxu0 0.0
        %1533 = vmatpush1.msra.mxu0 0.0
        %1534 = vmatprep.subr.mxu0 0.0
        %1535 = vmatpush1.msra.mxu0 0.0
        %1536 = vmatprep.subr.mxu0 0.0
        %1537 = vmatpush1.msra.mxu0 0.0
        %1538 = vmatprep.subr.mxu0 0.0
        %1539 = vmatpush1.msra.mxu0 0.0
        %1540 = vmatprep.subr.mxu0 0.0
        %1541 = vmatpush1.msra.mxu0 0.0
        %1542 = vmatprep.subr.mxu0 0.0
        %1543 = vmatpush1.msra.mxu0 0.0
        %1544 = vmatprep.subr.mxu0 0.0
        %1545 = vmatpush1.msra.mxu0 0.0
        %1546 = vmatprep.subr.mxu0 0.0
        %1547 = vmatpush1.msra.mxu0 0.0
        %1548 = vmatprep.subr.mxu0 0.0
        %1549 = vmatpush1.msra.mxu0 0.0
        %1550 = vmatprep.subr.mxu0 0.0
        %1551 = vmatpush1.msra.mxu0 0.0
        %1552 = vmatprep.subr.mxu0 0.0
        %1553 = vmatpush1.msra.mxu0 0.0
        %1554 = vmatprep.subr.mxu0 0.0
        %1555 = vmatpush1.msra.mxu0 0.0
        %1556 = vmatprep.subr.mxu0 0.0
        %1557 = vmatpush1.msra.mxu0 0.0
        %1558 = vmatprep.subr.mxu0 0.0
        %1559 = vmatpush1.msra.mxu0 0.0
        %1560 = vmatprep.subr.mxu0 0.0
        %1561 = vmatpush1.msra.mxu0 0.0
        %1562 = vmatprep.subr.mxu0 0.0
        %1563 = vmatpush1.msra.mxu0 0.0
        %1564 = vmatprep.mubr.f32.mxu0 0.0
        %v1565 = vand.u32 %v1253, 4294901760
        %v1566 = vsub.f32 %v1253, %v1565
        %v1567 = vand.u32 %v1566, 4294901760
        %1568 = vmatmul.mubr.f32.gmra.mrb[0].mxu0 %v1567
        %v1569 = vpop.f32.mrb[0].mxu0
        %v1570 = vadd.f32 %v1494, %v1569
        %v1571 = vpop.f32.mrb[0].mxu0
        %v1572 = vadd.f32 %v1496, %v1571
        %1573 = vdwg.mxu0
        %v1574 = vand.u32 %v1257, 4294901760
        %v1575 = vsub.f32 %v1257, %v1574
        %v1576 = vand.u32 %v1575, 4294901760
        %1577 = vmatprep.subr.mxu0 %v1576
        %v1578 = vand.u32 %v1255, 4294901760
        %v1579 = vsub.f32 %v1255, %v1578
        %v1580 = vand.u32 %v1579, 4294901760
        %1581 = vmatpush1.msra.mxu0 %v1580
        %1582 = vmatprep.subr.mxu0 0.0
        %1583 = vmatpush1.msra.mxu0 0.0
        %1584 = vmatprep.subr.mxu0 0.0
        %1585 = vmatpush1.msra.mxu0 0.0
        %1586 = vmatprep.subr.mxu0 0.0
        %1587 = vmatpush1.msra.mxu0 0.0
        %1588 = vmatprep.subr.mxu0 0.0
        %1589 = vmatpush1.msra.mxu0 0.0
        %1590 = vmatprep.subr.mxu0 0.0
        %1591 = vmatpush1.msra.mxu0 0.0
        %1592 = vmatprep.subr.mxu0 0.0
        %1593 = vmatpush1.msra.mxu0 0.0
        %1594 = vmatprep.subr.mxu0 0.0
        %1595 = vmatpush1.msra.mxu0 0.0
        %1596 = vmatprep.subr.mxu0 0.0
        %1597 = vmatpush1.msra.mxu0 0.0
        %1598 = vmatprep.subr.mxu0 0.0
        %1599 = vmatpush1.msra.mxu0 0.0
        %1600 = vmatprep.subr.mxu0 0.0
        %1601 = vmatpush1.msra.mxu0 0.0
        %1602 = vmatprep.subr.mxu0 0.0
        %1603 = vmatpush1.msra.mxu0 0.0
        %1604 = vmatprep.subr.mxu0 0.0
        %1605 = vmatpush1.msra.mxu0 0.0
        %1606 = vmatprep.subr.mxu0 0.0
        %1607 = vmatpush1.msra.mxu0 0.0
        %1608 = vmatprep.subr.mxu0 0.0
        %1609 = vmatpush1.msra.mxu0 0.0
        %1610 = vmatprep.subr.mxu0 0.0
        %1611 = vmatpush1.msra.mxu0 0.0
        %1612 = vmatprep.subr.mxu0 0.0
        %1613 = vmatpush1.msra.mxu0 0.0
        %1614 = vmatprep.subr.mxu0 0.0
        %1615 = vmatpush1.msra.mxu0 0.0
        %1616 = vmatprep.subr.mxu0 0.0
        %1617 = vmatpush1.msra.mxu0 0.0
        %1618 = vmatprep.subr.mxu0 0.0
        %1619 = vmatpush1.msra.mxu0 0.0
        %1620 = vmatprep.subr.mxu0 0.0
        %1621 = vmatpush1.msra.mxu0 0.0
        %1622 = vmatprep.subr.mxu0 0.0
        %1623 = vmatpush1.msra.mxu0 0.0
        %1624 = vmatprep.subr.mxu0 0.0
        %1625 = vmatpush1.msra.mxu0 0.0
        %1626 = vmatprep.subr.mxu0 0.0
        %1627 = vmatpush1.msra.mxu0 0.0
        %1628 = vmatprep.subr.mxu0 0.0
        %1629 = vmatpush1.msra.mxu0 0.0
        %1630 = vmatprep.subr.mxu0 0.0
        %1631 = vmatpush1.msra.mxu0 0.0
        %1632 = vmatprep.subr.mxu0 0.0
        %1633 = vmatpush1.msra.mxu0 0.0
        %1634 = vmatprep.subr.mxu0 0.0
        %1635 = vmatpush1.msra.mxu0 0.0
        %1636 = vmatprep.subr.mxu0 0.0
        %1637 = vmatpush1.msra.mxu0 0.0
        %1638 = vmatprep.subr.mxu0 0.0
        %1639 = vmatpush1.msra.mxu0 0.0
        %1640 = vmatprep.subr.mxu0 0.0
        %1641 = vmatpush1.msra.mxu0 0.0
        %1642 = vmatprep.subr.mxu0 0.0
        %1643 = vmatpush1.msra.mxu0 0.0
        %1644 = vmatprep.mubr.f32.mxu0 0.0
        %v1645 = vand.u32 %v1253, 4294901760
        %1646 = vmatmul.mubr.f32.gmra.mrb[0].mxu0 %v1645
        %v1647 = vpop.f32.mrb[0].mxu0
        %v1648 = vadd.f32 %v1570, %v1647
        %v1649 = vpop.f32.mrb[0].mxu0
        %v1650 = vadd.f32 %v1572, %v1649
        %1651 = vdwg.mxu0
        %v1652 = vand.u32 %v1257, 4294901760
        %1653 = vmatprep.subr.mxu0 %v1652
        %v1654 = vand.u32 %v1255, 4294901760
        %1655 = vmatpush1.msra.mxu0 %v1654
        %1656 = vmatprep.subr.mxu0 0.0
        %1657 = vmatpush1.msra.mxu0 0.0
        %1658 = vmatprep.subr.mxu0 0.0
        %1659 = vmatpush1.msra.mxu0 0.0
        %1660 = vmatprep.subr.mxu0 0.0
        %1661 = vmatpush1.msra.mxu0 0.0
        %1662 = vmatprep.subr.mxu0 0.0
        %1663 = vmatpush1.msra.mxu0 0.0
        %1664 = vmatprep.subr.mxu0 0.0
        %1665 = vmatpush1.msra.mxu0 0.0
        %1666 = vmatprep.subr.mxu0 0.0
        %1667 = vmatpush1.msra.mxu0 0.0
        %1668 = vmatprep.subr.mxu0 0.0
        %1669 = vmatpush1.msra.mxu0 0.0
        %1670 = vmatprep.subr.mxu0 0.0
        %1671 = vmatpush1.msra.mxu0 0.0
        %1672 = vmatprep.subr.mxu0 0.0
        %1673 = vmatpush1.msra.mxu0 0.0
        %1674 = vmatprep.subr.mxu0 0.0
        %1675 = vmatpush1.msra.mxu0 0.0
        %1676 = vmatprep.subr.mxu0 0.0
        %1677 = vmatpush1.msra.mxu0 0.0
        %1678 = vmatprep.subr.mxu0 0.0
        %1679 = vmatpush1.msra.mxu0 0.0
        %1680 = vmatprep.subr.mxu0 0.0
        %1681 = vmatpush1.msra.mxu0 0.0
        %1682 = vmatprep.subr.mxu0 0.0
        %1683 = vmatpush1.msra.mxu0 0.0
        %1684 = vmatprep.subr.mxu0 0.0
        %1685 = vmatpush1.msra.mxu0 0.0
        %1686 = vmatprep.subr.mxu0 0.0
        %1687 = vmatpush1.msra.mxu0 0.0
        %1688 = vmatprep.subr.mxu0 0.0
        %1689 = vmatpush1.msra.mxu0 0.0
        %1690 = vmatprep.subr.mxu0 0.0
        %1691 = vmatpush1.msra.mxu0 0.0
        %1692 = vmatprep.subr.mxu0 0.0
        %1693 = vmatpush1.msra.mxu0 0.0
        %1694 = vmatprep.subr.mxu0 0.0
        %1695 = vmatpush1.msra.mxu0 0.0
        %1696 = vmatprep.subr.mxu0 0.0
        %1697 = vmatpush1.msra.mxu0 0.0
        %1698 = vmatprep.subr.mxu0 0.0
        %1699 = vmatpush1.msra.mxu0 0.0
        %1700 = vmatprep.subr.mxu0 0.0
        %1701 = vmatpush1.msra.mxu0 0.0
        %1702 = vmatprep.subr.mxu0 0.0
        %1703 = vmatpush1.msra.mxu0 0.0
        %1704 = vmatprep.subr.mxu0 0.0
        %1705 = vmatpush1.msra.mxu0 0.0
        %1706 = vmatprep.subr.mxu0 0.0
        %1707 = vmatpush1.msra.mxu0 0.0
        %1708 = vmatprep.subr.mxu0 0.0
        %1709 = vmatpush1.msra.mxu0 0.0
        %1710 = vmatprep.subr.mxu0 0.0
        %1711 = vmatpush1.msra.mxu0 0.0
        %1712 = vmatprep.subr.mxu0 0.0
        %1713 = vmatpush1.msra.mxu0 0.0
        %1714 = vmatprep.subr.mxu0 0.0
        %1715 = vmatpush1.msra.mxu0 0.0
        %1716 = vmatprep.subr.mxu0 0.0
        %1717 = vmatpush1.msra.mxu0 0.0
        %1718 = vmatprep.mubr.f32.mxu0 0.0
        %v1719 = vand.u32 %v1253, 4294901760
        %1720 = vmatmul.mubr.f32.gmra.mrb[0].mxu0 %v1719
        %v1721 = vpop.f32.mrb[0].mxu0
        %v1722 = vadd.f32 %v1648, %v1721
        %v1723 = vpop.f32.mrb[0].mxu0
        %v1724 = vadd.f32 %v1650, %v1723
        %1725 = vdwg.mxu0
        %1726 = vmatprep.subr.mxu0 0.0
        %v1727 = vand.u32 %v1259, 4294901760
        %1728 = vmatpush1.msra.mxu0 %v1727
        %1729 = vmatprep.subr.mxu0 0.0
        %1730 = vmatpush1.msra.mxu0 0.0
        %1731 = vmatprep.subr.mxu0 0.0
        %1732 = vmatpush1.msra.mxu0 0.0
        %1733 = vmatprep.subr.mxu0 0.0
        %1734 = vmatpush1.msra.mxu0 0.0
        %1735 = vmatprep.subr.mxu0 0.0
        %1736 = vmatpush1.msra.mxu0 0.0
        %1737 = vmatprep.subr.mxu0 0.0
        %1738 = vmatpush1.msra.mxu0 0.0
        %1739 = vmatprep.subr.mxu0 0.0
        %1740 = vmatpush1.msra.mxu0 0.0
        %1741 = vmatprep.subr.mxu0 0.0
        %1742 = vmatpush1.msra.mxu0 0.0
        %1743 = vmatprep.subr.mxu0 0.0
        %1744 = vmatpush1.msra.mxu0 0.0
        %1745 = vmatprep.subr.mxu0 0.0
        %1746 = vmatpush1.msra.mxu0 0.0
        %1747 = vmatprep.subr.mxu0 0.0
        %1748 = vmatpush1.msra.mxu0 0.0
        %1749 = vmatprep.subr.mxu0 0.0
        %1750 = vmatpush1.msra.mxu0 0.0
        %1751 = vmatprep.subr.mxu0 0.0
        %1752 = vmatpush1.msra.mxu0 0.0
        %1753 = vmatprep.subr.mxu0 0.0
        %1754 = vmatpush1.msra.mxu0 0.0
        %1755 = vmatprep.subr.mxu0 0.0
        %1756 = vmatpush1.msra.mxu0 0.0
        %1757 = vmatprep.subr.mxu0 0.0
        %1758 = vmatpush1.msra.mxu0 0.0
        %1759 = vmatprep.subr.mxu0 0.0
        %1760 = vmatpush1.msra.mxu0 0.0
        %1761 = vmatprep.subr.mxu0 0.0
        %1762 = vmatpush1.msra.mxu0 0.0
        %1763 = vmatprep.subr.mxu0 0.0
        %1764 = vmatpush1.msra.mxu0 0.0
        %1765 = vmatprep.subr.mxu0 0.0
        %1766 = vmatpush1.msra.mxu0 0.0
        %1767 = vmatprep.subr.mxu0 0.0
        %1768 = vmatpush1.msra.mxu0 0.0
        %1769 = vmatprep.subr.mxu0 0.0
        %1770 = vmatpush1.msra.mxu0 0.0
        %1771 = vmatprep.subr.mxu0 0.0
        %1772 = vmatpush1.msra.mxu0 0.0
        %1773 = vmatprep.subr.mxu0 0.0
        %1774 = vmatpush1.msra.mxu0 0.0
        %1775 = vmatprep.subr.mxu0 0.0
        %1776 = vmatpush1.msra.mxu0 0.0
        %1777 = vmatprep.subr.mxu0 0.0
        %1778 = vmatpush1.msra.mxu0 0.0
        %1779 = vmatprep.subr.mxu0 0.0
        %1780 = vmatpush1.msra.mxu0 0.0
        %1781 = vmatprep.subr.mxu0 0.0
        %1782 = vmatpush1.msra.mxu0 0.0
        %1783 = vmatprep.subr.mxu0 0.0
        %1784 = vmatpush1.msra.mxu0 0.0
        %1785 = vmatprep.subr.mxu0 0.0
        %1786 = vmatpush1.msra.mxu0 0.0
        %1787 = vmatprep.subr.mxu0 0.0
        %1788 = vmatpush1.msra.mxu0 0.0
        %1789 = vmatprep.subr.mxu0 0.0
        %1790 = vmatpush1.msra.mxu0 0.0
        %1791 = vmatprep.mubr.f32.mxu0 0.0
        %v1792 = vand.u32 %v1253, 4294901760
        %v1793 = vsub.f32 %v1253, %v1792
        %v1794 = vand.u32 %v1793, 4294901760
        %v1795 = vsub.f32 %v1793, %v1794
        %v1796 = vand.u32 %v1795, 4294901760
        %1797 = vmatmul.mubr.f32.gmra.mrb[0].mxu0 %v1796
        %v1798 = vpop.f32.mrb[0].mxu0
        %v1799 = vadd.f32 %v1250, %v1798
        %v1800 = vpop.f32.mrb[0].mxu0
        %1801 = vdwg.mxu0
        %1802 = vmatprep.subr.mxu0 0.0
        %v1803 = vand.u32 %v1259, 4294901760
        %v1804 = vsub.f32 %v1259, %v1803
        %v1805 = vand.u32 %v1804, 4294901760
        %v1806 = vsub.f32 %v1804, %v1805
        %v1807 = vand.u32 %v1806, 4294901760
        %1808 = vmatpush1.msra.mxu0 %v1807
        %1809 = vmatprep.subr.mxu0 0.0
        %1810 = vmatpush1.msra.mxu0 0.0
        %1811 = vmatprep.subr.mxu0 0.0
        %1812 = vmatpush1.msra.mxu0 0.0
        %1813 = vmatprep.subr.mxu0 0.0
        %1814 = vmatpush1.msra.mxu0 0.0
        %1815 = vmatprep.subr.mxu0 0.0
        %1816 = vmatpush1.msra.mxu0 0.0
        %1817 = vmatprep.subr.mxu0 0.0
        %1818 = vmatpush1.msra.mxu0 0.0
        %1819 = vmatprep.subr.mxu0 0.0
        %1820 = vmatpush1.msra.mxu0 0.0
        %1821 = vmatprep.subr.mxu0 0.0
        %1822 = vmatpush1.msra.mxu0 0.0
        %1823 = vmatprep.subr.mxu0 0.0
        %1824 = vmatpush1.msra.mxu0 0.0
        %1825 = vmatprep.subr.mxu0 0.0
        %1826 = vmatpush1.msra.mxu0 0.0
        %1827 = vmatprep.subr.mxu0 0.0
        %1828 = vmatpush1.msra.mxu0 0.0
        %1829 = vmatprep.subr.mxu0 0.0
        %1830 = vmatpush1.msra.mxu0 0.0
        %1831 = vmatprep.subr.mxu0 0.0
        %1832 = vmatpush1.msra.mxu0 0.0
        %1833 = vmatprep.subr.mxu0 0.0
        %1834 = vmatpush1.msra.mxu0 0.0
        %1835 = vmatprep.subr.mxu0 0.0
        %1836 = vmatpush1.msra.mxu0 0.0
        %1837 = vmatprep.subr.mxu0 0.0
        %1838 = vmatpush1.msra.mxu0 0.0
        %1839 = vmatprep.subr.mxu0 0.0
        %1840 = vmatpush1.msra.mxu0 0.0
        %1841 = vmatprep.subr.mxu0 0.0
        %1842 = vmatpush1.msra.mxu0 0.0
        %1843 = vmatprep.subr.mxu0 0.0
        %1844 = vmatpush1.msra.mxu0 0.0
        %1845 = vmatprep.subr.mxu0 0.0
        %1846 = vmatpush1.msra.mxu0 0.0
        %1847 = vmatprep.subr.mxu0 0.0
        %1848 = vmatpush1.msra.mxu0 0.0
        %1849 = vmatprep.subr.mxu0 0.0
        %1850 = vmatpush1.msra.mxu0 0.0
        %1851 = vmatprep.subr.mxu0 0.0
        %1852 = vmatpush1.msra.mxu0 0.0
        %1853 = vmatprep.subr.mxu0 0.0
        %1854 = vmatpush1.msra.mxu0 0.0
        %1855 = vmatprep.subr.mxu0 0.0
        %1856 = vmatpush1.msra.mxu0 0.0
        %1857 = vmatprep.subr.mxu0 0.0
        %1858 = vmatpush1.msra.mxu0 0.0
        %1859 = vmatprep.subr.mxu0 0.0
        %1860 = vmatpush1.msra.mxu0 0.0
        %1861 = vmatprep.subr.mxu0 0.0
        %1862 = vmatpush1.msra.mxu0 0.0
        %1863 = vmatprep.subr.mxu0 0.0
        %1864 = vmatpush1.msra.mxu0 0.0
        %1865 = vmatprep.subr.mxu0 0.0
        %1866 = vmatpush1.msra.mxu0 0.0
        %1867 = vmatprep.subr.mxu0 0.0
        %1868 = vmatpush1.msra.mxu0 0.0
        %1869 = vmatprep.subr.mxu0 0.0
        %1870 = vmatpush1.msra.mxu0 0.0
        %1871 = vmatprep.mubr.f32.mxu0 0.0
        %v1872 = vand.u32 %v1253, 4294901760
        %1873 = vmatmul.mubr.f32.gmra.mrb[0].mxu0 %v1872
        %v1874 = vpop.f32.mrb[0].mxu0
        %v1875 = vadd.f32 %v1799, %v1874
        %v1876 = vpop.f32.mrb[0].mxu0
        %1877 = vdwg.mxu0
        %1878 = vmatprep.subr.mxu0 0.0
        %v1879 = vand.u32 %v1259, 4294901760
        %v1880 = vsub.f32 %v1259, %v1879
        %1881 = vmatpush1.msra.mxu0 %v1880
        %1882 = vmatprep.subr.mxu0 0.0
        %1883 = vmatpush1.msra.mxu0 0.0
        %1884 = vmatprep.subr.mxu0 0.0
        %1885 = vmatpush1.msra.mxu0 0.0
        %1886 = vmatprep.subr.mxu0 0.0
        %1887 = vmatpush1.msra.mxu0 0.0
        %1888 = vmatprep.subr.mxu0 0.0
        %1889 = vmatpush1.msra.mxu0 0.0
        %1890 = vmatprep.subr.mxu0 0.0
        %1891 = vmatpush1.msra.mxu0 0.0
        %1892 = vmatprep.subr.mxu0 0.0
        %1893 = vmatpush1.msra.mxu0 0.0
        %1894 = vmatprep.subr.mxu0 0.0
        %1895 = vmatpush1.msra.mxu0 0.0
        %1896 = vmatprep.subr.mxu0 0.0
        %1897 = vmatpush1.msra.mxu0 0.0
        %1898 = vmatprep.subr.mxu0 0.0
        %1899 = vmatpush1.msra.mxu0 0.0
        %1900 = vmatprep.subr.mxu0 0.0
        %1901 = vmatpush1.msra.mxu0 0.0
        %1902 = vmatprep.subr.mxu0 0.0
        %1903 = vmatpush1.msra.mxu0 0.0
        %1904 = vmatprep.subr.mxu0 0.0
        %1905 = vmatpush1.msra.mxu0 0.0
        %1906 = vmatprep.subr.mxu0 0.0
        %1907 = vmatpush1.msra.mxu0 0.0
        %1908 = vmatprep.subr.mxu0 0.0
        %1909 = vmatpush1.msra.mxu0 0.0
        %1910 = vmatprep.subr.mxu0 0.0
        %1911 = vmatpush1.msra.mxu0 0.0
        %1912 = vmatprep.subr.mxu0 0.0
        %1913 = vmatpush1.msra.mxu0 0.0
        %1914 = vmatprep.subr.mxu0 0.0
        %1915 = vmatpush1.msra.mxu0 0.0
        %1916 = vmatprep.subr.mxu0 0.0
        %1917 = vmatpush1.msra.mxu0 0.0
        %1918 = vmatprep.subr.mxu0 0.0
        %1919 = vmatpush1.msra.mxu0 0.0
        %1920 = vmatprep.subr.mxu0 0.0
        %1921 = vmatpush1.msra.mxu0 0.0
        %1922 = vmatprep.subr.mxu0 0.0
        %1923 = vmatpush1.msra.mxu0 0.0
        %1924 = vmatprep.subr.mxu0 0.0
        %1925 = vmatpush1.msra.mxu0 0.0
        %1926 = vmatprep.subr.mxu0 0.0
        %1927 = vmatpush1.msra.mxu0 0.0
        %1928 = vmatprep.subr.mxu0 0.0
        %1929 = vmatpush1.msra.mxu0 0.0
        %1930 = vmatprep.subr.mxu0 0.0
        %1931 = vmatpush1.msra.mxu0 0.0
        %1932 = vmatprep.subr.mxu0 0.0
        %1933 = vmatpush1.msra.mxu0 0.0
        %1934 = vmatprep.subr.mxu0 0.0
        %1935 = vmatpush1.msra.mxu0 0.0
        %1936 = vmatprep.subr.mxu0 0.0
        %1937 = vmatpush1.msra.mxu0 0.0
        %1938 = vmatprep.subr.mxu0 0.0
        %1939 = vmatpush1.msra.mxu0 0.0
        %1940 = vmatprep.subr.mxu0 0.0
        %1941 = vmatpush1.msra.mxu0 0.0
        %1942 = vmatprep.subr.mxu0 0.0
        %1943 = vmatpush1.msra.mxu0 0.0
        %1944 = vmatprep.mubr.f32.mxu0 0.0
        %v1945 = vand.u32 %v1253, 4294901760
        %v1946 = vsub.f32 %v1253, %v1945
        %1947 = vmatmul.mubr.f32.gmra.mrb[0].mxu0 %v1946
        %v1948 = vpop.f32.mrb[0].mxu0
        %v1949 = vadd.f32 %v1875, %v1948
        %v1950 = vpop.f32.mrb[0].mxu0
        %1951 = vdwg.mxu0
        %1952 = vmatprep.subr.mxu0 0.0
        %v1953 = vand.u32 %v1259, 4294901760
        %1954 = vmatpush1.msra.mxu0 %v1953
        %1955 = vmatprep.subr.mxu0 0.0
        %1956 = vmatpush1.msra.mxu0 0.0
        %1957 = vmatprep.subr.mxu0 0.0
        %1958 = vmatpush1.msra.mxu0 0.0
        %1959 = vmatprep.subr.mxu0 0.0
        %1960 = vmatpush1.msra.mxu0 0.0
        %1961 = vmatprep.subr.mxu0 0.0
        %1962 = vmatpush1.msra.mxu0 0.0
        %1963 = vmatprep.subr.mxu0 0.0
        %1964 = vmatpush1.msra.mxu0 0.0
        %1965 = vmatprep.subr.mxu0 0.0
        %1966 = vmatpush1.msra.mxu0 0.0
        %1967 = vmatprep.subr.mxu0 0.0
        %1968 = vmatpush1.msra.mxu0 0.0
        %1969 = vmatprep.subr.mxu0 0.0
        %1970 = vmatpush1.msra.mxu0 0.0
        %1971 = vmatprep.subr.mxu0 0.0
        %1972 = vmatpush1.msra.mxu0 0.0
        %1973 = vmatprep.subr.mxu0 0.0
        %1974 = vmatpush1.msra.mxu0 0.0
        %1975 = vmatprep.subr.mxu0 0.0
        %1976 = vmatpush1.msra.mxu0 0.0
        %1977 = vmatprep.subr.mxu0 0.0
        %1978 = vmatpush1.msra.mxu0 0.0
        %1979 = vmatprep.subr.mxu0 0.0
        %1980 = vmatpush1.msra.mxu0 0.0
        %1981 = vmatprep.subr.mxu0 0.0
        %1982 = vmatpush1.msra.mxu0 0.0
        %1983 = vmatprep.subr.mxu0 0.0
        %1984 = vmatpush1.msra.mxu0 0.0
        %1985 = vmatprep.subr.mxu0 0.0
        %1986 = vmatpush1.msra.mxu0 0.0
        %1987 = vmatprep.subr.mxu0 0.0
        %1988 = vmatpush1.msra.mxu0 0.0
        %1989 = vmatprep.subr.mxu0 0.0
        %1990 = vmatpush1.msra.mxu0 0.0
        %1991 = vmatprep.subr.mxu0 0.0
        %1992 = vmatpush1.msra.mxu0 0.0
        %1993 = vmatprep.subr.mxu0 0.0
        %1994 = vmatpush1.msra.mxu0 0.0
        %1995 = vmatprep.subr.mxu0 0.0
        %1996 = vmatpush1.msra.mxu0 0.0
        %1997 = vmatprep.subr.mxu0 0.0
        %1998 = vmatpush1.msra.mxu0 0.0
        %1999 = vmatprep.subr.mxu0 0.0
        %2000 = vmatpush1.msra.mxu0 0.0
        %2001 = vmatprep.subr.mxu0 0.0
        %2002 = vmatpush1.msra.mxu0 0.0
        %2003 = vmatprep.subr.mxu0 0.0
        %2004 = vmatpush1.msra.mxu0 0.0
        %2005 = vmatprep.subr.mxu0 0.0
        %2006 = vmatpush1.msra.mxu0 0.0
        %2007 = vmatprep.subr.mxu0 0.0
        %2008 = vmatpush1.msra.mxu0 0.0
        %2009 = vmatprep.subr.mxu0 0.0
        %2010 = vmatpush1.msra.mxu0 0.0
        %2011 = vmatprep.subr.mxu0 0.0
        %2012 = vmatpush1.msra.mxu0 0.0
        %2013 = vmatprep.subr.mxu0 0.0
        %2014 = vmatpush1.msra.mxu0 0.0
        %2015 = vmatprep.subr.mxu0 0.0
        %2016 = vmatpush1.msra.mxu0 0.0
        %2017 = vmatprep.mubr.f32.mxu0 0.0
        %v2018 = vand.u32 %v1253, 4294901760
        %v2019 = vsub.f32 %v1253, %v2018
        %v2020 = vand.u32 %v2019, 4294901760
        %2021 = vmatmul.mubr.f32.gmra.mrb[0].mxu0 %v2020
        %v2022 = vpop.f32.mrb[0].mxu0
        %v2023 = vadd.f32 %v1949, %v2022
        %v2024 = vpop.f32.mrb[0].mxu0
        %2025 = vdwg.mxu0
        %2026 = vmatprep.subr.mxu0 0.0
        %v2027 = vand.u32 %v1259, 4294901760
        %v2028 = vsub.f32 %v1259, %v2027
        %v2029 = vand.u32 %v2028, 4294901760
        %2030 = vmatpush1.msra.mxu0 %v2029
        %2031 = vmatprep.subr.mxu0 0.0
        %2032 = vmatpush1.msra.mxu0 0.0
        %2033 = vmatprep.subr.mxu0 0.0
        %2034 = vmatpush1.msra.mxu0 0.0
        %2035 = vmatprep.subr.mxu0 0.0
        %2036 = vmatpush1.msra.mxu0 0.0
        %2037 = vmatprep.subr.mxu0 0.0
        %2038 = vmatpush1.msra.mxu0 0.0
        %2039 = vmatprep.subr.mxu0 0.0
        %2040 = vmatpush1.msra.mxu0 0.0
        %2041 = vmatprep.subr.mxu0 0.0
        %2042 = vmatpush1.msra.mxu0 0.0
        %2043 = vmatprep.subr.mxu0 0.0
        %2044 = vmatpush1.msra.mxu0 0.0
        %2045 = vmatprep.subr.mxu0 0.0
        %2046 = vmatpush1.msra.mxu0 0.0
        %2047 = vmatprep.subr.mxu0 0.0
        %2048 = vmatpush1.msra.mxu0 0.0
        %2049 = vmatprep.subr.mxu0 0.0
        %2050 = vmatpush1.msra.mxu0 0.0
        %2051 = vmatprep.subr.mxu0 0.0
        %2052 = vmatpush1.msra.mxu0 0.0
        %2053 = vmatprep.subr.mxu0 0.0
        %2054 = vmatpush1.msra.mxu0 0.0
        %2055 = vmatprep.subr.mxu0 0.0
        %2056 = vmatpush1.msra.mxu0 0.0
        %2057 = vmatprep.subr.mxu0 0.0
        %2058 = vmatpush1.msra.mxu0 0.0
        %2059 = vmatprep.subr.mxu0 0.0
        %2060 = vmatpush1.msra.mxu0 0.0
        %2061 = vmatprep.subr.mxu0 0.0
        %2062 = vmatpush1.msra.mxu0 0.0
        %2063 = vmatprep.subr.mxu0 0.0
        %2064 = vmatpush1.msra.mxu0 0.0
        %2065 = vmatprep.subr.mxu0 0.0
        %2066 = vmatpush1.msra.mxu0 0.0
        %2067 = vmatprep.subr.mxu0 0.0
        %2068 = vmatpush1.msra.mxu0 0.0
        %2069 = vmatprep.subr.mxu0 0.0
        %2070 = vmatpush1.msra.mxu0 0.0
        %2071 = vmatprep.subr.mxu0 0.0
        %2072 = vmatpush1.msra.mxu0 0.0
        %2073 = vmatprep.subr.mxu0 0.0
        %2074 = vmatpush1.msra.mxu0 0.0
        %2075 = vmatprep.subr.mxu0 0.0
        %2076 = vmatpush1.msra.mxu0 0.0
        %2077 = vmatprep.subr.mxu0 0.0
        %2078 = vmatpush1.msra.mxu0 0.0
        %2079 = vmatprep.subr.mxu0 0.0
        %2080 = vmatpush1.msra.mxu0 0.0
        %2081 = vmatprep.subr.mxu0 0.0
        %2082 = vmatpush1.msra.mxu0 0.0
        %2083 = vmatprep.subr.mxu0 0.0
        %2084 = vmatpush1.msra.mxu0 0.0
        %2085 = vmatprep.subr.mxu0 0.0
        %2086 = vmatpush1.msra.mxu0 0.0
        %2087 = vmatprep.subr.mxu0 0.0
        %2088 = vmatpush1.msra.mxu0 0.0
        %2089 = vmatprep.subr.mxu0 0.0
        %2090 = vmatpush1.msra.mxu0 0.0
        %2091 = vmatprep.subr.mxu0 0.0
        %2092 = vmatpush1.msra.mxu0 0.0
        %2093 = vmatprep.mubr.f32.mxu0 0.0
        %v2094 = vand.u32 %v1253, 4294901760
        %2095 = vmatmul.mubr.f32.gmra.mrb[0].mxu0 %v2094
        %v2096 = vpop.f32.mrb[0].mxu0
        %v2097 = vadd.f32 %v2023, %v2096
        %v2098 = vpop.f32.mrb[0].mxu0
        %2099 = vdwg.mxu0
        %2100 = vmatprep.subr.mxu0 0.0
        %v2101 = vand.u32 %v1259, 4294901760
        %2102 = vmatpush1.msra.mxu0 %v2101
        %2103 = vmatprep.subr.mxu0 0.0
        %2104 = vmatpush1.msra.mxu0 0.0
        %2105 = vmatprep.subr.mxu0 0.0
        %2106 = vmatpush1.msra.mxu0 0.0
        %2107 = vmatprep.subr.mxu0 0.0
        %2108 = vmatpush1.msra.mxu0 0.0
        %2109 = vmatprep.subr.mxu0 0.0
        %2110 = vmatpush1.msra.mxu0 0.0
        %2111 = vmatprep.subr.mxu0 0.0
        %2112 = vmatpush1.msra.mxu0 0.0
        %2113 = vmatprep.subr.mxu0 0.0
        %2114 = vmatpush1.msra.mxu0 0.0
        %2115 = vmatprep.subr.mxu0 0.0
        %2116 = vmatpush1.msra.mxu0 0.0
        %2117 = vmatprep.subr.mxu0 0.0
        %2118 = vmatpush1.msra.mxu0 0.0
        %2119 = vmatprep.subr.mxu0 0.0
        %2120 = vmatpush1.msra.mxu0 0.0
        %2121 = vmatprep.subr.mxu0 0.0
        %2122 = vmatpush1.msra.mxu0 0.0
        %2123 = vmatprep.subr.mxu0 0.0
        %2124 = vmatpush1.msra.mxu0 0.0
        %2125 = vmatprep.subr.mxu0 0.0
        %2126 = vmatpush1.msra.mxu0 0.0
        %2127 = vmatprep.subr.mxu0 0.0
        %2128 = vmatpush1.msra.mxu0 0.0
        %2129 = vmatprep.subr.mxu0 0.0
        %2130 = vmatpush1.msra.mxu0 0.0
        %2131 = vmatprep.subr.mxu0 0.0
        %2132 = vmatpush1.msra.mxu0 0.0
        %2133 = vmatprep.subr.mxu0 0.0
        %2134 = vmatpush1.msra.mxu0 0.0
        %2135 = vmatprep.subr.mxu0 0.0
        %2136 = vmatpush1.msra.mxu0 0.0
        %2137 = vmatprep.subr.mxu0 0.0
        %2138 = vmatpush1.msra.mxu0 0.0
        %2139 = vmatprep.subr.mxu0 0.0
        %2140 = vmatpush1.msra.mxu0 0.0
        %2141 = vmatprep.subr.mxu0 0.0
        %2142 = vmatpush1.msra.mxu0 0.0
        %2143 = vmatprep.subr.mxu0 0.0
        %2144 = vmatpush1.msra.mxu0 0.0
        %2145 = vmatprep.subr.mxu0 0.0
        %2146 = vmatpush1.msra.mxu0 0.0
        %2147 = vmatprep.subr.mxu0 0.0
        %2148 = vmatpush1.msra.mxu0 0.0
        %2149 = vmatprep.subr.mxu0 0.0
        %2150 = vmatpush1.msra.mxu0 0.0
        %2151 = vmatprep.subr.mxu0 0.0
        %2152 = vmatpush1.msra.mxu0 0.0
        %2153 = vmatprep.subr.mxu0 0.0
        %2154 = vmatpush1.msra.mxu0 0.0
        %2155 = vmatprep.subr.mxu0 0.0
        %2156 = vmatpush1.msra.mxu0 0.0
        %2157 = vmatprep.subr.mxu0 0.0
        %2158 = vmatpush1.msra.mxu0 0.0
        %2159 = vmatprep.subr.mxu0 0.0
        %2160 = vmatpush1.msra.mxu0 0.0
        %2161 = vmatprep.subr.mxu0 0.0
        %2162 = vmatpush1.msra.mxu0 0.0
        %2163 = vmatprep.subr.mxu0 0.0
        %2164 = vmatpush1.msra.mxu0 0.0
        %2165 = vmatprep.mubr.f32.mxu0 0.0
        %v2166 = vand.u32 %v1253, 4294901760
        %2167 = vmatmul.mubr.f32.gmra.mrb[0].mxu0 %v2166
        %v2168 = vpop.f32.mrb[0].mxu0
        %v2169 = vadd.f32 %v2097, %v2168
        %v2170 = vpop.f32.mrb[0].mxu0
        %2171 = vdwg.mxu0
        %2172 = vrot.lane.b32.xlu0 %v316, 120
        %v2173 = vpop.permute.xlu0 %2172
        %2174 = vrot.lane.b32.xlu0 %v314, 126
        %v2175 = vpop.permute.xlu0 %2174
        %2176 = vrot.lane.b32.xlu0 %v322, 126
        %v2177 = vpop.permute.xlu0 %2176
        %2178 = vrot.lane.b32.xlu0 %v315, 126
        %v2179 = vpop.permute.xlu0 %2178
        %vm2180 = vcmask 1031168
        %v2181 = vsel %vm2180, %v2175, %v2177
        %v2182 = vsel %vm2180, %v2177, %v2179
        %v2183 = vsel %vm332, %v2173, 0
        %v2185 = vsel %vm335, %v2181, 0
        %v2187 = vsel %vm335, %v2182, 0
        %v2189 = vsel %vm335, %v2179, 0
        %v2191 = vand.u32 %v2187, 4294901760
        %2192 = vmatprep.subr.mxu0 %v2191
        %v2193 = vand.u32 %v2185, 4294901760
        %2194 = vmatpush1.msra.mxu0 %v2193
        %2195 = vmatprep.subr.mxu0 0.0
        %2196 = vmatpush1.msra.mxu0 0.0
        %2197 = vmatprep.subr.mxu0 0.0
        %2198 = vmatpush1.msra.mxu0 0.0
        %2199 = vmatprep.subr.mxu0 0.0
        %2200 = vmatpush1.msra.mxu0 0.0
        %2201 = vmatprep.subr.mxu0 0.0
        %2202 = vmatpush1.msra.mxu0 0.0
        %2203 = vmatprep.subr.mxu0 0.0
        %2204 = vmatpush1.msra.mxu0 0.0
        %2205 = vmatprep.subr.mxu0 0.0
        %2206 = vmatpush1.msra.mxu0 0.0
        %2207 = vmatprep.subr.mxu0 0.0
        %2208 = vmatpush1.msra.mxu0 0.0
        %2209 = vmatprep.subr.mxu0 0.0
        %2210 = vmatpush1.msra.mxu0 0.0
        %2211 = vmatprep.subr.mxu0 0.0
        %2212 = vmatpush1.msra.mxu0 0.0
        %2213 = vmatprep.subr.mxu0 0.0
        %2214 = vmatpush1.msra.mxu0 0.0
        %2215 = vmatprep.subr.mxu0 0.0
        %2216 = vmatpush1.msra.mxu0 0.0
        %2217 = vmatprep.subr.mxu0 0.0
        %2218 = vmatpush1.msra.mxu0 0.0
        %2219 = vmatprep.subr.mxu0 0.0
        %2220 = vmatpush1.msra.mxu0 0.0
        %2221 = vmatprep.subr.mxu0 0.0
        %2222 = vmatpush1.msra.mxu0 0.0
        %2223 = vmatprep.subr.mxu0 0.0
        %2224 = vmatpush1.msra.mxu0 0.0
        %2225 = vmatprep.subr.mxu0 0.0
        %2226 = vmatpush1.msra.mxu0 0.0
        %2227 = vmatprep.subr.mxu0 0.0
        %2228 = vmatpush1.msra.mxu0 0.0
        %2229 = vmatprep.subr.mxu0 0.0
        %2230 = vmatpush1.msra.mxu0 0.0
        %2231 = vmatprep.subr.mxu0 0.0
        %2232 = vmatpush1.msra.mxu0 0.0
        %2233 = vmatprep.subr.mxu0 0.0
        %2234 = vmatpush1.msra.mxu0 0.0
        %2235 = vmatprep.subr.mxu0 0.0
        %2236 = vmatpush1.msra.mxu0 0.0
        %2237 = vmatprep.subr.mxu0 0.0
        %2238 = vmatpush1.msra.mxu0 0.0
        %2239 = vmatprep.subr.mxu0 0.0
        %2240 = vmatpush1.msra.mxu0 0.0
        %2241 = vmatprep.subr.mxu0 0.0
        %2242 = vmatpush1.msra.mxu0 0.0
        %2243 = vmatprep.subr.mxu0 0.0
        %2244 = vmatpush1.msra.mxu0 0.0
        %2245 = vmatprep.subr.mxu0 0.0
        %2246 = vmatpush1.msra.mxu0 0.0
        %2247 = vmatprep.subr.mxu0 0.0
        %2248 = vmatpush1.msra.mxu0 0.0
        %2249 = vmatprep.subr.mxu0 0.0
        %2250 = vmatpush1.msra.mxu0 0.0
        %2251 = vmatprep.subr.mxu0 0.0
        %2252 = vmatpush1.msra.mxu0 0.0
        %2253 = vmatprep.subr.mxu0 0.0
        %2254 = vmatpush1.msra.mxu0 0.0
        %2255 = vmatprep.subr.mxu0 0.0
        %2256 = vmatpush1.msra.mxu0 0.0
        %2257 = vmatprep.mubr.f32.mxu0 0.0
        %v2258 = vand.u32 %v2183, 4294901760
        %v2259 = vsub.f32 %v2183, %v2258
        %v2260 = vand.u32 %v2259, 4294901760
        %v2261 = vsub.f32 %v2259, %v2260
        %v2262 = vand.u32 %v2261, 4294901760
        %2263 = vmatmul.mubr.f32.gmra.mrb[0].mxu0 %v2262
        %v2264 = vpop.f32.mrb[0].mxu0
        %v2265 = vadd.f32 0.0, %v2264
        %v2266 = vpop.f32.mrb[0].mxu0
        %v2267 = vadd.f32 0.0, %v2266
        %2268 = vdwg.mxu0
        %v2269 = vand.u32 %v2187, 4294901760
        %v2270 = vsub.f32 %v2187, %v2269
        %v2271 = vand.u32 %v2270, 4294901760
        %v2272 = vsub.f32 %v2270, %v2271
        %v2273 = vand.u32 %v2272, 4294901760
        %2274 = vmatprep.subr.mxu0 %v2273
        %v2275 = vand.u32 %v2185, 4294901760
        %v2276 = vsub.f32 %v2185, %v2275
        %v2277 = vand.u32 %v2276, 4294901760
        %v2278 = vsub.f32 %v2276, %v2277
        %v2279 = vand.u32 %v2278, 4294901760
        %2280 = vmatpush1.msra.mxu0 %v2279
        %2281 = vmatprep.subr.mxu0 0.0
        %2282 = vmatpush1.msra.mxu0 0.0
        %2283 = vmatprep.subr.mxu0 0.0
        %2284 = vmatpush1.msra.mxu0 0.0
        %2285 = vmatprep.subr.mxu0 0.0
        %2286 = vmatpush1.msra.mxu0 0.0
        %2287 = vmatprep.subr.mxu0 0.0
        %2288 = vmatpush1.msra.mxu0 0.0
        %2289 = vmatprep.subr.mxu0 0.0
        %2290 = vmatpush1.msra.mxu0 0.0
        %2291 = vmatprep.subr.mxu0 0.0
        %2292 = vmatpush1.msra.mxu0 0.0
        %2293 = vmatprep.subr.mxu0 0.0
        %2294 = vmatpush1.msra.mxu0 0.0
        %2295 = vmatprep.subr.mxu0 0.0
        %2296 = vmatpush1.msra.mxu0 0.0
        %2297 = vmatprep.subr.mxu0 0.0
        %2298 = vmatpush1.msra.mxu0 0.0
        %2299 = vmatprep.subr.mxu0 0.0
        %2300 = vmatpush1.msra.mxu0 0.0
        %2301 = vmatprep.subr.mxu0 0.0
        %2302 = vmatpush1.msra.mxu0 0.0
        %2303 = vmatprep.subr.mxu0 0.0
        %2304 = vmatpush1.msra.mxu0 0.0
        %2305 = vmatprep.subr.mxu0 0.0
        %2306 = vmatpush1.msra.mxu0 0.0
        %2307 = vmatprep.subr.mxu0 0.0
        %2308 = vmatpush1.msra.mxu0 0.0
        %2309 = vmatprep.subr.mxu0 0.0
        %2310 = vmatpush1.msra.mxu0 0.0
        %2311 = vmatprep.subr.mxu0 0.0
        %2312 = vmatpush1.msra.mxu0 0.0
        %2313 = vmatprep.subr.mxu0 0.0
        %2314 = vmatpush1.msra.mxu0 0.0
        %2315 = vmatprep.subr.mxu0 0.0
        %2316 = vmatpush1.msra.mxu0 0.0
        %2317 = vmatprep.subr.mxu0 0.0
        %2318 = vmatpush1.msra.mxu0 0.0
        %2319 = vmatprep.subr.mxu0 0.0
        %2320 = vmatpush1.msra.mxu0 0.0
        %2321 = vmatprep.subr.mxu0 0.0
        %2322 = vmatpush1.msra.mxu0 0.0
        %2323 = vmatprep.subr.mxu0 0.0
        %2324 = vmatpush1.msra.mxu0 0.0
        %2325 = vmatprep.subr.mxu0 0.0
        %2326 = vmatpush1.msra.mxu0 0.0
        %2327 = vmatprep.subr.mxu0 0.0
        %2328 = vmatpush1.msra.mxu0 0.0
        %2329 = vmatprep.subr.mxu0 0.0
        %2330 = vmatpush1.msra.mxu0 0.0
        %2331 = vmatprep.subr.mxu0 0.0
        %2332 = vmatpush1.msra.mxu0 0.0
        %2333 = vmatprep.subr.mxu0 0.0
        %2334 = vmatpush1.msra.mxu0 0.0
        %2335 = vmatprep.subr.mxu0 0.0
        %2336 = vmatpush1.msra.mxu0 0.0
        %2337 = vmatprep.subr.mxu0 0.0
        %2338 = vmatpush1.msra.mxu0 0.0
        %2339 = vmatprep.subr.mxu0 0.0
        %2340 = vmatpush1.msra.mxu0 0.0
        %2341 = vmatprep.subr.mxu0 0.0
        %2342 = vmatpush1.msra.mxu0 0.0
        %2343 = vmatprep.mubr.f32.mxu0 0.0
        %v2344 = vand.u32 %v2183, 4294901760
        %2345 = vmatmul.mubr.f32.gmra.mrb[0].mxu0 %v2344
        %v2346 = vpop.f32.mrb[0].mxu0
        %v2347 = vadd.f32 %v2265, %v2346
        %v2348 = vpop.f32.mrb[0].mxu0
        %v2349 = vadd.f32 %v2267, %v2348
        %2350 = vdwg.mxu0
        %v2351 = vand.u32 %v2187, 4294901760
        %v2352 = vsub.f32 %v2187, %v2351
        %2353 = vmatprep.subr.mxu0 %v2352
        %v2354 = vand.u32 %v2185, 4294901760
        %v2355 = vsub.f32 %v2185, %v2354
        %2356 = vmatpush1.msra.mxu0 %v2355
        %2357 = vmatprep.subr.mxu0 0.0
        %2358 = vmatpush1.msra.mxu0 0.0
        %2359 = vmatprep.subr.mxu0 0.0
        %2360 = vmatpush1.msra.mxu0 0.0
        %2361 = vmatprep.subr.mxu0 0.0
        %2362 = vmatpush1.msra.mxu0 0.0
        %2363 = vmatprep.subr.mxu0 0.0
        %2364 = vmatpush1.msra.mxu0 0.0
        %2365 = vmatprep.subr.mxu0 0.0
        %2366 = vmatpush1.msra.mxu0 0.0
        %2367 = vmatprep.subr.mxu0 0.0
        %2368 = vmatpush1.msra.mxu0 0.0
        %2369 = vmatprep.subr.mxu0 0.0
        %2370 = vmatpush1.msra.mxu0 0.0
        %2371 = vmatprep.subr.mxu0 0.0
        %2372 = vmatpush1.msra.mxu0 0.0
        %2373 = vmatprep.subr.mxu0 0.0
        %2374 = vmatpush1.msra.mxu0 0.0
        %2375 = vmatprep.subr.mxu0 0.0
        %2376 = vmatpush1.msra.mxu0 0.0
        %2377 = vmatprep.subr.mxu0 0.0
        %2378 = vmatpush1.msra.mxu0 0.0
        %2379 = vmatprep.subr.mxu0 0.0
        %2380 = vmatpush1.msra.mxu0 0.0
        %2381 = vmatprep.subr.mxu0 0.0
        %2382 = vmatpush1.msra.mxu0 0.0
        %2383 = vmatprep.subr.mxu0 0.0
        %2384 = vmatpush1.msra.mxu0 0.0
        %2385 = vmatprep.subr.mxu0 0.0
        %2386 = vmatpush1.msra.mxu0 0.0
        %2387 = vmatprep.subr.mxu0 0.0
        %2388 = vmatpush1.msra.mxu0 0.0
        %2389 = vmatprep.subr.mxu0 0.0
        %2390 = vmatpush1.msra.mxu0 0.0
        %2391 = vmatprep.subr.mxu0 0.0
        %2392 = vmatpush1.msra.mxu0 0.0
        %2393 = vmatprep.subr.mxu0 0.0
        %2394 = vmatpush1.msra.mxu0 0.0
        %2395 = vmatprep.subr.mxu0 0.0
        %2396 = vmatpush1.msra.mxu0 0.0
        %2397 = vmatprep.subr.mxu0 0.0
        %2398 = vmatpush1.msra.mxu0 0.0
        %2399 = vmatprep.subr.mxu0 0.0
        %2400 = vmatpush1.msra.mxu0 0.0
        %2401 = vmatprep.subr.mxu0 0.0
        %2402 = vmatpush1.msra.mxu0 0.0
        %2403 = vmatprep.subr.mxu0 0.0
        %2404 = vmatpush1.msra.mxu0 0.0
        %2405 = vmatprep.subr.mxu0 0.0
        %2406 = vmatpush1.msra.mxu0 0.0
        %2407 = vmatprep.subr.mxu0 0.0
        %2408 = vmatpush1.msra.mxu0 0.0
        %2409 = vmatprep.subr.mxu0 0.0
        %2410 = vmatpush1.msra.mxu0 0.0
        %2411 = vmatprep.subr.mxu0 0.0
        %2412 = vmatpush1.msra.mxu0 0.0
        %2413 = vmatprep.subr.mxu0 0.0
        %2414 = vmatpush1.msra.mxu0 0.0
        %2415 = vmatprep.subr.mxu0 0.0
        %2416 = vmatpush1.msra.mxu0 0.0
        %2417 = vmatprep.subr.mxu0 0.0
        %2418 = vmatpush1.msra.mxu0 0.0
        %2419 = vmatprep.mubr.f32.mxu0 0.0
        %v2420 = vand.u32 %v2183, 4294901760
        %v2421 = vsub.f32 %v2183, %v2420
        %2422 = vmatmul.mubr.f32.gmra.mrb[0].mxu0 %v2421
        %v2423 = vpop.f32.mrb[0].mxu0
        %v2424 = vadd.f32 %v2347, %v2423
        %v2425 = vpop.f32.mrb[0].mxu0
        %v2426 = vadd.f32 %v2349, %v2425
        %2427 = vdwg.mxu0
        %v2428 = vand.u32 %v2187, 4294901760
        %2429 = vmatprep.subr.mxu0 %v2428
        %v2430 = vand.u32 %v2185, 4294901760
        %2431 = vmatpush1.msra.mxu0 %v2430
        %2432 = vmatprep.subr.mxu0 0.0
        %2433 = vmatpush1.msra.mxu0 0.0
        %2434 = vmatprep.subr.mxu0 0.0
        %2435 = vmatpush1.msra.mxu0 0.0
        %2436 = vmatprep.subr.mxu0 0.0
        %2437 = vmatpush1.msra.mxu0 0.0
        %2438 = vmatprep.subr.mxu0 0.0
        %2439 = vmatpush1.msra.mxu0 0.0
        %2440 = vmatprep.subr.mxu0 0.0
        %2441 = vmatpush1.msra.mxu0 0.0
        %2442 = vmatprep.subr.mxu0 0.0
        %2443 = vmatpush1.msra.mxu0 0.0
        %2444 = vmatprep.subr.mxu0 0.0
        %2445 = vmatpush1.msra.mxu0 0.0
        %2446 = vmatprep.subr.mxu0 0.0
        %2447 = vmatpush1.msra.mxu0 0.0
        %2448 = vmatprep.subr.mxu0 0.0
        %2449 = vmatpush1.msra.mxu0 0.0
        %2450 = vmatprep.subr.mxu0 0.0
        %2451 = vmatpush1.msra.mxu0 0.0
        %2452 = vmatprep.subr.mxu0 0.0
        %2453 = vmatpush1.msra.mxu0 0.0
        %2454 = vmatprep.subr.mxu0 0.0
        %2455 = vmatpush1.msra.mxu0 0.0
        %2456 = vmatprep.subr.mxu0 0.0
        %2457 = vmatpush1.msra.mxu0 0.0
        %2458 = vmatprep.subr.mxu0 0.0
        %2459 = vmatpush1.msra.mxu0 0.0
        %2460 = vmatprep.subr.mxu0 0.0
        %2461 = vmatpush1.msra.mxu0 0.0
        %2462 = vmatprep.subr.mxu0 0.0
        %2463 = vmatpush1.msra.mxu0 0.0
        %2464 = vmatprep.subr.mxu0 0.0
        %2465 = vmatpush1.msra.mxu0 0.0
        %2466 = vmatprep.subr.mxu0 0.0
        %2467 = vmatpush1.msra.mxu0 0.0
        %2468 = vmatprep.subr.mxu0 0.0
        %2469 = vmatpush1.msra.mxu0 0.0
        %2470 = vmatprep.subr.mxu0 0.0
        %2471 = vmatpush1.msra.mxu0 0.0
        %2472 = vmatprep.subr.mxu0 0.0
        %2473 = vmatpush1.msra.mxu0 0.0
        %2474 = vmatprep.subr.mxu0 0.0
        %2475 = vmatpush1.msra.mxu0 0.0
        %2476 = vmatprep.subr.mxu0 0.0
        %2477 = vmatpush1.msra.mxu0 0.0
        %2478 = vmatprep.subr.mxu0 0.0
        %2479 = vmatpush1.msra.mxu0 0.0
        %2480 = vmatprep.subr.mxu0 0.0
        %2481 = vmatpush1.msra.mxu0 0.0
        %2482 = vmatprep.subr.mxu0 0.0
        %2483 = vmatpush1.msra.mxu0 0.0
        %2484 = vmatprep.subr.mxu0 0.0
        %2485 = vmatpush1.msra.mxu0 0.0
        %2486 = vmatprep.subr.mxu0 0.0
        %2487 = vmatpush1.msra.mxu0 0.0
        %2488 = vmatprep.subr.mxu0 0.0
        %2489 = vmatpush1.msra.mxu0 0.0
        %2490 = vmatprep.subr.mxu0 0.0
        %2491 = vmatpush1.msra.mxu0 0.0
        %2492 = vmatprep.subr.mxu0 0.0
        %2493 = vmatpush1.msra.mxu0 0.0
        %2494 = vmatprep.mubr.f32.mxu0 0.0
        %v2495 = vand.u32 %v2183, 4294901760
        %v2496 = vsub.f32 %v2183, %v2495
        %v2497 = vand.u32 %v2496, 4294901760
        %2498 = vmatmul.mubr.f32.gmra.mrb[0].mxu0 %v2497
        %v2499 = vpop.f32.mrb[0].mxu0
        %v2500 = vadd.f32 %v2424, %v2499
        %v2501 = vpop.f32.mrb[0].mxu0
        %v2502 = vadd.f32 %v2426, %v2501
        %2503 = vdwg.mxu0
        %v2504 = vand.u32 %v2187, 4294901760
        %v2505 = vsub.f32 %v2187, %v2504
        %v2506 = vand.u32 %v2505, 4294901760
        %2507 = vmatprep.subr.mxu0 %v2506
        %v2508 = vand.u32 %v2185, 4294901760
        %v2509 = vsub.f32 %v2185, %v2508
        %v2510 = vand.u32 %v2509, 4294901760
        %2511 = vmatpush1.msra.mxu0 %v2510
        %2512 = vmatprep.subr.mxu0 0.0
        %2513 = vmatpush1.msra.mxu0 0.0
        %2514 = vmatprep.subr.mxu0 0.0
        %2515 = vmatpush1.msra.mxu0 0.0
        %2516 = vmatprep.subr.mxu0 0.0
        %2517 = vmatpush1.msra.mxu0 0.0
        %2518 = vmatprep.subr.mxu0 0.0
        %2519 = vmatpush1.msra.mxu0 0.0
        %2520 = vmatprep.subr.mxu0 0.0
        %2521 = vmatpush1.msra.mxu0 0.0
        %2522 = vmatprep.subr.mxu0 0.0
        %2523 = vmatpush1.msra.mxu0 0.0
        %2524 = vmatprep.subr.mxu0 0.0
        %2525 = vmatpush1.msra.mxu0 0.0
        %2526 = vmatprep.subr.mxu0 0.0
        %2527 = vmatpush1.msra.mxu0 0.0
        %2528 = vmatprep.subr.mxu0 0.0
        %2529 = vmatpush1.msra.mxu0 0.0
        %2530 = vmatprep.subr.mxu0 0.0
        %2531 = vmatpush1.msra.mxu0 0.0
        %2532 = vmatprep.subr.mxu0 0.0
        %2533 = vmatpush1.msra.mxu0 0.0
        %2534 = vmatprep.subr.mxu0 0.0
        %2535 = vmatpush1.msra.mxu0 0.0
        %2536 = vmatprep.subr.mxu0 0.0
        %2537 = vmatpush1.msra.mxu0 0.0
        %2538 = vmatprep.subr.mxu0 0.0
        %2539 = vmatpush1.msra.mxu0 0.0
        %2540 = vmatprep.subr.mxu0 0.0
        %2541 = vmatpush1.msra.mxu0 0.0
        %2542 = vmatprep.subr.mxu0 0.0
        %2543 = vmatpush1.msra.mxu0 0.0
        %2544 = vmatprep.subr.mxu0 0.0
        %2545 = vmatpush1.msra.mxu0 0.0
        %2546 = vmatprep.subr.mxu0 0.0
        %2547 = vmatpush1.msra.mxu0 0.0
        %2548 = vmatprep.subr.mxu0 0.0
        %2549 = vmatpush1.msra.mxu0 0.0
        %2550 = vmatprep.subr.mxu0 0.0
        %2551 = vmatpush1.msra.mxu0 0.0
        %2552 = vmatprep.subr.mxu0 0.0
        %2553 = vmatpush1.msra.mxu0 0.0
        %2554 = vmatprep.subr.mxu0 0.0
        %2555 = vmatpush1.msra.mxu0 0.0
        %2556 = vmatprep.subr.mxu0 0.0
        %2557 = vmatpush1.msra.mxu0 0.0
        %2558 = vmatprep.subr.mxu0 0.0
        %2559 = vmatpush1.msra.mxu0 0.0
        %2560 = vmatprep.subr.mxu0 0.0
        %2561 = vmatpush1.msra.mxu0 0.0
        %2562 = vmatprep.subr.mxu0 0.0
        %2563 = vmatpush1.msra.mxu0 0.0
        %2564 = vmatprep.subr.mxu0 0.0
        %2565 = vmatpush1.msra.mxu0 0.0
        %2566 = vmatprep.subr.mxu0 0.0
        %2567 = vmatpush1.msra.mxu0 0.0
        %2568 = vmatprep.subr.mxu0 0.0
        %2569 = vmatpush1.msra.mxu0 0.0
        %2570 = vmatprep.subr.mxu0 0.0
        %2571 = vmatpush1.msra.mxu0 0.0
        %2572 = vmatprep.subr.mxu0 0.0
        %2573 = vmatpush1.msra.mxu0 0.0
        %2574 = vmatprep.mubr.f32.mxu0 0.0
        %v2575 = vand.u32 %v2183, 4294901760
        %2576 = vmatmul.mubr.f32.gmra.mrb[0].mxu0 %v2575
        %v2577 = vpop.f32.mrb[0].mxu0
        %v2578 = vadd.f32 %v2500, %v2577
        %v2579 = vpop.f32.mrb[0].mxu0
        %v2580 = vadd.f32 %v2502, %v2579
        %2581 = vdwg.mxu0
        %v2582 = vand.u32 %v2187, 4294901760
        %2583 = vmatprep.subr.mxu0 %v2582
        %v2584 = vand.u32 %v2185, 4294901760
        %2585 = vmatpush1.msra.mxu0 %v2584
        %2586 = vmatprep.subr.mxu0 0.0
        %2587 = vmatpush1.msra.mxu0 0.0
        %2588 = vmatprep.subr.mxu0 0.0
        %2589 = vmatpush1.msra.mxu0 0.0
        %2590 = vmatprep.subr.mxu0 0.0
        %2591 = vmatpush1.msra.mxu0 0.0
        %2592 = vmatprep.subr.mxu0 0.0
        %2593 = vmatpush1.msra.mxu0 0.0
        %2594 = vmatprep.subr.mxu0 0.0
        %2595 = vmatpush1.msra.mxu0 0.0
        %2596 = vmatprep.subr.mxu0 0.0
        %2597 = vmatpush1.msra.mxu0 0.0
        %2598 = vmatprep.subr.mxu0 0.0
        %2599 = vmatpush1.msra.mxu0 0.0
        %2600 = vmatprep.subr.mxu0 0.0
        %2601 = vmatpush1.msra.mxu0 0.0
        %2602 = vmatprep.subr.mxu0 0.0
        %2603 = vmatpush1.msra.mxu0 0.0
        %2604 = vmatprep.subr.mxu0 0.0
        %2605 = vmatpush1.msra.mxu0 0.0
        %2606 = vmatprep.subr.mxu0 0.0
        %2607 = vmatpush1.msra.mxu0 0.0
        %2608 = vmatprep.subr.mxu0 0.0
        %2609 = vmatpush1.msra.mxu0 0.0
        %2610 = vmatprep.subr.mxu0 0.0
        %2611 = vmatpush1.msra.mxu0 0.0
        %2612 = vmatprep.subr.mxu0 0.0
        %2613 = vmatpush1.msra.mxu0 0.0
        %2614 = vmatprep.subr.mxu0 0.0
        %2615 = vmatpush1.msra.mxu0 0.0
        %2616 = vmatprep.subr.mxu0 0.0
        %2617 = vmatpush1.msra.mxu0 0.0
        %2618 = vmatprep.subr.mxu0 0.0
        %2619 = vmatpush1.msra.mxu0 0.0
        %2620 = vmatprep.subr.mxu0 0.0
        %2621 = vmatpush1.msra.mxu0 0.0
        %2622 = vmatprep.subr.mxu0 0.0
        %2623 = vmatpush1.msra.mxu0 0.0
        %2624 = vmatprep.subr.mxu0 0.0
        %2625 = vmatpush1.msra.mxu0 0.0
        %2626 = vmatprep.subr.mxu0 0.0
        %2627 = vmatpush1.msra.mxu0 0.0
        %2628 = vmatprep.subr.mxu0 0.0
        %2629 = vmatpush1.msra.mxu0 0.0
        %2630 = vmatprep.subr.mxu0 0.0
        %2631 = vmatpush1.msra.mxu0 0.0
        %2632 = vmatprep.subr.mxu0 0.0
        %2633 = vmatpush1.msra.mxu0 0.0
        %2634 = vmatprep.subr.mxu0 0.0
        %2635 = vmatpush1.msra.mxu0 0.0
        %2636 = vmatprep.subr.mxu0 0.0
        %2637 = vmatpush1.msra.mxu0 0.0
        %2638 = vmatprep.subr.mxu0 0.0
        %2639 = vmatpush1.msra.mxu0 0.0
        %2640 = vmatprep.subr.mxu0 0.0
        %2641 = vmatpush1.msra.mxu0 0.0
        %2642 = vmatprep.subr.mxu0 0.0
        %2643 = vmatpush1.msra.mxu0 0.0
        %2644 = vmatprep.subr.mxu0 0.0
        %2645 = vmatpush1.msra.mxu0 0.0
        %2646 = vmatprep.subr.mxu0 0.0
        %2647 = vmatpush1.msra.mxu0 0.0
        %2648 = vmatprep.mubr.f32.mxu0 0.0
        %v2649 = vand.u32 %v2183, 4294901760
        %2650 = vmatmul.mubr.f32.gmra.mrb[0].mxu0 %v2649
        %v2651 = vpop.f32.mrb[0].mxu0
        %v2652 = vadd.f32 %v2578, %v2651
        %v2653 = vpop.f32.mrb[0].mxu0
        %v2654 = vadd.f32 %v2580, %v2653
        %2655 = vdwg.mxu0
        %2656 = vmatprep.subr.mxu0 0.0
        %v2657 = vand.u32 %v2189, 4294901760
        %2658 = vmatpush1.msra.mxu0 %v2657
        %2659 = vmatprep.subr.mxu0 0.0
        %2660 = vmatpush1.msra.mxu0 0.0
        %2661 = vmatprep.subr.mxu0 0.0
        %2662 = vmatpush1.msra.mxu0 0.0
        %2663 = vmatprep.subr.mxu0 0.0
        %2664 = vmatpush1.msra.mxu0 0.0
        %2665 = vmatprep.subr.mxu0 0.0
        %2666 = vmatpush1.msra.mxu0 0.0
        %2667 = vmatprep.subr.mxu0 0.0
        %2668 = vmatpush1.msra.mxu0 0.0
        %2669 = vmatprep.subr.mxu0 0.0
        %2670 = vmatpush1.msra.mxu0 0.0
        %2671 = vmatprep.subr.mxu0 0.0
        %2672 = vmatpush1.msra.mxu0 0.0
        %2673 = vmatprep.subr.mxu0 0.0
        %2674 = vmatpush1.msra.mxu0 0.0
        %2675 = vmatprep.subr.mxu0 0.0
        %2676 = vmatpush1.msra.mxu0 0.0
        %2677 = vmatprep.subr.mxu0 0.0
        %2678 = vmatpush1.msra.mxu0 0.0
        %2679 = vmatprep.subr.mxu0 0.0
        %2680 = vmatpush1.msra.mxu0 0.0
        %2681 = vmatprep.subr.mxu0 0.0
        %2682 = vmatpush1.msra.mxu0 0.0
        %2683 = vmatprep.subr.mxu0 0.0
        %2684 = vmatpush1.msra.mxu0 0.0
        %2685 = vmatprep.subr.mxu0 0.0
        %2686 = vmatpush1.msra.mxu0 0.0
        %2687 = vmatprep.subr.mxu0 0.0
        %2688 = vmatpush1.msra.mxu0 0.0
        %2689 = vmatprep.subr.mxu0 0.0
        %2690 = vmatpush1.msra.mxu0 0.0
        %2691 = vmatprep.subr.mxu0 0.0
        %2692 = vmatpush1.msra.mxu0 0.0
        %2693 = vmatprep.subr.mxu0 0.0
        %2694 = vmatpush1.msra.mxu0 0.0
        %2695 = vmatprep.subr.mxu0 0.0
        %2696 = vmatpush1.msra.mxu0 0.0
        %2697 = vmatprep.subr.mxu0 0.0
        %2698 = vmatpush1.msra.mxu0 0.0
        %2699 = vmatprep.subr.mxu0 0.0
        %2700 = vmatpush1.msra.mxu0 0.0
        %2701 = vmatprep.subr.mxu0 0.0
        %2702 = vmatpush1.msra.mxu0 0.0
        %2703 = vmatprep.subr.mxu0 0.0
        %2704 = vmatpush1.msra.mxu0 0.0
        %2705 = vmatprep.subr.mxu0 0.0
        %2706 = vmatpush1.msra.mxu0 0.0
        %2707 = vmatprep.subr.mxu0 0.0
        %2708 = vmatpush1.msra.mxu0 0.0
        %2709 = vmatprep.subr.mxu0 0.0
        %2710 = vmatpush1.msra.mxu0 0.0
        %2711 = vmatprep.subr.mxu0 0.0
        %2712 = vmatpush1.msra.mxu0 0.0
        %2713 = vmatprep.subr.mxu0 0.0
        %2714 = vmatpush1.msra.mxu0 0.0
        %2715 = vmatprep.subr.mxu0 0.0
        %2716 = vmatpush1.msra.mxu0 0.0
        %2717 = vmatprep.subr.mxu0 0.0
        %2718 = vmatpush1.msra.mxu0 0.0
        %2719 = vmatprep.subr.mxu0 0.0
        %2720 = vmatpush1.msra.mxu0 0.0
        %2721 = vmatprep.mubr.f32.mxu0 0.0
        %v2722 = vand.u32 %v2183, 4294901760
        %v2723 = vsub.f32 %v2183, %v2722
        %v2724 = vand.u32 %v2723, 4294901760
        %v2725 = vsub.f32 %v2723, %v2724
        %v2726 = vand.u32 %v2725, 4294901760
        %2727 = vmatmul.mubr.f32.gmra.mrb[0].mxu0 %v2726
        %v2728 = vpop.f32.mrb[0].mxu0
        %v2729 = vadd.f32 0.0, %v2728
        %v2730 = vpop.f32.mrb[0].mxu0
        %2731 = vdwg.mxu0
        %2732 = vmatprep.subr.mxu0 0.0
        %v2733 = vand.u32 %v2189, 4294901760
        %v2734 = vsub.f32 %v2189, %v2733
        %v2735 = vand.u32 %v2734, 4294901760
        %v2736 = vsub.f32 %v2734, %v2735
        %v2737 = vand.u32 %v2736, 4294901760
        %2738 = vmatpush1.msra.mxu0 %v2737
        %2739 = vmatprep.subr.mxu0 0.0
        %2740 = vmatpush1.msra.mxu0 0.0
        %2741 = vmatprep.subr.mxu0 0.0
        %2742 = vmatpush1.msra.mxu0 0.0
        %2743 = vmatprep.subr.mxu0 0.0
        %2744 = vmatpush1.msra.mxu0 0.0
        %2745 = vmatprep.subr.mxu0 0.0
        %2746 = vmatpush1.msra.mxu0 0.0
        %2747 = vmatprep.subr.mxu0 0.0
        %2748 = vmatpush1.msra.mxu0 0.0
        %2749 = vmatprep.subr.mxu0 0.0
        %2750 = vmatpush1.msra.mxu0 0.0
        %2751 = vmatprep.subr.mxu0 0.0
        %2752 = vmatpush1.msra.mxu0 0.0
        %2753 = vmatprep.subr.mxu0 0.0
        %2754 = vmatpush1.msra.mxu0 0.0
        %2755 = vmatprep.subr.mxu0 0.0
        %2756 = vmatpush1.msra.mxu0 0.0
        %2757 = vmatprep.subr.mxu0 0.0
        %2758 = vmatpush1.msra.mxu0 0.0
        %2759 = vmatprep.subr.mxu0 0.0
        %2760 = vmatpush1.msra.mxu0 0.0
        %2761 = vmatprep.subr.mxu0 0.0
        %2762 = vmatpush1.msra.mxu0 0.0
        %2763 = vmatprep.subr.mxu0 0.0
        %2764 = vmatpush1.msra.mxu0 0.0
        %2765 = vmatprep.subr.mxu0 0.0
        %2766 = vmatpush1.msra.mxu0 0.0
        %2767 = vmatprep.subr.mxu0 0.0
        %2768 = vmatpush1.msra.mxu0 0.0
        %2769 = vmatprep.subr.mxu0 0.0
        %2770 = vmatpush1.msra.mxu0 0.0
        %2771 = vmatprep.subr.mxu0 0.0
        %2772 = vmatpush1.msra.mxu0 0.0
        %2773 = vmatprep.subr.mxu0 0.0
        %2774 = vmatpush1.msra.mxu0 0.0
        %2775 = vmatprep.subr.mxu0 0.0
        %2776 = vmatpush1.msra.mxu0 0.0
        %2777 = vmatprep.subr.mxu0 0.0
        %2778 = vmatpush1.msra.mxu0 0.0
        %2779 = vmatprep.subr.mxu0 0.0
        %2780 = vmatpush1.msra.mxu0 0.0
        %2781 = vmatprep.subr.mxu0 0.0
        %2782 = vmatpush1.msra.mxu0 0.0
        %2783 = vmatprep.subr.mxu0 0.0
        %2784 = vmatpush1.msra.mxu0 0.0
        %2785 = vmatprep.subr.mxu0 0.0
        %2786 = vmatpush1.msra.mxu0 0.0
        %2787 = vmatprep.subr.mxu0 0.0
        %2788 = vmatpush1.msra.mxu0 0.0
        %2789 = vmatprep.subr.mxu0 0.0
        %2790 = vmatpush1.msra.mxu0 0.0
        %2791 = vmatprep.subr.mxu0 0.0
        %2792 = vmatpush1.msra.mxu0 0.0
        %2793 = vmatprep.subr.mxu0 0.0
        %2794 = vmatpush1.msra.mxu0 0.0
        %2795 = vmatprep.subr.mxu0 0.0
        %2796 = vmatpush1.msra.mxu0 0.0
        %2797 = vmatprep.subr.mxu0 0.0
        %2798 = vmatpush1.msra.mxu0 0.0
        %2799 = vmatprep.subr.mxu0 0.0
        %2800 = vmatpush1.msra.mxu0 0.0
        %2801 = vmatprep.mubr.f32.mxu0 0.0
        %v2802 = vand.u32 %v2183, 4294901760
        %2803 = vmatmul.mubr.f32.gmra.mrb[0].mxu0 %v2802
        %v2804 = vpop.f32.mrb[0].mxu0
        %v2805 = vadd.f32 %v2729, %v2804
        %v2806 = vpop.f32.mrb[0].mxu0
        %2807 = vdwg.mxu0
        %2808 = vmatprep.subr.mxu0 0.0
        %v2809 = vand.u32 %v2189, 4294901760
        %v2810 = vsub.f32 %v2189, %v2809
        %2811 = vmatpush1.msra.mxu0 %v2810
        %2812 = vmatprep.subr.mxu0 0.0
        %2813 = vmatpush1.msra.mxu0 0.0
        %2814 = vmatprep.subr.mxu0 0.0
        %2815 = vmatpush1.msra.mxu0 0.0
        %2816 = vmatprep.subr.mxu0 0.0
        %2817 = vmatpush1.msra.mxu0 0.0
        %2818 = vmatprep.subr.mxu0 0.0
        %2819 = vmatpush1.msra.mxu0 0.0
        %2820 = vmatprep.subr.mxu0 0.0
        %2821 = vmatpush1.msra.mxu0 0.0
        %2822 = vmatprep.subr.mxu0 0.0
        %2823 = vmatpush1.msra.mxu0 0.0
        %2824 = vmatprep.subr.mxu0 0.0
        %2825 = vmatpush1.msra.mxu0 0.0
        %2826 = vmatprep.subr.mxu0 0.0
        %2827 = vmatpush1.msra.mxu0 0.0
        %2828 = vmatprep.subr.mxu0 0.0
        %2829 = vmatpush1.msra.mxu0 0.0
        %2830 = vmatprep.subr.mxu0 0.0
        %2831 = vmatpush1.msra.mxu0 0.0
        %2832 = vmatprep.subr.mxu0 0.0
        %2833 = vmatpush1.msra.mxu0 0.0
        %2834 = vmatprep.subr.mxu0 0.0
        %2835 = vmatpush1.msra.mxu0 0.0
        %2836 = vmatprep.subr.mxu0 0.0
        %2837 = vmatpush1.msra.mxu0 0.0
        %2838 = vmatprep.subr.mxu0 0.0
        %2839 = vmatpush1.msra.mxu0 0.0
        %2840 = vmatprep.subr.mxu0 0.0
        %2841 = vmatpush1.msra.mxu0 0.0
        %2842 = vmatprep.subr.mxu0 0.0
        %2843 = vmatpush1.msra.mxu0 0.0
        %2844 = vmatprep.subr.mxu0 0.0
        %2845 = vmatpush1.msra.mxu0 0.0
        %2846 = vmatprep.subr.mxu0 0.0
        %2847 = vmatpush1.msra.mxu0 0.0
        %2848 = vmatprep.subr.mxu0 0.0
        %2849 = vmatpush1.msra.mxu0 0.0
        %2850 = vmatprep.subr.mxu0 0.0
        %2851 = vmatpush1.msra.mxu0 0.0
        %2852 = vmatprep.subr.mxu0 0.0
        %2853 = vmatpush1.msra.mxu0 0.0
        %2854 = vmatprep.subr.mxu0 0.0
        %2855 = vmatpush1.msra.mxu0 0.0
        %2856 = vmatprep.subr.mxu0 0.0
        %2857 = vmatpush1.msra.mxu0 0.0
        %2858 = vmatprep.subr.mxu0 0.0
        %2859 = vmatpush1.msra.mxu0 0.0
        %2860 = vmatprep.subr.mxu0 0.0
        %2861 = vmatpush1.msra.mxu0 0.0
        %2862 = vmatprep.subr.mxu0 0.0
        %2863 = vmatpush1.msra.mxu0 0.0
        %2864 = vmatprep.subr.mxu0 0.0
        %2865 = vmatpush1.msra.mxu0 0.0
        %2866 = vmatprep.subr.mxu0 0.0
        %2867 = vmatpush1.msra.mxu0 0.0
        %2868 = vmatprep.subr.mxu0 0.0
        %2869 = vmatpush1.msra.mxu0 0.0
        %2870 = vmatprep.subr.mxu0 0.0
        %2871 = vmatpush1.msra.mxu0 0.0
        %2872 = vmatprep.subr.mxu0 0.0
        %2873 = vmatpush1.msra.mxu0 0.0
        %2874 = vmatprep.mubr.f32.mxu0 0.0
        %v2875 = vand.u32 %v2183, 4294901760
        %v2876 = vsub.f32 %v2183, %v2875
        %2877 = vmatmul.mubr.f32.gmra.mrb[0].mxu0 %v2876
        %v2878 = vpop.f32.mrb[0].mxu0
        %v2879 = vadd.f32 %v2805, %v2878
        %v2880 = vpop.f32.mrb[0].mxu0
        %2881 = vdwg.mxu0
        %2882 = vmatprep.subr.mxu0 0.0
        %v2883 = vand.u32 %v2189, 4294901760
        %2884 = vmatpush1.msra.mxu0 %v2883
        %2885 = vmatprep.subr.mxu0 0.0
        %2886 = vmatpush1.msra.mxu0 0.0
        %2887 = vmatprep.subr.mxu0 0.0
        %2888 = vmatpush1.msra.mxu0 0.0
        %2889 = vmatprep.subr.mxu0 0.0
        %2890 = vmatpush1.msra.mxu0 0.0
        %2891 = vmatprep.subr.mxu0 0.0
        %2892 = vmatpush1.msra.mxu0 0.0
        %2893 = vmatprep.subr.mxu0 0.0
        %2894 = vmatpush1.msra.mxu0 0.0
        %2895 = vmatprep.subr.mxu0 0.0
        %2896 = vmatpush1.msra.mxu0 0.0
        %2897 = vmatprep.subr.mxu0 0.0
        %2898 = vmatpush1.msra.mxu0 0.0
        %2899 = vmatprep.subr.mxu0 0.0
        %2900 = vmatpush1.msra.mxu0 0.0
        %2901 = vmatprep.subr.mxu0 0.0
        %2902 = vmatpush1.msra.mxu0 0.0
        %2903 = vmatprep.subr.mxu0 0.0
        %2904 = vmatpush1.msra.mxu0 0.0
        %2905 = vmatprep.subr.mxu0 0.0
        %2906 = vmatpush1.msra.mxu0 0.0
        %2907 = vmatprep.subr.mxu0 0.0
        %2908 = vmatpush1.msra.mxu0 0.0
        %2909 = vmatprep.subr.mxu0 0.0
        %2910 = vmatpush1.msra.mxu0 0.0
        %2911 = vmatprep.subr.mxu0 0.0
        %2912 = vmatpush1.msra.mxu0 0.0
        %2913 = vmatprep.subr.mxu0 0.0
        %2914 = vmatpush1.msra.mxu0 0.0
        %2915 = vmatprep.subr.mxu0 0.0
        %2916 = vmatpush1.msra.mxu0 0.0
        %2917 = vmatprep.subr.mxu0 0.0
        %2918 = vmatpush1.msra.mxu0 0.0
        %2919 = vmatprep.subr.mxu0 0.0
        %2920 = vmatpush1.msra.mxu0 0.0
        %2921 = vmatprep.subr.mxu0 0.0
        %2922 = vmatpush1.msra.mxu0 0.0
        %2923 = vmatprep.subr.mxu0 0.0
        %2924 = vmatpush1.msra.mxu0 0.0
        %2925 = vmatprep.subr.mxu0 0.0
        %2926 = vmatpush1.msra.mxu0 0.0
        %2927 = vmatprep.subr.mxu0 0.0
        %2928 = vmatpush1.msra.mxu0 0.0
        %2929 = vmatprep.subr.mxu0 0.0
        %2930 = vmatpush1.msra.mxu0 0.0
        %2931 = vmatprep.subr.mxu0 0.0
        %2932 = vmatpush1.msra.mxu0 0.0
        %2933 = vmatprep.subr.mxu0 0.0
        %2934 = vmatpush1.msra.mxu0 0.0
        %2935 = vmatprep.subr.mxu0 0.0
        %2936 = vmatpush1.msra.mxu0 0.0
        %2937 = vmatprep.subr.mxu0 0.0
        %2938 = vmatpush1.msra.mxu0 0.0
        %2939 = vmatprep.subr.mxu0 0.0
        %2940 = vmatpush1.msra.mxu0 0.0
        %2941 = vmatprep.subr.mxu0 0.0
        %2942 = vmatpush1.msra.mxu0 0.0
        %2943 = vmatprep.subr.mxu0 0.0
        %2944 = vmatpush1.msra.mxu0 0.0
        %2945 = vmatprep.subr.mxu0 0.0
        %2946 = vmatpush1.msra.mxu0 0.0
        %2947 = vmatprep.mubr.f32.mxu0 0.0
        %v2948 = vand.u32 %v2183, 4294901760
        %v2949 = vsub.f32 %v2183, %v2948
        %v2950 = vand.u32 %v2949, 4294901760
        %2951 = vmatmul.mubr.f32.gmra.mrb[0].mxu0 %v2950
        %v2952 = vpop.f32.mrb[0].mxu0
        %v2953 = vadd.f32 %v2879, %v2952
        %v2954 = vpop.f32.mrb[0].mxu0
        %2955 = vdwg.mxu0
        %2956 = vmatprep.subr.mxu0 0.0
        %v2957 = vand.u32 %v2189, 4294901760
        %v2958 = vsub.f32 %v2189, %v2957
        %v2959 = vand.u32 %v2958, 4294901760
        %2960 = vmatpush1.msra.mxu0 %v2959
        %2961 = vmatprep.subr.mxu0 0.0
        %2962 = vmatpush1.msra.mxu0 0.0
        %2963 = vmatprep.subr.mxu0 0.0
        %2964 = vmatpush1.msra.mxu0 0.0
        %2965 = vmatprep.subr.mxu0 0.0
        %2966 = vmatpush1.msra.mxu0 0.0
        %2967 = vmatprep.subr.mxu0 0.0
        %2968 = vmatpush1.msra.mxu0 0.0
        %2969 = vmatprep.subr.mxu0 0.0
        %2970 = vmatpush1.msra.mxu0 0.0
        %2971 = vmatprep.subr.mxu0 0.0
        %2972 = vmatpush1.msra.mxu0 0.0
        %2973 = vmatprep.subr.mxu0 0.0
        %2974 = vmatpush1.msra.mxu0 0.0
        %2975 = vmatprep.subr.mxu0 0.0
        %2976 = vmatpush1.msra.mxu0 0.0
        %2977 = vmatprep.subr.mxu0 0.0
        %2978 = vmatpush1.msra.mxu0 0.0
        %2979 = vmatprep.subr.mxu0 0.0
        %2980 = vmatpush1.msra.mxu0 0.0
        %2981 = vmatprep.subr.mxu0 0.0
        %2982 = vmatpush1.msra.mxu0 0.0
        %2983 = vmatprep.subr.mxu0 0.0
        %2984 = vmatpush1.msra.mxu0 0.0
        %2985 = vmatprep.subr.mxu0 0.0
        %2986 = vmatpush1.msra.mxu0 0.0
        %2987 = vmatprep.subr.mxu0 0.0
        %2988 = vmatpush1.msra.mxu0 0.0
        %2989 = vmatprep.subr.mxu0 0.0
        %2990 = vmatpush1.msra.mxu0 0.0
        %2991 = vmatprep.subr.mxu0 0.0
        %2992 = vmatpush1.msra.mxu0 0.0
        %2993 = vmatprep.subr.mxu0 0.0
        %2994 = vmatpush1.msra.mxu0 0.0
        %2995 = vmatprep.subr.mxu0 0.0
        %2996 = vmatpush1.msra.mxu0 0.0
        %2997 = vmatprep.subr.mxu0 0.0
        %2998 = vmatpush1.msra.mxu0 0.0
        %2999 = vmatprep.subr.mxu0 0.0
        %3000 = vmatpush1.msra.mxu0 0.0
        %3001 = vmatprep.subr.mxu0 0.0
        %3002 = vmatpush1.msra.mxu0 0.0
        %3003 = vmatprep.subr.mxu0 0.0
        %3004 = vmatpush1.msra.mxu0 0.0
        %3005 = vmatprep.subr.mxu0 0.0
        %3006 = vmatpush1.msra.mxu0 0.0
        %3007 = vmatprep.subr.mxu0 0.0
        %3008 = vmatpush1.msra.mxu0 0.0
        %3009 = vmatprep.subr.mxu0 0.0
        %3010 = vmatpush1.msra.mxu0 0.0
        %3011 = vmatprep.subr.mxu0 0.0
        %3012 = vmatpush1.msra.mxu0 0.0
        %3013 = vmatprep.subr.mxu0 0.0
        %3014 = vmatpush1.msra.mxu0 0.0
        %3015 = vmatprep.subr.mxu0 0.0
        %3016 = vmatpush1.msra.mxu0 0.0
        %3017 = vmatprep.subr.mxu0 0.0
        %3018 = vmatpush1.msra.mxu0 0.0
        %3019 = vmatprep.subr.mxu0 0.0
        %3020 = vmatpush1.msra.mxu0 0.0
        %3021 = vmatprep.subr.mxu0 0.0
        %3022 = vmatpush1.msra.mxu0 0.0
        %3023 = vmatprep.mubr.f32.mxu0 0.0
        %v3024 = vand.u32 %v2183, 4294901760
        %3025 = vmatmul.mubr.f32.gmra.mrb[0].mxu0 %v3024
        %v3026 = vpop.f32.mrb[0].mxu0
        %v3027 = vadd.f32 %v2953, %v3026
        %v3028 = vpop.f32.mrb[0].mxu0
        %3029 = vdwg.mxu0
        %3030 = vmatprep.subr.mxu0 0.0
        %v3031 = vand.u32 %v2189, 4294901760
        %3032 = vmatpush1.msra.mxu0 %v3031
        %3033 = vmatprep.subr.mxu0 0.0
        %3034 = vmatpush1.msra.mxu0 0.0
        %3035 = vmatprep.subr.mxu0 0.0
        %3036 = vmatpush1.msra.mxu0 0.0
        %3037 = vmatprep.subr.mxu0 0.0
        %3038 = vmatpush1.msra.mxu0 0.0
        %3039 = vmatprep.subr.mxu0 0.0
        %3040 = vmatpush1.msra.mxu0 0.0
        %3041 = vmatprep.subr.mxu0 0.0
        %3042 = vmatpush1.msra.mxu0 0.0
        %3043 = vmatprep.subr.mxu0 0.0
        %3044 = vmatpush1.msra.mxu0 0.0
        %3045 = vmatprep.subr.mxu0 0.0
        %3046 = vmatpush1.msra.mxu0 0.0
        %3047 = vmatprep.subr.mxu0 0.0
        %3048 = vmatpush1.msra.mxu0 0.0
        %3049 = vmatprep.subr.mxu0 0.0
        %3050 = vmatpush1.msra.mxu0 0.0
        %3051 = vmatprep.subr.mxu0 0.0
        %3052 = vmatpush1.msra.mxu0 0.0
        %3053 = vmatprep.subr.mxu0 0.0
        %3054 = vmatpush1.msra.mxu0 0.0
        %3055 = vmatprep.subr.mxu0 0.0
        %3056 = vmatpush1.msra.mxu0 0.0
        %3057 = vmatprep.subr.mxu0 0.0
        %3058 = vmatpush1.msra.mxu0 0.0
        %3059 = vmatprep.subr.mxu0 0.0
        %3060 = vmatpush1.msra.mxu0 0.0
        %3061 = vmatprep.subr.mxu0 0.0
        %3062 = vmatpush1.msra.mxu0 0.0
        %3063 = vmatprep.subr.mxu0 0.0
        %3064 = vmatpush1.msra.mxu0 0.0
        %3065 = vmatprep.subr.mxu0 0.0
        %3066 = vmatpush1.msra.mxu0 0.0
        %3067 = vmatprep.subr.mxu0 0.0
        %3068 = vmatpush1.msra.mxu0 0.0
        %3069 = vmatprep.subr.mxu0 0.0
        %3070 = vmatpush1.msra.mxu0 0.0
        %3071 = vmatprep.subr.mxu0 0.0
        %3072 = vmatpush1.msra.mxu0 0.0
        %3073 = vmatprep.subr.mxu0 0.0
        %3074 = vmatpush1.msra.mxu0 0.0
        %3075 = vmatprep.subr.mxu0 0.0
        %3076 = vmatpush1.msra.mxu0 0.0
        %3077 = vmatprep.subr.mxu0 0.0
        %3078 = vmatpush1.msra.mxu0 0.0
        %3079 = vmatprep.subr.mxu0 0.0
        %3080 = vmatpush1.msra.mxu0 0.0
        %3081 = vmatprep.subr.mxu0 0.0
        %3082 = vmatpush1.msra.mxu0 0.0
        %3083 = vmatprep.subr.mxu0 0.0
        %3084 = vmatpush1.msra.mxu0 0.0
        %3085 = vmatprep.subr.mxu0 0.0
        %3086 = vmatpush1.msra.mxu0 0.0
        %3087 = vmatprep.subr.mxu0 0.0
        %3088 = vmatpush1.msra.mxu0 0.0
        %3089 = vmatprep.subr.mxu0 0.0
        %3090 = vmatpush1.msra.mxu0 0.0
        %3091 = vmatprep.subr.mxu0 0.0
        %3092 = vmatpush1.msra.mxu0 0.0
        %3093 = vmatprep.subr.mxu0 0.0
        %3094 = vmatpush1.msra.mxu0 0.0
        %3095 = vmatprep.mubr.f32.mxu0 0.0
        %v3096 = vand.u32 %v2183, 4294901760
        %3097 = vmatmul.mubr.f32.gmra.mrb[0].mxu0 %v3096
        %v3098 = vpop.f32.mrb[0].mxu0
        %v3099 = vadd.f32 %v3027, %v3098
        %v3100 = vpop.f32.mrb[0].mxu0
        %3101 = vdwg.mxu0
        %v3102 = vadd.f32 %v1722, %v2652
        %v3103 = vadd.f32 %v1724, %v2654
        %v3104 = vadd.f32 %v2169, %v3099
        %v3105 = vld [vmem:[%s2] sm:$0xff]
        %3107 = vset.pattern.permute.xlu0 0
        %3108 = vperm.xlu0 %3107, %v3105
        %v3109 = vpop.permute.xlu0 %3108
        %v3111 = vadd.f32 %v3102, %v3109
        %v3112 = vadd.f32 %v3103, %v3109
        %v3113 = vadd.f32 %v3104, %v3109
        %v3114 = vmax.f32 %v3111, 0.0
        %v3115 = vmax.f32 %v3112, 0.0
        %v3116 = vmax.f32 %v3113, 0.0
        %v3117 = vld [vmem:[%s3] sm:$0xff]
        %3119 = vrot.lane.b32.xlu0 %v3117, 120
        %v3120 = vpop.permute.xlu0 %3119
        %3124 = vrot.lane.b32.xlu0 %v3114, 126
        %v3125 = vpop.permute.xlu0 %3124
        %3126 = vrot.lane.b32.xlu0 %v3115, 126
        %v3127 = vpop.permute.xlu0 %3126
        %3128 = vrot.lane.b32.xlu0 %v3116, 126
        %v3129 = vpop.permute.xlu0 %3128
        %v3130 = vsel %vm2180, %v3125, %v3127
        %v3131 = vsel %vm2180, %v3127, %v3129
        %vm3135 = vcmask 64512
        %v3136 = vsel %vm3135, %v3120, 0
        %v3138 = vand.u32 %v3131, 4294901760
        %3139 = vmatprep.subr.mxu0 %v3138
        %v3140 = vand.u32 %v3130, 4294901760
        %3141 = vmatpush1.msra.mxu0 %v3140
        %3142 = vmatprep.subr.mxu0 0.0
        %3143 = vmatpush1.msra.mxu0 0.0
        %3144 = vmatprep.subr.mxu0 0.0
        %3145 = vmatpush1.msra.mxu0 0.0
        %3146 = vmatprep.subr.mxu0 0.0
        %3147 = vmatpush1.msra.mxu0 0.0
        %3148 = vmatprep.subr.mxu0 0.0
        %3149 = vmatpush1.msra.mxu0 0.0
        %3150 = vmatprep.subr.mxu0 0.0
        %3151 = vmatpush1.msra.mxu0 0.0
        %3152 = vmatprep.subr.mxu0 0.0
        %3153 = vmatpush1.msra.mxu0 0.0
        %3154 = vmatprep.subr.mxu0 0.0
        %3155 = vmatpush1.msra.mxu0 0.0
        %3156 = vmatprep.subr.mxu0 0.0
        %3157 = vmatpush1.msra.mxu0 0.0
        %3158 = vmatprep.subr.mxu0 0.0
        %3159 = vmatpush1.msra.mxu0 0.0
        %3160 = vmatprep.subr.mxu0 0.0
        %3161 = vmatpush1.msra.mxu0 0.0
        %3162 = vmatprep.subr.mxu0 0.0
        %3163 = vmatpush1.msra.mxu0 0.0
        %3164 = vmatprep.subr.mxu0 0.0
        %3165 = vmatpush1.msra.mxu0 0.0
        %3166 = vmatprep.subr.mxu0 0.0
        %3167 = vmatpush1.msra.mxu0 0.0
        %3168 = vmatprep.subr.mxu0 0.0
        %3169 = vmatpush1.msra.mxu0 0.0
        %3170 = vmatprep.subr.mxu0 0.0
        %3171 = vmatpush1.msra.mxu0 0.0
        %3172 = vmatprep.subr.mxu0 0.0
        %3173 = vmatpush1.msra.mxu0 0.0
        %3174 = vmatprep.subr.mxu0 0.0
        %3175 = vmatpush1.msra.mxu0 0.0
        %3176 = vmatprep.subr.mxu0 0.0
        %3177 = vmatpush1.msra.mxu0 0.0
        %3178 = vmatprep.subr.mxu0 0.0
        %3179 = vmatpush1.msra.mxu0 0.0
        %3180 = vmatprep.subr.mxu0 0.0
        %3181 = vmatpush1.msra.mxu0 0.0
        %3182 = vmatprep.subr.mxu0 0.0
        %3183 = vmatpush1.msra.mxu0 0.0
        %3184 = vmatprep.subr.mxu0 0.0
        %3185 = vmatpush1.msra.mxu0 0.0
        %3186 = vmatprep.subr.mxu0 0.0
        %3187 = vmatpush1.msra.mxu0 0.0
        %3188 = vmatprep.subr.mxu0 0.0
        %3189 = vmatpush1.msra.mxu0 0.0
        %3190 = vmatprep.subr.mxu0 0.0
        %3191 = vmatpush1.msra.mxu0 0.0
        %3192 = vmatprep.subr.mxu0 0.0
        %3193 = vmatpush1.msra.mxu0 0.0
        %3194 = vmatprep.subr.mxu0 0.0
        %3195 = vmatpush1.msra.mxu0 0.0
        %3196 = vmatprep.subr.mxu0 0.0
        %3197 = vmatpush1.msra.mxu0 0.0
        %3198 = vmatprep.subr.mxu0 0.0
        %3199 = vmatpush1.msra.mxu0 0.0
        %3200 = vmatprep.subr.mxu0 0.0
        %3201 = vmatpush1.msra.mxu0 0.0
        %3202 = vmatprep.subr.mxu0 0.0
        %3203 = vmatpush1.msra.mxu0 0.0
        %3204 = vmatprep.mubr.f32.mxu0 0.0
        %v3205 = vand.u32 %v3136, 4294901760
        %v3206 = vsub.f32 %v3136, %v3205
        %v3207 = vand.u32 %v3206, 4294901760
        %v3208 = vsub.f32 %v3206, %v3207
        %v3209 = vand.u32 %v3208, 4294901760
        %3210 = vmatmul.mubr.f32.gmra.mrb[0].mxu0 %v3209
        %v3211 = vpop.f32.mrb[0].mxu0
        %v3212 = vadd.f32 0.0, %v3211
        %v3213 = vpop.f32.mrb[0].mxu0
        %v3214 = vadd.f32 0.0, %v3213
        %3215 = vdwg.mxu0
        %v3216 = vand.u32 %v3131, 4294901760
        %v3217 = vsub.f32 %v3131, %v3216
        %v3218 = vand.u32 %v3217, 4294901760
        %v3219 = vsub.f32 %v3217, %v3218
        %v3220 = vand.u32 %v3219, 4294901760
        %3221 = vmatprep.subr.mxu0 %v3220
        %v3222 = vand.u32 %v3130, 4294901760
        %v3223 = vsub.f32 %v3130, %v3222
        %v3224 = vand.u32 %v3223, 4294901760
        %v3225 = vsub.f32 %v3223, %v3224
        %v3226 = vand.u32 %v3225, 4294901760
        %3227 = vmatpush1.msra.mxu0 %v3226
        %3228 = vmatprep.subr.mxu0 0.0
        %3229 = vmatpush1.msra.mxu0 0.0
        %3230 = vmatprep.subr.mxu0 0.0
        %3231 = vmatpush1.msra.mxu0 0.0
        %3232 = vmatprep.subr.mxu0 0.0
        %3233 = vmatpush1.msra.mxu0 0.0
        %3234 = vmatprep.subr.mxu0 0.0
        %3235 = vmatpush1.msra.mxu0 0.0
        %3236 = vmatprep.subr.mxu0 0.0
        %3237 = vmatpush1.msra.mxu0 0.0
        %3238 = vmatprep.subr.mxu0 0.0
        %3239 = vmatpush1.msra.mxu0 0.0
        %3240 = vmatprep.subr.mxu0 0.0
        %3241 = vmatpush1.msra.mxu0 0.0
        %3242 = vmatprep.subr.mxu0 0.0
        %3243 = vmatpush1.msra.mxu0 0.0
        %3244 = vmatprep.subr.mxu0 0.0
        %3245 = vmatpush1.msra.mxu0 0.0
        %3246 = vmatprep.subr.mxu0 0.0
        %3247 = vmatpush1.msra.mxu0 0.0
        %3248 = vmatprep.subr.mxu0 0.0
        %3249 = vmatpush1.msra.mxu0 0.0
        %3250 = vmatprep.subr.mxu0 0.0
        %3251 = vmatpush1.msra.mxu0 0.0
        %3252 = vmatprep.subr.mxu0 0.0
        %3253 = vmatpush1.msra.mxu0 0.0
        %3254 = vmatprep.subr.mxu0 0.0
        %3255 = vmatpush1.msra.mxu0 0.0
        %3256 = vmatprep.subr.mxu0 0.0
        %3257 = vmatpush1.msra.mxu0 0.0
        %3258 = vmatprep.subr.mxu0 0.0
        %3259 = vmatpush1.msra.mxu0 0.0
        %3260 = vmatprep.subr.mxu0 0.0
        %3261 = vmatpush1.msra.mxu0 0.0
        %3262 = vmatprep.subr.mxu0 0.0
        %3263 = vmatpush1.msra.mxu0 0.0
        %3264 = vmatprep.subr.mxu0 0.0
        %3265 = vmatpush1.msra.mxu0 0.0
        %3266 = vmatprep.subr.mxu0 0.0
        %3267 = vmatpush1.msra.mxu0 0.0
        %3268 = vmatprep.subr.mxu0 0.0
        %3269 = vmatpush1.msra.mxu0 0.0
        %3270 = vmatprep.subr.mxu0 0.0
        %3271 = vmatpush1.msra.mxu0 0.0
        %3272 = vmatprep.subr.mxu0 0.0
        %3273 = vmatpush1.msra.mxu0 0.0
        %3274 = vmatprep.subr.mxu0 0.0
        %3275 = vmatpush1.msra.mxu0 0.0
        %3276 = vmatprep.subr.mxu0 0.0
        %3277 = vmatpush1.msra.mxu0 0.0
        %3278 = vmatprep.subr.mxu0 0.0
        %3279 = vmatpush1.msra.mxu0 0.0
        %3280 = vmatprep.subr.mxu0 0.0
        %3281 = vmatpush1.msra.mxu0 0.0
        %3282 = vmatprep.subr.mxu0 0.0
        %3283 = vmatpush1.msra.mxu0 0.0
        %3284 = vmatprep.subr.mxu0 0.0
        %3285 = vmatpush1.msra.mxu0 0.0
        %3286 = vmatprep.subr.mxu0 0.0
        %3287 = vmatpush1.msra.mxu0 0.0
        %3288 = vmatprep.subr.mxu0 0.0
        %3289 = vmatpush1.msra.mxu0 0.0
        %3290 = vmatprep.mubr.f32.mxu0 0.0
        %v3291 = vand.u32 %v3136, 4294901760
        %3292 = vmatmul.mubr.f32.gmra.mrb[0].mxu0 %v3291
        %v3293 = vpop.f32.mrb[0].mxu0
        %v3294 = vadd.f32 %v3212, %v3293
        %v3295 = vpop.f32.mrb[0].mxu0
        %v3296 = vadd.f32 %v3214, %v3295
        %3297 = vdwg.mxu0
        %v3298 = vand.u32 %v3131, 4294901760
        %v3299 = vsub.f32 %v3131, %v3298
        %3300 = vmatprep.subr.mxu0 %v3299
        %v3301 = vand.u32 %v3130, 4294901760
        %v3302 = vsub.f32 %v3130, %v3301
        %3303 = vmatpush1.msra.mxu0 %v3302
        %3304 = vmatprep.subr.mxu0 0.0
        %3305 = vmatpush1.msra.mxu0 0.0
        %3306 = vmatprep.subr.mxu0 0.0
        %3307 = vmatpush1.msra.mxu0 0.0
        %3308 = vmatprep.subr.mxu0 0.0
        %3309 = vmatpush1.msra.mxu0 0.0
        %3310 = vmatprep.subr.mxu0 0.0
        %3311 = vmatpush1.msra.mxu0 0.0
        %3312 = vmatprep.subr.mxu0 0.0
        %3313 = vmatpush1.msra.mxu0 0.0
        %3314 = vmatprep.subr.mxu0 0.0
        %3315 = vmatpush1.msra.mxu0 0.0
        %3316 = vmatprep.subr.mxu0 0.0
        %3317 = vmatpush1.msra.mxu0 0.0
        %3318 = vmatprep.subr.mxu0 0.0
        %3319 = vmatpush1.msra.mxu0 0.0
        %3320 = vmatprep.subr.mxu0 0.0
        %3321 = vmatpush1.msra.mxu0 0.0
        %3322 = vmatprep.subr.mxu0 0.0
        %3323 = vmatpush1.msra.mxu0 0.0
        %3324 = vmatprep.subr.mxu0 0.0
        %3325 = vmatpush1.msra.mxu0 0.0
        %3326 = vmatprep.subr.mxu0 0.0
        %3327 = vmatpush1.msra.mxu0 0.0
        %3328 = vmatprep.subr.mxu0 0.0
        %3329 = vmatpush1.msra.mxu0 0.0
        %3330 = vmatprep.subr.mxu0 0.0
        %3331 = vmatpush1.msra.mxu0 0.0
        %3332 = vmatprep.subr.mxu0 0.0
        %3333 = vmatpush1.msra.mxu0 0.0
        %3334 = vmatprep.subr.mxu0 0.0
        %3335 = vmatpush1.msra.mxu0 0.0
        %3336 = vmatprep.subr.mxu0 0.0
        %3337 = vmatpush1.msra.mxu0 0.0
        %3338 = vmatprep.subr.mxu0 0.0
        %3339 = vmatpush1.msra.mxu0 0.0
        %3340 = vmatprep.subr.mxu0 0.0
        %3341 = vmatpush1.msra.mxu0 0.0
        %3342 = vmatprep.subr.mxu0 0.0
        %3343 = vmatpush1.msra.mxu0 0.0
        %3344 = vmatprep.subr.mxu0 0.0
        %3345 = vmatpush1.msra.mxu0 0.0
        %3346 = vmatprep.subr.mxu0 0.0
        %3347 = vmatpush1.msra.mxu0 0.0
        %3348 = vmatprep.subr.mxu0 0.0
        %3349 = vmatpush1.msra.mxu0 0.0
        %3350 = vmatprep.subr.mxu0 0.0
        %3351 = vmatpush1.msra.mxu0 0.0
        %3352 = vmatprep.subr.mxu0 0.0
        %3353 = vmatpush1.msra.mxu0 0.0
        %3354 = vmatprep.subr.mxu0 0.0
        %3355 = vmatpush1.msra.mxu0 0.0
        %3356 = vmatprep.subr.mxu0 0.0
        %3357 = vmatpush1.msra.mxu0 0.0
        %3358 = vmatprep.subr.mxu0 0.0
        %3359 = vmatpush1.msra.mxu0 0.0
        %3360 = vmatprep.subr.mxu0 0.0
        %3361 = vmatpush1.msra.mxu0 0.0
        %3362 = vmatprep.subr.mxu0 0.0
        %3363 = vmatpush1.msra.mxu0 0.0
        %3364 = vmatprep.subr.mxu0 0.0
        %3365 = vmatpush1.msra.mxu0 0.0
        %3366 = vmatprep.mubr.f32.mxu0 0.0
        %v3367 = vand.u32 %v3136, 4294901760
        %v3368 = vsub.f32 %v3136, %v3367
        %3369 = vmatmul.mubr.f32.gmra.mrb[0].mxu0 %v3368
        %v3370 = vpop.f32.mrb[0].mxu0
        %v3371 = vadd.f32 %v3294, %v3370
        %v3372 = vpop.f32.mrb[0].mxu0
        %v3373 = vadd.f32 %v3296, %v3372
        %3374 = vdwg.mxu0
        %v3375 = vand.u32 %v3131, 4294901760
        %3376 = vmatprep.subr.mxu0 %v3375
        %v3377 = vand.u32 %v3130, 4294901760
        %3378 = vmatpush1.msra.mxu0 %v3377
        %3379 = vmatprep.subr.mxu0 0.0
        %3380 = vmatpush1.msra.mxu0 0.0
        %3381 = vmatprep.subr.mxu0 0.0
        %3382 = vmatpush1.msra.mxu0 0.0
        %3383 = vmatprep.subr.mxu0 0.0
        %3384 = vmatpush1.msra.mxu0 0.0
        %3385 = vmatprep.subr.mxu0 0.0
        %3386 = vmatpush1.msra.mxu0 0.0
        %3387 = vmatprep.subr.mxu0 0.0
        %3388 = vmatpush1.msra.mxu0 0.0
        %3389 = vmatprep.subr.mxu0 0.0
        %3390 = vmatpush1.msra.mxu0 0.0
        %3391 = vmatprep.subr.mxu0 0.0
        %3392 = vmatpush1.msra.mxu0 0.0
        %3393 = vmatprep.subr.mxu0 0.0
        %3394 = vmatpush1.msra.mxu0 0.0
        %3395 = vmatprep.subr.mxu0 0.0
        %3396 = vmatpush1.msra.mxu0 0.0
        %3397 = vmatprep.subr.mxu0 0.0
        %3398 = vmatpush1.msra.mxu0 0.0
        %3399 = vmatprep.subr.mxu0 0.0
        %3400 = vmatpush1.msra.mxu0 0.0
        %3401 = vmatprep.subr.mxu0 0.0
        %3402 = vmatpush1.msra.mxu0 0.0
        %3403 = vmatprep.subr.mxu0 0.0
        %3404 = vmatpush1.msra.mxu0 0.0
        %3405 = vmatprep.subr.mxu0 0.0
        %3406 = vmatpush1.msra.mxu0 0.0
        %3407 = vmatprep.subr.mxu0 0.0
        %3408 = vmatpush1.msra.mxu0 0.0
        %3409 = vmatprep.subr.mxu0 0.0
        %3410 = vmatpush1.msra.mxu0 0.0
        %3411 = vmatprep.subr.mxu0 0.0
        %3412 = vmatpush1.msra.mxu0 0.0
        %3413 = vmatprep.subr.mxu0 0.0
        %3414 = vmatpush1.msra.mxu0 0.0
        %3415 = vmatprep.subr.mxu0 0.0
        %3416 = vmatpush1.msra.mxu0 0.0
        %3417 = vmatprep.subr.mxu0 0.0
        %3418 = vmatpush1.msra.mxu0 0.0
        %3419 = vmatprep.subr.mxu0 0.0
        %3420 = vmatpush1.msra.mxu0 0.0
        %3421 = vmatprep.subr.mxu0 0.0
        %3422 = vmatpush1.msra.mxu0 0.0
        %3423 = vmatprep.subr.mxu0 0.0
        %3424 = vmatpush1.msra.mxu0 0.0
        %3425 = vmatprep.subr.mxu0 0.0
        %3426 = vmatpush1.msra.mxu0 0.0
        %3427 = vmatprep.subr.mxu0 0.0
        %3428 = vmatpush1.msra.mxu0 0.0
        %3429 = vmatprep.subr.mxu0 0.0
        %3430 = vmatpush1.msra.mxu0 0.0
        %3431 = vmatprep.subr.mxu0 0.0
        %3432 = vmatpush1.msra.mxu0 0.0
        %3433 = vmatprep.subr.mxu0 0.0
        %3434 = vmatpush1.msra.mxu0 0.0
        %3435 = vmatprep.subr.mxu0 0.0
        %3436 = vmatpush1.msra.mxu0 0.0
        %3437 = vmatprep.subr.mxu0 0.0
        %3438 = vmatpush1.msra.mxu0 0.0
        %3439 = vmatprep.subr.mxu0 0.0
        %3440 = vmatpush1.msra.mxu0 0.0
        %3441 = vmatprep.mubr.f32.mxu0 0.0
        %v3442 = vand.u32 %v3136, 4294901760
        %v3443 = vsub.f32 %v3136, %v3442
        %v3444 = vand.u32 %v3443, 4294901760
        %3445 = vmatmul.mubr.f32.gmra.mrb[0].mxu0 %v3444
        %v3446 = vpop.f32.mrb[0].mxu0
        %v3447 = vadd.f32 %v3371, %v3446
        %v3448 = vpop.f32.mrb[0].mxu0
        %v3449 = vadd.f32 %v3373, %v3448
        %3450 = vdwg.mxu0
        %v3451 = vand.u32 %v3131, 4294901760
        %v3452 = vsub.f32 %v3131, %v3451
        %v3453 = vand.u32 %v3452, 4294901760
        %3454 = vmatprep.subr.mxu0 %v3453
        %v3455 = vand.u32 %v3130, 4294901760
        %v3456 = vsub.f32 %v3130, %v3455
        %v3457 = vand.u32 %v3456, 4294901760
        %3458 = vmatpush1.msra.mxu0 %v3457
        %3459 = vmatprep.subr.mxu0 0.0
        %3460 = vmatpush1.msra.mxu0 0.0
        %3461 = vmatprep.subr.mxu0 0.0
        %3462 = vmatpush1.msra.mxu0 0.0
        %3463 = vmatprep.subr.mxu0 0.0
        %3464 = vmatpush1.msra.mxu0 0.0
        %3465 = vmatprep.subr.mxu0 0.0
        %3466 = vmatpush1.msra.mxu0 0.0
        %3467 = vmatprep.subr.mxu0 0.0
        %3468 = vmatpush1.msra.mxu0 0.0
        %3469 = vmatprep.subr.mxu0 0.0
        %3470 = vmatpush1.msra.mxu0 0.0
        %3471 = vmatprep.subr.mxu0 0.0
        %3472 = vmatpush1.msra.mxu0 0.0
        %3473 = vmatprep.subr.mxu0 0.0
        %3474 = vmatpush1.msra.mxu0 0.0
        %3475 = vmatprep.subr.mxu0 0.0
        %3476 = vmatpush1.msra.mxu0 0.0
        %3477 = vmatprep.subr.mxu0 0.0
        %3478 = vmatpush1.msra.mxu0 0.0
        %3479 = vmatprep.subr.mxu0 0.0
        %3480 = vmatpush1.msra.mxu0 0.0
        %3481 = vmatprep.subr.mxu0 0.0
        %3482 = vmatpush1.msra.mxu0 0.0
        %3483 = vmatprep.subr.mxu0 0.0
        %3484 = vmatpush1.msra.mxu0 0.0
        %3485 = vmatprep.subr.mxu0 0.0
        %3486 = vmatpush1.msra.mxu0 0.0
        %3487 = vmatprep.subr.mxu0 0.0
        %3488 = vmatpush1.msra.mxu0 0.0
        %3489 = vmatprep.subr.mxu0 0.0
        %3490 = vmatpush1.msra.mxu0 0.0
        %3491 = vmatprep.subr.mxu0 0.0
        %3492 = vmatpush1.msra.mxu0 0.0
        %3493 = vmatprep.subr.mxu0 0.0
        %3494 = vmatpush1.msra.mxu0 0.0
        %3495 = vmatprep.subr.mxu0 0.0
        %3496 = vmatpush1.msra.mxu0 0.0
        %3497 = vmatprep.subr.mxu0 0.0
        %3498 = vmatpush1.msra.mxu0 0.0
        %3499 = vmatprep.subr.mxu0 0.0
        %3500 = vmatpush1.msra.mxu0 0.0
        %3501 = vmatprep.subr.mxu0 0.0
        %3502 = vmatpush1.msra.mxu0 0.0
        %3503 = vmatprep.subr.mxu0 0.0
        %3504 = vmatpush1.msra.mxu0 0.0
        %3505 = vmatprep.subr.mxu0 0.0
        %3506 = vmatpush1.msra.mxu0 0.0
        %3507 = vmatprep.subr.mxu0 0.0
        %3508 = vmatpush1.msra.mxu0 0.0
        %3509 = vmatprep.subr.mxu0 0.0
        %3510 = vmatpush1.msra.mxu0 0.0
        %3511 = vmatprep.subr.mxu0 0.0
        %3512 = vmatpush1.msra.mxu0 0.0
        %3513 = vmatprep.subr.mxu0 0.0
        %3514 = vmatpush1.msra.mxu0 0.0
        %3515 = vmatprep.subr.mxu0 0.0
        %3516 = vmatpush1.msra.mxu0 0.0
        %3517 = vmatprep.subr.mxu0 0.0
        %3518 = vmatpush1.msra.mxu0 0.0
        %3519 = vmatprep.subr.mxu0 0.0
        %3520 = vmatpush1.msra.mxu0 0.0
        %3521 = vmatprep.mubr.f32.mxu0 0.0
        %v3522 = vand.u32 %v3136, 4294901760
        %3523 = vmatmul.mubr.f32.gmra.mrb[0].mxu0 %v3522
        %v3524 = vpop.f32.mrb[0].mxu0
        %v3525 = vadd.f32 %v3447, %v3524
        %v3526 = vpop.f32.mrb[0].mxu0
        %v3527 = vadd.f32 %v3449, %v3526
        %3528 = vdwg.mxu0
        %v3529 = vand.u32 %v3131, 4294901760
        %3530 = vmatprep.subr.mxu0 %v3529
        %v3531 = vand.u32 %v3130, 4294901760
        %3532 = vmatpush1.msra.mxu0 %v3531
        %3533 = vmatprep.subr.mxu0 0.0
        %3534 = vmatpush1.msra.mxu0 0.0
        %3535 = vmatprep.subr.mxu0 0.0
        %3536 = vmatpush1.msra.mxu0 0.0
        %3537 = vmatprep.subr.mxu0 0.0
        %3538 = vmatpush1.msra.mxu0 0.0
        %3539 = vmatprep.subr.mxu0 0.0
        %3540 = vmatpush1.msra.mxu0 0.0
        %3541 = vmatprep.subr.mxu0 0.0
        %3542 = vmatpush1.msra.mxu0 0.0
        %3543 = vmatprep.subr.mxu0 0.0
        %3544 = vmatpush1.msra.mxu0 0.0
        %3545 = vmatprep.subr.mxu0 0.0
        %3546 = vmatpush1.msra.mxu0 0.0
        %3547 = vmatprep.subr.mxu0 0.0
        %3548 = vmatpush1.msra.mxu0 0.0
        %3549 = vmatprep.subr.mxu0 0.0
        %3550 = vmatpush1.msra.mxu0 0.0
        %3551 = vmatprep.subr.mxu0 0.0
        %3552 = vmatpush1.msra.mxu0 0.0
        %3553 = vmatprep.subr.mxu0 0.0
        %3554 = vmatpush1.msra.mxu0 0.0
        %3555 = vmatprep.subr.mxu0 0.0
        %3556 = vmatpush1.msra.mxu0 0.0
        %3557 = vmatprep.subr.mxu0 0.0
        %3558 = vmatpush1.msra.mxu0 0.0
        %3559 = vmatprep.subr.mxu0 0.0
        %3560 = vmatpush1.msra.mxu0 0.0
        %3561 = vmatprep.subr.mxu0 0.0
        %3562 = vmatpush1.msra.mxu0 0.0
        %3563 = vmatprep.subr.mxu0 0.0
        %3564 = vmatpush1.msra.mxu0 0.0
        %3565 = vmatprep.subr.mxu0 0.0
        %3566 = vmatpush1.msra.mxu0 0.0
        %3567 = vmatprep.subr.mxu0 0.0
        %3568 = vmatpush1.msra.mxu0 0.0
        %3569 = vmatprep.subr.mxu0 0.0
        %3570 = vmatpush1.msra.mxu0 0.0
        %3571 = vmatprep.subr.mxu0 0.0
        %3572 = vmatpush1.msra.mxu0 0.0
        %3573 = vmatprep.subr.mxu0 0.0
        %3574 = vmatpush1.msra.mxu0 0.0
        %3575 = vmatprep.subr.mxu0 0.0
        %3576 = vmatpush1.msra.mxu0 0.0
        %3577 = vmatprep.subr.mxu0 0.0
        %3578 = vmatpush1.msra.mxu0 0.0
        %3579 = vmatprep.subr.mxu0 0.0
        %3580 = vmatpush1.msra.mxu0 0.0
        %3581 = vmatprep.subr.mxu0 0.0
        %3582 = vmatpush1.msra.mxu0 0.0
        %3583 = vmatprep.subr.mxu0 0.0
        %3584 = vmatpush1.msra.mxu0 0.0
        %3585 = vmatprep.subr.mxu0 0.0
        %3586 = vmatpush1.msra.mxu0 0.0
        %3587 = vmatprep.subr.mxu0 0.0
        %3588 = vmatpush1.msra.mxu0 0.0
        %3589 = vmatprep.subr.mxu0 0.0
        %3590 = vmatpush1.msra.mxu0 0.0
        %3591 = vmatprep.subr.mxu0 0.0
        %3592 = vmatpush1.msra.mxu0 0.0
        %3593 = vmatprep.subr.mxu0 0.0
        %3594 = vmatpush1.msra.mxu0 0.0
        %3595 = vmatprep.mubr.f32.mxu0 0.0
        %v3596 = vand.u32 %v3136, 4294901760
        %3597 = vmatmul.mubr.f32.gmra.mrb[0].mxu0 %v3596
        %v3598 = vpop.f32.mrb[0].mxu0
        %v3599 = vadd.f32 %v3525, %v3598
        %v3600 = vpop.f32.mrb[0].mxu0
        %v3601 = vadd.f32 %v3527, %v3600
        %3602 = vdwg.mxu0
        %3603 = vmatprep.subr.mxu0 0.0
        %v3604 = vand.u32 %v3129, 4294901760
        %3605 = vmatpush1.msra.mxu0 %v3604
        %3606 = vmatprep.subr.mxu0 0.0
        %3607 = vmatpush1.msra.mxu0 0.0
        %3608 = vmatprep.subr.mxu0 0.0
        %3609 = vmatpush1.msra.mxu0 0.0
        %3610 = vmatprep.subr.mxu0 0.0
        %3611 = vmatpush1.msra.mxu0 0.0
        %3612 = vmatprep.subr.mxu0 0.0
        %3613 = vmatpush1.msra.mxu0 0.0
        %3614 = vmatprep.subr.mxu0 0.0
        %3615 = vmatpush1.msra.mxu0 0.0
        %3616 = vmatprep.subr.mxu0 0.0
        %3617 = vmatpush1.msra.mxu0 0.0
        %3618 = vmatprep.subr.mxu0 0.0
        %3619 = vmatpush1.msra.mxu0 0.0
        %3620 = vmatprep.subr.mxu0 0.0
        %3621 = vmatpush1.msra.mxu0 0.0
        %3622 = vmatprep.subr.mxu0 0.0
        %3623 = vmatpush1.msra.mxu0 0.0
        %3624 = vmatprep.subr.mxu0 0.0
        %3625 = vmatpush1.msra.mxu0 0.0
        %3626 = vmatprep.subr.mxu0 0.0
        %3627 = vmatpush1.msra.mxu0 0.0
        %3628 = vmatprep.subr.mxu0 0.0
        %3629 = vmatpush1.msra.mxu0 0.0
        %3630 = vmatprep.subr.mxu0 0.0
        %3631 = vmatpush1.msra.mxu0 0.0
        %3632 = vmatprep.subr.mxu0 0.0
        %3633 = vmatpush1.msra.mxu0 0.0
        %3634 = vmatprep.subr.mxu0 0.0
        %3635 = vmatpush1.msra.mxu0 0.0
        %3636 = vmatprep.subr.mxu0 0.0
        %3637 = vmatpush1.msra.mxu0 0.0
        %3638 = vmatprep.subr.mxu0 0.0
        %3639 = vmatpush1.msra.mxu0 0.0
        %3640 = vmatprep.subr.mxu0 0.0
        %3641 = vmatpush1.msra.mxu0 0.0
        %3642 = vmatprep.subr.mxu0 0.0
        %3643 = vmatpush1.msra.mxu0 0.0
        %3644 = vmatprep.subr.mxu0 0.0
        %3645 = vmatpush1.msra.mxu0 0.0
        %3646 = vmatprep.subr.mxu0 0.0
        %3647 = vmatpush1.msra.mxu0 0.0
        %3648 = vmatprep.subr.mxu0 0.0
        %3649 = vmatpush1.msra.mxu0 0.0
        %3650 = vmatprep.subr.mxu0 0.0
        %3651 = vmatpush1.msra.mxu0 0.0
        %3652 = vmatprep.subr.mxu0 0.0
        %3653 = vmatpush1.msra.mxu0 0.0
        %3654 = vmatprep.subr.mxu0 0.0
        %3655 = vmatpush1.msra.mxu0 0.0
        %3656 = vmatprep.subr.mxu0 0.0
        %3657 = vmatpush1.msra.mxu0 0.0
        %3658 = vmatprep.subr.mxu0 0.0
        %3659 = vmatpush1.msra.mxu0 0.0
        %3660 = vmatprep.subr.mxu0 0.0
        %3661 = vmatpush1.msra.mxu0 0.0
        %3662 = vmatprep.subr.mxu0 0.0
        %3663 = vmatpush1.msra.mxu0 0.0
        %3664 = vmatprep.subr.mxu0 0.0
        %3665 = vmatpush1.msra.mxu0 0.0
        %3666 = vmatprep.subr.mxu0 0.0
        %3667 = vmatpush1.msra.mxu0 0.0
        %3668 = vmatprep.mubr.f32.mxu0 0.0
        %v3669 = vand.u32 %v3136, 4294901760
        %v3670 = vsub.f32 %v3136, %v3669
        %v3671 = vand.u32 %v3670, 4294901760
        %v3672 = vsub.f32 %v3670, %v3671
        %v3673 = vand.u32 %v3672, 4294901760
        %3674 = vmatmul.mubr.f32.gmra.mrb[0].mxu0 %v3673
        %v3675 = vpop.f32.mrb[0].mxu0
        %v3676 = vadd.f32 0.0, %v3675
        %v3677 = vpop.f32.mrb[0].mxu0
        %3678 = vdwg.mxu0
        %3679 = vmatprep.subr.mxu0 0.0
        %v3680 = vand.u32 %v3129, 4294901760
        %v3681 = vsub.f32 %v3129, %v3680
        %v3682 = vand.u32 %v3681, 4294901760
        %v3683 = vsub.f32 %v3681, %v3682
        %v3684 = vand.u32 %v3683, 4294901760
        %3685 = vmatpush1.msra.mxu0 %v3684
        %3686 = vmatprep.subr.mxu0 0.0
        %3687 = vmatpush1.msra.mxu0 0.0
        %3688 = vmatprep.subr.mxu0 0.0
        %3689 = vmatpush1.msra.mxu0 0.0
        %3690 = vmatprep.subr.mxu0 0.0
        %3691 = vmatpush1.msra.mxu0 0.0
        %3692 = vmatprep.subr.mxu0 0.0
        %3693 = vmatpush1.msra.mxu0 0.0
        %3694 = vmatprep.subr.mxu0 0.0
        %3695 = vmatpush1.msra.mxu0 0.0
        %3696 = vmatprep.subr.mxu0 0.0
        %3697 = vmatpush1.msra.mxu0 0.0
        %3698 = vmatprep.subr.mxu0 0.0
        %3699 = vmatpush1.msra.mxu0 0.0
        %3700 = vmatprep.subr.mxu0 0.0
        %3701 = vmatpush1.msra.mxu0 0.0
        %3702 = vmatprep.subr.mxu0 0.0
        %3703 = vmatpush1.msra.mxu0 0.0
        %3704 = vmatprep.subr.mxu0 0.0
        %3705 = vmatpush1.msra.mxu0 0.0
        %3706 = vmatprep.subr.mxu0 0.0
        %3707 = vmatpush1.msra.mxu0 0.0
        %3708 = vmatprep.subr.mxu0 0.0
        %3709 = vmatpush1.msra.mxu0 0.0
        %3710 = vmatprep.subr.mxu0 0.0
        %3711 = vmatpush1.msra.mxu0 0.0
        %3712 = vmatprep.subr.mxu0 0.0
        %3713 = vmatpush1.msra.mxu0 0.0
        %3714 = vmatprep.subr.mxu0 0.0
        %3715 = vmatpush1.msra.mxu0 0.0
        %3716 = vmatprep.subr.mxu0 0.0
        %3717 = vmatpush1.msra.mxu0 0.0
        %3718 = vmatprep.subr.mxu0 0.0
        %3719 = vmatpush1.msra.mxu0 0.0
        %3720 = vmatprep.subr.mxu0 0.0
        %3721 = vmatpush1.msra.mxu0 0.0
        %3722 = vmatprep.subr.mxu0 0.0
        %3723 = vmatpush1.msra.mxu0 0.0
        %3724 = vmatprep.subr.mxu0 0.0
        %3725 = vmatpush1.msra.mxu0 0.0
        %3726 = vmatprep.subr.mxu0 0.0
        %3727 = vmatpush1.msra.mxu0 0.0
        %3728 = vmatprep.subr.mxu0 0.0
        %3729 = vmatpush1.msra.mxu0 0.0
        %3730 = vmatprep.subr.mxu0 0.0
        %3731 = vmatpush1.msra.mxu0 0.0
        %3732 = vmatprep.subr.mxu0 0.0
        %3733 = vmatpush1.msra.mxu0 0.0
        %3734 = vmatprep.subr.mxu0 0.0
        %3735 = vmatpush1.msra.mxu0 0.0
        %3736 = vmatprep.subr.mxu0 0.0
        %3737 = vmatpush1.msra.mxu0 0.0
        %3738 = vmatprep.subr.mxu0 0.0
        %3739 = vmatpush1.msra.mxu0 0.0
        %3740 = vmatprep.subr.mxu0 0.0
        %3741 = vmatpush1.msra.mxu0 0.0
        %3742 = vmatprep.subr.mxu0 0.0
        %3743 = vmatpush1.msra.mxu0 0.0
        %3744 = vmatprep.subr.mxu0 0.0
        %3745 = vmatpush1.msra.mxu0 0.0
        %3746 = vmatprep.subr.mxu0 0.0
        %3747 = vmatpush1.msra.mxu0 0.0
        %3748 = vmatprep.mubr.f32.mxu0 0.0
        %v3749 = vand.u32 %v3136, 4294901760
        %3750 = vmatmul.mubr.f32.gmra.mrb[0].mxu0 %v3749
        %v3751 = vpop.f32.mrb[0].mxu0
        %v3752 = vadd.f32 %v3676, %v3751
        %v3753 = vpop.f32.mrb[0].mxu0
        %3754 = vdwg.mxu0
        %3755 = vmatprep.subr.mxu0 0.0
        %v3756 = vand.u32 %v3129, 4294901760
        %v3757 = vsub.f32 %v3129, %v3756
        %3758 = vmatpush1.msra.mxu0 %v3757
        %3759 = vmatprep.subr.mxu0 0.0
        %3760 = vmatpush1.msra.mxu0 0.0
        %3761 = vmatprep.subr.mxu0 0.0
        %3762 = vmatpush1.msra.mxu0 0.0
        %3763 = vmatprep.subr.mxu0 0.0
        %3764 = vmatpush1.msra.mxu0 0.0
        %3765 = vmatprep.subr.mxu0 0.0
        %3766 = vmatpush1.msra.mxu0 0.0
        %3767 = vmatprep.subr.mxu0 0.0
        %3768 = vmatpush1.msra.mxu0 0.0
        %3769 = vmatprep.subr.mxu0 0.0
        %3770 = vmatpush1.msra.mxu0 0.0
        %3771 = vmatprep.subr.mxu0 0.0
        %3772 = vmatpush1.msra.mxu0 0.0
        %3773 = vmatprep.subr.mxu0 0.0
        %3774 = vmatpush1.msra.mxu0 0.0
        %3775 = vmatprep.subr.mxu0 0.0
        %3776 = vmatpush1.msra.mxu0 0.0
        %3777 = vmatprep.subr.mxu0 0.0
        %3778 = vmatpush1.msra.mxu0 0.0
        %3779 = vmatprep.subr.mxu0 0.0
        %3780 = vmatpush1.msra.mxu0 0.0
        %3781 = vmatprep.subr.mxu0 0.0
        %3782 = vmatpush1.msra.mxu0 0.0
        %3783 = vmatprep.subr.mxu0 0.0
        %3784 = vmatpush1.msra.mxu0 0.0
        %3785 = vmatprep.subr.mxu0 0.0
        %3786 = vmatpush1.msra.mxu0 0.0
        %3787 = vmatprep.subr.mxu0 0.0
        %3788 = vmatpush1.msra.mxu0 0.0
        %3789 = vmatprep.subr.mxu0 0.0
        %3790 = vmatpush1.msra.mxu0 0.0
        %3791 = vmatprep.subr.mxu0 0.0
        %3792 = vmatpush1.msra.mxu0 0.0
        %3793 = vmatprep.subr.mxu0 0.0
        %3794 = vmatpush1.msra.mxu0 0.0
        %3795 = vmatprep.subr.mxu0 0.0
        %3796 = vmatpush1.msra.mxu0 0.0
        %3797 = vmatprep.subr.mxu0 0.0
        %3798 = vmatpush1.msra.mxu0 0.0
        %3799 = vmatprep.subr.mxu0 0.0
        %3800 = vmatpush1.msra.mxu0 0.0
        %3801 = vmatprep.subr.mxu0 0.0
        %3802 = vmatpush1.msra.mxu0 0.0
        %3803 = vmatprep.subr.mxu0 0.0
        %3804 = vmatpush1.msra.mxu0 0.0
        %3805 = vmatprep.subr.mxu0 0.0
        %3806 = vmatpush1.msra.mxu0 0.0
        %3807 = vmatprep.subr.mxu0 0.0
        %3808 = vmatpush1.msra.mxu0 0.0
        %3809 = vmatprep.subr.mxu0 0.0
        %3810 = vmatpush1.msra.mxu0 0.0
        %3811 = vmatprep.subr.mxu0 0.0
        %3812 = vmatpush1.msra.mxu0 0.0
        %3813 = vmatprep.subr.mxu0 0.0
        %3814 = vmatpush1.msra.mxu0 0.0
        %3815 = vmatprep.subr.mxu0 0.0
        %3816 = vmatpush1.msra.mxu0 0.0
        %3817 = vmatprep.subr.mxu0 0.0
        %3818 = vmatpush1.msra.mxu0 0.0
        %3819 = vmatprep.subr.mxu0 0.0
        %3820 = vmatpush1.msra.mxu0 0.0
        %3821 = vmatprep.mubr.f32.mxu0 0.0
        %v3822 = vand.u32 %v3136, 4294901760
        %v3823 = vsub.f32 %v3136, %v3822
        %3824 = vmatmul.mubr.f32.gmra.mrb[0].mxu0 %v3823
        %v3825 = vpop.f32.mrb[0].mxu0
        %v3826 = vadd.f32 %v3752, %v3825
        %v3827 = vpop.f32.mrb[0].mxu0
        %3828 = vdwg.mxu0
        %3829 = vmatprep.subr.mxu0 0.0
        %v3830 = vand.u32 %v3129, 4294901760
        %3831 = vmatpush1.msra.mxu0 %v3830
        %3832 = vmatprep.subr.mxu0 0.0
        %3833 = vmatpush1.msra.mxu0 0.0
        %3834 = vmatprep.subr.mxu0 0.0
        %3835 = vmatpush1.msra.mxu0 0.0
        %3836 = vmatprep.subr.mxu0 0.0
        %3837 = vmatpush1.msra.mxu0 0.0
        %3838 = vmatprep.subr.mxu0 0.0
        %3839 = vmatpush1.msra.mxu0 0.0
        %3840 = vmatprep.subr.mxu0 0.0
        %3841 = vmatpush1.msra.mxu0 0.0
        %3842 = vmatprep.subr.mxu0 0.0
        %3843 = vmatpush1.msra.mxu0 0.0
        %3844 = vmatprep.subr.mxu0 0.0
        %3845 = vmatpush1.msra.mxu0 0.0
        %3846 = vmatprep.subr.mxu0 0.0
        %3847 = vmatpush1.msra.mxu0 0.0
        %3848 = vmatprep.subr.mxu0 0.0
        %3849 = vmatpush1.msra.mxu0 0.0
        %3850 = vmatprep.subr.mxu0 0.0
        %3851 = vmatpush1.msra.mxu0 0.0
        %3852 = vmatprep.subr.mxu0 0.0
        %3853 = vmatpush1.msra.mxu0 0.0
        %3854 = vmatprep.subr.mxu0 0.0
        %3855 = vmatpush1.msra.mxu0 0.0
        %3856 = vmatprep.subr.mxu0 0.0
        %3857 = vmatpush1.msra.mxu0 0.0
        %3858 = vmatprep.subr.mxu0 0.0
        %3859 = vmatpush1.msra.mxu0 0.0
        %3860 = vmatprep.subr.mxu0 0.0
        %3861 = vmatpush1.msra.mxu0 0.0
        %3862 = vmatprep.subr.mxu0 0.0
        %3863 = vmatpush1.msra.mxu0 0.0
        %3864 = vmatprep.subr.mxu0 0.0
        %3865 = vmatpush1.msra.mxu0 0.0
        %3866 = vmatprep.subr.mxu0 0.0
        %3867 = vmatpush1.msra.mxu0 0.0
        %3868 = vmatprep.subr.mxu0 0.0
        %3869 = vmatpush1.msra.mxu0 0.0
        %3870 = vmatprep.subr.mxu0 0.0
        %3871 = vmatpush1.msra.mxu0 0.0
        %3872 = vmatprep.subr.mxu0 0.0
        %3873 = vmatpush1.msra.mxu0 0.0
        %3874 = vmatprep.subr.mxu0 0.0
        %3875 = vmatpush1.msra.mxu0 0.0
        %3876 = vmatprep.subr.mxu0 0.0
        %3877 = vmatpush1.msra.mxu0 0.0
        %3878 = vmatprep.subr.mxu0 0.0
        %3879 = vmatpush1.msra.mxu0 0.0
        %3880 = vmatprep.subr.mxu0 0.0
        %3881 = vmatpush1.msra.mxu0 0.0
        %3882 = vmatprep.subr.mxu0 0.0
        %3883 = vmatpush1.msra.mxu0 0.0
        %3884 = vmatprep.subr.mxu0 0.0
        %3885 = vmatpush1.msra.mxu0 0.0
        %3886 = vmatprep.subr.mxu0 0.0
        %3887 = vmatpush1.msra.mxu0 0.0
        %3888 = vmatprep.subr.mxu0 0.0
        %3889 = vmatpush1.msra.mxu0 0.0
        %3890 = vmatprep.subr.mxu0 0.0
        %3891 = vmatpush1.msra.mxu0 0.0
        %3892 = vmatprep.subr.mxu0 0.0
        %3893 = vmatpush1.msra.mxu0 0.0
        %3894 = vmatprep.mubr.f32.mxu0 0.0
        %v3895 = vand.u32 %v3136, 4294901760
        %v3896 = vsub.f32 %v3136, %v3895
        %v3897 = vand.u32 %v3896, 4294901760
        %3898 = vmatmul.mubr.f32.gmra.mrb[0].mxu0 %v3897
        %v3899 = vpop.f32.mrb[0].mxu0
        %v3900 = vadd.f32 %v3826, %v3899
        %v3901 = vpop.f32.mrb[0].mxu0
        %3902 = vdwg.mxu0
        %3903 = vmatprep.subr.mxu0 0.0
        %v3904 = vand.u32 %v3129, 4294901760
        %v3905 = vsub.f32 %v3129, %v3904
        %v3906 = vand.u32 %v3905, 4294901760
        %3907 = vmatpush1.msra.mxu0 %v3906
        %3908 = vmatprep.subr.mxu0 0.0
        %3909 = vmatpush1.msra.mxu0 0.0
        %3910 = vmatprep.subr.mxu0 0.0
        %3911 = vmatpush1.msra.mxu0 0.0
        %3912 = vmatprep.subr.mxu0 0.0
        %3913 = vmatpush1.msra.mxu0 0.0
        %3914 = vmatprep.subr.mxu0 0.0
        %3915 = vmatpush1.msra.mxu0 0.0
        %3916 = vmatprep.subr.mxu0 0.0
        %3917 = vmatpush1.msra.mxu0 0.0
        %3918 = vmatprep.subr.mxu0 0.0
        %3919 = vmatpush1.msra.mxu0 0.0
        %3920 = vmatprep.subr.mxu0 0.0
        %3921 = vmatpush1.msra.mxu0 0.0
        %3922 = vmatprep.subr.mxu0 0.0
        %3923 = vmatpush1.msra.mxu0 0.0
        %3924 = vmatprep.subr.mxu0 0.0
        %3925 = vmatpush1.msra.mxu0 0.0
        %3926 = vmatprep.subr.mxu0 0.0
        %3927 = vmatpush1.msra.mxu0 0.0
        %3928 = vmatprep.subr.mxu0 0.0
        %3929 = vmatpush1.msra.mxu0 0.0
        %3930 = vmatprep.subr.mxu0 0.0
        %3931 = vmatpush1.msra.mxu0 0.0
        %3932 = vmatprep.subr.mxu0 0.0
        %3933 = vmatpush1.msra.mxu0 0.0
        %3934 = vmatprep.subr.mxu0 0.0
        %3935 = vmatpush1.msra.mxu0 0.0
        %3936 = vmatprep.subr.mxu0 0.0
        %3937 = vmatpush1.msra.mxu0 0.0
        %3938 = vmatprep.subr.mxu0 0.0
        %3939 = vmatpush1.msra.mxu0 0.0
        %3940 = vmatprep.subr.mxu0 0.0
        %3941 = vmatpush1.msra.mxu0 0.0
        %3942 = vmatprep.subr.mxu0 0.0
        %3943 = vmatpush1.msra.mxu0 0.0
        %3944 = vmatprep.subr.mxu0 0.0
        %3945 = vmatpush1.msra.mxu0 0.0
        %3946 = vmatprep.subr.mxu0 0.0
        %3947 = vmatpush1.msra.mxu0 0.0
        %3948 = vmatprep.subr.mxu0 0.0
        %3949 = vmatpush1.msra.mxu0 0.0
        %3950 = vmatprep.subr.mxu0 0.0
        %3951 = vmatpush1.msra.mxu0 0.0
        %3952 = vmatprep.subr.mxu0 0.0
        %3953 = vmatpush1.msra.mxu0 0.0
        %3954 = vmatprep.subr.mxu0 0.0
        %3955 = vmatpush1.msra.mxu0 0.0
        %3956 = vmatprep.subr.mxu0 0.0
        %3957 = vmatpush1.msra.mxu0 0.0
        %3958 = vmatprep.subr.mxu0 0.0
        %3959 = vmatpush1.msra.mxu0 0.0
        %3960 = vmatprep.subr.mxu0 0.0
        %3961 = vmatpush1.msra.mxu0 0.0
        %3962 = vmatprep.subr.mxu0 0.0
        %3963 = vmatpush1.msra.mxu0 0.0
        %3964 = vmatprep.subr.mxu0 0.0
        %3965 = vmatpush1.msra.mxu0 0.0
        %3966 = vmatprep.subr.mxu0 0.0
        %3967 = vmatpush1.msra.mxu0 0.0
        %3968 = vmatprep.subr.mxu0 0.0
        %3969 = vmatpush1.msra.mxu0 0.0
        %3970 = vmatprep.mubr.f32.mxu0 0.0
        %v3971 = vand.u32 %v3136, 4294901760
        %3972 = vmatmul.mubr.f32.gmra.mrb[0].mxu0 %v3971
        %v3973 = vpop.f32.mrb[0].mxu0
        %v3974 = vadd.f32 %v3900, %v3973
        %v3975 = vpop.f32.mrb[0].mxu0
        %3976 = vdwg.mxu0
        %3977 = vmatprep.subr.mxu0 0.0
        %v3978 = vand.u32 %v3129, 4294901760
        %3979 = vmatpush1.msra.mxu0 %v3978
        %3980 = vmatprep.subr.mxu0 0.0
        %3981 = vmatpush1.msra.mxu0 0.0
        %3982 = vmatprep.subr.mxu0 0.0
        %3983 = vmatpush1.msra.mxu0 0.0
        %3984 = vmatprep.subr.mxu0 0.0
        %3985 = vmatpush1.msra.mxu0 0.0
        %3986 = vmatprep.subr.mxu0 0.0
        %3987 = vmatpush1.msra.mxu0 0.0
        %3988 = vmatprep.subr.mxu0 0.0
        %3989 = vmatpush1.msra.mxu0 0.0
        %3990 = vmatprep.subr.mxu0 0.0
        %3991 = vmatpush1.msra.mxu0 0.0
        %3992 = vmatprep.subr.mxu0 0.0
        %3993 = vmatpush1.msra.mxu0 0.0
        %3994 = vmatprep.subr.mxu0 0.0
        %3995 = vmatpush1.msra.mxu0 0.0
        %3996 = vmatprep.subr.mxu0 0.0
        %3997 = vmatpush1.msra.mxu0 0.0
        %3998 = vmatprep.subr.mxu0 0.0
        %3999 = vmatpush1.msra.mxu0 0.0
        %4000 = vmatprep.subr.mxu0 0.0
        %4001 = vmatpush1.msra.mxu0 0.0
        %4002 = vmatprep.subr.mxu0 0.0
        %4003 = vmatpush1.msra.mxu0 0.0
        %4004 = vmatprep.subr.mxu0 0.0
        %4005 = vmatpush1.msra.mxu0 0.0
        %4006 = vmatprep.subr.mxu0 0.0
        %4007 = vmatpush1.msra.mxu0 0.0
        %4008 = vmatprep.subr.mxu0 0.0
        %4009 = vmatpush1.msra.mxu0 0.0
        %4010 = vmatprep.subr.mxu0 0.0
        %4011 = vmatpush1.msra.mxu0 0.0
        %4012 = vmatprep.subr.mxu0 0.0
        %4013 = vmatpush1.msra.mxu0 0.0
        %4014 = vmatprep.subr.mxu0 0.0
        %4015 = vmatpush1.msra.mxu0 0.0
        %4016 = vmatprep.subr.mxu0 0.0
        %4017 = vmatpush1.msra.mxu0 0.0
        %4018 = vmatprep.subr.mxu0 0.0
        %4019 = vmatpush1.msra.mxu0 0.0
        %4020 = vmatprep.subr.mxu0 0.0
        %4021 = vmatpush1.msra.mxu0 0.0
        %4022 = vmatprep.subr.mxu0 0.0
        %4023 = vmatpush1.msra.mxu0 0.0
        %4024 = vmatprep.subr.mxu0 0.0
        %4025 = vmatpush1.msra.mxu0 0.0
        %4026 = vmatprep.subr.mxu0 0.0
        %4027 = vmatpush1.msra.mxu0 0.0
        %4028 = vmatprep.subr.mxu0 0.0
        %4029 = vmatpush1.msra.mxu0 0.0
        %4030 = vmatprep.subr.mxu0 0.0
        %4031 = vmatpush1.msra.mxu0 0.0
        %4032 = vmatprep.subr.mxu0 0.0
        %4033 = vmatpush1.msra.mxu0 0.0
        %4034 = vmatprep.subr.mxu0 0.0
        %4035 = vmatpush1.msra.mxu0 0.0
        %4036 = vmatprep.subr.mxu0 0.0
        %4037 = vmatpush1.msra.mxu0 0.0
        %4038 = vmatprep.subr.mxu0 0.0
        %4039 = vmatpush1.msra.mxu0 0.0
        %4040 = vmatprep.subr.mxu0 0.0
        %4041 = vmatpush1.msra.mxu0 0.0
        %4042 = vmatprep.mubr.f32.mxu0 0.0
        %v4043 = vand.u32 %v3136, 4294901760
        %4044 = vmatmul.mubr.f32.gmra.mrb[0].mxu0 %v4043
        %v4045 = vpop.f32.mrb[0].mxu0
        %v4046 = vadd.f32 %v3974, %v4045
        %v4047 = vpop.f32.mrb[0].mxu0
        %4048 = vdwg.mxu0
        %v4049 = vsel %vm3135, %v3117, 0
        %v4051 = vand.u32 %v3115, 4294901760
        %4052 = vmatprep.subr.mxu0 %v4051
        %v4053 = vand.u32 %v3114, 4294901760
        %4054 = vmatpush1.msra.mxu0 %v4053
        %4055 = vmatprep.subr.mxu0 0.0
        %4056 = vmatpush1.msra.mxu0 0.0
        %4057 = vmatprep.subr.mxu0 0.0
        %4058 = vmatpush1.msra.mxu0 0.0
        %4059 = vmatprep.subr.mxu0 0.0
        %4060 = vmatpush1.msra.mxu0 0.0
        %4061 = vmatprep.subr.mxu0 0.0
        %4062 = vmatpush1.msra.mxu0 0.0
        %4063 = vmatprep.subr.mxu0 0.0
        %4064 = vmatpush1.msra.mxu0 0.0
        %4065 = vmatprep.subr.mxu0 0.0
        %4066 = vmatpush1.msra.mxu0 0.0
        %4067 = vmatprep.subr.mxu0 0.0
        %4068 = vmatpush1.msra.mxu0 0.0
        %4069 = vmatprep.subr.mxu0 0.0
        %4070 = vmatpush1.msra.mxu0 0.0
        %4071 = vmatprep.subr.mxu0 0.0
        %4072 = vmatpush1.msra.mxu0 0.0
        %4073 = vmatprep.subr.mxu0 0.0
        %4074 = vmatpush1.msra.mxu0 0.0
        %4075 = vmatprep.subr.mxu0 0.0
        %4076 = vmatpush1.msra.mxu0 0.0
        %4077 = vmatprep.subr.mxu0 0.0
        %4078 = vmatpush1.msra.mxu0 0.0
        %4079 = vmatprep.subr.mxu0 0.0
        %4080 = vmatpush1.msra.mxu0 0.0
        %4081 = vmatprep.subr.mxu0 0.0
        %4082 = vmatpush1.msra.mxu0 0.0
        %4083 = vmatprep.subr.mxu0 0.0
        %4084 = vmatpush1.msra.mxu0 0.0
        %4085 = vmatprep.subr.mxu0 0.0
        %4086 = vmatpush1.msra.mxu0 0.0
        %4087 = vmatprep.subr.mxu0 0.0
        %4088 = vmatpush1.msra.mxu0 0.0
        %4089 = vmatprep.subr.mxu0 0.0
        %4090 = vmatpush1.msra.mxu0 0.0
        %4091 = vmatprep.subr.mxu0 0.0
        %4092 = vmatpush1.msra.mxu0 0.0
        %4093 = vmatprep.subr.mxu0 0.0
        %4094 = vmatpush1.msra.mxu0 0.0
        %4095 = vmatprep.subr.mxu0 0.0
        %4096 = vmatpush1.msra.mxu0 0.0
        %4097 = vmatprep.subr.mxu0 0.0
        %4098 = vmatpush1.msra.mxu0 0.0
        %4099 = vmatprep.subr.mxu0 0.0
        %4100 = vmatpush1.msra.mxu0 0.0
        %4101 = vmatprep.subr.mxu0 0.0
        %4102 = vmatpush1.msra.mxu0 0.0
        %4103 = vmatprep.subr.mxu0 0.0
        %4104 = vmatpush1.msra.mxu0 0.0
        %4105 = vmatprep.subr.mxu0 0.0
        %4106 = vmatpush1.msra.mxu0 0.0
        %4107 = vmatprep.subr.mxu0 0.0
        %4108 = vmatpush1.msra.mxu0 0.0
        %4109 = vmatprep.subr.mxu0 0.0
        %4110 = vmatpush1.msra.mxu0 0.0
        %4111 = vmatprep.subr.mxu0 0.0
        %4112 = vmatpush1.msra.mxu0 0.0
        %4113 = vmatprep.subr.mxu0 0.0
        %4114 = vmatpush1.msra.mxu0 0.0
        %4115 = vmatprep.subr.mxu0 0.0
        %4116 = vmatpush1.msra.mxu0 0.0
        %4117 = vmatprep.mubr.f32.mxu0 0.0
        %v4118 = vand.u32 %v4049, 4294901760
        %v4119 = vsub.f32 %v4049, %v4118
        %v4120 = vand.u32 %v4119, 4294901760
        %v4121 = vsub.f32 %v4119, %v4120
        %v4122 = vand.u32 %v4121, 4294901760
        %4123 = vmatmul.mubr.f32.gmra.mrb[0].mxu0 %v4122
        %v4124 = vpop.f32.mrb[0].mxu0
        %v4125 = vadd.f32 %v3599, %v4124
        %v4126 = vpop.f32.mrb[0].mxu0
        %v4127 = vadd.f32 %v3601, %v4126
        %4128 = vdwg.mxu0
        %v4129 = vand.u32 %v3115, 4294901760
        %v4130 = vsub.f32 %v3115, %v4129
        %v4131 = vand.u32 %v4130, 4294901760
        %v4132 = vsub.f32 %v4130, %v4131
        %v4133 = vand.u32 %v4132, 4294901760
        %4134 = vmatprep.subr.mxu0 %v4133
        %v4135 = vand.u32 %v3114, 4294901760
        %v4136 = vsub.f32 %v3114, %v4135
        %v4137 = vand.u32 %v4136, 4294901760
        %v4138 = vsub.f32 %v4136, %v4137
        %v4139 = vand.u32 %v4138, 4294901760
        %4140 = vmatpush1.msra.mxu0 %v4139
        %4141 = vmatprep.subr.mxu0 0.0
        %4142 = vmatpush1.msra.mxu0 0.0
        %4143 = vmatprep.subr.mxu0 0.0
        %4144 = vmatpush1.msra.mxu0 0.0
        %4145 = vmatprep.subr.mxu0 0.0
        %4146 = vmatpush1.msra.mxu0 0.0
        %4147 = vmatprep.subr.mxu0 0.0
        %4148 = vmatpush1.msra.mxu0 0.0
        %4149 = vmatprep.subr.mxu0 0.0
        %4150 = vmatpush1.msra.mxu0 0.0
        %4151 = vmatprep.subr.mxu0 0.0
        %4152 = vmatpush1.msra.mxu0 0.0
        %4153 = vmatprep.subr.mxu0 0.0
        %4154 = vmatpush1.msra.mxu0 0.0
        %4155 = vmatprep.subr.mxu0 0.0
        %4156 = vmatpush1.msra.mxu0 0.0
        %4157 = vmatprep.subr.mxu0 0.0
        %4158 = vmatpush1.msra.mxu0 0.0
        %4159 = vmatprep.subr.mxu0 0.0
        %4160 = vmatpush1.msra.mxu0 0.0
        %4161 = vmatprep.subr.mxu0 0.0
        %4162 = vmatpush1.msra.mxu0 0.0
        %4163 = vmatprep.subr.mxu0 0.0
        %4164 = vmatpush1.msra.mxu0 0.0
        %4165 = vmatprep.subr.mxu0 0.0
        %4166 = vmatpush1.msra.mxu0 0.0
        %4167 = vmatprep.subr.mxu0 0.0
        %4168 = vmatpush1.msra.mxu0 0.0
        %4169 = vmatprep.subr.mxu0 0.0
        %4170 = vmatpush1.msra.mxu0 0.0
        %4171 = vmatprep.subr.mxu0 0.0
        %4172 = vmatpush1.msra.mxu0 0.0
        %4173 = vmatprep.subr.mxu0 0.0
        %4174 = vmatpush1.msra.mxu0 0.0
        %4175 = vmatprep.subr.mxu0 0.0
        %4176 = vmatpush1.msra.mxu0 0.0
        %4177 = vmatprep.subr.mxu0 0.0
        %4178 = vmatpush1.msra.mxu0 0.0
        %4179 = vmatprep.subr.mxu0 0.0
        %4180 = vmatpush1.msra.mxu0 0.0
        %4181 = vmatprep.subr.mxu0 0.0
        %4182 = vmatpush1.msra.mxu0 0.0
        %4183 = vmatprep.subr.mxu0 0.0
        %4184 = vmatpush1.msra.mxu0 0.0
        %4185 = vmatprep.subr.mxu0 0.0
        %4186 = vmatpush1.msra.mxu0 0.0
        %4187 = vmatprep.subr.mxu0 0.0
        %4188 = vmatpush1.msra.mxu0 0.0
        %4189 = vmatprep.subr.mxu0 0.0
        %4190 = vmatpush1.msra.mxu0 0.0
        %4191 = vmatprep.subr.mxu0 0.0
        %4192 = vmatpush1.msra.mxu0 0.0
        %4193 = vmatprep.subr.mxu0 0.0
        %4194 = vmatpush1.msra.mxu0 0.0
        %4195 = vmatprep.subr.mxu0 0.0
        %4196 = vmatpush1.msra.mxu0 0.0
        %4197 = vmatprep.subr.mxu0 0.0
        %4198 = vmatpush1.msra.mxu0 0.0
        %4199 = vmatprep.subr.mxu0 0.0
        %4200 = vmatpush1.msra.mxu0 0.0
        %4201 = vmatprep.subr.mxu0 0.0
        %4202 = vmatpush1.msra.mxu0 0.0
        %4203 = vmatprep.mubr.f32.mxu0 0.0
        %v4204 = vand.u32 %v4049, 4294901760
        %4205 = vmatmul.mubr.f32.gmra.mrb[0].mxu0 %v4204
        %v4206 = vpop.f32.mrb[0].mxu0
        %v4207 = vadd.f32 %v4125, %v4206
        %v4208 = vpop.f32.mrb[0].mxu0
        %v4209 = vadd.f32 %v4127, %v4208
        %4210 = vdwg.mxu0
        %v4211 = vand.u32 %v3115, 4294901760
        %v4212 = vsub.f32 %v3115, %v4211
        %4213 = vmatprep.subr.mxu0 %v4212
        %v4214 = vand.u32 %v3114, 4294901760
        %v4215 = vsub.f32 %v3114, %v4214
        %4216 = vmatpush1.msra.mxu0 %v4215
        %4217 = vmatprep.subr.mxu0 0.0
        %4218 = vmatpush1.msra.mxu0 0.0
        %4219 = vmatprep.subr.mxu0 0.0
        %4220 = vmatpush1.msra.mxu0 0.0
        %4221 = vmatprep.subr.mxu0 0.0
        %4222 = vmatpush1.msra.mxu0 0.0
        %4223 = vmatprep.subr.mxu0 0.0
        %4224 = vmatpush1.msra.mxu0 0.0
        %4225 = vmatprep.subr.mxu0 0.0
        %4226 = vmatpush1.msra.mxu0 0.0
        %4227 = vmatprep.subr.mxu0 0.0
        %4228 = vmatpush1.msra.mxu0 0.0
        %4229 = vmatprep.subr.mxu0 0.0
        %4230 = vmatpush1.msra.mxu0 0.0
        %4231 = vmatprep.subr.mxu0 0.0
        %4232 = vmatpush1.msra.mxu0 0.0
        %4233 = vmatprep.subr.mxu0 0.0
        %4234 = vmatpush1.msra.mxu0 0.0
        %4235 = vmatprep.subr.mxu0 0.0
        %4236 = vmatpush1.msra.mxu0 0.0
        %4237 = vmatprep.subr.mxu0 0.0
        %4238 = vmatpush1.msra.mxu0 0.0
        %4239 = vmatprep.subr.mxu0 0.0
        %4240 = vmatpush1.msra.mxu0 0.0
        %4241 = vmatprep.subr.mxu0 0.0
        %4242 = vmatpush1.msra.mxu0 0.0
        %4243 = vmatprep.subr.mxu0 0.0
        %4244 = vmatpush1.msra.mxu0 0.0
        %4245 = vmatprep.subr.mxu0 0.0
        %4246 = vmatpush1.msra.mxu0 0.0
        %4247 = vmatprep.subr.mxu0 0.0
        %4248 = vmatpush1.msra.mxu0 0.0
        %4249 = vmatprep.subr.mxu0 0.0
        %4250 = vmatpush1.msra.mxu0 0.0
        %4251 = vmatprep.subr.mxu0 0.0
        %4252 = vmatpush1.msra.mxu0 0.0
        %4253 = vmatprep.subr.mxu0 0.0
        %4254 = vmatpush1.msra.mxu0 0.0
        %4255 = vmatprep.subr.mxu0 0.0
        %4256 = vmatpush1.msra.mxu0 0.0
        %4257 = vmatprep.subr.mxu0 0.0
        %4258 = vmatpush1.msra.mxu0 0.0
        %4259 = vmatprep.subr.mxu0 0.0
        %4260 = vmatpush1.msra.mxu0 0.0
        %4261 = vmatprep.subr.mxu0 0.0
        %4262 = vmatpush1.msra.mxu0 0.0
        %4263 = vmatprep.subr.mxu0 0.0
        %4264 = vmatpush1.msra.mxu0 0.0
        %4265 = vmatprep.subr.mxu0 0.0
        %4266 = vmatpush1.msra.mxu0 0.0
        %4267 = vmatprep.subr.mxu0 0.0
        %4268 = vmatpush1.msra.mxu0 0.0
        %4269 = vmatprep.subr.mxu0 0.0
        %4270 = vmatpush1.msra.mxu0 0.0
        %4271 = vmatprep.subr.mxu0 0.0
        %4272 = vmatpush1.msra.mxu0 0.0
        %4273 = vmatprep.subr.mxu0 0.0
        %4274 = vmatpush1.msra.mxu0 0.0
        %4275 = vmatprep.subr.mxu0 0.0
        %4276 = vmatpush1.msra.mxu0 0.0
        %4277 = vmatprep.subr.mxu0 0.0
        %4278 = vmatpush1.msra.mxu0 0.0
        %4279 = vmatprep.mubr.f32.mxu0 0.0
        %v4280 = vand.u32 %v4049, 4294901760
        %v4281 = vsub.f32 %v4049, %v4280
        %4282 = vmatmul.mubr.f32.gmra.mrb[0].mxu0 %v4281
        %v4283 = vpop.f32.mrb[0].mxu0
        %v4284 = vadd.f32 %v4207, %v4283
        %v4285 = vpop.f32.mrb[0].mxu0
        %v4286 = vadd.f32 %v4209, %v4285
        %4287 = vdwg.mxu0
        %v4288 = vand.u32 %v3115, 4294901760
        %4289 = vmatprep.subr.mxu0 %v4288
        %v4290 = vand.u32 %v3114, 4294901760
        %4291 = vmatpush1.msra.mxu0 %v4290
        %4292 = vmatprep.subr.mxu0 0.0
        %4293 = vmatpush1.msra.mxu0 0.0
        %4294 = vmatprep.subr.mxu0 0.0
        %4295 = vmatpush1.msra.mxu0 0.0
        %4296 = vmatprep.subr.mxu0 0.0
        %4297 = vmatpush1.msra.mxu0 0.0
        %4298 = vmatprep.subr.mxu0 0.0
        %4299 = vmatpush1.msra.mxu0 0.0
        %4300 = vmatprep.subr.mxu0 0.0
        %4301 = vmatpush1.msra.mxu0 0.0
        %4302 = vmatprep.subr.mxu0 0.0
        %4303 = vmatpush1.msra.mxu0 0.0
        %4304 = vmatprep.subr.mxu0 0.0
        %4305 = vmatpush1.msra.mxu0 0.0
        %4306 = vmatprep.subr.mxu0 0.0
        %4307 = vmatpush1.msra.mxu0 0.0
        %4308 = vmatprep.subr.mxu0 0.0
        %4309 = vmatpush1.msra.mxu0 0.0
        %4310 = vmatprep.subr.mxu0 0.0
        %4311 = vmatpush1.msra.mxu0 0.0
        %4312 = vmatprep.subr.mxu0 0.0
        %4313 = vmatpush1.msra.mxu0 0.0
        %4314 = vmatprep.subr.mxu0 0.0
        %4315 = vmatpush1.msra.mxu0 0.0
        %4316 = vmatprep.subr.mxu0 0.0
        %4317 = vmatpush1.msra.mxu0 0.0
        %4318 = vmatprep.subr.mxu0 0.0
        %4319 = vmatpush1.msra.mxu0 0.0
        %4320 = vmatprep.subr.mxu0 0.0
        %4321 = vmatpush1.msra.mxu0 0.0
        %4322 = vmatprep.subr.mxu0 0.0
        %4323 = vmatpush1.msra.mxu0 0.0
        %4324 = vmatprep.subr.mxu0 0.0
        %4325 = vmatpush1.msra.mxu0 0.0
        %4326 = vmatprep.subr.mxu0 0.0
        %4327 = vmatpush1.msra.mxu0 0.0
        %4328 = vmatprep.subr.mxu0 0.0
        %4329 = vmatpush1.msra.mxu0 0.0
        %4330 = vmatprep.subr.mxu0 0.0
        %4331 = vmatpush1.msra.mxu0 0.0
        %4332 = vmatprep.subr.mxu0 0.0
        %4333 = vmatpush1.msra.mxu0 0.0
        %4334 = vmatprep.subr.mxu0 0.0
        %4335 = vmatpush1.msra.mxu0 0.0
        %4336 = vmatprep.subr.mxu0 0.0
        %4337 = vmatpush1.msra.mxu0 0.0
        %4338 = vmatprep.subr.mxu0 0.0
        %4339 = vmatpush1.msra.mxu0 0.0
        %4340 = vmatprep.subr.mxu0 0.0
        %4341 = vmatpush1.msra.mxu0 0.0
        %4342 = vmatprep.subr.mxu0 0.0
        %4343 = vmatpush1.msra.mxu0 0.0
        %4344 = vmatprep.subr.mxu0 0.0
        %4345 = vmatpush1.msra.mxu0 0.0
        %4346 = vmatprep.subr.mxu0 0.0
        %4347 = vmatpush1.msra.mxu0 0.0
        %4348 = vmatprep.subr.mxu0 0.0
        %4349 = vmatpush1.msra.mxu0 0.0
        %4350 = vmatprep.subr.mxu0 0.0
        %4351 = vmatpush1.msra.mxu0 0.0
        %4352 = vmatprep.subr.mxu0 0.0
        %4353 = vmatpush1.msra.mxu0 0.0
        %4354 = vmatprep.mubr.f32.mxu0 0.0
        %v4355 = vand.u32 %v4049, 4294901760
        %v4356 = vsub.f32 %v4049, %v4355
        %v4357 = vand.u32 %v4356, 4294901760
        %4358 = vmatmul.mubr.f32.gmra.mrb[0].mxu0 %v4357
        %v4359 = vpop.f32.mrb[0].mxu0
        %v4360 = vadd.f32 %v4284, %v4359
        %v4361 = vpop.f32.mrb[0].mxu0
        %v4362 = vadd.f32 %v4286, %v4361
        %4363 = vdwg.mxu0
        %v4364 = vand.u32 %v3115, 4294901760
        %v4365 = vsub.f32 %v3115, %v4364
        %v4366 = vand.u32 %v4365, 4294901760
        %4367 = vmatprep.subr.mxu0 %v4366
        %v4368 = vand.u32 %v3114, 4294901760
        %v4369 = vsub.f32 %v3114, %v4368
        %v4370 = vand.u32 %v4369, 4294901760
        %4371 = vmatpush1.msra.mxu0 %v4370
        %4372 = vmatprep.subr.mxu0 0.0
        %4373 = vmatpush1.msra.mxu0 0.0
        %4374 = vmatprep.subr.mxu0 0.0
        %4375 = vmatpush1.msra.mxu0 0.0
        %4376 = vmatprep.subr.mxu0 0.0
        %4377 = vmatpush1.msra.mxu0 0.0
        %4378 = vmatprep.subr.mxu0 0.0
        %4379 = vmatpush1.msra.mxu0 0.0
        %4380 = vmatprep.subr.mxu0 0.0
        %4381 = vmatpush1.msra.mxu0 0.0
        %4382 = vmatprep.subr.mxu0 0.0
        %4383 = vmatpush1.msra.mxu0 0.0
        %4384 = vmatprep.subr.mxu0 0.0
        %4385 = vmatpush1.msra.mxu0 0.0
        %4386 = vmatprep.subr.mxu0 0.0
        %4387 = vmatpush1.msra.mxu0 0.0
        %4388 = vmatprep.subr.mxu0 0.0
        %4389 = vmatpush1.msra.mxu0 0.0
        %4390 = vmatprep.subr.mxu0 0.0
        %4391 = vmatpush1.msra.mxu0 0.0
        %4392 = vmatprep.subr.mxu0 0.0
        %4393 = vmatpush1.msra.mxu0 0.0
        %4394 = vmatprep.subr.mxu0 0.0
        %4395 = vmatpush1.msra.mxu0 0.0
        %4396 = vmatprep.subr.mxu0 0.0
        %4397 = vmatpush1.msra.mxu0 0.0
        %4398 = vmatprep.subr.mxu0 0.0
        %4399 = vmatpush1.msra.mxu0 0.0
        %4400 = vmatprep.subr.mxu0 0.0
        %4401 = vmatpush1.msra.mxu0 0.0
        %4402 = vmatprep.subr.mxu0 0.0
        %4403 = vmatpush1.msra.mxu0 0.0
        %4404 = vmatprep.subr.mxu0 0.0
        %4405 = vmatpush1.msra.mxu0 0.0
        %4406 = vmatprep.subr.mxu0 0.0
        %4407 = vmatpush1.msra.mxu0 0.0
        %4408 = vmatprep.subr.mxu0 0.0
        %4409 = vmatpush1.msra.mxu0 0.0
        %4410 = vmatprep.subr.mxu0 0.0
        %4411 = vmatpush1.msra.mxu0 0.0
        %4412 = vmatprep.subr.mxu0 0.0
        %4413 = vmatpush1.msra.mxu0 0.0
        %4414 = vmatprep.subr.mxu0 0.0
        %4415 = vmatpush1.msra.mxu0 0.0
        %4416 = vmatprep.subr.mxu0 0.0
        %4417 = vmatpush1.msra.mxu0 0.0
        %4418 = vmatprep.subr.mxu0 0.0
        %4419 = vmatpush1.msra.mxu0 0.0
        %4420 = vmatprep.subr.mxu0 0.0
        %4421 = vmatpush1.msra.mxu0 0.0
        %4422 = vmatprep.subr.mxu0 0.0
        %4423 = vmatpush1.msra.mxu0 0.0
        %4424 = vmatprep.subr.mxu0 0.0
        %4425 = vmatpush1.msra.mxu0 0.0
        %4426 = vmatprep.subr.mxu0 0.0
        %4427 = vmatpush1.msra.mxu0 0.0
        %4428 = vmatprep.subr.mxu0 0.0
        %4429 = vmatpush1.msra.mxu0 0.0
        %4430 = vmatprep.subr.mxu0 0.0
        %4431 = vmatpush1.msra.mxu0 0.0
        %4432 = vmatprep.subr.mxu0 0.0
        %4433 = vmatpush1.msra.mxu0 0.0
        %4434 = vmatprep.mubr.f32.mxu0 0.0
        %v4435 = vand.u32 %v4049, 4294901760
        %4436 = vmatmul.mubr.f32.gmra.mrb[0].mxu0 %v4435
        %v4437 = vpop.f32.mrb[0].mxu0
        %v4438 = vadd.f32 %v4360, %v4437
        %v4439 = vpop.f32.mrb[0].mxu0
        %v4440 = vadd.f32 %v4362, %v4439
        %4441 = vdwg.mxu0
        %v4442 = vand.u32 %v3115, 4294901760
        %4443 = vmatprep.subr.mxu0 %v4442
        %v4444 = vand.u32 %v3114, 4294901760
        %4445 = vmatpush1.msra.mxu0 %v4444
        %4446 = vmatprep.subr.mxu0 0.0
        %4447 = vmatpush1.msra.mxu0 0.0
        %4448 = vmatprep.subr.mxu0 0.0
        %4449 = vmatpush1.msra.mxu0 0.0
        %4450 = vmatprep.subr.mxu0 0.0
        %4451 = vmatpush1.msra.mxu0 0.0
        %4452 = vmatprep.subr.mxu0 0.0
        %4453 = vmatpush1.msra.mxu0 0.0
        %4454 = vmatprep.subr.mxu0 0.0
        %4455 = vmatpush1.msra.mxu0 0.0
        %4456 = vmatprep.subr.mxu0 0.0
        %4457 = vmatpush1.msra.mxu0 0.0
        %4458 = vmatprep.subr.mxu0 0.0
        %4459 = vmatpush1.msra.mxu0 0.0
        %4460 = vmatprep.subr.mxu0 0.0
        %4461 = vmatpush1.msra.mxu0 0.0
        %4462 = vmatprep.subr.mxu0 0.0
        %4463 = vmatpush1.msra.mxu0 0.0
        %4464 = vmatprep.subr.mxu0 0.0
        %4465 = vmatpush1.msra.mxu0 0.0
        %4466 = vmatprep.subr.mxu0 0.0
        %4467 = vmatpush1.msra.mxu0 0.0
        %4468 = vmatprep.subr.mxu0 0.0
        %4469 = vmatpush1.msra.mxu0 0.0
        %4470 = vmatprep.subr.mxu0 0.0
        %4471 = vmatpush1.msra.mxu0 0.0
        %4472 = vmatprep.subr.mxu0 0.0
        %4473 = vmatpush1.msra.mxu0 0.0
        %4474 = vmatprep.subr.mxu0 0.0
        %4475 = vmatpush1.msra.mxu0 0.0
        %4476 = vmatprep.subr.mxu0 0.0
        %4477 = vmatpush1.msra.mxu0 0.0
        %4478 = vmatprep.subr.mxu0 0.0
        %4479 = vmatpush1.msra.mxu0 0.0
        %4480 = vmatprep.subr.mxu0 0.0
        %4481 = vmatpush1.msra.mxu0 0.0
        %4482 = vmatprep.subr.mxu0 0.0
        %4483 = vmatpush1.msra.mxu0 0.0
        %4484 = vmatprep.subr.mxu0 0.0
        %4485 = vmatpush1.msra.mxu0 0.0
        %4486 = vmatprep.subr.mxu0 0.0
        %4487 = vmatpush1.msra.mxu0 0.0
        %4488 = vmatprep.subr.mxu0 0.0
        %4489 = vmatpush1.msra.mxu0 0.0
        %4490 = vmatprep.subr.mxu0 0.0
        %4491 = vmatpush1.msra.mxu0 0.0
        %4492 = vmatprep.subr.mxu0 0.0
        %4493 = vmatpush1.msra.mxu0 0.0
        %4494 = vmatprep.subr.mxu0 0.0
        %4495 = vmatpush1.msra.mxu0 0.0
        %4496 = vmatprep.subr.mxu0 0.0
        %4497 = vmatpush1.msra.mxu0 0.0
        %4498 = vmatprep.subr.mxu0 0.0
        %4499 = vmatpush1.msra.mxu0 0.0
        %4500 = vmatprep.subr.mxu0 0.0
        %4501 = vmatpush1.msra.mxu0 0.0
        %4502 = vmatprep.subr.mxu0 0.0
        %4503 = vmatpush1.msra.mxu0 0.0
        %4504 = vmatprep.subr.mxu0 0.0
        %4505 = vmatpush1.msra.mxu0 0.0
        %4506 = vmatprep.subr.mxu0 0.0
        %4507 = vmatpush1.msra.mxu0 0.0
        %4508 = vmatprep.mubr.f32.mxu0 0.0
        %v4509 = vand.u32 %v4049, 4294901760
        %4510 = vmatmul.mubr.f32.gmra.mrb[0].mxu0 %v4509
        %v4511 = vpop.f32.mrb[0].mxu0
        %v4512 = vadd.f32 %v4438, %v4511
        %v4513 = vpop.f32.mrb[0].mxu0
        %v4514 = vadd.f32 %v4440, %v4513
        %4515 = vdwg.mxu0
        %4516 = vmatprep.subr.mxu0 0.0
        %v4517 = vand.u32 %v3116, 4294901760
        %4518 = vmatpush1.msra.mxu0 %v4517
        %4519 = vmatprep.subr.mxu0 0.0
        %4520 = vmatpush1.msra.mxu0 0.0
        %4521 = vmatprep.subr.mxu0 0.0
        %4522 = vmatpush1.msra.mxu0 0.0
        %4523 = vmatprep.subr.mxu0 0.0
        %4524 = vmatpush1.msra.mxu0 0.0
        %4525 = vmatprep.subr.mxu0 0.0
        %4526 = vmatpush1.msra.mxu0 0.0
        %4527 = vmatprep.subr.mxu0 0.0
        %4528 = vmatpush1.msra.mxu0 0.0
        %4529 = vmatprep.subr.mxu0 0.0
        %4530 = vmatpush1.msra.mxu0 0.0
        %4531 = vmatprep.subr.mxu0 0.0
        %4532 = vmatpush1.msra.mxu0 0.0
        %4533 = vmatprep.subr.mxu0 0.0
        %4534 = vmatpush1.msra.mxu0 0.0
        %4535 = vmatprep.subr.mxu0 0.0
        %4536 = vmatpush1.msra.mxu0 0.0
        %4537 = vmatprep.subr.mxu0 0.0
        %4538 = vmatpush1.msra.mxu0 0.0
        %4539 = vmatprep.subr.mxu0 0.0
        %4540 = vmatpush1.msra.mxu0 0.0
        %4541 = vmatprep.subr.mxu0 0.0
        %4542 = vmatpush1.msra.mxu0 0.0
        %4543 = vmatprep.subr.mxu0 0.0
        %4544 = vmatpush1.msra.mxu0 0.0
        %4545 = vmatprep.subr.mxu0 0.0
        %4546 = vmatpush1.msra.mxu0 0.0
        %4547 = vmatprep.subr.mxu0 0.0
        %4548 = vmatpush1.msra.mxu0 0.0
        %4549 = vmatprep.subr.mxu0 0.0
        %4550 = vmatpush1.msra.mxu0 0.0
        %4551 = vmatprep.subr.mxu0 0.0
        %4552 = vmatpush1.msra.mxu0 0.0
        %4553 = vmatprep.subr.mxu0 0.0
        %4554 = vmatpush1.msra.mxu0 0.0
        %4555 = vmatprep.subr.mxu0 0.0
        %4556 = vmatpush1.msra.mxu0 0.0
        %4557 = vmatprep.subr.mxu0 0.0
        %4558 = vmatpush1.msra.mxu0 0.0
        %4559 = vmatprep.subr.mxu0 0.0
        %4560 = vmatpush1.msra.mxu0 0.0
        %4561 = vmatprep.subr.mxu0 0.0
        %4562 = vmatpush1.msra.mxu0 0.0
        %4563 = vmatprep.subr.mxu0 0.0
        %4564 = vmatpush1.msra.mxu0 0.0
        %4565 = vmatprep.subr.mxu0 0.0
        %4566 = vmatpush1.msra.mxu0 0.0
        %4567 = vmatprep.subr.mxu0 0.0
        %4568 = vmatpush1.msra.mxu0 0.0
        %4569 = vmatprep.subr.mxu0 0.0
        %4570 = vmatpush1.msra.mxu0 0.0
        %4571 = vmatprep.subr.mxu0 0.0
        %4572 = vmatpush1.msra.mxu0 0.0
        %4573 = vmatprep.subr.mxu0 0.0
        %4574 = vmatpush1.msra.mxu0 0.0
        %4575 = vmatprep.subr.mxu0 0.0
        %4576 = vmatpush1.msra.mxu0 0.0
        %4577 = vmatprep.subr.mxu0 0.0
        %4578 = vmatpush1.msra.mxu0 0.0
        %4579 = vmatprep.subr.mxu0 0.0
        %4580 = vmatpush1.msra.mxu0 0.0
        %4581 = vmatprep.mubr.f32.mxu0 0.0
        %v4582 = vand.u32 %v4049, 4294901760
        %v4583 = vsub.f32 %v4049, %v4582
        %v4584 = vand.u32 %v4583, 4294901760
        %v4585 = vsub.f32 %v4583, %v4584
        %v4586 = vand.u32 %v4585, 4294901760
        %4587 = vmatmul.mubr.f32.gmra.mrb[0].mxu0 %v4586
        %v4588 = vpop.f32.mrb[0].mxu0
        %v4589 = vadd.f32 %v4046, %v4588
        %v4590 = vpop.f32.mrb[0].mxu0
        %4591 = vdwg.mxu0
        %4592 = vmatprep.subr.mxu0 0.0
        %v4593 = vand.u32 %v3116, 4294901760
        %v4594 = vsub.f32 %v3116, %v4593
        %v4595 = vand.u32 %v4594, 4294901760
        %v4596 = vsub.f32 %v4594, %v4595
        %v4597 = vand.u32 %v4596, 4294901760
        %4598 = vmatpush1.msra.mxu0 %v4597
        %4599 = vmatprep.subr.mxu0 0.0
        %4600 = vmatpush1.msra.mxu0 0.0
        %4601 = vmatprep.subr.mxu0 0.0
        %4602 = vmatpush1.msra.mxu0 0.0
        %4603 = vmatprep.subr.mxu0 0.0
        %4604 = vmatpush1.msra.mxu0 0.0
        %4605 = vmatprep.subr.mxu0 0.0
        %4606 = vmatpush1.msra.mxu0 0.0
        %4607 = vmatprep.subr.mxu0 0.0
        %4608 = vmatpush1.msra.mxu0 0.0
        %4609 = vmatprep.subr.mxu0 0.0
        %4610 = vmatpush1.msra.mxu0 0.0
        %4611 = vmatprep.subr.mxu0 0.0
        %4612 = vmatpush1.msra.mxu0 0.0
        %4613 = vmatprep.subr.mxu0 0.0
        %4614 = vmatpush1.msra.mxu0 0.0
        %4615 = vmatprep.subr.mxu0 0.0
        %4616 = vmatpush1.msra.mxu0 0.0
        %4617 = vmatprep.subr.mxu0 0.0
        %4618 = vmatpush1.msra.mxu0 0.0
        %4619 = vmatprep.subr.mxu0 0.0
        %4620 = vmatpush1.msra.mxu0 0.0
        %4621 = vmatprep.subr.mxu0 0.0
        %4622 = vmatpush1.msra.mxu0 0.0
        %4623 = vmatprep.subr.mxu0 0.0
        %4624 = vmatpush1.msra.mxu0 0.0
        %4625 = vmatprep.subr.mxu0 0.0
        %4626 = vmatpush1.msra.mxu0 0.0
        %4627 = vmatprep.subr.mxu0 0.0
        %4628 = vmatpush1.msra.mxu0 0.0
        %4629 = vmatprep.subr.mxu0 0.0
        %4630 = vmatpush1.msra.mxu0 0.0
        %4631 = vmatprep.subr.mxu0 0.0
        %4632 = vmatpush1.msra.mxu0 0.0
        %4633 = vmatprep.subr.mxu0 0.0
        %4634 = vmatpush1.msra.mxu0 0.0
        %4635 = vmatprep.subr.mxu0 0.0
        %4636 = vmatpush1.msra.mxu0 0.0
        %4637 = vmatprep.subr.mxu0 0.0
        %4638 = vmatpush1.msra.mxu0 0.0
        %4639 = vmatprep.subr.mxu0 0.0
        %4640 = vmatpush1.msra.mxu0 0.0
        %4641 = vmatprep.subr.mxu0 0.0
        %4642 = vmatpush1.msra.mxu0 0.0
        %4643 = vmatprep.subr.mxu0 0.0
        %4644 = vmatpush1.msra.mxu0 0.0
        %4645 = vmatprep.subr.mxu0 0.0
        %4646 = vmatpush1.msra.mxu0 0.0
        %4647 = vmatprep.subr.mxu0 0.0
        %4648 = vmatpush1.msra.mxu0 0.0
        %4649 = vmatprep.subr.mxu0 0.0
        %4650 = vmatpush1.msra.mxu0 0.0
        %4651 = vmatprep.subr.mxu0 0.0
        %4652 = vmatpush1.msra.mxu0 0.0
        %4653 = vmatprep.subr.mxu0 0.0
        %4654 = vmatpush1.msra.mxu0 0.0
        %4655 = vmatprep.subr.mxu0 0.0
        %4656 = vmatpush1.msra.mxu0 0.0
        %4657 = vmatprep.subr.mxu0 0.0
        %4658 = vmatpush1.msra.mxu0 0.0
        %4659 = vmatprep.subr.mxu0 0.0
        %4660 = vmatpush1.msra.mxu0 0.0
        %4661 = vmatprep.mubr.f32.mxu0 0.0
        %v4662 = vand.u32 %v4049, 4294901760
        %4663 = vmatmul.mubr.f32.gmra.mrb[0].mxu0 %v4662
        %v4664 = vpop.f32.mrb[0].mxu0
        %v4665 = vadd.f32 %v4589, %v4664
        %v4666 = vpop.f32.mrb[0].mxu0
        %4667 = vdwg.mxu0
        %4668 = vmatprep.subr.mxu0 0.0
        %v4669 = vand.u32 %v3116, 4294901760
        %v4670 = vsub.f32 %v3116, %v4669
        %4671 = vmatpush1.msra.mxu0 %v4670
        %4672 = vmatprep.subr.mxu0 0.0
        %4673 = vmatpush1.msra.mxu0 0.0
        %4674 = vmatprep.subr.mxu0 0.0
        %4675 = vmatpush1.msra.mxu0 0.0
        %4676 = vmatprep.subr.mxu0 0.0
        %4677 = vmatpush1.msra.mxu0 0.0
        %4678 = vmatprep.subr.mxu0 0.0
        %4679 = vmatpush1.msra.mxu0 0.0
        %4680 = vmatprep.subr.mxu0 0.0
        %4681 = vmatpush1.msra.mxu0 0.0
        %4682 = vmatprep.subr.mxu0 0.0
        %4683 = vmatpush1.msra.mxu0 0.0
        %4684 = vmatprep.subr.mxu0 0.0
        %4685 = vmatpush1.msra.mxu0 0.0
        %4686 = vmatprep.subr.mxu0 0.0
        %4687 = vmatpush1.msra.mxu0 0.0
        %4688 = vmatprep.subr.mxu0 0.0
        %4689 = vmatpush1.msra.mxu0 0.0
        %4690 = vmatprep.subr.mxu0 0.0
        %4691 = vmatpush1.msra.mxu0 0.0
        %4692 = vmatprep.subr.mxu0 0.0
        %4693 = vmatpush1.msra.mxu0 0.0
        %4694 = vmatprep.subr.mxu0 0.0
        %4695 = vmatpush1.msra.mxu0 0.0
        %4696 = vmatprep.subr.mxu0 0.0
        %4697 = vmatpush1.msra.mxu0 0.0
        %4698 = vmatprep.subr.mxu0 0.0
        %4699 = vmatpush1.msra.mxu0 0.0
        %4700 = vmatprep.subr.mxu0 0.0
        %4701 = vmatpush1.msra.mxu0 0.0
        %4702 = vmatprep.subr.mxu0 0.0
        %4703 = vmatpush1.msra.mxu0 0.0
        %4704 = vmatprep.subr.mxu0 0.0
        %4705 = vmatpush1.msra.mxu0 0.0
        %4706 = vmatprep.subr.mxu0 0.0
        %4707 = vmatpush1.msra.mxu0 0.0
        %4708 = vmatprep.subr.mxu0 0.0
        %4709 = vmatpush1.msra.mxu0 0.0
        %4710 = vmatprep.subr.mxu0 0.0
        %4711 = vmatpush1.msra.mxu0 0.0
        %4712 = vmatprep.subr.mxu0 0.0
        %4713 = vmatpush1.msra.mxu0 0.0
        %4714 = vmatprep.subr.mxu0 0.0
        %4715 = vmatpush1.msra.mxu0 0.0
        %4716 = vmatprep.subr.mxu0 0.0
        %4717 = vmatpush1.msra.mxu0 0.0
        %4718 = vmatprep.subr.mxu0 0.0
        %4719 = vmatpush1.msra.mxu0 0.0
        %4720 = vmatprep.subr.mxu0 0.0
        %4721 = vmatpush1.msra.mxu0 0.0
        %4722 = vmatprep.subr.mxu0 0.0
        %4723 = vmatpush1.msra.mxu0 0.0
        %4724 = vmatprep.subr.mxu0 0.0
        %4725 = vmatpush1.msra.mxu0 0.0
        %4726 = vmatprep.subr.mxu0 0.0
        %4727 = vmatpush1.msra.mxu0 0.0
        %4728 = vmatprep.subr.mxu0 0.0
        %4729 = vmatpush1.msra.mxu0 0.0
        %4730 = vmatprep.subr.mxu0 0.0
        %4731 = vmatpush1.msra.mxu0 0.0
        %4732 = vmatprep.subr.mxu0 0.0
        %4733 = vmatpush1.msra.mxu0 0.0
        %4734 = vmatprep.mubr.f32.mxu0 0.0
        %v4735 = vand.u32 %v4049, 4294901760
        %v4736 = vsub.f32 %v4049, %v4735
        %4737 = vmatmul.mubr.f32.gmra.mrb[0].mxu0 %v4736
        %v4738 = vpop.f32.mrb[0].mxu0
        %v4739 = vadd.f32 %v4665, %v4738
        %v4740 = vpop.f32.mrb[0].mxu0
        %4741 = vdwg.mxu0
        %4742 = vmatprep.subr.mxu0 0.0
        %v4743 = vand.u32 %v3116, 4294901760
        %4744 = vmatpush1.msra.mxu0 %v4743
        %4745 = vmatprep.subr.mxu0 0.0
        %4746 = vmatpush1.msra.mxu0 0.0
        %4747 = vmatprep.subr.mxu0 0.0
        %4748 = vmatpush1.msra.mxu0 0.0
        %4749 = vmatprep.subr.mxu0 0.0
        %4750 = vmatpush1.msra.mxu0 0.0
        %4751 = vmatprep.subr.mxu0 0.0
        %4752 = vmatpush1.msra.mxu0 0.0
        %4753 = vmatprep.subr.mxu0 0.0
        %4754 = vmatpush1.msra.mxu0 0.0
        %4755 = vmatprep.subr.mxu0 0.0
        %4756 = vmatpush1.msra.mxu0 0.0
        %4757 = vmatprep.subr.mxu0 0.0
        %4758 = vmatpush1.msra.mxu0 0.0
        %4759 = vmatprep.subr.mxu0 0.0
        %4760 = vmatpush1.msra.mxu0 0.0
        %4761 = vmatprep.subr.mxu0 0.0
        %4762 = vmatpush1.msra.mxu0 0.0
        %4763 = vmatprep.subr.mxu0 0.0
        %4764 = vmatpush1.msra.mxu0 0.0
        %4765 = vmatprep.subr.mxu0 0.0
        %4766 = vmatpush1.msra.mxu0 0.0
        %4767 = vmatprep.subr.mxu0 0.0
        %4768 = vmatpush1.msra.mxu0 0.0
        %4769 = vmatprep.subr.mxu0 0.0
        %4770 = vmatpush1.msra.mxu0 0.0
        %4771 = vmatprep.subr.mxu0 0.0
        %4772 = vmatpush1.msra.mxu0 0.0
        %4773 = vmatprep.subr.mxu0 0.0
        %4774 = vmatpush1.msra.mxu0 0.0
        %4775 = vmatprep.subr.mxu0 0.0
        %4776 = vmatpush1.msra.mxu0 0.0
        %4777 = vmatprep.subr.mxu0 0.0
        %4778 = vmatpush1.msra.mxu0 0.0
        %4779 = vmatprep.subr.mxu0 0.0
        %4780 = vmatpush1.msra.mxu0 0.0
        %4781 = vmatprep.subr.mxu0 0.0
        %4782 = vmatpush1.msra.mxu0 0.0
        %4783 = vmatprep.subr.mxu0 0.0
        %4784 = vmatpush1.msra.mxu0 0.0
        %4785 = vmatprep.subr.mxu0 0.0
        %4786 = vmatpush1.msra.mxu0 0.0
        %4787 = vmatprep.subr.mxu0 0.0
        %4788 = vmatpush1.msra.mxu0 0.0
        %4789 = vmatprep.subr.mxu0 0.0
        %4790 = vmatpush1.msra.mxu0 0.0
        %4791 = vmatprep.subr.mxu0 0.0
        %4792 = vmatpush1.msra.mxu0 0.0
        %4793 = vmatprep.subr.mxu0 0.0
        %4794 = vmatpush1.msra.mxu0 0.0
        %4795 = vmatprep.subr.mxu0 0.0
        %4796 = vmatpush1.msra.mxu0 0.0
        %4797 = vmatprep.subr.mxu0 0.0
        %4798 = vmatpush1.msra.mxu0 0.0
        %4799 = vmatprep.subr.mxu0 0.0
        %4800 = vmatpush1.msra.mxu0 0.0
        %4801 = vmatprep.subr.mxu0 0.0
        %4802 = vmatpush1.msra.mxu0 0.0
        %4803 = vmatprep.subr.mxu0 0.0
        %4804 = vmatpush1.msra.mxu0 0.0
        %4805 = vmatprep.subr.mxu0 0.0
        %4806 = vmatpush1.msra.mxu0 0.0
        %4807 = vmatprep.mubr.f32.mxu0 0.0
        %v4808 = vand.u32 %v4049, 4294901760
        %v4809 = vsub.f32 %v4049, %v4808
        %v4810 = vand.u32 %v4809, 4294901760
        %4811 = vmatmul.mubr.f32.gmra.mrb[0].mxu0 %v4810
        %v4812 = vpop.f32.mrb[0].mxu0
        %v4813 = vadd.f32 %v4739, %v4812
        %v4814 = vpop.f32.mrb[0].mxu0
        %4815 = vdwg.mxu0
        %4816 = vmatprep.subr.mxu0 0.0
        %v4817 = vand.u32 %v3116, 4294901760
        %v4818 = vsub.f32 %v3116, %v4817
        %v4819 = vand.u32 %v4818, 4294901760
        %4820 = vmatpush1.msra.mxu0 %v4819
        %4821 = vmatprep.subr.mxu0 0.0
        %4822 = vmatpush1.msra.mxu0 0.0
        %4823 = vmatprep.subr.mxu0 0.0
        %4824 = vmatpush1.msra.mxu0 0.0
        %4825 = vmatprep.subr.mxu0 0.0
        %4826 = vmatpush1.msra.mxu0 0.0
        %4827 = vmatprep.subr.mxu0 0.0
        %4828 = vmatpush1.msra.mxu0 0.0
        %4829 = vmatprep.subr.mxu0 0.0
        %4830 = vmatpush1.msra.mxu0 0.0
        %4831 = vmatprep.subr.mxu0 0.0
        %4832 = vmatpush1.msra.mxu0 0.0
        %4833 = vmatprep.subr.mxu0 0.0
        %4834 = vmatpush1.msra.mxu0 0.0
        %4835 = vmatprep.subr.mxu0 0.0
        %4836 = vmatpush1.msra.mxu0 0.0
        %4837 = vmatprep.subr.mxu0 0.0
        %4838 = vmatpush1.msra.mxu0 0.0
        %4839 = vmatprep.subr.mxu0 0.0
        %4840 = vmatpush1.msra.mxu0 0.0
        %4841 = vmatprep.subr.mxu0 0.0
        %4842 = vmatpush1.msra.mxu0 0.0
        %4843 = vmatprep.subr.mxu0 0.0
        %4844 = vmatpush1.msra.mxu0 0.0
        %4845 = vmatprep.subr.mxu0 0.0
        %4846 = vmatpush1.msra.mxu0 0.0
        %4847 = vmatprep.subr.mxu0 0.0
        %4848 = vmatpush1.msra.mxu0 0.0
        %4849 = vmatprep.subr.mxu0 0.0
        %4850 = vmatpush1.msra.mxu0 0.0
        %4851 = vmatprep.subr.mxu0 0.0
        %4852 = vmatpush1.msra.mxu0 0.0
        %4853 = vmatprep.subr.mxu0 0.0
        %4854 = vmatpush1.msra.mxu0 0.0
        %4855 = vmatprep.subr.mxu0 0.0
        %4856 = vmatpush1.msra.mxu0 0.0
        %4857 = vmatprep.subr.mxu0 0.0
        %4858 = vmatpush1.msra.mxu0 0.0
        %4859 = vmatprep.subr.mxu0 0.0
        %4860 = vmatpush1.msra.mxu0 0.0
        %4861 = vmatprep.subr.mxu0 0.0
        %4862 = vmatpush1.msra.mxu0 0.0
        %4863 = vmatprep.subr.mxu0 0.0
        %4864 = vmatpush1.msra.mxu0 0.0
        %4865 = vmatprep.subr.mxu0 0.0
        %4866 = vmatpush1.msra.mxu0 0.0
        %4867 = vmatprep.subr.mxu0 0.0
        %4868 = vmatpush1.msra.mxu0 0.0
        %4869 = vmatprep.subr.mxu0 0.0
        %4870 = vmatpush1.msra.mxu0 0.0
        %4871 = vmatprep.subr.mxu0 0.0
        %4872 = vmatpush1.msra.mxu0 0.0
        %4873 = vmatprep.subr.mxu0 0.0
        %4874 = vmatpush1.msra.mxu0 0.0
        %4875 = vmatprep.subr.mxu0 0.0
        %4876 = vmatpush1.msra.mxu0 0.0
        %4877 = vmatprep.subr.mxu0 0.0
        %4878 = vmatpush1.msra.mxu0 0.0
        %4879 = vmatprep.subr.mxu0 0.0
        %4880 = vmatpush1.msra.mxu0 0.0
        %4881 = vmatprep.subr.mxu0 0.0
        %4882 = vmatpush1.msra.mxu0 0.0
        %4883 = vmatprep.mubr.f32.mxu0 0.0
        %v4884 = vand.u32 %v4049, 4294901760
        %4885 = vmatmul.mubr.f32.gmra.mrb[0].mxu0 %v4884
        %v4886 = vpop.f32.mrb[0].mxu0
        %v4887 = vadd.f32 %v4813, %v4886
        %v4888 = vpop.f32.mrb[0].mxu0
        %4889 = vdwg.mxu0
        %4890 = vmatprep.subr.mxu0 0.0
        %v4891 = vand.u32 %v3116, 4294901760
        %4892 = vmatpush1.msra.mxu0 %v4891
        %4893 = vmatprep.subr.mxu0 0.0
        %4894 = vmatpush1.msra.mxu0 0.0
        %4895 = vmatprep.subr.mxu0 0.0
        %4896 = vmatpush1.msra.mxu0 0.0
        %4897 = vmatprep.subr.mxu0 0.0
        %4898 = vmatpush1.msra.mxu0 0.0
        %4899 = vmatprep.subr.mxu0 0.0
        %4900 = vmatpush1.msra.mxu0 0.0
        %4901 = vmatprep.subr.mxu0 0.0
        %4902 = vmatpush1.msra.mxu0 0.0
        %4903 = vmatprep.subr.mxu0 0.0
        %4904 = vmatpush1.msra.mxu0 0.0
        %4905 = vmatprep.subr.mxu0 0.0
        %4906 = vmatpush1.msra.mxu0 0.0
        %4907 = vmatprep.subr.mxu0 0.0
        %4908 = vmatpush1.msra.mxu0 0.0
        %4909 = vmatprep.subr.mxu0 0.0
        %4910 = vmatpush1.msra.mxu0 0.0
        %4911 = vmatprep.subr.mxu0 0.0
        %4912 = vmatpush1.msra.mxu0 0.0
        %4913 = vmatprep.subr.mxu0 0.0
        %4914 = vmatpush1.msra.mxu0 0.0
        %4915 = vmatprep.subr.mxu0 0.0
        %4916 = vmatpush1.msra.mxu0 0.0
        %4917 = vmatprep.subr.mxu0 0.0
        %4918 = vmatpush1.msra.mxu0 0.0
        %4919 = vmatprep.subr.mxu0 0.0
        %4920 = vmatpush1.msra.mxu0 0.0
        %4921 = vmatprep.subr.mxu0 0.0
        %4922 = vmatpush1.msra.mxu0 0.0
        %4923 = vmatprep.subr.mxu0 0.0
        %4924 = vmatpush1.msra.mxu0 0.0
        %4925 = vmatprep.subr.mxu0 0.0
        %4926 = vmatpush1.msra.mxu0 0.0
        %4927 = vmatprep.subr.mxu0 0.0
        %4928 = vmatpush1.msra.mxu0 0.0
        %4929 = vmatprep.subr.mxu0 0.0
        %4930 = vmatpush1.msra.mxu0 0.0
        %4931 = vmatprep.subr.mxu0 0.0
        %4932 = vmatpush1.msra.mxu0 0.0
        %4933 = vmatprep.subr.mxu0 0.0
        %4934 = vmatpush1.msra.mxu0 0.0
        %4935 = vmatprep.subr.mxu0 0.0
        %4936 = vmatpush1.msra.mxu0 0.0
        %4937 = vmatprep.subr.mxu0 0.0
        %4938 = vmatpush1.msra.mxu0 0.0
        %4939 = vmatprep.subr.mxu0 0.0
        %4940 = vmatpush1.msra.mxu0 0.0
        %4941 = vmatprep.subr.mxu0 0.0
        %4942 = vmatpush1.msra.mxu0 0.0
        %4943 = vmatprep.subr.mxu0 0.0
        %4944 = vmatpush1.msra.mxu0 0.0
        %4945 = vmatprep.subr.mxu0 0.0
        %4946 = vmatpush1.msra.mxu0 0.0
        %4947 = vmatprep.subr.mxu0 0.0
        %4948 = vmatpush1.msra.mxu0 0.0
        %4949 = vmatprep.subr.mxu0 0.0
        %4950 = vmatpush1.msra.mxu0 0.0
        %4951 = vmatprep.subr.mxu0 0.0
        %4952 = vmatpush1.msra.mxu0 0.0
        %4953 = vmatprep.subr.mxu0 0.0
        %4954 = vmatpush1.msra.mxu0 0.0
        %4955 = vmatprep.mubr.f32.mxu0 0.0
        %v4956 = vand.u32 %v4049, 4294901760
        %4957 = vmatmul.mubr.f32.gmra.mrb[0].mxu0 %v4956
        %v4958 = vpop.f32.mrb[0].mxu0
        %v4959 = vadd.f32 %v4887, %v4958
        %v4960 = vpop.f32.mrb[0].mxu0
        %4961 = vdwg.mxu0
        %4962 = vrot.lane.b32.xlu0 %v3117, 112
        %v4963 = vpop.permute.xlu0 %4962
        %4964 = vrot.lane.b32.xlu0 %v3114, 124
        %v4965 = vpop.permute.xlu0 %4964
        %4966 = vrot.lane.b32.xlu0 %v3115, 124
        %v4967 = vpop.permute.xlu0 %4966
        %4968 = vrot.lane.b32.xlu0 %v3116, 124
        %v4969 = vpop.permute.xlu0 %4968
        %vm4970 = vcmask 1014784
        %v4971 = vsel %vm4970, %v4965, %v4967
        %v4972 = vsel %vm4970, %v4967, %v4969
        %v4976 = vsel %vm3135, %v4963, 0
        %v4978 = vand.u32 %v4972, 4294901760
        %4979 = vmatprep.subr.mxu0 %v4978
        %v4980 = vand.u32 %v4971, 4294901760
        %4981 = vmatpush1.msra.mxu0 %v4980
        %4982 = vmatprep.subr.mxu0 0.0
        %4983 = vmatpush1.msra.mxu0 0.0
        %4984 = vmatprep.subr.mxu0 0.0
        %4985 = vmatpush1.msra.mxu0 0.0
        %4986 = vmatprep.subr.mxu0 0.0
        %4987 = vmatpush1.msra.mxu0 0.0
        %4988 = vmatprep.subr.mxu0 0.0
        %4989 = vmatpush1.msra.mxu0 0.0
        %4990 = vmatprep.subr.mxu0 0.0
        %4991 = vmatpush1.msra.mxu0 0.0
        %4992 = vmatprep.subr.mxu0 0.0
        %4993 = vmatpush1.msra.mxu0 0.0
        %4994 = vmatprep.subr.mxu0 0.0
        %4995 = vmatpush1.msra.mxu0 0.0
        %4996 = vmatprep.subr.mxu0 0.0
        %4997 = vmatpush1.msra.mxu0 0.0
        %4998 = vmatprep.subr.mxu0 0.0
        %4999 = vmatpush1.msra.mxu0 0.0
        %5000 = vmatprep.subr.mxu0 0.0
        %5001 = vmatpush1.msra.mxu0 0.0
        %5002 = vmatprep.subr.mxu0 0.0
        %5003 = vmatpush1.msra.mxu0 0.0
        %5004 = vmatprep.subr.mxu0 0.0
        %5005 = vmatpush1.msra.mxu0 0.0
        %5006 = vmatprep.subr.mxu0 0.0
        %5007 = vmatpush1.msra.mxu0 0.0
        %5008 = vmatprep.subr.mxu0 0.0
        %5009 = vmatpush1.msra.mxu0 0.0
        %5010 = vmatprep.subr.mxu0 0.0
        %5011 = vmatpush1.msra.mxu0 0.0
        %5012 = vmatprep.subr.mxu0 0.0
        %5013 = vmatpush1.msra.mxu0 0.0
        %5014 = vmatprep.subr.mxu0 0.0
        %5015 = vmatpush1.msra.mxu0 0.0
        %5016 = vmatprep.subr.mxu0 0.0
        %5017 = vmatpush1.msra.mxu0 0.0
        %5018 = vmatprep.subr.mxu0 0.0
        %5019 = vmatpush1.msra.mxu0 0.0
        %5020 = vmatprep.subr.mxu0 0.0
        %5021 = vmatpush1.msra.mxu0 0.0
        %5022 = vmatprep.subr.mxu0 0.0
        %5023 = vmatpush1.msra.mxu0 0.0
        %5024 = vmatprep.subr.mxu0 0.0
        %5025 = vmatpush1.msra.mxu0 0.0
        %5026 = vmatprep.subr.mxu0 0.0
        %5027 = vmatpush1.msra.mxu0 0.0
        %5028 = vmatprep.subr.mxu0 0.0
        %5029 = vmatpush1.msra.mxu0 0.0
        %5030 = vmatprep.subr.mxu0 0.0
        %5031 = vmatpush1.msra.mxu0 0.0
        %5032 = vmatprep.subr.mxu0 0.0
        %5033 = vmatpush1.msra.mxu0 0.0
        %5034 = vmatprep.subr.mxu0 0.0
        %5035 = vmatpush1.msra.mxu0 0.0
        %5036 = vmatprep.subr.mxu0 0.0
        %5037 = vmatpush1.msra.mxu0 0.0
        %5038 = vmatprep.subr.mxu0 0.0
        %5039 = vmatpush1.msra.mxu0 0.0
        %5040 = vmatprep.subr.mxu0 0.0
        %5041 = vmatpush1.msra.mxu0 0.0
        %5042 = vmatprep.subr.mxu0 0.0
        %5043 = vmatpush1.msra.mxu0 0.0
        %5044 = vmatprep.mubr.f32.mxu0 0.0
        %v5045 = vand.u32 %v4976, 4294901760
        %v5046 = vsub.f32 %v4976, %v5045
        %v5047 = vand.u32 %v5046, 4294901760
        %v5048 = vsub.f32 %v5046, %v5047
        %v5049 = vand.u32 %v5048, 4294901760
        %5050 = vmatmul.mubr.f32.gmra.mrb[0].mxu0 %v5049
        %v5051 = vpop.f32.mrb[0].mxu0
        %v5052 = vadd.f32 0.0, %v5051
        %v5053 = vpop.f32.mrb[0].mxu0
        %v5054 = vadd.f32 0.0, %v5053
        %5055 = vdwg.mxu0
        %v5056 = vand.u32 %v4972, 4294901760
        %v5057 = vsub.f32 %v4972, %v5056
        %v5058 = vand.u32 %v5057, 4294901760
        %v5059 = vsub.f32 %v5057, %v5058
        %v5060 = vand.u32 %v5059, 4294901760
        %5061 = vmatprep.subr.mxu0 %v5060
        %v5062 = vand.u32 %v4971, 4294901760
        %v5063 = vsub.f32 %v4971, %v5062
        %v5064 = vand.u32 %v5063, 4294901760
        %v5065 = vsub.f32 %v5063, %v5064
        %v5066 = vand.u32 %v5065, 4294901760
        %5067 = vmatpush1.msra.mxu0 %v5066
        %5068 = vmatprep.subr.mxu0 0.0
        %5069 = vmatpush1.msra.mxu0 0.0
        %5070 = vmatprep.subr.mxu0 0.0
        %5071 = vmatpush1.msra.mxu0 0.0
        %5072 = vmatprep.subr.mxu0 0.0
        %5073 = vmatpush1.msra.mxu0 0.0
        %5074 = vmatprep.subr.mxu0 0.0
        %5075 = vmatpush1.msra.mxu0 0.0
        %5076 = vmatprep.subr.mxu0 0.0
        %5077 = vmatpush1.msra.mxu0 0.0
        %5078 = vmatprep.subr.mxu0 0.0
        %5079 = vmatpush1.msra.mxu0 0.0
        %5080 = vmatprep.subr.mxu0 0.0
        %5081 = vmatpush1.msra.mxu0 0.0
        %5082 = vmatprep.subr.mxu0 0.0
        %5083 = vmatpush1.msra.mxu0 0.0
        %5084 = vmatprep.subr.mxu0 0.0
        %5085 = vmatpush1.msra.mxu0 0.0
        %5086 = vmatprep.subr.mxu0 0.0
        %5087 = vmatpush1.msra.mxu0 0.0
        %5088 = vmatprep.subr.mxu0 0.0
        %5089 = vmatpush1.msra.mxu0 0.0
        %5090 = vmatprep.subr.mxu0 0.0
        %5091 = vmatpush1.msra.mxu0 0.0
        %5092 = vmatprep.subr.mxu0 0.0
        %5093 = vmatpush1.msra.mxu0 0.0
        %5094 = vmatprep.subr.mxu0 0.0
        %5095 = vmatpush1.msra.mxu0 0.0
        %5096 = vmatprep.subr.mxu0 0.0
        %5097 = vmatpush1.msra.mxu0 0.0
        %5098 = vmatprep.subr.mxu0 0.0
        %5099 = vmatpush1.msra.mxu0 0.0
        %5100 = vmatprep.subr.mxu0 0.0
        %5101 = vmatpush1.msra.mxu0 0.0
        %5102 = vmatprep.subr.mxu0 0.0
        %5103 = vmatpush1.msra.mxu0 0.0
        %5104 = vmatprep.subr.mxu0 0.0
        %5105 = vmatpush1.msra.mxu0 0.0
        %5106 = vmatprep.subr.mxu0 0.0
        %5107 = vmatpush1.msra.mxu0 0.0
        %5108 = vmatprep.subr.mxu0 0.0
        %5109 = vmatpush1.msra.mxu0 0.0
        %5110 = vmatprep.subr.mxu0 0.0
        %5111 = vmatpush1.msra.mxu0 0.0
        %5112 = vmatprep.subr.mxu0 0.0
        %5113 = vmatpush1.msra.mxu0 0.0
        %5114 = vmatprep.subr.mxu0 0.0
        %5115 = vmatpush1.msra.mxu0 0.0
        %5116 = vmatprep.subr.mxu0 0.0
        %5117 = vmatpush1.msra.mxu0 0.0
        %5118 = vmatprep.subr.mxu0 0.0
        %5119 = vmatpush1.msra.mxu0 0.0
        %5120 = vmatprep.subr.mxu0 0.0
        %5121 = vmatpush1.msra.mxu0 0.0
        %5122 = vmatprep.subr.mxu0 0.0
        %5123 = vmatpush1.msra.mxu0 0.0
        %5124 = vmatprep.subr.mxu0 0.0
        %5125 = vmatpush1.msra.mxu0 0.0
        %5126 = vmatprep.subr.mxu0 0.0
        %5127 = vmatpush1.msra.mxu0 0.0
        %5128 = vmatprep.subr.mxu0 0.0
        %5129 = vmatpush1.msra.mxu0 0.0
        %5130 = vmatprep.mubr.f32.mxu0 0.0
        %v5131 = vand.u32 %v4976, 4294901760
        %5132 = vmatmul.mubr.f32.gmra.mrb[0].mxu0 %v5131
        %v5133 = vpop.f32.mrb[0].mxu0
        %v5134 = vadd.f32 %v5052, %v5133
        %v5135 = vpop.f32.mrb[0].mxu0
        %v5136 = vadd.f32 %v5054, %v5135
        %5137 = vdwg.mxu0
        %v5138 = vand.u32 %v4972, 4294901760
        %v5139 = vsub.f32 %v4972, %v5138
        %5140 = vmatprep.subr.mxu0 %v5139
        %v5141 = vand.u32 %v4971, 4294901760
        %v5142 = vsub.f32 %v4971, %v5141
        %5143 = vmatpush1.msra.mxu0 %v5142
        %5144 = vmatprep.subr.mxu0 0.0
        %5145 = vmatpush1.msra.mxu0 0.0
        %5146 = vmatprep.subr.mxu0 0.0
        %5147 = vmatpush1.msra.mxu0 0.0
        %5148 = vmatprep.subr.mxu0 0.0
        %5149 = vmatpush1.msra.mxu0 0.0
        %5150 = vmatprep.subr.mxu0 0.0
        %5151 = vmatpush1.msra.mxu0 0.0
        %5152 = vmatprep.subr.mxu0 0.0
        %5153 = vmatpush1.msra.mxu0 0.0
        %5154 = vmatprep.subr.mxu0 0.0
        %5155 = vmatpush1.msra.mxu0 0.0
        %5156 = vmatprep.subr.mxu0 0.0
        %5157 = vmatpush1.msra.mxu0 0.0
        %5158 = vmatprep.subr.mxu0 0.0
        %5159 = vmatpush1.msra.mxu0 0.0
        %5160 = vmatprep.subr.mxu0 0.0
        %5161 = vmatpush1.msra.mxu0 0.0
        %5162 = vmatprep.subr.mxu0 0.0
        %5163 = vmatpush1.msra.mxu0 0.0
        %5164 = vmatprep.subr.mxu0 0.0
        %5165 = vmatpush1.msra.mxu0 0.0
        %5166 = vmatprep.subr.mxu0 0.0
        %5167 = vmatpush1.msra.mxu0 0.0
        %5168 = vmatprep.subr.mxu0 0.0
        %5169 = vmatpush1.msra.mxu0 0.0
        %5170 = vmatprep.subr.mxu0 0.0
        %5171 = vmatpush1.msra.mxu0 0.0
        %5172 = vmatprep.subr.mxu0 0.0
        %5173 = vmatpush1.msra.mxu0 0.0
        %5174 = vmatprep.subr.mxu0 0.0
        %5175 = vmatpush1.msra.mxu0 0.0
        %5176 = vmatprep.subr.mxu0 0.0
        %5177 = vmatpush1.msra.mxu0 0.0
        %5178 = vmatprep.subr.mxu0 0.0
        %5179 = vmatpush1.msra.mxu0 0.0
        %5180 = vmatprep.subr.mxu0 0.0
        %5181 = vmatpush1.msra.mxu0 0.0
        %5182 = vmatprep.subr.mxu0 0.0
        %5183 = vmatpush1.msra.mxu0 0.0
        %5184 = vmatprep.subr.mxu0 0.0
        %5185 = vmatpush1.msra.mxu0 0.0
        %5186 = vmatprep.subr.mxu0 0.0
        %5187 = vmatpush1.msra.mxu0 0.0
        %5188 = vmatprep.subr.mxu0 0.0
        %5189 = vmatpush1.msra.mxu0 0.0
        %5190 = vmatprep.subr.mxu0 0.0
        %5191 = vmatpush1.msra.mxu0 0.0
        %5192 = vmatprep.subr.mxu0 0.0
        %5193 = vmatpush1.msra.mxu0 0.0
        %5194 = vmatprep.subr.mxu0 0.0
        %5195 = vmatpush1.msra.mxu0 0.0
        %5196 = vmatprep.subr.mxu0 0.0
        %5197 = vmatpush1.msra.mxu0 0.0
        %5198 = vmatprep.subr.mxu0 0.0
        %5199 = vmatpush1.msra.mxu0 0.0
        %5200 = vmatprep.subr.mxu0 0.0
        %5201 = vmatpush1.msra.mxu0 0.0
        %5202 = vmatprep.subr.mxu0 0.0
        %5203 = vmatpush1.msra.mxu0 0.0
        %5204 = vmatprep.subr.mxu0 0.0
        %5205 = vmatpush1.msra.mxu0 0.0
        %5206 = vmatprep.mubr.f32.mxu0 0.0
        %v5207 = vand.u32 %v4976, 4294901760
        %v5208 = vsub.f32 %v4976, %v5207
        %5209 = vmatmul.mubr.f32.gmra.mrb[0].mxu0 %v5208
        %v5210 = vpop.f32.mrb[0].mxu0
        %v5211 = vadd.f32 %v5134, %v5210
        %v5212 = vpop.f32.mrb[0].mxu0
        %v5213 = vadd.f32 %v5136, %v5212
        %5214 = vdwg.mxu0
        %v5215 = vand.u32 %v4972, 4294901760
        %5216 = vmatprep.subr.mxu0 %v5215
        %v5217 = vand.u32 %v4971, 4294901760
        %5218 = vmatpush1.msra.mxu0 %v5217
        %5219 = vmatprep.subr.mxu0 0.0
        %5220 = vmatpush1.msra.mxu0 0.0
        %5221 = vmatprep.subr.mxu0 0.0
        %5222 = vmatpush1.msra.mxu0 0.0
        %5223 = vmatprep.subr.mxu0 0.0
        %5224 = vmatpush1.msra.mxu0 0.0
        %5225 = vmatprep.subr.mxu0 0.0
        %5226 = vmatpush1.msra.mxu0 0.0
        %5227 = vmatprep.subr.mxu0 0.0
        %5228 = vmatpush1.msra.mxu0 0.0
        %5229 = vmatprep.subr.mxu0 0.0
        %5230 = vmatpush1.msra.mxu0 0.0
        %5231 = vmatprep.subr.mxu0 0.0
        %5232 = vmatpush1.msra.mxu0 0.0
        %5233 = vmatprep.subr.mxu0 0.0
        %5234 = vmatpush1.msra.mxu0 0.0
        %5235 = vmatprep.subr.mxu0 0.0
        %5236 = vmatpush1.msra.mxu0 0.0
        %5237 = vmatprep.subr.mxu0 0.0
        %5238 = vmatpush1.msra.mxu0 0.0
        %5239 = vmatprep.subr.mxu0 0.0
        %5240 = vmatpush1.msra.mxu0 0.0
        %5241 = vmatprep.subr.mxu0 0.0
        %5242 = vmatpush1.msra.mxu0 0.0
        %5243 = vmatprep.subr.mxu0 0.0
        %5244 = vmatpush1.msra.mxu0 0.0
        %5245 = vmatprep.subr.mxu0 0.0
        %5246 = vmatpush1.msra.mxu0 0.0
        %5247 = vmatprep.subr.mxu0 0.0
        %5248 = vmatpush1.msra.mxu0 0.0
        %5249 = vmatprep.subr.mxu0 0.0
        %5250 = vmatpush1.msra.mxu0 0.0
        %5251 = vmatprep.subr.mxu0 0.0
        %5252 = vmatpush1.msra.mxu0 0.0
        %5253 = vmatprep.subr.mxu0 0.0
        %5254 = vmatpush1.msra.mxu0 0.0
        %5255 = vmatprep.subr.mxu0 0.0
        %5256 = vmatpush1.msra.mxu0 0.0
        %5257 = vmatprep.subr.mxu0 0.0
        %5258 = vmatpush1.msra.mxu0 0.0
        %5259 = vmatprep.subr.mxu0 0.0
        %5260 = vmatpush1.msra.mxu0 0.0
        %5261 = vmatprep.subr.mxu0 0.0
        %5262 = vmatpush1.msra.mxu0 0.0
        %5263 = vmatprep.subr.mxu0 0.0
        %5264 = vmatpush1.msra.mxu0 0.0
        %5265 = vmatprep.subr.mxu0 0.0
        %5266 = vmatpush1.msra.mxu0 0.0
        %5267 = vmatprep.subr.mxu0 0.0
        %5268 = vmatpush1.msra.mxu0 0.0
        %5269 = vmatprep.subr.mxu0 0.0
        %5270 = vmatpush1.msra.mxu0 0.0
        %5271 = vmatprep.subr.mxu0 0.0
        %5272 = vmatpush1.msra.mxu0 0.0
        %5273 = vmatprep.subr.mxu0 0.0
        %5274 = vmatpush1.msra.mxu0 0.0
        %5275 = vmatprep.subr.mxu0 0.0
        %5276 = vmatpush1.msra.mxu0 0.0
        %5277 = vmatprep.subr.mxu0 0.0
        %5278 = vmatpush1.msra.mxu0 0.0
        %5279 = vmatprep.subr.mxu0 0.0
        %5280 = vmatpush1.msra.mxu0 0.0
        %5281 = vmatprep.mubr.f32.mxu0 0.0
        %v5282 = vand.u32 %v4976, 4294901760
        %v5283 = vsub.f32 %v4976, %v5282
        %v5284 = vand.u32 %v5283, 4294901760
        %5285 = vmatmul.mubr.f32.gmra.mrb[0].mxu0 %v5284
        %v5286 = vpop.f32.mrb[0].mxu0
        %v5287 = vadd.f32 %v5211, %v5286
        %v5288 = vpop.f32.mrb[0].mxu0
        %v5289 = vadd.f32 %v5213, %v5288
        %5290 = vdwg.mxu0
        %v5291 = vand.u32 %v4972, 4294901760
        %v5292 = vsub.f32 %v4972, %v5291
        %v5293 = vand.u32 %v5292, 4294901760
        %5294 = vmatprep.subr.mxu0 %v5293
        %v5295 = vand.u32 %v4971, 4294901760
        %v5296 = vsub.f32 %v4971, %v5295
        %v5297 = vand.u32 %v5296, 4294901760
        %5298 = vmatpush1.msra.mxu0 %v5297
        %5299 = vmatprep.subr.mxu0 0.0
        %5300 = vmatpush1.msra.mxu0 0.0
        %5301 = vmatprep.subr.mxu0 0.0
        %5302 = vmatpush1.msra.mxu0 0.0
        %5303 = vmatprep.subr.mxu0 0.0
        %5304 = vmatpush1.msra.mxu0 0.0
        %5305 = vmatprep.subr.mxu0 0.0
        %5306 = vmatpush1.msra.mxu0 0.0
        %5307 = vmatprep.subr.mxu0 0.0
        %5308 = vmatpush1.msra.mxu0 0.0
        %5309 = vmatprep.subr.mxu0 0.0
        %5310 = vmatpush1.msra.mxu0 0.0
        %5311 = vmatprep.subr.mxu0 0.0
        %5312 = vmatpush1.msra.mxu0 0.0
        %5313 = vmatprep.subr.mxu0 0.0
        %5314 = vmatpush1.msra.mxu0 0.0
        %5315 = vmatprep.subr.mxu0 0.0
        %5316 = vmatpush1.msra.mxu0 0.0
        %5317 = vmatprep.subr.mxu0 0.0
        %5318 = vmatpush1.msra.mxu0 0.0
        %5319 = vmatprep.subr.mxu0 0.0
        %5320 = vmatpush1.msra.mxu0 0.0
        %5321 = vmatprep.subr.mxu0 0.0
        %5322 = vmatpush1.msra.mxu0 0.0
        %5323 = vmatprep.subr.mxu0 0.0
        %5324 = vmatpush1.msra.mxu0 0.0
        %5325 = vmatprep.subr.mxu0 0.0
        %5326 = vmatpush1.msra.mxu0 0.0
        %5327 = vmatprep.subr.mxu0 0.0
        %5328 = vmatpush1.msra.mxu0 0.0
        %5329 = vmatprep.subr.mxu0 0.0
        %5330 = vmatpush1.msra.mxu0 0.0
        %5331 = vmatprep.subr.mxu0 0.0
        %5332 = vmatpush1.msra.mxu0 0.0
        %5333 = vmatprep.subr.mxu0 0.0
        %5334 = vmatpush1.msra.mxu0 0.0
        %5335 = vmatprep.subr.mxu0 0.0
        %5336 = vmatpush1.msra.mxu0 0.0
        %5337 = vmatprep.subr.mxu0 0.0
        %5338 = vmatpush1.msra.mxu0 0.0
        %5339 = vmatprep.subr.mxu0 0.0
        %5340 = vmatpush1.msra.mxu0 0.0
        %5341 = vmatprep.subr.mxu0 0.0
        %5342 = vmatpush1.msra.mxu0 0.0
        %5343 = vmatprep.subr.mxu0 0.0
        %5344 = vmatpush1.msra.mxu0 0.0
        %5345 = vmatprep.subr.mxu0 0.0
        %5346 = vmatpush1.msra.mxu0 0.0
        %5347 = vmatprep.subr.mxu0 0.0
        %5348 = vmatpush1.msra.mxu0 0.0
        %5349 = vmatprep.subr.mxu0 0.0
        %5350 = vmatpush1.msra.mxu0 0.0
        %5351 = vmatprep.subr.mxu0 0.0
        %5352 = vmatpush1.msra.mxu0 0.0
        %5353 = vmatprep.subr.mxu0 0.0
        %5354 = vmatpush1.msra.mxu0 0.0
        %5355 = vmatprep.subr.mxu0 0.0
        %5356 = vmatpush1.msra.mxu0 0.0
        %5357 = vmatprep.subr.mxu0 0.0
        %5358 = vmatpush1.msra.mxu0 0.0
        %5359 = vmatprep.subr.mxu0 0.0
        %5360 = vmatpush1.msra.mxu0 0.0
        %5361 = vmatprep.mubr.f32.mxu0 0.0
        %v5362 = vand.u32 %v4976, 4294901760
        %5363 = vmatmul.mubr.f32.gmra.mrb[0].mxu0 %v5362
        %v5364 = vpop.f32.mrb[0].mxu0
        %v5365 = vadd.f32 %v5287, %v5364
        %v5366 = vpop.f32.mrb[0].mxu0
        %v5367 = vadd.f32 %v5289, %v5366
        %5368 = vdwg.mxu0
        %v5369 = vand.u32 %v4972, 4294901760
        %5370 = vmatprep.subr.mxu0 %v5369
        %v5371 = vand.u32 %v4971, 4294901760
        %5372 = vmatpush1.msra.mxu0 %v5371
        %5373 = vmatprep.subr.mxu0 0.0
        %5374 = vmatpush1.msra.mxu0 0.0
        %5375 = vmatprep.subr.mxu0 0.0
        %5376 = vmatpush1.msra.mxu0 0.0
        %5377 = vmatprep.subr.mxu0 0.0
        %5378 = vmatpush1.msra.mxu0 0.0
        %5379 = vmatprep.subr.mxu0 0.0
        %5380 = vmatpush1.msra.mxu0 0.0
        %5381 = vmatprep.subr.mxu0 0.0
        %5382 = vmatpush1.msra.mxu0 0.0
        %5383 = vmatprep.subr.mxu0 0.0
        %5384 = vmatpush1.msra.mxu0 0.0
        %5385 = vmatprep.subr.mxu0 0.0
        %5386 = vmatpush1.msra.mxu0 0.0
        %5387 = vmatprep.subr.mxu0 0.0
        %5388 = vmatpush1.msra.mxu0 0.0
        %5389 = vmatprep.subr.mxu0 0.0
        %5390 = vmatpush1.msra.mxu0 0.0
        %5391 = vmatprep.subr.mxu0 0.0
        %5392 = vmatpush1.msra.mxu0 0.0
        %5393 = vmatprep.subr.mxu0 0.0
        %5394 = vmatpush1.msra.mxu0 0.0
        %5395 = vmatprep.subr.mxu0 0.0
        %5396 = vmatpush1.msra.mxu0 0.0
        %5397 = vmatprep.subr.mxu0 0.0
        %5398 = vmatpush1.msra.mxu0 0.0
        %5399 = vmatprep.subr.mxu0 0.0
        %5400 = vmatpush1.msra.mxu0 0.0
        %5401 = vmatprep.subr.mxu0 0.0
        %5402 = vmatpush1.msra.mxu0 0.0
        %5403 = vmatprep.subr.mxu0 0.0
        %5404 = vmatpush1.msra.mxu0 0.0
        %5405 = vmatprep.subr.mxu0 0.0
        %5406 = vmatpush1.msra.mxu0 0.0
        %5407 = vmatprep.subr.mxu0 0.0
        %5408 = vmatpush1.msra.mxu0 0.0
        %5409 = vmatprep.subr.mxu0 0.0
        %5410 = vmatpush1.msra.mxu0 0.0
        %5411 = vmatprep.subr.mxu0 0.0
        %5412 = vmatpush1.msra.mxu0 0.0
        %5413 = vmatprep.subr.mxu0 0.0
        %5414 = vmatpush1.msra.mxu0 0.0
        %5415 = vmatprep.subr.mxu0 0.0
        %5416 = vmatpush1.msra.mxu0 0.0
        %5417 = vmatprep.subr.mxu0 0.0
        %5418 = vmatpush1.msra.mxu0 0.0
        %5419 = vmatprep.subr.mxu0 0.0
        %5420 = vmatpush1.msra.mxu0 0.0
        %5421 = vmatprep.subr.mxu0 0.0
        %5422 = vmatpush1.msra.mxu0 0.0
        %5423 = vmatprep.subr.mxu0 0.0
        %5424 = vmatpush1.msra.mxu0 0.0
        %5425 = vmatprep.subr.mxu0 0.0
        %5426 = vmatpush1.msra.mxu0 0.0
        %5427 = vmatprep.subr.mxu0 0.0
        %5428 = vmatpush1.msra.mxu0 0.0
        %5429 = vmatprep.subr.mxu0 0.0
        %5430 = vmatpush1.msra.mxu0 0.0
        %5431 = vmatprep.subr.mxu0 0.0
        %5432 = vmatpush1.msra.mxu0 0.0
        %5433 = vmatprep.subr.mxu0 0.0
        %5434 = vmatpush1.msra.mxu0 0.0
        %5435 = vmatprep.mubr.f32.mxu0 0.0
        %v5436 = vand.u32 %v4976, 4294901760
        %5437 = vmatmul.mubr.f32.gmra.mrb[0].mxu0 %v5436
        %v5438 = vpop.f32.mrb[0].mxu0
        %v5439 = vadd.f32 %v5365, %v5438
        %v5440 = vpop.f32.mrb[0].mxu0
        %v5441 = vadd.f32 %v5367, %v5440
        %5442 = vdwg.mxu0
        %5443 = vmatprep.subr.mxu0 0.0
        %v5444 = vand.u32 %v4969, 4294901760
        %5445 = vmatpush1.msra.mxu0 %v5444
        %5446 = vmatprep.subr.mxu0 0.0
        %5447 = vmatpush1.msra.mxu0 0.0
        %5448 = vmatprep.subr.mxu0 0.0
        %5449 = vmatpush1.msra.mxu0 0.0
        %5450 = vmatprep.subr.mxu0 0.0
        %5451 = vmatpush1.msra.mxu0 0.0
        %5452 = vmatprep.subr.mxu0 0.0
        %5453 = vmatpush1.msra.mxu0 0.0
        %5454 = vmatprep.subr.mxu0 0.0
        %5455 = vmatpush1.msra.mxu0 0.0
        %5456 = vmatprep.subr.mxu0 0.0
        %5457 = vmatpush1.msra.mxu0 0.0
        %5458 = vmatprep.subr.mxu0 0.0
        %5459 = vmatpush1.msra.mxu0 0.0
        %5460 = vmatprep.subr.mxu0 0.0
        %5461 = vmatpush1.msra.mxu0 0.0
        %5462 = vmatprep.subr.mxu0 0.0
        %5463 = vmatpush1.msra.mxu0 0.0
        %5464 = vmatprep.subr.mxu0 0.0
        %5465 = vmatpush1.msra.mxu0 0.0
        %5466 = vmatprep.subr.mxu0 0.0
        %5467 = vmatpush1.msra.mxu0 0.0
        %5468 = vmatprep.subr.mxu0 0.0
        %5469 = vmatpush1.msra.mxu0 0.0
        %5470 = vmatprep.subr.mxu0 0.0
        %5471 = vmatpush1.msra.mxu0 0.0
        %5472 = vmatprep.subr.mxu0 0.0
        %5473 = vmatpush1.msra.mxu0 0.0
        %5474 = vmatprep.subr.mxu0 0.0
        %5475 = vmatpush1.msra.mxu0 0.0
        %5476 = vmatprep.subr.mxu0 0.0
        %5477 = vmatpush1.msra.mxu0 0.0
        %5478 = vmatprep.subr.mxu0 0.0
        %5479 = vmatpush1.msra.mxu0 0.0
        %5480 = vmatprep.subr.mxu0 0.0
        %5481 = vmatpush1.msra.mxu0 0.0
        %5482 = vmatprep.subr.mxu0 0.0
        %5483 = vmatpush1.msra.mxu0 0.0
        %5484 = vmatprep.subr.mxu0 0.0
        %5485 = vmatpush1.msra.mxu0 0.0
        %5486 = vmatprep.subr.mxu0 0.0
        %5487 = vmatpush1.msra.mxu0 0.0
        %5488 = vmatprep.subr.mxu0 0.0
        %5489 = vmatpush1.msra.mxu0 0.0
        %5490 = vmatprep.subr.mxu0 0.0
        %5491 = vmatpush1.msra.mxu0 0.0
        %5492 = vmatprep.subr.mxu0 0.0
        %5493 = vmatpush1.msra.mxu0 0.0
        %5494 = vmatprep.subr.mxu0 0.0
        %5495 = vmatpush1.msra.mxu0 0.0
        %5496 = vmatprep.subr.mxu0 0.0
        %5497 = vmatpush1.msra.mxu0 0.0
        %5498 = vmatprep.subr.mxu0 0.0
        %5499 = vmatpush1.msra.mxu0 0.0
        %5500 = vmatprep.subr.mxu0 0.0
        %5501 = vmatpush1.msra.mxu0 0.0
        %5502 = vmatprep.subr.mxu0 0.0
        %5503 = vmatpush1.msra.mxu0 0.0
        %5504 = vmatprep.subr.mxu0 0.0
        %5505 = vmatpush1.msra.mxu0 0.0
        %5506 = vmatprep.subr.mxu0 0.0
        %5507 = vmatpush1.msra.mxu0 0.0
        %5508 = vmatprep.mubr.f32.mxu0 0.0
        %v5509 = vand.u32 %v4976, 4294901760
        %v5510 = vsub.f32 %v4976, %v5509
        %v5511 = vand.u32 %v5510, 4294901760
        %v5512 = vsub.f32 %v5510, %v5511
        %v5513 = vand.u32 %v5512, 4294901760
        %5514 = vmatmul.mubr.f32.gmra.mrb[0].mxu0 %v5513
        %v5515 = vpop.f32.mrb[0].mxu0
        %v5516 = vadd.f32 0.0, %v5515
        %v5517 = vpop.f32.mrb[0].mxu0
        %5518 = vdwg.mxu0
        %5519 = vmatprep.subr.mxu0 0.0
        %v5520 = vand.u32 %v4969, 4294901760
        %v5521 = vsub.f32 %v4969, %v5520
        %v5522 = vand.u32 %v5521, 4294901760
        %v5523 = vsub.f32 %v5521, %v5522
        %v5524 = vand.u32 %v5523, 4294901760
        %5525 = vmatpush1.msra.mxu0 %v5524
        %5526 = vmatprep.subr.mxu0 0.0
        %5527 = vmatpush1.msra.mxu0 0.0
        %5528 = vmatprep.subr.mxu0 0.0
        %5529 = vmatpush1.msra.mxu0 0.0
        %5530 = vmatprep.subr.mxu0 0.0
        %5531 = vmatpush1.msra.mxu0 0.0
        %5532 = vmatprep.subr.mxu0 0.0
        %5533 = vmatpush1.msra.mxu0 0.0
        %5534 = vmatprep.subr.mxu0 0.0
        %5535 = vmatpush1.msra.mxu0 0.0
        %5536 = vmatprep.subr.mxu0 0.0
        %5537 = vmatpush1.msra.mxu0 0.0
        %5538 = vmatprep.subr.mxu0 0.0
        %5539 = vmatpush1.msra.mxu0 0.0
        %5540 = vmatprep.subr.mxu0 0.0
        %5541 = vmatpush1.msra.mxu0 0.0
        %5542 = vmatprep.subr.mxu0 0.0
        %5543 = vmatpush1.msra.mxu0 0.0
        %5544 = vmatprep.subr.mxu0 0.0
        %5545 = vmatpush1.msra.mxu0 0.0
        %5546 = vmatprep.subr.mxu0 0.0
        %5547 = vmatpush1.msra.mxu0 0.0
        %5548 = vmatprep.subr.mxu0 0.0
        %5549 = vmatpush1.msra.mxu0 0.0
        %5550 = vmatprep.subr.mxu0 0.0
        %5551 = vmatpush1.msra.mxu0 0.0
        %5552 = vmatprep.subr.mxu0 0.0
        %5553 = vmatpush1.msra.mxu0 0.0
        %5554 = vmatprep.subr.mxu0 0.0
        %5555 = vmatpush1.msra.mxu0 0.0
        %5556 = vmatprep.subr.mxu0 0.0
        %5557 = vmatpush1.msra.mxu0 0.0
        %5558 = vmatprep.subr.mxu0 0.0
        %5559 = vmatpush1.msra.mxu0 0.0
        %5560 = vmatprep.subr.mxu0 0.0
        %5561 = vmatpush1.msra.mxu0 0.0
        %5562 = vmatprep.subr.mxu0 0.0
        %5563 = vmatpush1.msra.mxu0 0.0
        %5564 = vmatprep.subr.mxu0 0.0
        %5565 = vmatpush1.msra.mxu0 0.0
        %5566 = vmatprep.subr.mxu0 0.0
        %5567 = vmatpush1.msra.mxu0 0.0
        %5568 = vmatprep.subr.mxu0 0.0
        %5569 = vmatpush1.msra.mxu0 0.0
        %5570 = vmatprep.subr.mxu0 0.0
        %5571 = vmatpush1.msra.mxu0 0.0
        %5572 = vmatprep.subr.mxu0 0.0
        %5573 = vmatpush1.msra.mxu0 0.0
        %5574 = vmatprep.subr.mxu0 0.0
        %5575 = vmatpush1.msra.mxu0 0.0
        %5576 = vmatprep.subr.mxu0 0.0
        %5577 = vmatpush1.msra.mxu0 0.0
        %5578 = vmatprep.subr.mxu0 0.0
        %5579 = vmatpush1.msra.mxu0 0.0
        %5580 = vmatprep.subr.mxu0 0.0
        %5581 = vmatpush1.msra.mxu0 0.0
        %5582 = vmatprep.subr.mxu0 0.0
        %5583 = vmatpush1.msra.mxu0 0.0
        %5584 = vmatprep.subr.mxu0 0.0
        %5585 = vmatpush1.msra.mxu0 0.0
        %5586 = vmatprep.subr.mxu0 0.0
        %5587 = vmatpush1.msra.mxu0 0.0
        %5588 = vmatprep.mubr.f32.mxu0 0.0
        %v5589 = vand.u32 %v4976, 4294901760
        %5590 = vmatmul.mubr.f32.gmra.mrb[0].mxu0 %v5589
        %v5591 = vpop.f32.mrb[0].mxu0
        %v5592 = vadd.f32 %v5516, %v5591
        %v5593 = vpop.f32.mrb[0].mxu0
        %5594 = vdwg.mxu0
        %5595 = vmatprep.subr.mxu0 0.0
        %v5596 = vand.u32 %v4969, 4294901760
        %v5597 = vsub.f32 %v4969, %v5596
        %5598 = vmatpush1.msra.mxu0 %v5597
        %5599 = vmatprep.subr.mxu0 0.0
        %5600 = vmatpush1.msra.mxu0 0.0
        %5601 = vmatprep.subr.mxu0 0.0
        %5602 = vmatpush1.msra.mxu0 0.0
        %5603 = vmatprep.subr.mxu0 0.0
        %5604 = vmatpush1.msra.mxu0 0.0
        %5605 = vmatprep.subr.mxu0 0.0
        %5606 = vmatpush1.msra.mxu0 0.0
        %5607 = vmatprep.subr.mxu0 0.0
        %5608 = vmatpush1.msra.mxu0 0.0
        %5609 = vmatprep.subr.mxu0 0.0
        %5610 = vmatpush1.msra.mxu0 0.0
        %5611 = vmatprep.subr.mxu0 0.0
        %5612 = vmatpush1.msra.mxu0 0.0
        %5613 = vmatprep.subr.mxu0 0.0
        %5614 = vmatpush1.msra.mxu0 0.0
        %5615 = vmatprep.subr.mxu0 0.0
        %5616 = vmatpush1.msra.mxu0 0.0
        %5617 = vmatprep.subr.mxu0 0.0
        %5618 = vmatpush1.msra.mxu0 0.0
        %5619 = vmatprep.subr.mxu0 0.0
        %5620 = vmatpush1.msra.mxu0 0.0
        %5621 = vmatprep.subr.mxu0 0.0
        %5622 = vmatpush1.msra.mxu0 0.0
        %5623 = vmatprep.subr.mxu0 0.0
        %5624 = vmatpush1.msra.mxu0 0.0
        %5625 = vmatprep.subr.mxu0 0.0
        %5626 = vmatpush1.msra.mxu0 0.0
        %5627 = vmatprep.subr.mxu0 0.0
        %5628 = vmatpush1.msra.mxu0 0.0
        %5629 = vmatprep.subr.mxu0 0.0
        %5630 = vmatpush1.msra.mxu0 0.0
        %5631 = vmatprep.subr.mxu0 0.0
        %5632 = vmatpush1.msra.mxu0 0.0
        %5633 = vmatprep.subr.mxu0 0.0
        %5634 = vmatpush1.msra.mxu0 0.0
        %5635 = vmatprep.subr.mxu0 0.0
        %5636 = vmatpush1.msra.mxu0 0.0
        %5637 = vmatprep.subr.mxu0 0.0
        %5638 = vmatpush1.msra.mxu0 0.0
        %5639 = vmatprep.subr.mxu0 0.0
        %5640 = vmatpush1.msra.mxu0 0.0
        %5641 = vmatprep.subr.mxu0 0.0
        %5642 = vmatpush1.msra.mxu0 0.0
        %5643 = vmatprep.subr.mxu0 0.0
        %5644 = vmatpush1.msra.mxu0 0.0
        %5645 = vmatprep.subr.mxu0 0.0
        %5646 = vmatpush1.msra.mxu0 0.0
        %5647 = vmatprep.subr.mxu0 0.0
        %5648 = vmatpush1.msra.mxu0 0.0
        %5649 = vmatprep.subr.mxu0 0.0
        %5650 = vmatpush1.msra.mxu0 0.0
        %5651 = vmatprep.subr.mxu0 0.0
        %5652 = vmatpush1.msra.mxu0 0.0
        %5653 = vmatprep.subr.mxu0 0.0
        %5654 = vmatpush1.msra.mxu0 0.0
        %5655 = vmatprep.subr.mxu0 0.0
        %5656 = vmatpush1.msra.mxu0 0.0
        %5657 = vmatprep.subr.mxu0 0.0
        %5658 = vmatpush1.msra.mxu0 0.0
        %5659 = vmatprep.subr.mxu0 0.0
        %5660 = vmatpush1.msra.mxu0 0.0
        %5661 = vmatprep.mubr.f32.mxu0 0.0
        %v5662 = vand.u32 %v4976, 4294901760
        %v5663 = vsub.f32 %v4976, %v5662
        %5664 = vmatmul.mubr.f32.gmra.mrb[0].mxu0 %v5663
        %v5665 = vpop.f32.mrb[0].mxu0
        %v5666 = vadd.f32 %v5592, %v5665
        %v5667 = vpop.f32.mrb[0].mxu0
        %5668 = vdwg.mxu0
        %5669 = vmatprep.subr.mxu0 0.0
        %v5670 = vand.u32 %v4969, 4294901760
        %5671 = vmatpush1.msra.mxu0 %v5670
        %5672 = vmatprep.subr.mxu0 0.0
        %5673 = vmatpush1.msra.mxu0 0.0
        %5674 = vmatprep.subr.mxu0 0.0
        %5675 = vmatpush1.msra.mxu0 0.0
        %5676 = vmatprep.subr.mxu0 0.0
        %5677 = vmatpush1.msra.mxu0 0.0
        %5678 = vmatprep.subr.mxu0 0.0
        %5679 = vmatpush1.msra.mxu0 0.0
        %5680 = vmatprep.subr.mxu0 0.0
        %5681 = vmatpush1.msra.mxu0 0.0
        %5682 = vmatprep.subr.mxu0 0.0
        %5683 = vmatpush1.msra.mxu0 0.0
        %5684 = vmatprep.subr.mxu0 0.0
        %5685 = vmatpush1.msra.mxu0 0.0
        %5686 = vmatprep.subr.mxu0 0.0
        %5687 = vmatpush1.msra.mxu0 0.0
        %5688 = vmatprep.subr.mxu0 0.0
        %5689 = vmatpush1.msra.mxu0 0.0
        %5690 = vmatprep.subr.mxu0 0.0
        %5691 = vmatpush1.msra.mxu0 0.0
        %5692 = vmatprep.subr.mxu0 0.0
        %5693 = vmatpush1.msra.mxu0 0.0
        %5694 = vmatprep.subr.mxu0 0.0
        %5695 = vmatpush1.msra.mxu0 0.0
        %5696 = vmatprep.subr.mxu0 0.0
        %5697 = vmatpush1.msra.mxu0 0.0
        %5698 = vmatprep.subr.mxu0 0.0
        %5699 = vmatpush1.msra.mxu0 0.0
        %5700 = vmatprep.subr.mxu0 0.0
        %5701 = vmatpush1.msra.mxu0 0.0
        %5702 = vmatprep.subr.mxu0 0.0
        %5703 = vmatpush1.msra.mxu0 0.0
        %5704 = vmatprep.subr.mxu0 0.0
        %5705 = vmatpush1.msra.mxu0 0.0
        %5706 = vmatprep.subr.mxu0 0.0
        %5707 = vmatpush1.msra.mxu0 0.0
        %5708 = vmatprep.subr.mxu0 0.0
        %5709 = vmatpush1.msra.mxu0 0.0
        %5710 = vmatprep.subr.mxu0 0.0
        %5711 = vmatpush1.msra.mxu0 0.0
        %5712 = vmatprep.subr.mxu0 0.0
        %5713 = vmatpush1.msra.mxu0 0.0
        %5714 = vmatprep.subr.mxu0 0.0
        %5715 = vmatpush1.msra.mxu0 0.0
        %5716 = vmatprep.subr.mxu0 0.0
        %5717 = vmatpush1.msra.mxu0 0.0
        %5718 = vmatprep.subr.mxu0 0.0
        %5719 = vmatpush1.msra.mxu0 0.0
        %5720 = vmatprep.subr.mxu0 0.0
        %5721 = vmatpush1.msra.mxu0 0.0
        %5722 = vmatprep.subr.mxu0 0.0
        %5723 = vmatpush1.msra.mxu0 0.0
        %5724 = vmatprep.subr.mxu0 0.0
        %5725 = vmatpush1.msra.mxu0 0.0
        %5726 = vmatprep.subr.mxu0 0.0
        %5727 = vmatpush1.msra.mxu0 0.0
        %5728 = vmatprep.subr.mxu0 0.0
        %5729 = vmatpush1.msra.mxu0 0.0
        %5730 = vmatprep.subr.mxu0 0.0
        %5731 = vmatpush1.msra.mxu0 0.0
        %5732 = vmatprep.subr.mxu0 0.0
        %5733 = vmatpush1.msra.mxu0 0.0
        %5734 = vmatprep.mubr.f32.mxu0 0.0
        %v5735 = vand.u32 %v4976, 4294901760
        %v5736 = vsub.f32 %v4976, %v5735
        %v5737 = vand.u32 %v5736, 4294901760
        %5738 = vmatmul.mubr.f32.gmra.mrb[0].mxu0 %v5737
        %v5739 = vpop.f32.mrb[0].mxu0
        %v5740 = vadd.f32 %v5666, %v5739
        %v5741 = vpop.f32.mrb[0].mxu0
        %5742 = vdwg.mxu0
        %5743 = vmatprep.subr.mxu0 0.0
        %v5744 = vand.u32 %v4969, 4294901760
        %v5745 = vsub.f32 %v4969, %v5744
        %v5746 = vand.u32 %v5745, 4294901760
        %5747 = vmatpush1.msra.mxu0 %v5746
        %5748 = vmatprep.subr.mxu0 0.0
        %5749 = vmatpush1.msra.mxu0 0.0
        %5750 = vmatprep.subr.mxu0 0.0
        %5751 = vmatpush1.msra.mxu0 0.0
        %5752 = vmatprep.subr.mxu0 0.0
        %5753 = vmatpush1.msra.mxu0 0.0
        %5754 = vmatprep.subr.mxu0 0.0
        %5755 = vmatpush1.msra.mxu0 0.0
        %5756 = vmatprep.subr.mxu0 0.0
        %5757 = vmatpush1.msra.mxu0 0.0
        %5758 = vmatprep.subr.mxu0 0.0
        %5759 = vmatpush1.msra.mxu0 0.0
        %5760 = vmatprep.subr.mxu0 0.0
        %5761 = vmatpush1.msra.mxu0 0.0
        %5762 = vmatprep.subr.mxu0 0.0
        %5763 = vmatpush1.msra.mxu0 0.0
        %5764 = vmatprep.subr.mxu0 0.0
        %5765 = vmatpush1.msra.mxu0 0.0
        %5766 = vmatprep.subr.mxu0 0.0
        %5767 = vmatpush1.msra.mxu0 0.0
        %5768 = vmatprep.subr.mxu0 0.0
        %5769 = vmatpush1.msra.mxu0 0.0
        %5770 = vmatprep.subr.mxu0 0.0
        %5771 = vmatpush1.msra.mxu0 0.0
        %5772 = vmatprep.subr.mxu0 0.0
        %5773 = vmatpush1.msra.mxu0 0.0
        %5774 = vmatprep.subr.mxu0 0.0
        %5775 = vmatpush1.msra.mxu0 0.0
        %5776 = vmatprep.subr.mxu0 0.0
        %5777 = vmatpush1.msra.mxu0 0.0
        %5778 = vmatprep.subr.mxu0 0.0
        %5779 = vmatpush1.msra.mxu0 0.0
        %5780 = vmatprep.subr.mxu0 0.0
        %5781 = vmatpush1.msra.mxu0 0.0
        %5782 = vmatprep.subr.mxu0 0.0
        %5783 = vmatpush1.msra.mxu0 0.0
        %5784 = vmatprep.subr.mxu0 0.0
        %5785 = vmatpush1.msra.mxu0 0.0
        %5786 = vmatprep.subr.mxu0 0.0
        %5787 = vmatpush1.msra.mxu0 0.0
        %5788 = vmatprep.subr.mxu0 0.0
        %5789 = vmatpush1.msra.mxu0 0.0
        %5790 = vmatprep.subr.mxu0 0.0
        %5791 = vmatpush1.msra.mxu0 0.0
        %5792 = vmatprep.subr.mxu0 0.0
        %5793 = vmatpush1.msra.mxu0 0.0
        %5794 = vmatprep.subr.mxu0 0.0
        %5795 = vmatpush1.msra.mxu0 0.0
        %5796 = vmatprep.subr.mxu0 0.0
        %5797 = vmatpush1.msra.mxu0 0.0
        %5798 = vmatprep.subr.mxu0 0.0
        %5799 = vmatpush1.msra.mxu0 0.0
        %5800 = vmatprep.subr.mxu0 0.0
        %5801 = vmatpush1.msra.mxu0 0.0
        %5802 = vmatprep.subr.mxu0 0.0
        %5803 = vmatpush1.msra.mxu0 0.0
        %5804 = vmatprep.subr.mxu0 0.0
        %5805 = vmatpush1.msra.mxu0 0.0
        %5806 = vmatprep.subr.mxu0 0.0
        %5807 = vmatpush1.msra.mxu0 0.0
        %5808 = vmatprep.subr.mxu0 0.0
        %5809 = vmatpush1.msra.mxu0 0.0
        %5810 = vmatprep.mubr.f32.mxu0 0.0
        %v5811 = vand.u32 %v4976, 4294901760
        %5812 = vmatmul.mubr.f32.gmra.mrb[0].mxu0 %v5811
        %v5813 = vpop.f32.mrb[0].mxu0
        %v5814 = vadd.f32 %v5740, %v5813
        %v5815 = vpop.f32.mrb[0].mxu0
        %5816 = vdwg.mxu0
        %5817 = vmatprep.subr.mxu0 0.0
        %v5818 = vand.u32 %v4969, 4294901760
        %5819 = vmatpush1.msra.mxu0 %v5818
        %5820 = vmatprep.subr.mxu0 0.0
        %5821 = vmatpush1.msra.mxu0 0.0
        %5822 = vmatprep.subr.mxu0 0.0
        %5823 = vmatpush1.msra.mxu0 0.0
        %5824 = vmatprep.subr.mxu0 0.0
        %5825 = vmatpush1.msra.mxu0 0.0
        %5826 = vmatprep.subr.mxu0 0.0
        %5827 = vmatpush1.msra.mxu0 0.0
        %5828 = vmatprep.subr.mxu0 0.0
        %5829 = vmatpush1.msra.mxu0 0.0
        %5830 = vmatprep.subr.mxu0 0.0
        %5831 = vmatpush1.msra.mxu0 0.0
        %5832 = vmatprep.subr.mxu0 0.0
        %5833 = vmatpush1.msra.mxu0 0.0
        %5834 = vmatprep.subr.mxu0 0.0
        %5835 = vmatpush1.msra.mxu0 0.0
        %5836 = vmatprep.subr.mxu0 0.0
        %5837 = vmatpush1.msra.mxu0 0.0
        %5838 = vmatprep.subr.mxu0 0.0
        %5839 = vmatpush1.msra.mxu0 0.0
        %5840 = vmatprep.subr.mxu0 0.0
        %5841 = vmatpush1.msra.mxu0 0.0
        %5842 = vmatprep.subr.mxu0 0.0
        %5843 = vmatpush1.msra.mxu0 0.0
        %5844 = vmatprep.subr.mxu0 0.0
        %5845 = vmatpush1.msra.mxu0 0.0
        %5846 = vmatprep.subr.mxu0 0.0
        %5847 = vmatpush1.msra.mxu0 0.0
        %5848 = vmatprep.subr.mxu0 0.0
        %5849 = vmatpush1.msra.mxu0 0.0
        %5850 = vmatprep.subr.mxu0 0.0
        %5851 = vmatpush1.msra.mxu0 0.0
        %5852 = vmatprep.subr.mxu0 0.0
        %5853 = vmatpush1.msra.mxu0 0.0
        %5854 = vmatprep.subr.mxu0 0.0
        %5855 = vmatpush1.msra.mxu0 0.0
        %5856 = vmatprep.subr.mxu0 0.0
        %5857 = vmatpush1.msra.mxu0 0.0
        %5858 = vmatprep.subr.mxu0 0.0
        %5859 = vmatpush1.msra.mxu0 0.0
        %5860 = vmatprep.subr.mxu0 0.0
        %5861 = vmatpush1.msra.mxu0 0.0
        %5862 = vmatprep.subr.mxu0 0.0
        %5863 = vmatpush1.msra.mxu0 0.0
        %5864 = vmatprep.subr.mxu0 0.0
        %5865 = vmatpush1.msra.mxu0 0.0
        %5866 = vmatprep.subr.mxu0 0.0
        %5867 = vmatpush1.msra.mxu0 0.0
        %5868 = vmatprep.subr.mxu0 0.0
        %5869 = vmatpush1.msra.mxu0 0.0
        %5870 = vmatprep.subr.mxu0 0.0
        %5871 = vmatpush1.msra.mxu0 0.0
        %5872 = vmatprep.subr.mxu0 0.0
        %5873 = vmatpush1.msra.mxu0 0.0
        %5874 = vmatprep.subr.mxu0 0.0
        %5875 = vmatpush1.msra.mxu0 0.0
        %5876 = vmatprep.subr.mxu0 0.0
        %5877 = vmatpush1.msra.mxu0 0.0
        %5878 = vmatprep.subr.mxu0 0.0
        %5879 = vmatpush1.msra.mxu0 0.0
        %5880 = vmatprep.subr.mxu0 0.0
        %5881 = vmatpush1.msra.mxu0 0.0
        %5882 = vmatprep.mubr.f32.mxu0 0.0
        %v5883 = vand.u32 %v4976, 4294901760
        %5884 = vmatmul.mubr.f32.gmra.mrb[0].mxu0 %v5883
        %v5885 = vpop.f32.mrb[0].mxu0
        %v5886 = vadd.f32 %v5814, %v5885
        %v5887 = vpop.f32.mrb[0].mxu0
        %5888 = vdwg.mxu0
        %v5889 = vadd.f32 %v4512, %v5439
        %v5890 = vadd.f32 %v4514, %v5441
        %v5891 = vadd.f32 %v4959, %v5886
        %v5892 = vld [vmem:[%s4] sm:$0xff]
        %5894 = vset.pattern.permute.xlu0 0
        %5895 = vperm.xlu0 %5894, %v5892
        %v5896 = vpop.permute.xlu0 %5895
        %v5898 = vadd.f32 %v5889, %v5896
        %v5899 = vadd.f32 %v5890, %v5896
        %v5900 = vadd.f32 %v5891, %v5896
        %v5901 = vtanh.pop %v5898
        %v5902 = vtanh.pop %v5899
        %v5903 = vtanh.pop %v5900
        %v5904 = vld [vmem:[%s5] sm:$0xf]
        %5906 = vrot.lane.b32.xlu0 %v5904, 120
        %v5907 = vpop.permute.xlu0 %5906
        %5911 = vrot.lane.b32.xlu0 %v5901, 124
        %v5912 = vpop.permute.xlu0 %5911
        %5913 = vrot.lane.b32.xlu0 %v5902, 124
        %v5914 = vpop.permute.xlu0 %5913
        %5915 = vrot.lane.b32.xlu0 %v5903, 124
        %v5916 = vpop.permute.xlu0 %5915
        %v5917 = vsel %vm4970, %v5912, %v5914
        %v5918 = vsel %vm4970, %v5914, %v5916
        %v5921 = vsel %vm3135, %v5907, 0
        %v5923 = vand.u32 %v5918, 4294901760
        %5924 = vmatprep.subr.mxu0 %v5923
        %v5925 = vand.u32 %v5917, 4294901760
        %5926 = vmatpush1.msra.mxu0 %v5925
        %5927 = vmatprep.subr.mxu0 0.0
        %5928 = vmatpush1.msra.mxu0 0.0
        %5929 = vmatprep.subr.mxu0 0.0
        %5930 = vmatpush1.msra.mxu0 0.0
        %5931 = vmatprep.subr.mxu0 0.0
        %5932 = vmatpush1.msra.mxu0 0.0
        %5933 = vmatprep.subr.mxu0 0.0
        %5934 = vmatpush1.msra.mxu0 0.0
        %5935 = vmatprep.subr.mxu0 0.0
        %5936 = vmatpush1.msra.mxu0 0.0
        %5937 = vmatprep.subr.mxu0 0.0
        %5938 = vmatpush1.msra.mxu0 0.0
        %5939 = vmatprep.subr.mxu0 0.0
        %5940 = vmatpush1.msra.mxu0 0.0
        %5941 = vmatprep.subr.mxu0 0.0
        %5942 = vmatpush1.msra.mxu0 0.0
        %5943 = vmatprep.subr.mxu0 0.0
        %5944 = vmatpush1.msra.mxu0 0.0
        %5945 = vmatprep.subr.mxu0 0.0
        %5946 = vmatpush1.msra.mxu0 0.0
        %5947 = vmatprep.subr.mxu0 0.0
        %5948 = vmatpush1.msra.mxu0 0.0
        %5949 = vmatprep.subr.mxu0 0.0
        %5950 = vmatpush1.msra.mxu0 0.0
        %5951 = vmatprep.subr.mxu0 0.0
        %5952 = vmatpush1.msra.mxu0 0.0
        %5953 = vmatprep.subr.mxu0 0.0
        %5954 = vmatpush1.msra.mxu0 0.0
        %5955 = vmatprep.subr.mxu0 0.0
        %5956 = vmatpush1.msra.mxu0 0.0
        %5957 = vmatprep.subr.mxu0 0.0
        %5958 = vmatpush1.msra.mxu0 0.0
        %5959 = vmatprep.subr.mxu0 0.0
        %5960 = vmatpush1.msra.mxu0 0.0
        %5961 = vmatprep.subr.mxu0 0.0
        %5962 = vmatpush1.msra.mxu0 0.0
        %5963 = vmatprep.subr.mxu0 0.0
        %5964 = vmatpush1.msra.mxu0 0.0
        %5965 = vmatprep.subr.mxu0 0.0
        %5966 = vmatpush1.msra.mxu0 0.0
        %5967 = vmatprep.subr.mxu0 0.0
        %5968 = vmatpush1.msra.mxu0 0.0
        %5969 = vmatprep.subr.mxu0 0.0
        %5970 = vmatpush1.msra.mxu0 0.0
        %5971 = vmatprep.subr.mxu0 0.0
        %5972 = vmatpush1.msra.mxu0 0.0
        %5973 = vmatprep.subr.mxu0 0.0
        %5974 = vmatpush1.msra.mxu0 0.0
        %5975 = vmatprep.subr.mxu0 0.0
        %5976 = vmatpush1.msra.mxu0 0.0
        %5977 = vmatprep.subr.mxu0 0.0
        %5978 = vmatpush1.msra.mxu0 0.0
        %5979 = vmatprep.subr.mxu0 0.0
        %5980 = vmatpush1.msra.mxu0 0.0
        %5981 = vmatprep.subr.mxu0 0.0
        %5982 = vmatpush1.msra.mxu0 0.0
        %5983 = vmatprep.subr.mxu0 0.0
        %5984 = vmatpush1.msra.mxu0 0.0
        %5985 = vmatprep.subr.mxu0 0.0
        %5986 = vmatpush1.msra.mxu0 0.0
        %5987 = vmatprep.subr.mxu0 0.0
        %5988 = vmatpush1.msra.mxu0 0.0
        %5989 = vmatprep.mubr.f32.mxu0 0.0
        %v5990 = vand.u32 %v5921, 4294901760
        %v5991 = vsub.f32 %v5921, %v5990
        %v5992 = vand.u32 %v5991, 4294901760
        %v5993 = vsub.f32 %v5991, %v5992
        %v5994 = vand.u32 %v5993, 4294901760
        %5995 = vmatmul.mubr.f32.gmra.mrb[0].mxu0 %v5994
        %v5996 = vpop.f32.mrb[0].mxu0
        %v5997 = vadd.f32 0.0, %v5996
        %v5998 = vpop.f32.mrb[0].mxu0
        %v5999 = vadd.f32 0.0, %v5998
        %6000 = vdwg.mxu0
        %v6001 = vand.u32 %v5918, 4294901760
        %v6002 = vsub.f32 %v5918, %v6001
        %v6003 = vand.u32 %v6002, 4294901760
        %v6004 = vsub.f32 %v6002, %v6003
        %v6005 = vand.u32 %v6004, 4294901760
        %6006 = vmatprep.subr.mxu0 %v6005
        %v6007 = vand.u32 %v5917, 4294901760
        %v6008 = vsub.f32 %v5917, %v6007
        %v6009 = vand.u32 %v6008, 4294901760
        %v6010 = vsub.f32 %v6008, %v6009
        %v6011 = vand.u32 %v6010, 4294901760
        %6012 = vmatpush1.msra.mxu0 %v6011
        %6013 = vmatprep.subr.mxu0 0.0
        %6014 = vmatpush1.msra.mxu0 0.0
        %6015 = vmatprep.subr.mxu0 0.0
        %6016 = vmatpush1.msra.mxu0 0.0
        %6017 = vmatprep.subr.mxu0 0.0
        %6018 = vmatpush1.msra.mxu0 0.0
        %6019 = vmatprep.subr.mxu0 0.0
        %6020 = vmatpush1.msra.mxu0 0.0
        %6021 = vmatprep.subr.mxu0 0.0
        %6022 = vmatpush1.msra.mxu0 0.0
        %6023 = vmatprep.subr.mxu0 0.0
        %6024 = vmatpush1.msra.mxu0 0.0
        %6025 = vmatprep.subr.mxu0 0.0
        %6026 = vmatpush1.msra.mxu0 0.0
        %6027 = vmatprep.subr.mxu0 0.0
        %6028 = vmatpush1.msra.mxu0 0.0
        %6029 = vmatprep.subr.mxu0 0.0
        %6030 = vmatpush1.msra.mxu0 0.0
        %6031 = vmatprep.subr.mxu0 0.0
        %6032 = vmatpush1.msra.mxu0 0.0
        %6033 = vmatprep.subr.mxu0 0.0
        %6034 = vmatpush1.msra.mxu0 0.0
        %6035 = vmatprep.subr.mxu0 0.0
        %6036 = vmatpush1.msra.mxu0 0.0
        %6037 = vmatprep.subr.mxu0 0.0
        %6038 = vmatpush1.msra.mxu0 0.0
        %6039 = vmatprep.subr.mxu0 0.0
        %6040 = vmatpush1.msra.mxu0 0.0
        %6041 = vmatprep.subr.mxu0 0.0
        %6042 = vmatpush1.msra.mxu0 0.0
        %6043 = vmatprep.subr.mxu0 0.0
        %6044 = vmatpush1.msra.mxu0 0.0
        %6045 = vmatprep.subr.mxu0 0.0
        %6046 = vmatpush1.msra.mxu0 0.0
        %6047 = vmatprep.subr.mxu0 0.0
        %6048 = vmatpush1.msra.mxu0 0.0
        %6049 = vmatprep.subr.mxu0 0.0
        %6050 = vmatpush1.msra.mxu0 0.0
        %6051 = vmatprep.subr.mxu0 0.0
        %6052 = vmatpush1.msra.mxu0 0.0
        %6053 = vmatprep.subr.mxu0 0.0
        %6054 = vmatpush1.msra.mxu0 0.0
        %6055 = vmatprep.subr.mxu0 0.0
        %6056 = vmatpush1.msra.mxu0 0.0
        %6057 = vmatprep.subr.mxu0 0.0
        %6058 = vmatpush1.msra.mxu0 0.0
        %6059 = vmatprep.subr.mxu0 0.0
        %6060 = vmatpush1.msra.mxu0 0.0
        %6061 = vmatprep.subr.mxu0 0.0
        %6062 = vmatpush1.msra.mxu0 0.0
        %6063 = vmatprep.subr.mxu0 0.0
        %6064 = vmatpush1.msra.mxu0 0.0
        %6065 = vmatprep.subr.mxu0 0.0
        %6066 = vmatpush1.msra.mxu0 0.0
        %6067 = vmatprep.subr.mxu0 0.0
        %6068 = vmatpush1.msra.mxu0 0.0
        %6069 = vmatprep.subr.mxu0 0.0
        %6070 = vmatpush1.msra.mxu0 0.0
        %6071 = vmatprep.subr.mxu0 0.0
        %6072 = vmatpush1.msra.mxu0 0.0
        %6073 = vmatprep.subr.mxu0 0.0
        %6074 = vmatpush1.msra.mxu0 0.0
        %6075 = vmatprep.mubr.f32.mxu0 0.0
        %v6076 = vand.u32 %v5921, 4294901760
        %6077 = vmatmul.mubr.f32.gmra.mrb[0].mxu0 %v6076
        %v6078 = vpop.f32.mrb[0].mxu0
        %v6079 = vadd.f32 %v5997, %v6078
        %v6080 = vpop.f32.mrb[0].mxu0
        %v6081 = vadd.f32 %v5999, %v6080
        %6082 = vdwg.mxu0
        %v6083 = vand.u32 %v5918, 4294901760
        %v6084 = vsub.f32 %v5918, %v6083
        %6085 = vmatprep.subr.mxu0 %v6084
        %v6086 = vand.u32 %v5917, 4294901760
        %v6087 = vsub.f32 %v5917, %v6086
        %6088 = vmatpush1.msra.mxu0 %v6087
        %6089 = vmatprep.subr.mxu0 0.0
        %6090 = vmatpush1.msra.mxu0 0.0
        %6091 = vmatprep.subr.mxu0 0.0
        %6092 = vmatpush1.msra.mxu0 0.0
        %6093 = vmatprep.subr.mxu0 0.0
        %6094 = vmatpush1.msra.mxu0 0.0
        %6095 = vmatprep.subr.mxu0 0.0
        %6096 = vmatpush1.msra.mxu0 0.0
        %6097 = vmatprep.subr.mxu0 0.0
        %6098 = vmatpush1.msra.mxu0 0.0
        %6099 = vmatprep.subr.mxu0 0.0
        %6100 = vmatpush1.msra.mxu0 0.0
        %6101 = vmatprep.subr.mxu0 0.0
        %6102 = vmatpush1.msra.mxu0 0.0
        %6103 = vmatprep.subr.mxu0 0.0
        %6104 = vmatpush1.msra.mxu0 0.0
        %6105 = vmatprep.subr.mxu0 0.0
        %6106 = vmatpush1.msra.mxu0 0.0
        %6107 = vmatprep.subr.mxu0 0.0
        %6108 = vmatpush1.msra.mxu0 0.0
        %6109 = vmatprep.subr.mxu0 0.0
        %6110 = vmatpush1.msra.mxu0 0.0
        %6111 = vmatprep.subr.mxu0 0.0
        %6112 = vmatpush1.msra.mxu0 0.0
        %6113 = vmatprep.subr.mxu0 0.0
        %6114 = vmatpush1.msra.mxu0 0.0
        %6115 = vmatprep.subr.mxu0 0.0
        %6116 = vmatpush1.msra.mxu0 0.0
        %6117 = vmatprep.subr.mxu0 0.0
        %6118 = vmatpush1.msra.mxu0 0.0
        %6119 = vmatprep.subr.mxu0 0.0
        %6120 = vmatpush1.msra.mxu0 0.0
        %6121 = vmatprep.subr.mxu0 0.0
        %6122 = vmatpush1.msra.mxu0 0.0
        %6123 = vmatprep.subr.mxu0 0.0
        %6124 = vmatpush1.msra.mxu0 0.0
        %6125 = vmatprep.subr.mxu0 0.0
        %6126 = vmatpush1.msra.mxu0 0.0
        %6127 = vmatprep.subr.mxu0 0.0
        %6128 = vmatpush1.msra.mxu0 0.0
        %6129 = vmatprep.subr.mxu0 0.0
        %6130 = vmatpush1.msra.mxu0 0.0
        %6131 = vmatprep.subr.mxu0 0.0
        %6132 = vmatpush1.msra.mxu0 0.0
        %6133 = vmatprep.subr.mxu0 0.0
        %6134 = vmatpush1.msra.mxu0 0.0
        %6135 = vmatprep.subr.mxu0 0.0
        %6136 = vmatpush1.msra.mxu0 0.0
        %6137 = vmatprep.subr.mxu0 0.0
        %6138 = vmatpush1.msra.mxu0 0.0
        %6139 = vmatprep.subr.mxu0 0.0
        %6140 = vmatpush1.msra.mxu0 0.0
        %6141 = vmatprep.subr.mxu0 0.0
        %6142 = vmatpush1.msra.mxu0 0.0
        %6143 = vmatprep.subr.mxu0 0.0
        %6144 = vmatpush1.msra.mxu0 0.0
        %6145 = vmatprep.subr.mxu0 0.0
        %6146 = vmatpush1.msra.mxu0 0.0
        %6147 = vmatprep.subr.mxu0 0.0
        %6148 = vmatpush1.msra.mxu0 0.0
        %6149 = vmatprep.subr.mxu0 0.0
        %6150 = vmatpush1.msra.mxu0 0.0
        %6151 = vmatprep.mubr.f32.mxu0 0.0
        %v6152 = vand.u32 %v5921, 4294901760
        %v6153 = vsub.f32 %v5921, %v6152
        %6154 = vmatmul.mubr.f32.gmra.mrb[0].mxu0 %v6153
        %v6155 = vpop.f32.mrb[0].mxu0
        %v6156 = vadd.f32 %v6079, %v6155
        %v6157 = vpop.f32.mrb[0].mxu0
        %v6158 = vadd.f32 %v6081, %v6157
        %6159 = vdwg.mxu0
        %v6160 = vand.u32 %v5918, 4294901760
        %6161 = vmatprep.subr.mxu0 %v6160
        %v6162 = vand.u32 %v5917, 4294901760
        %6163 = vmatpush1.msra.mxu0 %v6162
        %6164 = vmatprep.subr.mxu0 0.0
        %6165 = vmatpush1.msra.mxu0 0.0
        %6166 = vmatprep.subr.mxu0 0.0
        %6167 = vmatpush1.msra.mxu0 0.0
        %6168 = vmatprep.subr.mxu0 0.0
        %6169 = vmatpush1.msra.mxu0 0.0
        %6170 = vmatprep.subr.mxu0 0.0
        %6171 = vmatpush1.msra.mxu0 0.0
        %6172 = vmatprep.subr.mxu0 0.0
        %6173 = vmatpush1.msra.mxu0 0.0
        %6174 = vmatprep.subr.mxu0 0.0
        %6175 = vmatpush1.msra.mxu0 0.0
        %6176 = vmatprep.subr.mxu0 0.0
        %6177 = vmatpush1.msra.mxu0 0.0
        %6178 = vmatprep.subr.mxu0 0.0
        %6179 = vmatpush1.msra.mxu0 0.0
        %6180 = vmatprep.subr.mxu0 0.0
        %6181 = vmatpush1.msra.mxu0 0.0
        %6182 = vmatprep.subr.mxu0 0.0
        %6183 = vmatpush1.msra.mxu0 0.0
        %6184 = vmatprep.subr.mxu0 0.0
        %6185 = vmatpush1.msra.mxu0 0.0
        %6186 = vmatprep.subr.mxu0 0.0
        %6187 = vmatpush1.msra.mxu0 0.0
        %6188 = vmatprep.subr.mxu0 0.0
        %6189 = vmatpush1.msra.mxu0 0.0
        %6190 = vmatprep.subr.mxu0 0.0
        %6191 = vmatpush1.msra.mxu0 0.0
        %6192 = vmatprep.subr.mxu0 0.0
        %6193 = vmatpush1.msra.mxu0 0.0
        %6194 = vmatprep.subr.mxu0 0.0
        %6195 = vmatpush1.msra.mxu0 0.0
        %6196 = vmatprep.subr.mxu0 0.0
        %6197 = vmatpush1.msra.mxu0 0.0
        %6198 = vmatprep.subr.mxu0 0.0
        %6199 = vmatpush1.msra.mxu0 0.0
        %6200 = vmatprep.subr.mxu0 0.0
        %6201 = vmatpush1.msra.mxu0 0.0
        %6202 = vmatprep.subr.mxu0 0.0
        %6203 = vmatpush1.msra.mxu0 0.0
        %6204 = vmatprep.subr.mxu0 0.0
        %6205 = vmatpush1.msra.mxu0 0.0
        %6206 = vmatprep.subr.mxu0 0.0
        %6207 = vmatpush1.msra.mxu0 0.0
        %6208 = vmatprep.subr.mxu0 0.0
        %6209 = vmatpush1.msra.mxu0 0.0
        %6210 = vmatprep.subr.mxu0 0.0
        %6211 = vmatpush1.msra.mxu0 0.0
        %6212 = vmatprep.subr.mxu0 0.0
        %6213 = vmatpush1.msra.mxu0 0.0
        %6214 = vmatprep.subr.mxu0 0.0
        %6215 = vmatpush1.msra.mxu0 0.0
        %6216 = vmatprep.subr.mxu0 0.0
        %6217 = vmatpush1.msra.mxu0 0.0
        %6218 = vmatprep.subr.mxu0 0.0
        %6219 = vmatpush1.msra.mxu0 0.0
        %6220 = vmatprep.subr.mxu0 0.0
        %6221 = vmatpush1.msra.mxu0 0.0
        %6222 = vmatprep.subr.mxu0 0.0
        %6223 = vmatpush1.msra.mxu0 0.0
        %6224 = vmatprep.subr.mxu0 0.0
        %6225 = vmatpush1.msra.mxu0 0.0
        %6226 = vmatprep.mubr.f32.mxu0 0.0
        %v6227 = vand.u32 %v5921, 4294901760
        %v6228 = vsub.f32 %v5921, %v6227
        %v6229 = vand.u32 %v6228, 4294901760
        %6230 = vmatmul.mubr.f32.gmra.mrb[0].mxu0 %v6229
        %v6231 = vpop.f32.mrb[0].mxu0
        %v6232 = vadd.f32 %v6156, %v6231
        %v6233 = vpop.f32.mrb[0].mxu0
        %v6234 = vadd.f32 %v6158, %v6233
        %6235 = vdwg.mxu0
        %v6236 = vand.u32 %v5918, 4294901760
        %v6237 = vsub.f32 %v5918, %v6236
        %v6238 = vand.u32 %v6237, 4294901760
        %6239 = vmatprep.subr.mxu0 %v6238
        %v6240 = vand.u32 %v5917, 4294901760
        %v6241 = vsub.f32 %v5917, %v6240
        %v6242 = vand.u32 %v6241, 4294901760
        %6243 = vmatpush1.msra.mxu0 %v6242
        %6244 = vmatprep.subr.mxu0 0.0
        %6245 = vmatpush1.msra.mxu0 0.0
        %6246 = vmatprep.subr.mxu0 0.0
        %6247 = vmatpush1.msra.mxu0 0.0
        %6248 = vmatprep.subr.mxu0 0.0
        %6249 = vmatpush1.msra.mxu0 0.0
        %6250 = vmatprep.subr.mxu0 0.0
        %6251 = vmatpush1.msra.mxu0 0.0
        %6252 = vmatprep.subr.mxu0 0.0
        %6253 = vmatpush1.msra.mxu0 0.0
        %6254 = vmatprep.subr.mxu0 0.0
        %6255 = vmatpush1.msra.mxu0 0.0
        %6256 = vmatprep.subr.mxu0 0.0
        %6257 = vmatpush1.msra.mxu0 0.0
        %6258 = vmatprep.subr.mxu0 0.0
        %6259 = vmatpush1.msra.mxu0 0.0
        %6260 = vmatprep.subr.mxu0 0.0
        %6261 = vmatpush1.msra.mxu0 0.0
        %6262 = vmatprep.subr.mxu0 0.0
        %6263 = vmatpush1.msra.mxu0 0.0
        %6264 = vmatprep.subr.mxu0 0.0
        %6265 = vmatpush1.msra.mxu0 0.0
        %6266 = vmatprep.subr.mxu0 0.0
        %6267 = vmatpush1.msra.mxu0 0.0
        %6268 = vmatprep.subr.mxu0 0.0
        %6269 = vmatpush1.msra.mxu0 0.0
        %6270 = vmatprep.subr.mxu0 0.0
        %6271 = vmatpush1.msra.mxu0 0.0
        %6272 = vmatprep.subr.mxu0 0.0
        %6273 = vmatpush1.msra.mxu0 0.0
        %6274 = vmatprep.subr.mxu0 0.0
        %6275 = vmatpush1.msra.mxu0 0.0
        %6276 = vmatprep.subr.mxu0 0.0
        %6277 = vmatpush1.msra.mxu0 0.0
        %6278 = vmatprep.subr.mxu0 0.0
        %6279 = vmatpush1.msra.mxu0 0.0
        %6280 = vmatprep.subr.mxu0 0.0
        %6281 = vmatpush1.msra.mxu0 0.0
        %6282 = vmatprep.subr.mxu0 0.0
        %6283 = vmatpush1.msra.mxu0 0.0
        %6284 = vmatprep.subr.mxu0 0.0
        %6285 = vmatpush1.msra.mxu0 0.0
        %6286 = vmatprep.subr.mxu0 0.0
        %6287 = vmatpush1.msra.mxu0 0.0
        %6288 = vmatprep.subr.mxu0 0.0
        %6289 = vmatpush1.msra.mxu0 0.0
        %6290 = vmatprep.subr.mxu0 0.0
        %6291 = vmatpush1.msra.mxu0 0.0
        %6292 = vmatprep.subr.mxu0 0.0
        %6293 = vmatpush1.msra.mxu0 0.0
        %6294 = vmatprep.subr.mxu0 0.0
        %6295 = vmatpush1.msra.mxu0 0.0
        %6296 = vmatprep.subr.mxu0 0.0
        %6297 = vmatpush1.msra.mxu0 0.0
        %6298 = vmatprep.subr.mxu0 0.0
        %6299 = vmatpush1.msra.mxu0 0.0
        %6300 = vmatprep.subr.mxu0 0.0
        %6301 = vmatpush1.msra.mxu0 0.0
        %6302 = vmatprep.subr.mxu0 0.0
        %6303 = vmatpush1.msra.mxu0 0.0
        %6304 = vmatprep.subr.mxu0 0.0
        %6305 = vmatpush1.msra.mxu0 0.0
        %6306 = vmatprep.mubr.f32.mxu0 0.0
        %v6307 = vand.u32 %v5921, 4294901760
        %6308 = vmatmul.mubr.f32.gmra.mrb[0].mxu0 %v6307
        %v6309 = vpop.f32.mrb[0].mxu0
        %v6310 = vadd.f32 %v6232, %v6309
        %v6311 = vpop.f32.mrb[0].mxu0
        %v6312 = vadd.f32 %v6234, %v6311
        %6313 = vdwg.mxu0
        %v6314 = vand.u32 %v5918, 4294901760
        %6315 = vmatprep.subr.mxu0 %v6314
        %v6316 = vand.u32 %v5917, 4294901760
        %6317 = vmatpush1.msra.mxu0 %v6316
        %6318 = vmatprep.subr.mxu0 0.0
        %6319 = vmatpush1.msra.mxu0 0.0
        %6320 = vmatprep.subr.mxu0 0.0
        %6321 = vmatpush1.msra.mxu0 0.0
        %6322 = vmatprep.subr.mxu0 0.0
        %6323 = vmatpush1.msra.mxu0 0.0
        %6324 = vmatprep.subr.mxu0 0.0
        %6325 = vmatpush1.msra.mxu0 0.0
        %6326 = vmatprep.subr.mxu0 0.0
        %6327 = vmatpush1.msra.mxu0 0.0
        %6328 = vmatprep.subr.mxu0 0.0
        %6329 = vmatpush1.msra.mxu0 0.0
        %6330 = vmatprep.subr.mxu0 0.0
        %6331 = vmatpush1.msra.mxu0 0.0
        %6332 = vmatprep.subr.mxu0 0.0
        %6333 = vmatpush1.msra.mxu0 0.0
        %6334 = vmatprep.subr.mxu0 0.0
        %6335 = vmatpush1.msra.mxu0 0.0
        %6336 = vmatprep.subr.mxu0 0.0
        %6337 = vmatpush1.msra.mxu0 0.0
        %6338 = vmatprep.subr.mxu0 0.0
        %6339 = vmatpush1.msra.mxu0 0.0
        %6340 = vmatprep.subr.mxu0 0.0
        %6341 = vmatpush1.msra.mxu0 0.0
        %6342 = vmatprep.subr.mxu0 0.0
        %6343 = vmatpush1.msra.mxu0 0.0
        %6344 = vmatprep.subr.mxu0 0.0
        %6345 = vmatpush1.msra.mxu0 0.0
        %6346 = vmatprep.subr.mxu0 0.0
        %6347 = vmatpush1.msra.mxu0 0.0
        %6348 = vmatprep.subr.mxu0 0.0
        %6349 = vmatpush1.msra.mxu0 0.0
        %6350 = vmatprep.subr.mxu0 0.0
        %6351 = vmatpush1.msra.mxu0 0.0
        %6352 = vmatprep.subr.mxu0 0.0
        %6353 = vmatpush1.msra.mxu0 0.0
        %6354 = vmatprep.subr.mxu0 0.0
        %6355 = vmatpush1.msra.mxu0 0.0
        %6356 = vmatprep.subr.mxu0 0.0
        %6357 = vmatpush1.msra.mxu0 0.0
        %6358 = vmatprep.subr.mxu0 0.0
        %6359 = vmatpush1.msra.mxu0 0.0
        %6360 = vmatprep.subr.mxu0 0.0
        %6361 = vmatpush1.msra.mxu0 0.0
        %6362 = vmatprep.subr.mxu0 0.0
        %6363 = vmatpush1.msra.mxu0 0.0
        %6364 = vmatprep.subr.mxu0 0.0
        %6365 = vmatpush1.msra.mxu0 0.0
        %6366 = vmatprep.subr.mxu0 0.0
        %6367 = vmatpush1.msra.mxu0 0.0
        %6368 = vmatprep.subr.mxu0 0.0
        %6369 = vmatpush1.msra.mxu0 0.0
        %6370 = vmatprep.subr.mxu0 0.0
        %6371 = vmatpush1.msra.mxu0 0.0
        %6372 = vmatprep.subr.mxu0 0.0
        %6373 = vmatpush1.msra.mxu0 0.0
        %6374 = vmatprep.subr.mxu0 0.0
        %6375 = vmatpush1.msra.mxu0 0.0
        %6376 = vmatprep.subr.mxu0 0.0
        %6377 = vmatpush1.msra.mxu0 0.0
        %6378 = vmatprep.subr.mxu0 0.0
        %6379 = vmatpush1.msra.mxu0 0.0
        %6380 = vmatprep.mubr.f32.mxu0 0.0
        %v6381 = vand.u32 %v5921, 4294901760
        %6382 = vmatmul.mubr.f32.gmra.mrb[0].mxu0 %v6381
        %v6383 = vpop.f32.mrb[0].mxu0
        %v6384 = vadd.f32 %v6310, %v6383
        %v6385 = vpop.f32.mrb[0].mxu0
        %v6386 = vadd.f32 %v6312, %v6385
        %6387 = vdwg.mxu0
        %v6388 = vsel %vm3135, %v5904, 0
        %v6390 = vand.u32 %v5902, 4294901760
        %6391 = vmatprep.subr.mxu0 %v6390
        %v6392 = vand.u32 %v5901, 4294901760
        %6393 = vmatpush1.msra.mxu0 %v6392
        %6394 = vmatprep.subr.mxu0 0.0
        %6395 = vmatpush1.msra.mxu0 0.0
        %6396 = vmatprep.subr.mxu0 0.0
        %6397 = vmatpush1.msra.mxu0 0.0
        %6398 = vmatprep.subr.mxu0 0.0
        %6399 = vmatpush1.msra.mxu0 0.0
        %6400 = vmatprep.subr.mxu0 0.0
        %6401 = vmatpush1.msra.mxu0 0.0
        %6402 = vmatprep.subr.mxu0 0.0
        %6403 = vmatpush1.msra.mxu0 0.0
        %6404 = vmatprep.subr.mxu0 0.0
        %6405 = vmatpush1.msra.mxu0 0.0
        %6406 = vmatprep.subr.mxu0 0.0
        %6407 = vmatpush1.msra.mxu0 0.0
        %6408 = vmatprep.subr.mxu0 0.0
        %6409 = vmatpush1.msra.mxu0 0.0
        %6410 = vmatprep.subr.mxu0 0.0
        %6411 = vmatpush1.msra.mxu0 0.0
        %6412 = vmatprep.subr.mxu0 0.0
        %6413 = vmatpush1.msra.mxu0 0.0
        %6414 = vmatprep.subr.mxu0 0.0
        %6415 = vmatpush1.msra.mxu0 0.0
        %6416 = vmatprep.subr.mxu0 0.0
        %6417 = vmatpush1.msra.mxu0 0.0
        %6418 = vmatprep.subr.mxu0 0.0
        %6419 = vmatpush1.msra.mxu0 0.0
        %6420 = vmatprep.subr.mxu0 0.0
        %6421 = vmatpush1.msra.mxu0 0.0
        %6422 = vmatprep.subr.mxu0 0.0
        %6423 = vmatpush1.msra.mxu0 0.0
        %6424 = vmatprep.subr.mxu0 0.0
        %6425 = vmatpush1.msra.mxu0 0.0
        %6426 = vmatprep.subr.mxu0 0.0
        %6427 = vmatpush1.msra.mxu0 0.0
        %6428 = vmatprep.subr.mxu0 0.0
        %6429 = vmatpush1.msra.mxu0 0.0
        %6430 = vmatprep.subr.mxu0 0.0
        %6431 = vmatpush1.msra.mxu0 0.0
        %6432 = vmatprep.subr.mxu0 0.0
        %6433 = vmatpush1.msra.mxu0 0.0
        %6434 = vmatprep.subr.mxu0 0.0
        %6435 = vmatpush1.msra.mxu0 0.0
        %6436 = vmatprep.subr.mxu0 0.0
        %6437 = vmatpush1.msra.mxu0 0.0
        %6438 = vmatprep.subr.mxu0 0.0
        %6439 = vmatpush1.msra.mxu0 0.0
        %6440 = vmatprep.subr.mxu0 0.0
        %6441 = vmatpush1.msra.mxu0 0.0
        %6442 = vmatprep.subr.mxu0 0.0
        %6443 = vmatpush1.msra.mxu0 0.0
        %6444 = vmatprep.subr.mxu0 0.0
        %6445 = vmatpush1.msra.mxu0 0.0
        %6446 = vmatprep.subr.mxu0 0.0
        %6447 = vmatpush1.msra.mxu0 0.0
        %6448 = vmatprep.subr.mxu0 0.0
        %6449 = vmatpush1.msra.mxu0 0.0
        %6450 = vmatprep.subr.mxu0 0.0
        %6451 = vmatpush1.msra.mxu0 0.0
        %6452 = vmatprep.subr.mxu0 0.0
        %6453 = vmatpush1.msra.mxu0 0.0
        %6454 = vmatprep.subr.mxu0 0.0
        %6455 = vmatpush1.msra.mxu0 0.0
        %6456 = vmatprep.mubr.f32.mxu0 0.0
        %v6457 = vand.u32 %v6388, 4294901760
        %v6458 = vsub.f32 %v6388, %v6457
        %v6459 = vand.u32 %v6458, 4294901760
        %v6460 = vsub.f32 %v6458, %v6459
        %v6461 = vand.u32 %v6460, 4294901760
        %6462 = vmatmul.mubr.f32.gmra.mrb[0].mxu0 %v6461
        %v6463 = vpop.f32.mrb[0].mxu0
        %v6464 = vadd.f32 %v6384, %v6463
        %v6465 = vpop.f32.mrb[0].mxu0
        %v6466 = vadd.f32 %v6386, %v6465
        %6467 = vdwg.mxu0
        %v6468 = vand.u32 %v5902, 4294901760
        %v6469 = vsub.f32 %v5902, %v6468
        %v6470 = vand.u32 %v6469, 4294901760
        %v6471 = vsub.f32 %v6469, %v6470
        %v6472 = vand.u32 %v6471, 4294901760
        %6473 = vmatprep.subr.mxu0 %v6472
        %v6474 = vand.u32 %v5901, 4294901760
        %v6475 = vsub.f32 %v5901, %v6474
        %v6476 = vand.u32 %v6475, 4294901760
        %v6477 = vsub.f32 %v6475, %v6476
        %v6478 = vand.u32 %v6477, 4294901760
        %6479 = vmatpush1.msra.mxu0 %v6478
        %6480 = vmatprep.subr.mxu0 0.0
        %6481 = vmatpush1.msra.mxu0 0.0
        %6482 = vmatprep.subr.mxu0 0.0
        %6483 = vmatpush1.msra.mxu0 0.0
        %6484 = vmatprep.subr.mxu0 0.0
        %6485 = vmatpush1.msra.mxu0 0.0
        %6486 = vmatprep.subr.mxu0 0.0
        %6487 = vmatpush1.msra.mxu0 0.0
        %6488 = vmatprep.subr.mxu0 0.0
        %6489 = vmatpush1.msra.mxu0 0.0
        %6490 = vmatprep.subr.mxu0 0.0
        %6491 = vmatpush1.msra.mxu0 0.0
        %6492 = vmatprep.subr.mxu0 0.0
        %6493 = vmatpush1.msra.mxu0 0.0
        %6494 = vmatprep.subr.mxu0 0.0
        %6495 = vmatpush1.msra.mxu0 0.0
        %6496 = vmatprep.subr.mxu0 0.0
        %6497 = vmatpush1.msra.mxu0 0.0
        %6498 = vmatprep.subr.mxu0 0.0
        %6499 = vmatpush1.msra.mxu0 0.0
        %6500 = vmatprep.subr.mxu0 0.0
        %6501 = vmatpush1.msra.mxu0 0.0
        %6502 = vmatprep.subr.mxu0 0.0
        %6503 = vmatpush1.msra.mxu0 0.0
        %6504 = vmatprep.subr.mxu0 0.0
        %6505 = vmatpush1.msra.mxu0 0.0
        %6506 = vmatprep.subr.mxu0 0.0
        %6507 = vmatpush1.msra.mxu0 0.0
        %6508 = vmatprep.subr.mxu0 0.0
        %6509 = vmatpush1.msra.mxu0 0.0
        %6510 = vmatprep.subr.mxu0 0.0
        %6511 = vmatpush1.msra.mxu0 0.0
        %6512 = vmatprep.subr.mxu0 0.0
        %6513 = vmatpush1.msra.mxu0 0.0
        %6514 = vmatprep.subr.mxu0 0.0
        %6515 = vmatpush1.msra.mxu0 0.0
        %6516 = vmatprep.subr.mxu0 0.0
        %6517 = vmatpush1.msra.mxu0 0.0
        %6518 = vmatprep.subr.mxu0 0.0
        %6519 = vmatpush1.msra.mxu0 0.0
        %6520 = vmatprep.subr.mxu0 0.0
        %6521 = vmatpush1.msra.mxu0 0.0
        %6522 = vmatprep.subr.mxu0 0.0
        %6523 = vmatpush1.msra.mxu0 0.0
        %6524 = vmatprep.subr.mxu0 0.0
        %6525 = vmatpush1.msra.mxu0 0.0
        %6526 = vmatprep.subr.mxu0 0.0
        %6527 = vmatpush1.msra.mxu0 0.0
        %6528 = vmatprep.subr.mxu0 0.0
        %6529 = vmatpush1.msra.mxu0 0.0
        %6530 = vmatprep.subr.mxu0 0.0
        %6531 = vmatpush1.msra.mxu0 0.0
        %6532 = vmatprep.subr.mxu0 0.0
        %6533 = vmatpush1.msra.mxu0 0.0
        %6534 = vmatprep.subr.mxu0 0.0
        %6535 = vmatpush1.msra.mxu0 0.0
        %6536 = vmatprep.subr.mxu0 0.0
        %6537 = vmatpush1.msra.mxu0 0.0
        %6538 = vmatprep.subr.mxu0 0.0
        %6539 = vmatpush1.msra.mxu0 0.0
        %6540 = vmatprep.subr.mxu0 0.0
        %6541 = vmatpush1.msra.mxu0 0.0
        %6542 = vmatprep.mubr.f32.mxu0 0.0
        %v6543 = vand.u32 %v6388, 4294901760
        %6544 = vmatmul.mubr.f32.gmra.mrb[0].mxu0 %v6543
        %v6545 = vpop.f32.mrb[0].mxu0
        %v6546 = vadd.f32 %v6464, %v6545
        %v6547 = vpop.f32.mrb[0].mxu0
        %v6548 = vadd.f32 %v6466, %v6547
        %6549 = vdwg.mxu0
        %v6550 = vand.u32 %v5902, 4294901760
        %v6551 = vsub.f32 %v5902, %v6550
        %6552 = vmatprep.subr.mxu0 %v6551
        %v6553 = vand.u32 %v5901, 4294901760
        %v6554 = vsub.f32 %v5901, %v6553
        %6555 = vmatpush1.msra.mxu0 %v6554
        %6556 = vmatprep.subr.mxu0 0.0
        %6557 = vmatpush1.msra.mxu0 0.0
        %6558 = vmatprep.subr.mxu0 0.0
        %6559 = vmatpush1.msra.mxu0 0.0
        %6560 = vmatprep.subr.mxu0 0.0
        %6561 = vmatpush1.msra.mxu0 0.0
        %6562 = vmatprep.subr.mxu0 0.0
        %6563 = vmatpush1.msra.mxu0 0.0
        %6564 = vmatprep.subr.mxu0 0.0
        %6565 = vmatpush1.msra.mxu0 0.0
        %6566 = vmatprep.subr.mxu0 0.0
        %6567 = vmatpush1.msra.mxu0 0.0
        %6568 = vmatprep.subr.mxu0 0.0
        %6569 = vmatpush1.msra.mxu0 0.0
        %6570 = vmatprep.subr.mxu0 0.0
        %6571 = vmatpush1.msra.mxu0 0.0
        %6572 = vmatprep.subr.mxu0 0.0
        %6573 = vmatpush1.msra.mxu0 0.0
        %6574 = vmatprep.subr.mxu0 0.0
        %6575 = vmatpush1.msra.mxu0 0.0
        %6576 = vmatprep.subr.mxu0 0.0
        %6577 = vmatpush1.msra.mxu0 0.0
        %6578 = vmatprep.subr.mxu0 0.0
        %6579 = vmatpush1.msra.mxu0 0.0
        %6580 = vmatprep.subr.mxu0 0.0
        %6581 = vmatpush1.msra.mxu0 0.0
        %6582 = vmatprep.subr.mxu0 0.0
        %6583 = vmatpush1.msra.mxu0 0.0
        %6584 = vmatprep.subr.mxu0 0.0
        %6585 = vmatpush1.msra.mxu0 0.0
        %6586 = vmatprep.subr.mxu0 0.0
        %6587 = vmatpush1.msra.mxu0 0.0
        %6588 = vmatprep.subr.mxu0 0.0
        %6589 = vmatpush1.msra.mxu0 0.0
        %6590 = vmatprep.subr.mxu0 0.0
        %6591 = vmatpush1.msra.mxu0 0.0
        %6592 = vmatprep.subr.mxu0 0.0
        %6593 = vmatpush1.msra.mxu0 0.0
        %6594 = vmatprep.subr.mxu0 0.0
        %6595 = vmatpush1.msra.mxu0 0.0
        %6596 = vmatprep.subr.mxu0 0.0
        %6597 = vmatpush1.msra.mxu0 0.0
        %6598 = vmatprep.subr.mxu0 0.0
        %6599 = vmatpush1.msra.mxu0 0.0
        %6600 = vmatprep.subr.mxu0 0.0
        %6601 = vmatpush1.msra.mxu0 0.0
        %6602 = vmatprep.subr.mxu0 0.0
        %6603 = vmatpush1.msra.mxu0 0.0
        %6604 = vmatprep.subr.mxu0 0.0
        %6605 = vmatpush1.msra.mxu0 0.0
        %6606 = vmatprep.subr.mxu0 0.0
        %6607 = vmatpush1.msra.mxu0 0.0
        %6608 = vmatprep.subr.mxu0 0.0
        %6609 = vmatpush1.msra.mxu0 0.0
        %6610 = vmatprep.subr.mxu0 0.0
        %6611 = vmatpush1.msra.mxu0 0.0
        %6612 = vmatprep.subr.mxu0 0.0
        %6613 = vmatpush1.msra.mxu0 0.0
        %6614 = vmatprep.subr.mxu0 0.0
        %6615 = vmatpush1.msra.mxu0 0.0
        %6616 = vmatprep.subr.mxu0 0.0
        %6617 = vmatpush1.msra.mxu0 0.0
        %6618 = vmatprep.mubr.f32.mxu0 0.0
        %v6619 = vand.u32 %v6388, 4294901760
        %v6620 = vsub.f32 %v6388, %v6619
        %6621 = vmatmul.mubr.f32.gmra.mrb[0].mxu0 %v6620
        %v6622 = vpop.f32.mrb[0].mxu0
        %v6623 = vadd.f32 %v6546, %v6622
        %v6624 = vpop.f32.mrb[0].mxu0
        %v6625 = vadd.f32 %v6548, %v6624
        %6626 = vdwg.mxu0
        %v6627 = vand.u32 %v5902, 4294901760
        %6628 = vmatprep.subr.mxu0 %v6627
        %v6629 = vand.u32 %v5901, 4294901760
        %6630 = vmatpush1.msra.mxu0 %v6629
        %6631 = vmatprep.subr.mxu0 0.0
        %6632 = vmatpush1.msra.mxu0 0.0
        %6633 = vmatprep.subr.mxu0 0.0
        %6634 = vmatpush1.msra.mxu0 0.0
        %6635 = vmatprep.subr.mxu0 0.0
        %6636 = vmatpush1.msra.mxu0 0.0
        %6637 = vmatprep.subr.mxu0 0.0
        %6638 = vmatpush1.msra.mxu0 0.0
        %6639 = vmatprep.subr.mxu0 0.0
        %6640 = vmatpush1.msra.mxu0 0.0
        %6641 = vmatprep.subr.mxu0 0.0
        %6642 = vmatpush1.msra.mxu0 0.0
        %6643 = vmatprep.subr.mxu0 0.0
        %6644 = vmatpush1.msra.mxu0 0.0
        %6645 = vmatprep.subr.mxu0 0.0
        %6646 = vmatpush1.msra.mxu0 0.0
        %6647 = vmatprep.subr.mxu0 0.0
        %6648 = vmatpush1.msra.mxu0 0.0
        %6649 = vmatprep.subr.mxu0 0.0
        %6650 = vmatpush1.msra.mxu0 0.0
        %6651 = vmatprep.subr.mxu0 0.0
        %6652 = vmatpush1.msra.mxu0 0.0
        %6653 = vmatprep.subr.mxu0 0.0
        %6654 = vmatpush1.msra.mxu0 0.0
        %6655 = vmatprep.subr.mxu0 0.0
        %6656 = vmatpush1.msra.mxu0 0.0
        %6657 = vmatprep.subr.mxu0 0.0
        %6658 = vmatpush1.msra.mxu0 0.0
        %6659 = vmatprep.subr.mxu0 0.0
        %6660 = vmatpush1.msra.mxu0 0.0
        %6661 = vmatprep.subr.mxu0 0.0
        %6662 = vmatpush1.msra.mxu0 0.0
        %6663 = vmatprep.subr.mxu0 0.0
        %6664 = vmatpush1.msra.mxu0 0.0
        %6665 = vmatprep.subr.mxu0 0.0
        %6666 = vmatpush1.msra.mxu0 0.0
        %6667 = vmatprep.subr.mxu0 0.0
        %6668 = vmatpush1.msra.mxu0 0.0
        %6669 = vmatprep.subr.mxu0 0.0
        %6670 = vmatpush1.msra.mxu0 0.0
        %6671 = vmatprep.subr.mxu0 0.0
        %6672 = vmatpush1.msra.mxu0 0.0
        %6673 = vmatprep.subr.mxu0 0.0
        %6674 = vmatpush1.msra.mxu0 0.0
        %6675 = vmatprep.subr.mxu0 0.0
        %6676 = vmatpush1.msra.mxu0 0.0
        %6677 = vmatprep.subr.mxu0 0.0
        %6678 = vmatpush1.msra.mxu0 0.0
        %6679 = vmatprep.subr.mxu0 0.0
        %6680 = vmatpush1.msra.mxu0 0.0
        %6681 = vmatprep.subr.mxu0 0.0
        %6682 = vmatpush1.msra.mxu0 0.0
        %6683 = vmatprep.subr.mxu0 0.0
        %6684 = vmatpush1.msra.mxu0 0.0
        %6685 = vmatprep.subr.mxu0 0.0
        %6686 = vmatpush1.msra.mxu0 0.0
        %6687 = vmatprep.subr.mxu0 0.0
        %6688 = vmatpush1.msra.mxu0 0.0
        %6689 = vmatprep.subr.mxu0 0.0
        %6690 = vmatpush1.msra.mxu0 0.0
        %6691 = vmatprep.subr.mxu0 0.0
        %6692 = vmatpush1.msra.mxu0 0.0
        %6693 = vmatprep.mubr.f32.mxu0 0.0
        %v6694 = vand.u32 %v6388, 4294901760
        %v6695 = vsub.f32 %v6388, %v6694
        %v6696 = vand.u32 %v6695, 4294901760
        %6697 = vmatmul.mubr.f32.gmra.mrb[0].mxu0 %v6696
        %v6698 = vpop.f32.mrb[0].mxu0
        %v6699 = vadd.f32 %v6623, %v6698
        %v6700 = vpop.f32.mrb[0].mxu0
        %v6701 = vadd.f32 %v6625, %v6700
        %6702 = vdwg.mxu0
        %v6703 = vand.u32 %v5902, 4294901760
        %v6704 = vsub.f32 %v5902, %v6703
        %v6705 = vand.u32 %v6704, 4294901760
        %6706 = vmatprep.subr.mxu0 %v6705
        %v6707 = vand.u32 %v5901, 4294901760
        %v6708 = vsub.f32 %v5901, %v6707
        %v6709 = vand.u32 %v6708, 4294901760
        %6710 = vmatpush1.msra.mxu0 %v6709
        %6711 = vmatprep.subr.mxu0 0.0
        %6712 = vmatpush1.msra.mxu0 0.0
        %6713 = vmatprep.subr.mxu0 0.0
        %6714 = vmatpush1.msra.mxu0 0.0
        %6715 = vmatprep.subr.mxu0 0.0
        %6716 = vmatpush1.msra.mxu0 0.0
        %6717 = vmatprep.subr.mxu0 0.0
        %6718 = vmatpush1.msra.mxu0 0.0
        %6719 = vmatprep.subr.mxu0 0.0
        %6720 = vmatpush1.msra.mxu0 0.0
        %6721 = vmatprep.subr.mxu0 0.0
        %6722 = vmatpush1.msra.mxu0 0.0
        %6723 = vmatprep.subr.mxu0 0.0
        %6724 = vmatpush1.msra.mxu0 0.0
        %6725 = vmatprep.subr.mxu0 0.0
        %6726 = vmatpush1.msra.mxu0 0.0
        %6727 = vmatprep.subr.mxu0 0.0
        %6728 = vmatpush1.msra.mxu0 0.0
        %6729 = vmatprep.subr.mxu0 0.0
        %6730 = vmatpush1.msra.mxu0 0.0
        %6731 = vmatprep.subr.mxu0 0.0
        %6732 = vmatpush1.msra.mxu0 0.0
        %6733 = vmatprep.subr.mxu0 0.0
        %6734 = vmatpush1.msra.mxu0 0.0
        %6735 = vmatprep.subr.mxu0 0.0
        %6736 = vmatpush1.msra.mxu0 0.0
        %6737 = vmatprep.subr.mxu0 0.0
        %6738 = vmatpush1.msra.mxu0 0.0
        %6739 = vmatprep.subr.mxu0 0.0
        %6740 = vmatpush1.msra.mxu0 0.0
        %6741 = vmatprep.subr.mxu0 0.0
        %6742 = vmatpush1.msra.mxu0 0.0
        %6743 = vmatprep.subr.mxu0 0.0
        %6744 = vmatpush1.msra.mxu0 0.0
        %6745 = vmatprep.subr.mxu0 0.0
        %6746 = vmatpush1.msra.mxu0 0.0
        %6747 = vmatprep.subr.mxu0 0.0
        %6748 = vmatpush1.msra.mxu0 0.0
        %6749 = vmatprep.subr.mxu0 0.0
        %6750 = vmatpush1.msra.mxu0 0.0
        %6751 = vmatprep.subr.mxu0 0.0
        %6752 = vmatpush1.msra.mxu0 0.0
        %6753 = vmatprep.subr.mxu0 0.0
        %6754 = vmatpush1.msra.mxu0 0.0
        %6755 = vmatprep.subr.mxu0 0.0
        %6756 = vmatpush1.msra.mxu0 0.0
        %6757 = vmatprep.subr.mxu0 0.0
        %6758 = vmatpush1.msra.mxu0 0.0
        %6759 = vmatprep.subr.mxu0 0.0
        %6760 = vmatpush1.msra.mxu0 0.0
        %6761 = vmatprep.subr.mxu0 0.0
        %6762 = vmatpush1.msra.mxu0 0.0
        %6763 = vmatprep.subr.mxu0 0.0
        %6764 = vmatpush1.msra.mxu0 0.0
        %6765 = vmatprep.subr.mxu0 0.0
        %6766 = vmatpush1.msra.mxu0 0.0
        %6767 = vmatprep.subr.mxu0 0.0
        %6768 = vmatpush1.msra.mxu0 0.0
        %6769 = vmatprep.subr.mxu0 0.0
        %6770 = vmatpush1.msra.mxu0 0.0
        %6771 = vmatprep.subr.mxu0 0.0
        %6772 = vmatpush1.msra.mxu0 0.0
        %6773 = vmatprep.mubr.f32.mxu0 0.0
        %v6774 = vand.u32 %v6388, 4294901760
        %6775 = vmatmul.mubr.f32.gmra.mrb[0].mxu0 %v6774
        %v6776 = vpop.f32.mrb[0].mxu0
        %v6777 = vadd.f32 %v6699, %v6776
        %v6778 = vpop.f32.mrb[0].mxu0
        %v6779 = vadd.f32 %v6701, %v6778
        %6780 = vdwg.mxu0
        %v6781 = vand.u32 %v5902, 4294901760
        %6782 = vmatprep.subr.mxu0 %v6781
        %v6783 = vand.u32 %v5901, 4294901760
        %6784 = vmatpush1.msra.mxu0 %v6783
        %6785 = vmatprep.subr.mxu0 0.0
        %6786 = vmatpush1.msra.mxu0 0.0
        %6787 = vmatprep.subr.mxu0 0.0
        %6788 = vmatpush1.msra.mxu0 0.0
        %6789 = vmatprep.subr.mxu0 0.0
        %6790 = vmatpush1.msra.mxu0 0.0
        %6791 = vmatprep.subr.mxu0 0.0
        %6792 = vmatpush1.msra.mxu0 0.0
        %6793 = vmatprep.subr.mxu0 0.0
        %6794 = vmatpush1.msra.mxu0 0.0
        %6795 = vmatprep.subr.mxu0 0.0
        %6796 = vmatpush1.msra.mxu0 0.0
        %6797 = vmatprep.subr.mxu0 0.0
        %6798 = vmatpush1.msra.mxu0 0.0
        %6799 = vmatprep.subr.mxu0 0.0
        %6800 = vmatpush1.msra.mxu0 0.0
        %6801 = vmatprep.subr.mxu0 0.0
        %6802 = vmatpush1.msra.mxu0 0.0
        %6803 = vmatprep.subr.mxu0 0.0
        %6804 = vmatpush1.msra.mxu0 0.0
        %6805 = vmatprep.subr.mxu0 0.0
        %6806 = vmatpush1.msra.mxu0 0.0
        %6807 = vmatprep.subr.mxu0 0.0
        %6808 = vmatpush1.msra.mxu0 0.0
        %6809 = vmatprep.subr.mxu0 0.0
        %6810 = vmatpush1.msra.mxu0 0.0
        %6811 = vmatprep.subr.mxu0 0.0
        %6812 = vmatpush1.msra.mxu0 0.0
        %6813 = vmatprep.subr.mxu0 0.0
        %6814 = vmatpush1.msra.mxu0 0.0
        %6815 = vmatprep.subr.mxu0 0.0
        %6816 = vmatpush1.msra.mxu0 0.0
        %6817 = vmatprep.subr.mxu0 0.0
        %6818 = vmatpush1.msra.mxu0 0.0
        %6819 = vmatprep.subr.mxu0 0.0
        %6820 = vmatpush1.msra.mxu0 0.0
        %6821 = vmatprep.subr.mxu0 0.0
        %6822 = vmatpush1.msra.mxu0 0.0
        %6823 = vmatprep.subr.mxu0 0.0
        %6824 = vmatpush1.msra.mxu0 0.0
        %6825 = vmatprep.subr.mxu0 0.0
        %6826 = vmatpush1.msra.mxu0 0.0
        %6827 = vmatprep.subr.mxu0 0.0
        %6828 = vmatpush1.msra.mxu0 0.0
        %6829 = vmatprep.subr.mxu0 0.0
        %6830 = vmatpush1.msra.mxu0 0.0
        %6831 = vmatprep.subr.mxu0 0.0
        %6832 = vmatpush1.msra.mxu0 0.0
        %6833 = vmatprep.subr.mxu0 0.0
        %6834 = vmatpush1.msra.mxu0 0.0
        %6835 = vmatprep.subr.mxu0 0.0
        %6836 = vmatpush1.msra.mxu0 0.0
        %6837 = vmatprep.subr.mxu0 0.0
        %6838 = vmatpush1.msra.mxu0 0.0
        %6839 = vmatprep.subr.mxu0 0.0
        %6840 = vmatpush1.msra.mxu0 0.0
        %6841 = vmatprep.subr.mxu0 0.0
        %6842 = vmatpush1.msra.mxu0 0.0
        %6843 = vmatprep.subr.mxu0 0.0
        %6844 = vmatpush1.msra.mxu0 0.0
        %6845 = vmatprep.subr.mxu0 0.0
        %6846 = vmatpush1.msra.mxu0 0.0
        %6847 = vmatprep.mubr.f32.mxu0 0.0
        %v6848 = vand.u32 %v6388, 4294901760
        %6849 = vmatmul.mubr.f32.gmra.mrb[0].mxu0 %v6848
        %v6850 = vpop.f32.mrb[0].mxu0
        %v6851 = vadd.f32 %v6777, %v6850
        %v6852 = vpop.f32.mrb[0].mxu0
        %v6853 = vadd.f32 %v6779, %v6852
        %6854 = vdwg.mxu0
        %v6855 = vld [vmem:[%s6] sm:$0xf]
        %6857 = vset.pattern.permute.xlu0 0
        %6858 = vperm.xlu0 %6857, %v6855
        %v6859 = vpop.permute.xlu0 %6858
        %v6861 = vadd.f32 %v6851, %v6859
        %v6862 = vadd.f32 %v6853, %v6859
        %v6865 = vcombine.low %v6861, %v6862
        %6867 = vst [vmem:[%s312] sm:$0xff] %v6865
        %s6868 = sand.u32 %s200, 1
        %s6869 = scalar_lea.sflag [#allocation4], %s6868
        %s6870 = sand.u32 %s200, 1
        %s6871 = smul.addr %s6870, 8
        %s6872 = scalar_lea.vmem [#allocation5], %s6871
        // Predicated region
        $region53: #{tpu_custom_call.1} parent=47 // pred_check
          %p6873 = pneg %p210
        $region54: #{tpu_custom_call.1} parent=47 // pred_check_branch
          %6875 = sbr.rel (%p6873) target = $region56
        $region55: #{tpu_custom_call.1} parent=47 // pred_region
          %s6876 = smul.u32 2, %s29
          %s6878 = ssub.s32 128, 128
          %6879 = vsyncadd %s6869, %s6878
          %s6880 = smul.addr %s28, 4
          %s6881 = sadd.s32 %s6876, %s6880
          %s6882 = smul.addr %s6881, 64
          %s6883 = scalar_lea.hbm %s7, %s6882
          %s6885 = sshll.u32 %s6872, 4
          %s6886 = int_to_ptr.vmem [resolvable:$true] %s6885
          %6888 = dma.vmem_to_hbm [thread:$0]  %s6886, 128, %s6883, %s6869
        $region56: #{tpu_custom_call.1} parent=47 // pred_fallthru
          _
      $region48: #{tpu_custom_call.1} parent=5 // pred_fallthru
        _
      %p6889 = scmp.le.s32.totalorder 2, %s19
      // Predicated region
      $region57: #{tpu_custom_call.1} parent=5 // pred_check
        %p6890 = pneg %p6889
      $region58: #{tpu_custom_call.1} parent=5 // pred_check_branch
        %6892 = sbr.rel (%p6890) target = $region60
      $region59: #{tpu_custom_call.1} parent=5 // pred_region
        %s6893 = ssub.s32 %s19, 2
        // Predicated region
        $region61: #{tpu_custom_call.1} parent=59 // pred_check
          %p6894 = pneg %p216
        $region62: #{tpu_custom_call.1} parent=59 // pred_check_branch
          %6896 = sbr.rel (%p6894) target = $region64
        $region63: #{tpu_custom_call.1} parent=59 // pred_region
          %s6897 = sand.u32 %s201, 1
          %s6898 = scalar_lea.sflag [#allocation4], %s6897
          %s6899 = sand.u32 %s201, 1
          %s6900 = smul.addr %s6899, 8
          %s6901 = scalar_lea.vmem [#allocation5], %s6900
          %6902 = dma.done %s6898, 128
        $region64: #{tpu_custom_call.1} parent=59 // pred_fallthru
          _
      $region60: #{tpu_custom_call.1} parent=5 // pred_fallthru
        _
    $region6: #{tpu_custom_call.1} parent=1 // loop_footer
      %s23 = sadd.s32 1, %s19
    $region7: #{tpu_custom_call.1} parent=1 // loop_footer_branch
      %18 = sbr.rel target = $region3
    $region8: #{tpu_custom_call.1} parent=1 // loop_exit
      _
    %6903 = vsyncpa [#allocation3], 1
    %s6904 = scalar_lea.sflag [#allocation3], 1
    %6905 = vsyncpa %s6904, 1
    %6906 = vsyncpa [#allocation4], 1
    %s6907 = scalar_lea.sflag [#allocation4], 1
    %6908 = vsyncpa %s6907, 1

</llo_original>
